<compile_context>
chip_gen: v5e
topology: v5e:2x2
jax: 0.10.0
libtpu: 0.0.40
codegen_flags: <defaults>
</compile_context>

<pallas_src>
import functools

import jax
import jax.numpy as jnp
from jax.experimental import pallas as pl
from jax.experimental.pallas import tpu as pltpu


def _round_up(x, m):
    return ((x + m - 1) // m) * m


# -----------------------------------------------------------------------------
# Fused Pallas kernel: all layers, both directions, whole sequence.
# -----------------------------------------------------------------------------
def fused_bigru_kernel(*refs, num_layers, seq_len, bp, hp):
    """Ref layout:
         refs[0]                       xcat  (T*Bp, Kin0)  rows = [x_t | x_{T-1-t}]
         refs[1+4l .. 4+4l]            layer-l: wi (K_l,6Hp), bi (1,6Hp),
                                       wh (2Hp,6Hp), bhn (1,2Hp)
         refs[1+4L]                    out   (T*Bp, 2Hp)   [h_fwd | h_bwd] (padded)
         refs[2+4L]                    gi scratch   (T*Bp, 6Hp)
         refs[3+4L] (only if L > 1)    hcat scratch (T*Bp, 4Hp)

       Gate-column layout (each block Hp lanes, 128-aligned):
         [ r_fwd | r_bwd | z_fwd | z_bwd | n_fwd | n_bwd ]
    """
    T, Bp, Hp = seq_len, bp, hp
    xcat_ref = refs[0]
    out_ref = refs[1 + 4 * num_layers]
    gi_ref = refs[2 + 4 * num_layers]
    hcat_ref = refs[3 + 4 * num_layers] if num_layers > 1 else None

    for layer in range(num_layers):
        wi_ref, bi_ref, wh_ref, bhn_ref = refs[1 + 4 * layer: 5 + 4 * layer]
        last = layer == num_layers - 1

        # (1) Hoisted input projection: all timesteps, both directions, one MXU
        #     matmul off the serial path.  b_ih (+ folded b_hh_{r,z}) lives in bi.
        #     Backward-direction source columns are already time-reversed, so the
        #     recurrence reads one row block per step for both directions.
        src = xcat_ref[...] if layer == 0 else hcat_ref[...]
        gi_ref[...] = (
            jnp.dot(src, wi_ref[...], preferred_element_type=jnp.float32)
            + bi_ref[...])

        # (2) Hidden weights / n-gate hidden bias hoisted above the recurrence.
        wh = wh_ref[...]          # (2Hp, 6Hp) block-diagonal fwd/bwd, permuted gate cols
        bhn = bhn_ref[...]        # (1, 2Hp)   [b_hh_n fwd | bwd] — must stay inside r*(.)

        def step(s, h, *, last=last):
            # h = [h_fwd | h_bwd], shape (Bp, 2Hp); Bp is a multiple of 8 so every
            # row block below is a full, aligned sublane tile.
            row = pl.multiple_of(s * Bp, Bp)
            rev = pl.multiple_of((T - 1 - s) * Bp, Bp)

            gi = gi_ref[pl.ds(row, Bp), :]                              # (Bp, 6Hp)
            # ONE matmul per step for both directions (block-diagonal W_h).
            gh = jnp.dot(h, wh, preferred_element_type=jnp.float32)    # (Bp, 6Hp)

            # ONE sigmoid (r_f, r_b, z_f, z_b) and ONE tanh (n_f, n_b) per step.
            rz = jax.nn.sigmoid(gi[:, :4 * Hp] + gh[:, :4 * Hp])
            r = rz[:, :2 * Hp]                                          # [r_f | r_b]
            z = rz[:, 2 * Hp:]                                          # [z_f | z_b]
            n = jnp.tanh(gi[:, 4 * Hp:] + r * (gh[:, 4 * Hp:] + bhn))   # [n_f | n_b]
            h_new = (1.0 - z) * n + z * h                               # (Bp, 2Hp)

            h_f = h_new[:, :Hp]
            h_b = h_new[:, Hp:]
            if last:
                # Final layer: lane-dense padded fwd|bwd output slab, written directly.
                out_ref[pl.ds(row, Bp), :Hp] = h_f                      # time s
                out_ref[pl.ds(rev, Bp), Hp:] = h_b                      # time T-1-s
            else:
                # Intermediate layer: store BOTH time orders so the next layer's
                # hoisted projection needs no reversal.
                # cols: [fwd-order h_f | fwd-order h_b | rev-order h_f | rev-order h_b]
                hcat_ref[pl.ds(row, Bp), 0 * Hp:1 * Hp] = h_f
                hcat_ref[pl.ds(rev, Bp), 1 * Hp:2 * Hp] = h_b
                hcat_ref[pl.ds(rev, Bp), 2 * Hp:3 * Hp] = h_f
                hcat_ref[pl.ds(row, Bp), 3 * Hp:4 * Hp] = h_b
            return h_new

        h0 = jnp.zeros((Bp, 2 * Hp), jnp.float32)       # matches get_initial_states()
        jax.lax.fori_loop(0, T, step, h0, unroll=True)


def run_generative_gru(xcat, layer_params, *, seq_len, bp, hp):
    """Single pallas_call for the whole stack. xcat: (T*Bp, Kin0)."""
    num_layers = len(layer_params)
    inputs = [xcat]
    for p in layer_params:
        inputs += [p["wi"], p["bi"], p["wh"], p["bhn"]]
    scratch = [pltpu.VMEM((seq_len * bp, 6 * hp), jnp.float32)]         # gi
    if num_layers > 1:
        scratch.append(pltpu.VMEM((seq_len * bp, 4 * hp), jnp.float32))  # hcat
    vmem = pl.BlockSpec(memory_space=pltpu.MemorySpace.VMEM)
    return pl.pallas_call(
        functools.partial(fused_bigru_kernel, num_layers=num_layers,
                          seq_len=seq_len, bp=bp, hp=hp),
        out_shape=jax.ShapeDtypeStruct((seq_len * bp, 2 * hp), jnp.float32),
        in_specs=[vmem] * len(inputs),
        out_specs=vmem,
        scratch_shapes=scratch,
        # TODO(synk): when scaling T/B/H, bump
        # pltpu.CompilerParams(vmem_limit_bytes=...) and time-chunk the gi hoist
        # (v7x has only 64 MiB VMEM); unnecessary at these toy sizes.
    )(*inputs)


# -----------------------------------------------------------------------------
# Parameter init (PyTorch layout) and one-time preparation into kernel layout.
# -----------------------------------------------------------------------------
def init_gru_params(key, input_size, hidden, layers):
    bound = 1.0 / (hidden ** 0.5)
    params = []
    for layer in range(layers):
        in_size = input_size if layer == 0 else 2 * hidden
        per_dir = []
        for _direction in range(2):
            key, k0, k1, k2, k3 = jax.random.split(key, 5)
            w_ih = jax.random.uniform(k0, (3 * hidden, in_size), jnp.float32, -bound, bound)
            w_hh = jax.random.uniform(k1, (3 * hidden, hidden), jnp.float32, -bound, bound)
            b_ih = jax.random.uniform(k2, (3 * hidden,), jnp.float32, -bound, bound)
            b_hh = jax.random.uniform(k3, (3 * hidden,), jnp.float32, -bound, bound)
            per_dir.append((w_ih, w_hh, b_ih, b_hh))
        params.append(per_dir)
    return params


def prepare_gru_params(raw_params, input_size, hidden):
    """One-time fuse / permute / pad of PyTorch weights into the kernel layout."""
    H = hidden
    Hp = _round_up(H, 128)                       # pad each gate block to 128 lanes
    # gate g (0=r, 1=z, 2=n) -> (fwd column block, bwd column block)
    gate_cols = ((0, 0, 1), (1, 2, 3), (2, 4, 5))
    prepared = []
    for l, (fwd_p, bwd_p) in enumerate(raw_params):
        wih_f, whh_f, bih_f, bhh_f = fwd_p
        wih_b, whh_b, bih_b, bhh_b = bwd_p
        d_in = input_size if l == 0 else 2 * H

        # Block-diagonal hidden weights, gate columns permuted to [r_f r_b z_f z_b n_f n_b].
        wh = jnp.zeros((2 * Hp, 6 * Hp), jnp.float32)
        for g, cf, cb in gate_cols:
            wh = wh.at[0:H, cf * Hp:cf * Hp + H].set(whh_f[g * H:(g + 1) * H, :].T)
            wh = wh.at[Hp:Hp + H, cb * Hp:cb * Hp + H].set(whh_b[g * H:(g + 1) * H, :].T)

        # Input-side bias: fold b_hh_r / b_hh_z; keep b_hh_n separate (inside r*(.)).
        bi = jnp.zeros((1, 6 * Hp), jnp.float32)
        for g, cf, cb in gate_cols:
            fold = g != 2
            bf = bih_f[g * H:(g + 1) * H] + (bhh_f[g * H:(g + 1) * H] if fold else 0.0)
            bb = bih_b[g * H:(g + 1) * H] + (bhh_b[g * H:(g + 1) * H] if fold else 0.0)
            bi = bi.at[0, cf * Hp:cf * Hp + H].set(bf)
            bi = bi.at[0, cb * Hp:cb * Hp + H].set(bb)
        bhn = jnp.zeros((1, 2 * Hp), jnp.float32)
        bhn = bhn.at[0, 0:H].set(bhh_f[2 * H:3 * H])
        bhn = bhn.at[0, Hp:Hp + H].set(bhh_b[2 * H:3 * H])

        # Input weights, laid out to consume the "cat" rows (fwd source | time-reversed source).
        if l == 0:
            k_in = _round_up(2 * d_in, 128)
            wi = jnp.zeros((k_in, 6 * Hp), jnp.float32)
            for g, cf, cb in gate_cols:
                wi = wi.at[0:d_in, cf * Hp:cf * Hp + H].set(wih_f[g * H:(g + 1) * H, :].T)
                wi = wi.at[d_in:2 * d_in, cb * Hp:cb * Hp + H].set(wih_b[g * H:(g + 1) * H, :].T)
        else:
            # rows: [fwd-order h_f (Hp) | fwd-order h_b (Hp) | rev-order h_f (Hp) | rev-order h_b (Hp)]
            k_in = 4 * Hp
            wi = jnp.zeros((k_in, 6 * Hp), jnp.float32)
            for g, cf, cb in gate_cols:
                wf = wih_f[g * H:(g + 1) * H, :]        # (H, 2H): [:, :H] fwd-out, [:, H:] bwd-out
                wb = wih_b[g * H:(g + 1) * H, :]
                wi = wi.at[0:H, cf * Hp:cf * Hp + H].set(wf[:, 0:H].T)
                wi = wi.at[Hp:Hp + H, cf * Hp:cf * Hp + H].set(wf[:, H:2 * H].T)
                wi = wi.at[2 * Hp:2 * Hp + H, cb * Hp:cb * Hp + H].set(wb[:, 0:H].T)
                wi = wi.at[3 * Hp:3 * Hp + H, cb * Hp:cb * Hp + H].set(wb[:, H:2 * H].T)

        prepared.append(dict(wi=wi, bi=bi, wh=wh, bhn=bhn, k_in=k_in))
    return dict(layers=prepared, hidden=H, hidden_p=Hp, input_size=input_size)


def generative_gru_forward(x_btf, prep):
    """Forward pass of GenerativeGRU.  x_btf: (B, T, input_size) -> (B, T, 2H)."""
    B, T, F = x_btf.shape
    H, Hp = prep["hidden"], prep["hidden_p"]
    Bp = _round_up(max(B, 1), 8)                 # pad batch to the 8-sublane tile
    k0 = prep["layers"][0]["k_in"]

    x_tbf = jnp.transpose(x_btf, (1, 0, 2)).astype(jnp.float32)        # (T, B, F), once
    x_tbf = jnp.pad(x_tbf, ((0, 0), (0, Bp - B), (0, 0)))
    xcat = jnp.concatenate([x_tbf, x_tbf[::-1]], axis=-1)              # [x_t | x_{T-1-t}]
    xcat = xcat.reshape(T * Bp, 2 * F)
    xcat = jnp.pad(xcat, ((0, 0), (0, k0 - 2 * F)))                    # lane-pad K

    out = run_generative_gru(xcat, prep["layers"], seq_len=T, bp=Bp, hp=Hp)
    out = out.reshape(T, Bp, 2 * Hp)
    out = jnp.concatenate([out[:, :B, :H], out[:, :B, Hp:Hp + H]], axis=-1)  # (T, B, 2H)
    return jnp.transpose(out, (1, 0, 2))                               # (B, T, 2H), once


# -----------------------------------------------------------------------------
# Pure-JAX reference (lax.scan) for correctness check.
# -----------------------------------------------------------------------------
def _ref_gru_direction(x_btd, w_ih, w_hh, b_ih, b_hh, *, reverse):
    B, T, D = x_btd.shape
    H = w_hh.shape[1]
    if reverse:
        x_btd = x_btd[:, ::-1, :]
    x_tbd = jnp.transpose(x_btd, (1, 0, 2))

    def step(h, x_t):
        gi = x_t @ w_ih.T + b_ih
        gh = h @ w_hh.T + b_hh
        r = jax.nn.sigmoid(gi[:, :H] + gh[:, :H])
        z = jax.nn.sigmoid(gi[:, H:2 * H] + gh[:, H:2 * H])
        n = jnp.tanh(gi[:, 2 * H:] + r * gh[:, 2 * H:])
        h_new = (1.0 - z) * n + z * h
        return h_new, h_new

    h0 = jnp.zeros((B, H), jnp.float32)
    _, out = jax.lax.scan(step, h0, x_tbd)
    out = jnp.transpose(out, (1, 0, 2))
    if reverse:
        out = out[:, ::-1, :]
    return out


def _ref_forward(x_btf, raw_params):
    h = x_btf
    for fwd_p, bwd_p in raw_params:
        out_f = _ref_gru_direction(h, *fwd_p, reverse=False)
        out_b = _ref_gru_direction(h, *bwd_p, reverse=True)
        h = jnp.concatenate([out_f, out_b], axis=-1)
    return h


if __name__ == "__main__":
    # Small shapes implied by the module: X is (batch, seq, input_size).
    batch, seq, input_size = 2, 8, 16
    hiddens, layers, dropout = 32, 2, 0.0

    key = jax.random.PRNGKey(0)
    key, kx, kp = jax.random.split(key, 3)
    x = jax.random.normal(kx, (batch, seq, input_size), jnp.float32)
    raw_params = init_gru_params(kp, input_size, hiddens, layers)
    prep = prepare_gru_params(raw_params, input_size, hiddens)   # one-time weight fusion

    out = jax.block_until_ready(generative_gru_forward(x, prep))
    assert out.shape == (batch, seq, 2 * hiddens), out.shape

    ref = jax.block_until_ready(_ref_forward(x, raw_params))
    assert jnp.allclose(out, ref, atol=1e-5, rtol=1e-5), "mismatch vs pure-JAX reference"

    print("KERNEL_OK")
</pallas_src>

<mosaic_0001>
module attributes {stable_mosaic.version = 11 : i64} {
  func.func @fused_bigru_kernel(%arg0: memref<64x128xf32, #tpu.memory_space<vmem>>, %arg1: memref<128x768xf32, #tpu.memory_space<vmem>>, %arg2: memref<1x768xf32, #tpu.memory_space<vmem>>, %arg3: memref<256x768xf32, #tpu.memory_space<vmem>>, %arg4: memref<1x256xf32, #tpu.memory_space<vmem>>, %arg5: memref<512x768xf32, #tpu.memory_space<vmem>>, %arg6: memref<1x768xf32, #tpu.memory_space<vmem>>, %arg7: memref<256x768xf32, #tpu.memory_space<vmem>>, %arg8: memref<1x256xf32, #tpu.memory_space<vmem>>, %arg9: memref<64x256xf32, #tpu.memory_space<vmem>>, %arg10: memref<64x768xf32, #tpu.memory_space<vmem>>, %arg11: memref<64x512xf32, #tpu.memory_space<vmem>>) attributes {dimension_semantics = [], scalar_prefetch = 0 : i64, scratch_operands = 2 : i64, tpu.core_type = #tpu.core_type<tc>} {
    %c0 = arith.constant 0 : index
    %c0_0 = arith.constant 0 : index
    %0 = vector.load %arg0[%c0, %c0_0] : memref<64x128xf32, #tpu.memory_space<vmem>>, vector<64x128xf32>
    %c0_1 = arith.constant 0 : index
    %c0_2 = arith.constant 0 : index
    %1 = vector.load %arg1[%c0_1, %c0_2] : memref<128x768xf32, #tpu.memory_space<vmem>>, vector<128x768xf32>
    %cst = arith.constant dense<0.000000e+00> : vector<64x768xf32>
    %2 = tpu.matmul %0, %1, %cst {dimension_numbers = #tpu.dot_dimension_numbers<[1], [0], [0], [1], [0, 0, 1, 1], [], []>} : vector<64x128xf32>, vector<128x768xf32>, vector<64x768xf32> -> vector<64x768xf32>
    %c0_3 = arith.constant 0 : index
    %c0_4 = arith.constant 0 : index
    %3 = vector.load %arg2[%c0_3, %c0_4] : memref<1x768xf32, #tpu.memory_space<vmem>>, vector<1x768xf32>
    %4 = vector.broadcast %3 : vector<1x768xf32> to vector<64x768xf32>
    %5 = arith.addf %2, %4 : vector<64x768xf32>
    %c0_5 = arith.constant 0 : index
    %c0_6 = arith.constant 0 : index
    %6 = vector.load %arg10[%c0_5, %c0_6] : memref<64x768xf32, #tpu.memory_space<vmem>>, vector<64x768xf32>
    tpu.vector_store %arg10[%c0_5, %c0_6], %5 {strides = array<i32>} : memref<64x768xf32, #tpu.memory_space<vmem>>, vector<64x768xf32>,
    %c0_7 = arith.constant 0 : index
    %c0_8 = arith.constant 0 : index
    %7 = vector.load %arg3[%c0_7, %c0_8] : memref<256x768xf32, #tpu.memory_space<vmem>>, vector<256x768xf32>
    %c0_9 = arith.constant 0 : index
    %c0_10 = arith.constant 0 : index
    %8 = vector.load %arg4[%c0_9, %c0_10] : memref<1x256xf32, #tpu.memory_space<vmem>>, vector<1x256xf32>
    %cst_11 = arith.constant 0.000000e+00 : f32
    %9 = vector.broadcast %cst_11 : f32 to vector<8x256xf32>
    %c0_i32 = arith.constant 0 : i32
    %c8_i32 = arith.constant 8 : i32
    %10 = arith.muli %c0_i32, %c8_i32 : i32
    %11 = tpu.assume_multiple %10, 8 : i32
    %c7_i32 = arith.constant 7 : i32
    %12 = arith.subi %c7_i32, %c0_i32 : i32
    %c8_i32_12 = arith.constant 8 : i32
    %13 = arith.muli %12, %c8_i32_12 : i32
    %14 = tpu.assume_multiple %13, 8 : i32
    %15 = arith.index_cast %11 : i32 to index
    %c0_13 = arith.constant 0 : index
    %16 = vector.load %arg10[%15, %c0_13] : memref<64x768xf32, #tpu.memory_space<vmem>>, vector<8x768xf32>
    %cst_14 = arith.constant dense<0.000000e+00> : vector<8x768xf32>
    %17 = tpu.matmul %9, %7, %cst_14 {dimension_numbers = #tpu.dot_dimension_numbers<[1], [0], [0], [1], [0, 0, 1, 1], [], []>} : vector<8x256xf32>, vector<256x768xf32>, vector<8x768xf32> -> vector<8x768xf32>
    %18 = vector.extract_strided_slice %16 {offsets = [0, 0], sizes = [8, 512], strides = [1, 1]} : vector<8x768xf32> to vector<8x512xf32>
    %19 = vector.extract_strided_slice %17 {offsets = [0, 0], sizes = [8, 512], strides = [1, 1]} : vector<8x768xf32> to vector<8x512xf32>
    %20 = arith.addf %18, %19 : vector<8x512xf32>
    %21 = arith.negf %20 : vector<8x512xf32>
    %22 = math.exp %21 : vector<8x512xf32>
    %cst_15 = arith.constant 1.000000e+00 : f32
    %23 = vector.broadcast %cst_15 : f32 to vector<8x512xf32>
    %24 = arith.addf %23, %22 : vector<8x512xf32>
    %25 = arith.divf %23, %24 : vector<8x512xf32>
    %26 = vector.extract_strided_slice %25 {offsets = [0, 0], sizes = [8, 256], strides = [1, 1]} : vector<8x512xf32> to vector<8x256xf32>
    %27 = vector.extract_strided_slice %25 {offsets = [0, 256], sizes = [8, 256], strides = [1, 1]} : vector<8x512xf32> to vector<8x256xf32>
    %28 = vector.extract_strided_slice %16 {offsets = [0, 512], sizes = [8, 256], strides = [1, 1]} : vector<8x768xf32> to vector<8x256xf32>
    %29 = vector.extract_strided_slice %17 {offsets = [0, 512], sizes = [8, 256], strides = [1, 1]} : vector<8x768xf32> to vector<8x256xf32>
    %30 = vector.broadcast %8 : vector<1x256xf32> to vector<8x256xf32>
    %31 = arith.addf %29, %30 : vector<8x256xf32>
    %32 = arith.mulf %26, %31 : vector<8x256xf32>
    %33 = arith.addf %28, %32 : vector<8x256xf32>
    %34 = math.tanh %33 : vector<8x256xf32>
    %cst_16 = arith.constant 1.000000e+00 : f32
    %35 = vector.broadcast %cst_16 : f32 to vector<8x256xf32>
    %36 = arith.subf %35, %27 : vector<8x256xf32>
    %37 = arith.mulf %36, %34 : vector<8x256xf32>
    %38 = arith.mulf %27, %9 : vector<8x256xf32>
    %39 = arith.addf %37, %38 : vector<8x256xf32>
    %40 = vector.extract_strided_slice %39 {offsets = [0, 0], sizes = [8, 128], strides = [1, 1]} : vector<8x256xf32> to vector<8x128xf32>
    %41 = vector.extract_strided_slice %39 {offsets = [0, 128], sizes = [8, 128], strides = [1, 1]} : vector<8x256xf32> to vector<8x128xf32>
    %42 = arith.index_cast %11 : i32 to index
    %c0_17 = arith.constant 0 : index
    %43 = vector.load %arg11[%42, %c0_17] : memref<64x512xf32, #tpu.memory_space<vmem>>, vector<8x128xf32>
    tpu.vector_store %arg11[%42, %c0_17], %40 {strides = array<i32>} : memref<64x512xf32, #tpu.memory_space<vmem>>, vector<8x128xf32>,
    %44 = arith.index_cast %14 : i32 to index
    %c128 = arith.constant 128 : index
    %45 = vector.load %arg11[%44, %c128] : memref<64x512xf32, #tpu.memory_space<vmem>>, vector<8x128xf32>
    tpu.vector_store %arg11[%44, %c128], %41 {strides = array<i32>} : memref<64x512xf32, #tpu.memory_space<vmem>>, vector<8x128xf32>,
    %46 = arith.index_cast %14 : i32 to index
    %c256 = arith.constant 256 : index
    %47 = vector.load %arg11[%46, %c256] : memref<64x512xf32, #tpu.memory_space<vmem>>, vector<8x128xf32>
    tpu.vector_store %arg11[%46, %c256], %40 {strides = array<i32>} : memref<64x512xf32, #tpu.memory_space<vmem>>, vector<8x128xf32>,
    %48 = arith.index_cast %11 : i32 to index
    %c384 = arith.constant 384 : index
    %49 = vector.load %arg11[%48, %c384] : memref<64x512xf32, #tpu.memory_space<vmem>>, vector<8x128xf32>
    tpu.vector_store %arg11[%48, %c384], %41 {strides = array<i32>} : memref<64x512xf32, #tpu.memory_space<vmem>>, vector<8x128xf32>,
    %c1_i32 = arith.constant 1 : i32
    %c8_i32_18 = arith.constant 8 : i32
    %50 = arith.muli %c1_i32, %c8_i32_18 : i32
    %51 = tpu.assume_multiple %50, 8 : i32
    %c7_i32_19 = arith.constant 7 : i32
    %52 = arith.subi %c7_i32_19, %c1_i32 : i32
    %c8_i32_20 = arith.constant 8 : i32
    %53 = arith.muli %52, %c8_i32_20 : i32
    %54 = tpu.assume_multiple %53, 8 : i32
    %55 = arith.index_cast %51 : i32 to index
    %c0_21 = arith.constant 0 : index
    %56 = vector.load %arg10[%55, %c0_21] : memref<64x768xf32, #tpu.memory_space<vmem>>, vector<8x768xf32>
    %cst_22 = arith.constant dense<0.000000e+00> : vector<8x768xf32>
    %57 = tpu.matmul %39, %7, %cst_22 {dimension_numbers = #tpu.dot_dimension_numbers<[1], [0], [0], [1], [0, 0, 1, 1], [], []>} : vector<8x256xf32>, vector<256x768xf32>, vector<8x768xf32> -> vector<8x768xf32>
    %58 = vector.extract_strided_slice %56 {offsets = [0, 0], sizes = [8, 512], strides = [1, 1]} : vector<8x768xf32> to vector<8x512xf32>
    %59 = vector.extract_strided_slice %57 {offsets = [0, 0], sizes = [8, 512], strides = [1, 1]} : vector<8x768xf32> to vector<8x512xf32>
    %60 = arith.addf %58, %59 : vector<8x512xf32>
    %61 = arith.negf %60 : vector<8x512xf32>
    %62 = math.exp %61 : vector<8x512xf32>
    %cst_23 = arith.constant 1.000000e+00 : f32
    %63 = vector.broadcast %cst_23 : f32 to vector<8x512xf32>
    %64 = arith.addf %63, %62 : vector<8x512xf32>
    %65 = arith.divf %63, %64 : vector<8x512xf32>
    %66 = vector.extract_strided_slice %65 {offsets = [0, 0], sizes = [8, 256], strides = [1, 1]} : vector<8x512xf32> to vector<8x256xf32>
    %67 = vector.extract_strided_slice %65 {offsets = [0, 256], sizes = [8, 256], strides = [1, 1]} : vector<8x512xf32> to vector<8x256xf32>
    %68 = vector.extract_strided_slice %56 {offsets = [0, 512], sizes = [8, 256], strides = [1, 1]} : vector<8x768xf32> to vector<8x256xf32>
    %69 = vector.extract_strided_slice %57 {offsets = [0, 512], sizes = [8, 256], strides = [1, 1]} : vector<8x768xf32> to vector<8x256xf32>
    %70 = vector.broadcast %8 : vector<1x256xf32> to vector<8x256xf32>
    %71 = arith.addf %69, %70 : vector<8x256xf32>
    %72 = arith.mulf %66, %71 : vector<8x256xf32>
    %73 = arith.addf %68, %72 : vector<8x256xf32>
    %74 = math.tanh %73 : vector<8x256xf32>
    %cst_24 = arith.constant 1.000000e+00 : f32
    %75 = vector.broadcast %cst_24 : f32 to vector<8x256xf32>
    %76 = arith.subf %75, %67 : vector<8x256xf32>
    %77 = arith.mulf %76, %74 : vector<8x256xf32>
    %78 = arith.mulf %67, %39 : vector<8x256xf32>
    %79 = arith.addf %77, %78 : vector<8x256xf32>
    %80 = vector.extract_strided_slice %79 {offsets = [0, 0], sizes = [8, 128], strides = [1, 1]} : vector<8x256xf32> to vector<8x128xf32>
    %81 = vector.extract_strided_slice %79 {offsets = [0, 128], sizes = [8, 128], strides = [1, 1]} : vector<8x256xf32> to vector<8x128xf32>
    %82 = arith.index_cast %51 : i32 to index
    %c0_25 = arith.constant 0 : index
    %83 = vector.load %arg11[%82, %c0_25] : memref<64x512xf32, #tpu.memory_space<vmem>>, vector<8x128xf32>
    tpu.vector_store %arg11[%82, %c0_25], %80 {strides = array<i32>} : memref<64x512xf32, #tpu.memory_space<vmem>>, vector<8x128xf32>,
    %84 = arith.index_cast %54 : i32 to index
    %c128_26 = arith.constant 128 : index
    %85 = vector.load %arg11[%84, %c128_26] : memref<64x512xf32, #tpu.memory_space<vmem>>, vector<8x128xf32>
    tpu.vector_store %arg11[%84, %c128_26], %81 {strides = array<i32>} : memref<64x512xf32, #tpu.memory_space<vmem>>, vector<8x128xf32>,
    %86 = arith.index_cast %54 : i32 to index
    %c256_27 = arith.constant 256 : index
    %87 = vector.load %arg11[%86, %c256_27] : memref<64x512xf32, #tpu.memory_space<vmem>>, vector<8x128xf32>
    tpu.vector_store %arg11[%86, %c256_27], %80 {strides = array<i32>} : memref<64x512xf32, #tpu.memory_space<vmem>>, vector<8x128xf32>,
    %88 = arith.index_cast %51 : i32 to index
    %c384_28 = arith.constant 384 : index
    %89 = vector.load %arg11[%88, %c384_28] : memref<64x512xf32, #tpu.memory_space<vmem>>, vector<8x128xf32>
    tpu.vector_store %arg11[%88, %c384_28], %81 {strides = array<i32>} : memref<64x512xf32, #tpu.memory_space<vmem>>, vector<8x128xf32>,
    %c2_i32 = arith.constant 2 : i32
    %c8_i32_29 = arith.constant 8 : i32
    %90 = arith.muli %c2_i32, %c8_i32_29 : i32
    %91 = tpu.assume_multiple %90, 8 : i32
    %c7_i32_30 = arith.constant 7 : i32
    %92 = arith.subi %c7_i32_30, %c2_i32 : i32
    %c8_i32_31 = arith.constant 8 : i32
    %93 = arith.muli %92, %c8_i32_31 : i32
    %94 = tpu.assume_multiple %93, 8 : i32
    %95 = arith.index_cast %91 : i32 to index
    %c0_32 = arith.constant 0 : index
    %96 = vector.load %arg10[%95, %c0_32] : memref<64x768xf32, #tpu.memory_space<vmem>>, vector<8x768xf32>
    %cst_33 = arith.constant dense<0.000000e+00> : vector<8x768xf32>
    %97 = tpu.matmul %79, %7, %cst_33 {dimension_numbers = #tpu.dot_dimension_numbers<[1], [0], [0], [1], [0, 0, 1, 1], [], []>} : vector<8x256xf32>, vector<256x768xf32>, vector<8x768xf32> -> vector<8x768xf32>
    %98 = vector.extract_strided_slice %96 {offsets = [0, 0], sizes = [8, 512], strides = [1, 1]} : vector<8x768xf32> to vector<8x512xf32>
    %99 = vector.extract_strided_slice %97 {offsets = [0, 0], sizes = [8, 512], strides = [1, 1]} : vector<8x768xf32> to vector<8x512xf32>
    %100 = arith.addf %98, %99 : vector<8x512xf32>
    %101 = arith.negf %100 : vector<8x512xf32>
    %102 = math.exp %101 : vector<8x512xf32>
    %cst_34 = arith.constant 1.000000e+00 : f32
    %103 = vector.broadcast %cst_34 : f32 to vector<8x512xf32>
    %104 = arith.addf %103, %102 : vector<8x512xf32>
    %105 = arith.divf %103, %104 : vector<8x512xf32>
    %106 = vector.extract_strided_slice %105 {offsets = [0, 0], sizes = [8, 256], strides = [1, 1]} : vector<8x512xf32> to vector<8x256xf32>
    %107 = vector.extract_strided_slice %105 {offsets = [0, 256], sizes = [8, 256], strides = [1, 1]} : vector<8x512xf32> to vector<8x256xf32>
    %108 = vector.extract_strided_slice %96 {offsets = [0, 512], sizes = [8, 256], strides = [1, 1]} : vector<8x768xf32> to vector<8x256xf32>
    %109 = vector.extract_strided_slice %97 {offsets = [0, 512], sizes = [8, 256], strides = [1, 1]} : vector<8x768xf32> to vector<8x256xf32>
    %110 = vector.broadcast %8 : vector<1x256xf32> to vector<8x256xf32>
    %111 = arith.addf %109, %110 : vector<8x256xf32>
    %112 = arith.mulf %106, %111 : vector<8x256xf32>
    %113 = arith.addf %108, %112 : vector<8x256xf32>
    %114 = math.tanh %113 : vector<8x256xf32>
    %cst_35 = arith.constant 1.000000e+00 : f32
    %115 = vector.broadcast %cst_35 : f32 to vector<8x256xf32>
    %116 = arith.subf %115, %107 : vector<8x256xf32>
    %117 = arith.mulf %116, %114 : vector<8x256xf32>
    %118 = arith.mulf %107, %79 : vector<8x256xf32>
    %119 = arith.addf %117, %118 : vector<8x256xf32>
    %120 = vector.extract_strided_slice %119 {offsets = [0, 0], sizes = [8, 128], strides = [1, 1]} : vector<8x256xf32> to vector<8x128xf32>
    %121 = vector.extract_strided_slice %119 {offsets = [0, 128], sizes = [8, 128], strides = [1, 1]} : vector<8x256xf32> to vector<8x128xf32>
    %122 = arith.index_cast %91 : i32 to index
    %c0_36 = arith.constant 0 : index
    %123 = vector.load %arg11[%122, %c0_36] : memref<64x512xf32, #tpu.memory_space<vmem>>, vector<8x128xf32>
    tpu.vector_store %arg11[%122, %c0_36], %120 {strides = array<i32>} : memref<64x512xf32, #tpu.memory_space<vmem>>, vector<8x128xf32>,
    %124 = arith.index_cast %94 : i32 to index
    %c128_37 = arith.constant 128 : index
    %125 = vector.load %arg11[%124, %c128_37] : memref<64x512xf32, #tpu.memory_space<vmem>>, vector<8x128xf32>
    tpu.vector_store %arg11[%124, %c128_37], %121 {strides = array<i32>} : memref<64x512xf32, #tpu.memory_space<vmem>>, vector<8x128xf32>,
    %126 = arith.index_cast %94 : i32 to index
    %c256_38 = arith.constant 256 : index
    %127 = vector.load %arg11[%126, %c256_38] : memref<64x512xf32, #tpu.memory_space<vmem>>, vector<8x128xf32>
    tpu.vector_store %arg11[%126, %c256_38], %120 {strides = array<i32>} : memref<64x512xf32, #tpu.memory_space<vmem>>, vector<8x128xf32>,
    %128 = arith.index_cast %91 : i32 to index
    %c384_39 = arith.constant 384 : index
    %129 = vector.load %arg11[%128, %c384_39] : memref<64x512xf32, #tpu.memory_space<vmem>>, vector<8x128xf32>
    tpu.vector_store %arg11[%128, %c384_39], %121 {strides = array<i32>} : memref<64x512xf32, #tpu.memory_space<vmem>>, vector<8x128xf32>,
    %c3_i32 = arith.constant 3 : i32
    %c8_i32_40 = arith.constant 8 : i32
    %130 = arith.muli %c3_i32, %c8_i32_40 : i32
    %131 = tpu.assume_multiple %130, 8 : i32
    %c7_i32_41 = arith.constant 7 : i32
    %132 = arith.subi %c7_i32_41, %c3_i32 : i32
    %c8_i32_42 = arith.constant 8 : i32
    %133 = arith.muli %132, %c8_i32_42 : i32
    %134 = tpu.assume_multiple %133, 8 : i32
    %135 = arith.index_cast %131 : i32 to index
    %c0_43 = arith.constant 0 : index
    %136 = vector.load %arg10[%135, %c0_43] : memref<64x768xf32, #tpu.memory_space<vmem>>, vector<8x768xf32>
    %cst_44 = arith.constant dense<0.000000e+00> : vector<8x768xf32>
    %137 = tpu.matmul %119, %7, %cst_44 {dimension_numbers = #tpu.dot_dimension_numbers<[1], [0], [0], [1], [0, 0, 1, 1], [], []>} : vector<8x256xf32>, vector<256x768xf32>, vector<8x768xf32> -> vector<8x768xf32>
    %138 = vector.extract_strided_slice %136 {offsets = [0, 0], sizes = [8, 512], strides = [1, 1]} : vector<8x768xf32> to vector<8x512xf32>
    %139 = vector.extract_strided_slice %137 {offsets = [0, 0], sizes = [8, 512], strides = [1, 1]} : vector<8x768xf32> to vector<8x512xf32>
    %140 = arith.addf %138, %139 : vector<8x512xf32>
    %141 = arith.negf %140 : vector<8x512xf32>
    %142 = math.exp %141 : vector<8x512xf32>
    %cst_45 = arith.constant 1.000000e+00 : f32
    %143 = vector.broadcast %cst_45 : f32 to vector<8x512xf32>
    %144 = arith.addf %143, %142 : vector<8x512xf32>
    %145 = arith.divf %143, %144 : vector<8x512xf32>
    %146 = vector.extract_strided_slice %145 {offsets = [0, 0], sizes = [8, 256], strides = [1, 1]} : vector<8x512xf32> to vector<8x256xf32>
    %147 = vector.extract_strided_slice %145 {offsets = [0, 256], sizes = [8, 256], strides = [1, 1]} : vector<8x512xf32> to vector<8x256xf32>
    %148 = vector.extract_strided_slice %136 {offsets = [0, 512], sizes = [8, 256], strides = [1, 1]} : vector<8x768xf32> to vector<8x256xf32>
    %149 = vector.extract_strided_slice %137 {offsets = [0, 512], sizes = [8, 256], strides = [1, 1]} : vector<8x768xf32> to vector<8x256xf32>
    %150 = vector.broadcast %8 : vector<1x256xf32> to vector<8x256xf32>
    %151 = arith.addf %149, %150 : vector<8x256xf32>
    %152 = arith.mulf %146, %151 : vector<8x256xf32>
    %153 = arith.addf %148, %152 : vector<8x256xf32>
    %154 = math.tanh %153 : vector<8x256xf32>
    %cst_46 = arith.constant 1.000000e+00 : f32
    %155 = vector.broadcast %cst_46 : f32 to vector<8x256xf32>
    %156 = arith.subf %155, %147 : vector<8x256xf32>
    %157 = arith.mulf %156, %154 : vector<8x256xf32>
    %158 = arith.mulf %147, %119 : vector<8x256xf32>
    %159 = arith.addf %157, %158 : vector<8x256xf32>
    %160 = vector.extract_strided_slice %159 {offsets = [0, 0], sizes = [8, 128], strides = [1, 1]} : vector<8x256xf32> to vector<8x128xf32>
    %161 = vector.extract_strided_slice %159 {offsets = [0, 128], sizes = [8, 128], strides = [1, 1]} : vector<8x256xf32> to vector<8x128xf32>
    %162 = arith.index_cast %131 : i32 to index
    %c0_47 = arith.constant 0 : index
    %163 = vector.load %arg11[%162, %c0_47] : memref<64x512xf32, #tpu.memory_space<vmem>>, vector<8x128xf32>
    tpu.vector_store %arg11[%162, %c0_47], %160 {strides = array<i32>} : memref<64x512xf32, #tpu.memory_space<vmem>>, vector<8x128xf32>,
    %164 = arith.index_cast %134 : i32 to index
    %c128_48 = arith.constant 128 : index
    %165 = vector.load %arg11[%164, %c128_48] : memref<64x512xf32, #tpu.memory_space<vmem>>, vector<8x128xf32>
    tpu.vector_store %arg11[%164, %c128_48], %161 {strides = array<i32>} : memref<64x512xf32, #tpu.memory_space<vmem>>, vector<8x128xf32>,
    %166 = arith.index_cast %134 : i32 to index
    %c256_49 = arith.constant 256 : index
    %167 = vector.load %arg11[%166, %c256_49] : memref<64x512xf32, #tpu.memory_space<vmem>>, vector<8x128xf32>
    tpu.vector_store %arg11[%166, %c256_49], %160 {strides = array<i32>} : memref<64x512xf32, #tpu.memory_space<vmem>>, vector<8x128xf32>,
    %168 = arith.index_cast %131 : i32 to index
    %c384_50 = arith.constant 384 : index
    %169 = vector.load %arg11[%168, %c384_50] : memref<64x512xf32, #tpu.memory_space<vmem>>, vector<8x128xf32>
    tpu.vector_store %arg11[%168, %c384_50], %161 {strides = array<i32>} : memref<64x512xf32, #tpu.memory_space<vmem>>, vector<8x128xf32>,
    %c4_i32 = arith.constant 4 : i32
    %c8_i32_51 = arith.constant 8 : i32
    %170 = arith.muli %c4_i32, %c8_i32_51 : i32
    %171 = tpu.assume_multiple %170, 8 : i32
    %c7_i32_52 = arith.constant 7 : i32
    %172 = arith.subi %c7_i32_52, %c4_i32 : i32
    %c8_i32_53 = arith.constant 8 : i32
    %173 = arith.muli %172, %c8_i32_53 : i32
    %174 = tpu.assume_multiple %173, 8 : i32
    %175 = arith.index_cast %171 : i32 to index
    %c0_54 = arith.constant 0 : index
    %176 = vector.load %arg10[%175, %c0_54] : memref<64x768xf32, #tpu.memory_space<vmem>>, vector<8x768xf32>
    %cst_55 = arith.constant dense<0.000000e+00> : vector<8x768xf32>
    %177 = tpu.matmul %159, %7, %cst_55 {dimension_numbers = #tpu.dot_dimension_numbers<[1], [0], [0], [1], [0, 0, 1, 1], [], []>} : vector<8x256xf32>, vector<256x768xf32>, vector<8x768xf32> -> vector<8x768xf32>
    %178 = vector.extract_strided_slice %176 {offsets = [0, 0], sizes = [8, 512], strides = [1, 1]} : vector<8x768xf32> to vector<8x512xf32>
    %179 = vector.extract_strided_slice %177 {offsets = [0, 0], sizes = [8, 512], strides = [1, 1]} : vector<8x768xf32> to vector<8x512xf32>
    %180 = arith.addf %178, %179 : vector<8x512xf32>
    %181 = arith.negf %180 : vector<8x512xf32>
    %182 = math.exp %181 : vector<8x512xf32>
    %cst_56 = arith.constant 1.000000e+00 : f32
    %183 = vector.broadcast %cst_56 : f32 to vector<8x512xf32>
    %184 = arith.addf %183, %182 : vector<8x512xf32>
    %185 = arith.divf %183, %184 : vector<8x512xf32>
    %186 = vector.extract_strided_slice %185 {offsets = [0, 0], sizes = [8, 256], strides = [1, 1]} : vector<8x512xf32> to vector<8x256xf32>
    %187 = vector.extract_strided_slice %185 {offsets = [0, 256], sizes = [8, 256], strides = [1, 1]} : vector<8x512xf32> to vector<8x256xf32>
    %188 = vector.extract_strided_slice %176 {offsets = [0, 512], sizes = [8, 256], strides = [1, 1]} : vector<8x768xf32> to vector<8x256xf32>
    %189 = vector.extract_strided_slice %177 {offsets = [0, 512], sizes = [8, 256], strides = [1, 1]} : vector<8x768xf32> to vector<8x256xf32>
    %190 = vector.broadcast %8 : vector<1x256xf32> to vector<8x256xf32>
    %191 = arith.addf %189, %190 : vector<8x256xf32>
    %192 = arith.mulf %186, %191 : vector<8x256xf32>
    %193 = arith.addf %188, %192 : vector<8x256xf32>
    %194 = math.tanh %193 : vector<8x256xf32>
    %cst_57 = arith.constant 1.000000e+00 : f32
    %195 = vector.broadcast %cst_57 : f32 to vector<8x256xf32>
    %196 = arith.subf %195, %187 : vector<8x256xf32>
    %197 = arith.mulf %196, %194 : vector<8x256xf32>
    %198 = arith.mulf %187, %159 : vector<8x256xf32>
    %199 = arith.addf %197, %198 : vector<8x256xf32>
    %200 = vector.extract_strided_slice %199 {offsets = [0, 0], sizes = [8, 128], strides = [1, 1]} : vector<8x256xf32> to vector<8x128xf32>
    %201 = vector.extract_strided_slice %199 {offsets = [0, 128], sizes = [8, 128], strides = [1, 1]} : vector<8x256xf32> to vector<8x128xf32>
    %202 = arith.index_cast %171 : i32 to index
    %c0_58 = arith.constant 0 : index
    %203 = vector.load %arg11[%202, %c0_58] : memref<64x512xf32, #tpu.memory_space<vmem>>, vector<8x128xf32>
    tpu.vector_store %arg11[%202, %c0_58], %200 {strides = array<i32>} : memref<64x512xf32, #tpu.memory_space<vmem>>, vector<8x128xf32>,
    %204 = arith.index_cast %174 : i32 to index
    %c128_59 = arith.constant 128 : index
    %205 = vector.load %arg11[%204, %c128_59] : memref<64x512xf32, #tpu.memory_space<vmem>>, vector<8x128xf32>
    tpu.vector_store %arg11[%204, %c128_59], %201 {strides = array<i32>} : memref<64x512xf32, #tpu.memory_space<vmem>>, vector<8x128xf32>,
    %206 = arith.index_cast %174 : i32 to index
    %c256_60 = arith.constant 256 : index
    %207 = vector.load %arg11[%206, %c256_60] : memref<64x512xf32, #tpu.memory_space<vmem>>, vector<8x128xf32>
    tpu.vector_store %arg11[%206, %c256_60], %200 {strides = array<i32>} : memref<64x512xf32, #tpu.memory_space<vmem>>, vector<8x128xf32>,
    %208 = arith.index_cast %171 : i32 to index
    %c384_61 = arith.constant 384 : index
    %209 = vector.load %arg11[%208, %c384_61] : memref<64x512xf32, #tpu.memory_space<vmem>>, vector<8x128xf32>
    tpu.vector_store %arg11[%208, %c384_61], %201 {strides = array<i32>} : memref<64x512xf32, #tpu.memory_space<vmem>>, vector<8x128xf32>,
    %c5_i32 = arith.constant 5 : i32
    %c8_i32_62 = arith.constant 8 : i32
    %210 = arith.muli %c5_i32, %c8_i32_62 : i32
    %211 = tpu.assume_multiple %210, 8 : i32
    %c7_i32_63 = arith.constant 7 : i32
    %212 = arith.subi %c7_i32_63, %c5_i32 : i32
    %c8_i32_64 = arith.constant 8 : i32
    %213 = arith.muli %212, %c8_i32_64 : i32
    %214 = tpu.assume_multiple %213, 8 : i32
    %215 = arith.index_cast %211 : i32 to index
    %c0_65 = arith.constant 0 : index
    %216 = vector.load %arg10[%215, %c0_65] : memref<64x768xf32, #tpu.memory_space<vmem>>, vector<8x768xf32>
    %cst_66 = arith.constant dense<0.000000e+00> : vector<8x768xf32>
    %217 = tpu.matmul %199, %7, %cst_66 {dimension_numbers = #tpu.dot_dimension_numbers<[1], [0], [0], [1], [0, 0, 1, 1], [], []>} : vector<8x256xf32>, vector<256x768xf32>, vector<8x768xf32> -> vector<8x768xf32>
    %218 = vector.extract_strided_slice %216 {offsets = [0, 0], sizes = [8, 512], strides = [1, 1]} : vector<8x768xf32> to vector<8x512xf32>
    %219 = vector.extract_strided_slice %217 {offsets = [0, 0], sizes = [8, 512], strides = [1, 1]} : vector<8x768xf32> to vector<8x512xf32>
    %220 = arith.addf %218, %219 : vector<8x512xf32>
    %221 = arith.negf %220 : vector<8x512xf32>
    %222 = math.exp %221 : vector<8x512xf32>
    %cst_67 = arith.constant 1.000000e+00 : f32
    %223 = vector.broadcast %cst_67 : f32 to vector<8x512xf32>
    %224 = arith.addf %223, %222 : vector<8x512xf32>
    %225 = arith.divf %223, %224 : vector<8x512xf32>
    %226 = vector.extract_strided_slice %225 {offsets = [0, 0], sizes = [8, 256], strides = [1, 1]} : vector<8x512xf32> to vector<8x256xf32>
    %227 = vector.extract_strided_slice %225 {offsets = [0, 256], sizes = [8, 256], strides = [1, 1]} : vector<8x512xf32> to vector<8x256xf32>
    %228 = vector.extract_strided_slice %216 {offsets = [0, 512], sizes = [8, 256], strides = [1, 1]} : vector<8x768xf32> to vector<8x256xf32>
    %229 = vector.extract_strided_slice %217 {offsets = [0, 512], sizes = [8, 256], strides = [1, 1]} : vector<8x768xf32> to vector<8x256xf32>
    %230 = vector.broadcast %8 : vector<1x256xf32> to vector<8x256xf32>
    %231 = arith.addf %229, %230 : vector<8x256xf32>
    %232 = arith.mulf %226, %231 : vector<8x256xf32>
    %233 = arith.addf %228, %232 : vector<8x256xf32>
    %234 = math.tanh %233 : vector<8x256xf32>
    %cst_68 = arith.constant 1.000000e+00 : f32
    %235 = vector.broadcast %cst_68 : f32 to vector<8x256xf32>
    %236 = arith.subf %235, %227 : vector<8x256xf32>
    %237 = arith.mulf %236, %234 : vector<8x256xf32>
    %238 = arith.mulf %227, %199 : vector<8x256xf32>
    %239 = arith.addf %237, %238 : vector<8x256xf32>
    %240 = vector.extract_strided_slice %239 {offsets = [0, 0], sizes = [8, 128], strides = [1, 1]} : vector<8x256xf32> to vector<8x128xf32>
    %241 = vector.extract_strided_slice %239 {offsets = [0, 128], sizes = [8, 128], strides = [1, 1]} : vector<8x256xf32> to vector<8x128xf32>
    %242 = arith.index_cast %211 : i32 to index
    %c0_69 = arith.constant 0 : index
    %243 = vector.load %arg11[%242, %c0_69] : memref<64x512xf32, #tpu.memory_space<vmem>>, vector<8x128xf32>
    tpu.vector_store %arg11[%242, %c0_69], %240 {strides = array<i32>} : memref<64x512xf32, #tpu.memory_space<vmem>>, vector<8x128xf32>,
    %244 = arith.index_cast %214 : i32 to index
    %c128_70 = arith.constant 128 : index
    %245 = vector.load %arg11[%244, %c128_70] : memref<64x512xf32, #tpu.memory_space<vmem>>, vector<8x128xf32>
    tpu.vector_store %arg11[%244, %c128_70], %241 {strides = array<i32>} : memref<64x512xf32, #tpu.memory_space<vmem>>, vector<8x128xf32>,
    %246 = arith.index_cast %214 : i32 to index
    %c256_71 = arith.constant 256 : index
    %247 = vector.load %arg11[%246, %c256_71] : memref<64x512xf32, #tpu.memory_space<vmem>>, vector<8x128xf32>
    tpu.vector_store %arg11[%246, %c256_71], %240 {strides = array<i32>} : memref<64x512xf32, #tpu.memory_space<vmem>>, vector<8x128xf32>,
    %248 = arith.index_cast %211 : i32 to index
    %c384_72 = arith.constant 384 : index
    %249 = vector.load %arg11[%248, %c384_72] : memref<64x512xf32, #tpu.memory_space<vmem>>, vector<8x128xf32>
    tpu.vector_store %arg11[%248, %c384_72], %241 {strides = array<i32>} : memref<64x512xf32, #tpu.memory_space<vmem>>, vector<8x128xf32>,
    %c6_i32 = arith.constant 6 : i32
    %c8_i32_73 = arith.constant 8 : i32
    %250 = arith.muli %c6_i32, %c8_i32_73 : i32
    %251 = tpu.assume_multiple %250, 8 : i32
    %c7_i32_74 = arith.constant 7 : i32
    %252 = arith.subi %c7_i32_74, %c6_i32 : i32
    %c8_i32_75 = arith.constant 8 : i32
    %253 = arith.muli %252, %c8_i32_75 : i32
    %254 = tpu.assume_multiple %253, 8 : i32
    %255 = arith.index_cast %251 : i32 to index
    %c0_76 = arith.constant 0 : index
    %256 = vector.load %arg10[%255, %c0_76] : memref<64x768xf32, #tpu.memory_space<vmem>>, vector<8x768xf32>
    %cst_77 = arith.constant dense<0.000000e+00> : vector<8x768xf32>
    %257 = tpu.matmul %239, %7, %cst_77 {dimension_numbers = #tpu.dot_dimension_numbers<[1], [0], [0], [1], [0, 0, 1, 1], [], []>} : vector<8x256xf32>, vector<256x768xf32>, vector<8x768xf32> -> vector<8x768xf32>
    %258 = vector.extract_strided_slice %256 {offsets = [0, 0], sizes = [8, 512], strides = [1, 1]} : vector<8x768xf32> to vector<8x512xf32>
    %259 = vector.extract_strided_slice %257 {offsets = [0, 0], sizes = [8, 512], strides = [1, 1]} : vector<8x768xf32> to vector<8x512xf32>
    %260 = arith.addf %258, %259 : vector<8x512xf32>
    %261 = arith.negf %260 : vector<8x512xf32>
    %262 = math.exp %261 : vector<8x512xf32>
    %cst_78 = arith.constant 1.000000e+00 : f32
    %263 = vector.broadcast %cst_78 : f32 to vector<8x512xf32>
    %264 = arith.addf %263, %262 : vector<8x512xf32>
    %265 = arith.divf %263, %264 : vector<8x512xf32>
    %266 = vector.extract_strided_slice %265 {offsets = [0, 0], sizes = [8, 256], strides = [1, 1]} : vector<8x512xf32> to vector<8x256xf32>
    %267 = vector.extract_strided_slice %265 {offsets = [0, 256], sizes = [8, 256], strides = [1, 1]} : vector<8x512xf32> to vector<8x256xf32>
    %268 = vector.extract_strided_slice %256 {offsets = [0, 512], sizes = [8, 256], strides = [1, 1]} : vector<8x768xf32> to vector<8x256xf32>
    %269 = vector.extract_strided_slice %257 {offsets = [0, 512], sizes = [8, 256], strides = [1, 1]} : vector<8x768xf32> to vector<8x256xf32>
    %270 = vector.broadcast %8 : vector<1x256xf32> to vector<8x256xf32>
    %271 = arith.addf %269, %270 : vector<8x256xf32>
    %272 = arith.mulf %266, %271 : vector<8x256xf32>
    %273 = arith.addf %268, %272 : vector<8x256xf32>
    %274 = math.tanh %273 : vector<8x256xf32>
    %cst_79 = arith.constant 1.000000e+00 : f32
    %275 = vector.broadcast %cst_79 : f32 to vector<8x256xf32>
    %276 = arith.subf %275, %267 : vector<8x256xf32>
    %277 = arith.mulf %276, %274 : vector<8x256xf32>
    %278 = arith.mulf %267, %239 : vector<8x256xf32>
    %279 = arith.addf %277, %278 : vector<8x256xf32>
    %280 = vector.extract_strided_slice %279 {offsets = [0, 0], sizes = [8, 128], strides = [1, 1]} : vector<8x256xf32> to vector<8x128xf32>
    %281 = vector.extract_strided_slice %279 {offsets = [0, 128], sizes = [8, 128], strides = [1, 1]} : vector<8x256xf32> to vector<8x128xf32>
    %282 = arith.index_cast %251 : i32 to index
    %c0_80 = arith.constant 0 : index
    %283 = vector.load %arg11[%282, %c0_80] : memref<64x512xf32, #tpu.memory_space<vmem>>, vector<8x128xf32>
    tpu.vector_store %arg11[%282, %c0_80], %280 {strides = array<i32>} : memref<64x512xf32, #tpu.memory_space<vmem>>, vector<8x128xf32>,
    %284 = arith.index_cast %254 : i32 to index
    %c128_81 = arith.constant 128 : index
    %285 = vector.load %arg11[%284, %c128_81] : memref<64x512xf32, #tpu.memory_space<vmem>>, vector<8x128xf32>
    tpu.vector_store %arg11[%284, %c128_81], %281 {strides = array<i32>} : memref<64x512xf32, #tpu.memory_space<vmem>>, vector<8x128xf32>,
    %286 = arith.index_cast %254 : i32 to index
    %c256_82 = arith.constant 256 : index
    %287 = vector.load %arg11[%286, %c256_82] : memref<64x512xf32, #tpu.memory_space<vmem>>, vector<8x128xf32>
    tpu.vector_store %arg11[%286, %c256_82], %280 {strides = array<i32>} : memref<64x512xf32, #tpu.memory_space<vmem>>, vector<8x128xf32>,
    %288 = arith.index_cast %251 : i32 to index
    %c384_83 = arith.constant 384 : index
    %289 = vector.load %arg11[%288, %c384_83] : memref<64x512xf32, #tpu.memory_space<vmem>>, vector<8x128xf32>
    tpu.vector_store %arg11[%288, %c384_83], %281 {strides = array<i32>} : memref<64x512xf32, #tpu.memory_space<vmem>>, vector<8x128xf32>,
    %c7_i32_84 = arith.constant 7 : i32
    %c8_i32_85 = arith.constant 8 : i32
    %290 = arith.muli %c7_i32_84, %c8_i32_85 : i32
    %291 = tpu.assume_multiple %290, 8 : i32
    %c7_i32_86 = arith.constant 7 : i32
    %292 = arith.subi %c7_i32_86, %c7_i32_84 : i32
    %c8_i32_87 = arith.constant 8 : i32
    %293 = arith.muli %292, %c8_i32_87 : i32
    %294 = tpu.assume_multiple %293, 8 : i32
    %295 = arith.index_cast %291 : i32 to index
    %c0_88 = arith.constant 0 : index
    %296 = vector.load %arg10[%295, %c0_88] : memref<64x768xf32, #tpu.memory_space<vmem>>, vector<8x768xf32>
    %cst_89 = arith.constant dense<0.000000e+00> : vector<8x768xf32>
    %297 = tpu.matmul %279, %7, %cst_89 {dimension_numbers = #tpu.dot_dimension_numbers<[1], [0], [0], [1], [0, 0, 1, 1], [], []>} : vector<8x256xf32>, vector<256x768xf32>, vector<8x768xf32> -> vector<8x768xf32>
    %298 = vector.extract_strided_slice %296 {offsets = [0, 0], sizes = [8, 512], strides = [1, 1]} : vector<8x768xf32> to vector<8x512xf32>
    %299 = vector.extract_strided_slice %297 {offsets = [0, 0], sizes = [8, 512], strides = [1, 1]} : vector<8x768xf32> to vector<8x512xf32>
    %300 = arith.addf %298, %299 : vector<8x512xf32>
    %301 = arith.negf %300 : vector<8x512xf32>
    %302 = math.exp %301 : vector<8x512xf32>
    %cst_90 = arith.constant 1.000000e+00 : f32
    %303 = vector.broadcast %cst_90 : f32 to vector<8x512xf32>
    %304 = arith.addf %303, %302 : vector<8x512xf32>
    %305 = arith.divf %303, %304 : vector<8x512xf32>
    %306 = vector.extract_strided_slice %305 {offsets = [0, 0], sizes = [8, 256], strides = [1, 1]} : vector<8x512xf32> to vector<8x256xf32>
    %307 = vector.extract_strided_slice %305 {offsets = [0, 256], sizes = [8, 256], strides = [1, 1]} : vector<8x512xf32> to vector<8x256xf32>
    %308 = vector.extract_strided_slice %296 {offsets = [0, 512], sizes = [8, 256], strides = [1, 1]} : vector<8x768xf32> to vector<8x256xf32>
    %309 = vector.extract_strided_slice %297 {offsets = [0, 512], sizes = [8, 256], strides = [1, 1]} : vector<8x768xf32> to vector<8x256xf32>
    %310 = vector.broadcast %8 : vector<1x256xf32> to vector<8x256xf32>
    %311 = arith.addf %309, %310 : vector<8x256xf32>
    %312 = arith.mulf %306, %311 : vector<8x256xf32>
    %313 = arith.addf %308, %312 : vector<8x256xf32>
    %314 = math.tanh %313 : vector<8x256xf32>
    %cst_91 = arith.constant 1.000000e+00 : f32
    %315 = vector.broadcast %cst_91 : f32 to vector<8x256xf32>
    %316 = arith.subf %315, %307 : vector<8x256xf32>
    %317 = arith.mulf %316, %314 : vector<8x256xf32>
    %318 = arith.mulf %307, %279 : vector<8x256xf32>
    %319 = arith.addf %317, %318 : vector<8x256xf32>
    %320 = vector.extract_strided_slice %319 {offsets = [0, 0], sizes = [8, 128], strides = [1, 1]} : vector<8x256xf32> to vector<8x128xf32>
    %321 = vector.extract_strided_slice %319 {offsets = [0, 128], sizes = [8, 128], strides = [1, 1]} : vector<8x256xf32> to vector<8x128xf32>
    %322 = arith.index_cast %291 : i32 to index
    %c0_92 = arith.constant 0 : index
    %323 = vector.load %arg11[%322, %c0_92] : memref<64x512xf32, #tpu.memory_space<vmem>>, vector<8x128xf32>
    tpu.vector_store %arg11[%322, %c0_92], %320 {strides = array<i32>} : memref<64x512xf32, #tpu.memory_space<vmem>>, vector<8x128xf32>,
    %324 = arith.index_cast %294 : i32 to index
    %c128_93 = arith.constant 128 : index
    %325 = vector.load %arg11[%324, %c128_93] : memref<64x512xf32, #tpu.memory_space<vmem>>, vector<8x128xf32>
    tpu.vector_store %arg11[%324, %c128_93], %321 {strides = array<i32>} : memref<64x512xf32, #tpu.memory_space<vmem>>, vector<8x128xf32>,
    %326 = arith.index_cast %294 : i32 to index
    %c256_94 = arith.constant 256 : index
    %327 = vector.load %arg11[%326, %c256_94] : memref<64x512xf32, #tpu.memory_space<vmem>>, vector<8x128xf32>
    tpu.vector_store %arg11[%326, %c256_94], %320 {strides = array<i32>} : memref<64x512xf32, #tpu.memory_space<vmem>>, vector<8x128xf32>,
    %328 = arith.index_cast %291 : i32 to index
    %c384_95 = arith.constant 384 : index
    %329 = vector.load %arg11[%328, %c384_95] : memref<64x512xf32, #tpu.memory_space<vmem>>, vector<8x128xf32>
    tpu.vector_store %arg11[%328, %c384_95], %321 {strides = array<i32>} : memref<64x512xf32, #tpu.memory_space<vmem>>, vector<8x128xf32>,
    %c8_i32_96 = arith.constant 8 : i32
    %c0_97 = arith.constant 0 : index
    %c0_98 = arith.constant 0 : index
    %330 = vector.load %arg11[%c0_97, %c0_98] : memref<64x512xf32, #tpu.memory_space<vmem>>, vector<64x512xf32>
    %c0_99 = arith.constant 0 : index
    %c0_100 = arith.constant 0 : index
    %331 = vector.load %arg5[%c0_99, %c0_100] : memref<512x768xf32, #tpu.memory_space<vmem>>, vector<512x768xf32>
    %cst_101 = arith.constant dense<0.000000e+00> : vector<64x768xf32>
    %332 = tpu.matmul %330, %331, %cst_101 {dimension_numbers = #tpu.dot_dimension_numbers<[1], [0], [0], [1], [0, 0, 1, 1], [], []>} : vector<64x512xf32>, vector<512x768xf32>, vector<64x768xf32> -> vector<64x768xf32>
    %c0_102 = arith.constant 0 : index
    %c0_103 = arith.constant 0 : index
    %333 = vector.load %arg6[%c0_102, %c0_103] : memref<1x768xf32, #tpu.memory_space<vmem>>, vector<1x768xf32>
    %334 = vector.broadcast %333 : vector<1x768xf32> to vector<64x768xf32>
    %335 = arith.addf %332, %334 : vector<64x768xf32>
    %c0_104 = arith.constant 0 : index
    %c0_105 = arith.constant 0 : index
    %336 = vector.load %arg10[%c0_104, %c0_105] : memref<64x768xf32, #tpu.memory_space<vmem>>, vector<64x768xf32>
    tpu.vector_store %arg10[%c0_104, %c0_105], %335 {strides = array<i32>} : memref<64x768xf32, #tpu.memory_space<vmem>>, vector<64x768xf32>,
    %c0_106 = arith.constant 0 : index
    %c0_107 = arith.constant 0 : index
    %337 = vector.load %arg7[%c0_106, %c0_107] : memref<256x768xf32, #tpu.memory_space<vmem>>, vector<256x768xf32>
    %c0_108 = arith.constant 0 : index
    %c0_109 = arith.constant 0 : index
    %338 = vector.load %arg8[%c0_108, %c0_109] : memref<1x256xf32, #tpu.memory_space<vmem>>, vector<1x256xf32>
    %cst_110 = arith.constant 0.000000e+00 : f32
    %339 = vector.broadcast %cst_110 : f32 to vector<8x256xf32>
    %c0_i32_111 = arith.constant 0 : i32
    %c8_i32_112 = arith.constant 8 : i32
    %340 = arith.muli %c0_i32_111, %c8_i32_112 : i32
    %341 = tpu.assume_multiple %340, 8 : i32
    %c7_i32_113 = arith.constant 7 : i32
    %342 = arith.subi %c7_i32_113, %c0_i32_111 : i32
    %c8_i32_114 = arith.constant 8 : i32
    %343 = arith.muli %342, %c8_i32_114 : i32
    %344 = tpu.assume_multiple %343, 8 : i32
    %345 = arith.index_cast %341 : i32 to index
    %c0_115 = arith.constant 0 : index
    %346 = vector.load %arg10[%345, %c0_115] : memref<64x768xf32, #tpu.memory_space<vmem>>, vector<8x768xf32>
    %cst_116 = arith.constant dense<0.000000e+00> : vector<8x768xf32>
    %347 = tpu.matmul %339, %337, %cst_116 {dimension_numbers = #tpu.dot_dimension_numbers<[1], [0], [0], [1], [0, 0, 1, 1], [], []>} : vector<8x256xf32>, vector<256x768xf32>, vector<8x768xf32> -> vector<8x768xf32>
    %348 = vector.extract_strided_slice %346 {offsets = [0, 0], sizes = [8, 512], strides = [1, 1]} : vector<8x768xf32> to vector<8x512xf32>
    %349 = vector.extract_strided_slice %347 {offsets = [0, 0], sizes = [8, 512], strides = [1, 1]} : vector<8x768xf32> to vector<8x512xf32>
    %350 = arith.addf %348, %349 : vector<8x512xf32>
    %351 = arith.negf %350 : vector<8x512xf32>
    %352 = math.exp %351 : vector<8x512xf32>
    %cst_117 = arith.constant 1.000000e+00 : f32
    %353 = vector.broadcast %cst_117 : f32 to vector<8x512xf32>
    %354 = arith.addf %353, %352 : vector<8x512xf32>
    %355 = arith.divf %353, %354 : vector<8x512xf32>
    %356 = vector.extract_strided_slice %355 {offsets = [0, 0], sizes = [8, 256], strides = [1, 1]} : vector<8x512xf32> to vector<8x256xf32>
    %357 = vector.extract_strided_slice %355 {offsets = [0, 256], sizes = [8, 256], strides = [1, 1]} : vector<8x512xf32> to vector<8x256xf32>
    %358 = vector.extract_strided_slice %346 {offsets = [0, 512], sizes = [8, 256], strides = [1, 1]} : vector<8x768xf32> to vector<8x256xf32>
    %359 = vector.extract_strided_slice %347 {offsets = [0, 512], sizes = [8, 256], strides = [1, 1]} : vector<8x768xf32> to vector<8x256xf32>
    %360 = vector.broadcast %338 : vector<1x256xf32> to vector<8x256xf32>
    %361 = arith.addf %359, %360 : vector<8x256xf32>
    %362 = arith.mulf %356, %361 : vector<8x256xf32>
    %363 = arith.addf %358, %362 : vector<8x256xf32>
    %364 = math.tanh %363 : vector<8x256xf32>
    %cst_118 = arith.constant 1.000000e+00 : f32
    %365 = vector.broadcast %cst_118 : f32 to vector<8x256xf32>
    %366 = arith.subf %365, %357 : vector<8x256xf32>
    %367 = arith.mulf %366, %364 : vector<8x256xf32>
    %368 = arith.mulf %357, %339 : vector<8x256xf32>
    %369 = arith.addf %367, %368 : vector<8x256xf32>
    %370 = vector.extract_strided_slice %369 {offsets = [0, 0], sizes = [8, 128], strides = [1, 1]} : vector<8x256xf32> to vector<8x128xf32>
    %371 = vector.extract_strided_slice %369 {offsets = [0, 128], sizes = [8, 128], strides = [1, 1]} : vector<8x256xf32> to vector<8x128xf32>
    %372 = arith.index_cast %341 : i32 to index
    %c0_119 = arith.constant 0 : index
    %373 = vector.load %arg9[%372, %c0_119] : memref<64x256xf32, #tpu.memory_space<vmem>>, vector<8x128xf32>
    tpu.vector_store %arg9[%372, %c0_119], %370 {strides = array<i32>} : memref<64x256xf32, #tpu.memory_space<vmem>>, vector<8x128xf32>,
    %374 = arith.index_cast %344 : i32 to index
    %c128_120 = arith.constant 128 : index
    %375 = vector.load %arg9[%374, %c128_120] : memref<64x256xf32, #tpu.memory_space<vmem>>, vector<8x128xf32>
    tpu.vector_store %arg9[%374, %c128_120], %371 {strides = array<i32>} : memref<64x256xf32, #tpu.memory_space<vmem>>, vector<8x128xf32>,
    %c1_i32_121 = arith.constant 1 : i32
    %c8_i32_122 = arith.constant 8 : i32
    %376 = arith.muli %c1_i32_121, %c8_i32_122 : i32
    %377 = tpu.assume_multiple %376, 8 : i32
    %c7_i32_123 = arith.constant 7 : i32
    %378 = arith.subi %c7_i32_123, %c1_i32_121 : i32
    %c8_i32_124 = arith.constant 8 : i32
    %379 = arith.muli %378, %c8_i32_124 : i32
    %380 = tpu.assume_multiple %379, 8 : i32
    %381 = arith.index_cast %377 : i32 to index
    %c0_125 = arith.constant 0 : index
    %382 = vector.load %arg10[%381, %c0_125] : memref<64x768xf32, #tpu.memory_space<vmem>>, vector<8x768xf32>
    %cst_126 = arith.constant dense<0.000000e+00> : vector<8x768xf32>
    %383 = tpu.matmul %369, %337, %cst_126 {dimension_numbers = #tpu.dot_dimension_numbers<[1], [0], [0], [1], [0, 0, 1, 1], [], []>} : vector<8x256xf32>, vector<256x768xf32>, vector<8x768xf32> -> vector<8x768xf32>
    %384 = vector.extract_strided_slice %382 {offsets = [0, 0], sizes = [8, 512], strides = [1, 1]} : vector<8x768xf32> to vector<8x512xf32>
    %385 = vector.extract_strided_slice %383 {offsets = [0, 0], sizes = [8, 512], strides = [1, 1]} : vector<8x768xf32> to vector<8x512xf32>
    %386 = arith.addf %384, %385 : vector<8x512xf32>
    %387 = arith.negf %386 : vector<8x512xf32>
    %388 = math.exp %387 : vector<8x512xf32>
    %cst_127 = arith.constant 1.000000e+00 : f32
    %389 = vector.broadcast %cst_127 : f32 to vector<8x512xf32>
    %390 = arith.addf %389, %388 : vector<8x512xf32>
    %391 = arith.divf %389, %390 : vector<8x512xf32>
    %392 = vector.extract_strided_slice %391 {offsets = [0, 0], sizes = [8, 256], strides = [1, 1]} : vector<8x512xf32> to vector<8x256xf32>
    %393 = vector.extract_strided_slice %391 {offsets = [0, 256], sizes = [8, 256], strides = [1, 1]} : vector<8x512xf32> to vector<8x256xf32>
    %394 = vector.extract_strided_slice %382 {offsets = [0, 512], sizes = [8, 256], strides = [1, 1]} : vector<8x768xf32> to vector<8x256xf32>
    %395 = vector.extract_strided_slice %383 {offsets = [0, 512], sizes = [8, 256], strides = [1, 1]} : vector<8x768xf32> to vector<8x256xf32>
    %396 = vector.broadcast %338 : vector<1x256xf32> to vector<8x256xf32>
    %397 = arith.addf %395, %396 : vector<8x256xf32>
    %398 = arith.mulf %392, %397 : vector<8x256xf32>
    %399 = arith.addf %394, %398 : vector<8x256xf32>
    %400 = math.tanh %399 : vector<8x256xf32>
    %cst_128 = arith.constant 1.000000e+00 : f32
    %401 = vector.broadcast %cst_128 : f32 to vector<8x256xf32>
    %402 = arith.subf %401, %393 : vector<8x256xf32>
    %403 = arith.mulf %402, %400 : vector<8x256xf32>
    %404 = arith.mulf %393, %369 : vector<8x256xf32>
    %405 = arith.addf %403, %404 : vector<8x256xf32>
    %406 = vector.extract_strided_slice %405 {offsets = [0, 0], sizes = [8, 128], strides = [1, 1]} : vector<8x256xf32> to vector<8x128xf32>
    %407 = vector.extract_strided_slice %405 {offsets = [0, 128], sizes = [8, 128], strides = [1, 1]} : vector<8x256xf32> to vector<8x128xf32>
    %408 = arith.index_cast %377 : i32 to index
    %c0_129 = arith.constant 0 : index
    %409 = vector.load %arg9[%408, %c0_129] : memref<64x256xf32, #tpu.memory_space<vmem>>, vector<8x128xf32>
    tpu.vector_store %arg9[%408, %c0_129], %406 {strides = array<i32>} : memref<64x256xf32, #tpu.memory_space<vmem>>, vector<8x128xf32>,
    %410 = arith.index_cast %380 : i32 to index
    %c128_130 = arith.constant 128 : index
    %411 = vector.load %arg9[%410, %c128_130] : memref<64x256xf32, #tpu.memory_space<vmem>>, vector<8x128xf32>
    tpu.vector_store %arg9[%410, %c128_130], %407 {strides = array<i32>} : memref<64x256xf32, #tpu.memory_space<vmem>>, vector<8x128xf32>,
    %c2_i32_131 = arith.constant 2 : i32
    %c8_i32_132 = arith.constant 8 : i32
    %412 = arith.muli %c2_i32_131, %c8_i32_132 : i32
    %413 = tpu.assume_multiple %412, 8 : i32
    %c7_i32_133 = arith.constant 7 : i32
    %414 = arith.subi %c7_i32_133, %c2_i32_131 : i32
    %c8_i32_134 = arith.constant 8 : i32
    %415 = arith.muli %414, %c8_i32_134 : i32
    %416 = tpu.assume_multiple %415, 8 : i32
    %417 = arith.index_cast %413 : i32 to index
    %c0_135 = arith.constant 0 : index
    %418 = vector.load %arg10[%417, %c0_135] : memref<64x768xf32, #tpu.memory_space<vmem>>, vector<8x768xf32>
    %cst_136 = arith.constant dense<0.000000e+00> : vector<8x768xf32>
    %419 = tpu.matmul %405, %337, %cst_136 {dimension_numbers = #tpu.dot_dimension_numbers<[1], [0], [0], [1], [0, 0, 1, 1], [], []>} : vector<8x256xf32>, vector<256x768xf32>, vector<8x768xf32> -> vector<8x768xf32>
    %420 = vector.extract_strided_slice %418 {offsets = [0, 0], sizes = [8, 512], strides = [1, 1]} : vector<8x768xf32> to vector<8x512xf32>
    %421 = vector.extract_strided_slice %419 {offsets = [0, 0], sizes = [8, 512], strides = [1, 1]} : vector<8x768xf32> to vector<8x512xf32>
    %422 = arith.addf %420, %421 : vector<8x512xf32>
    %423 = arith.negf %422 : vector<8x512xf32>
    %424 = math.exp %423 : vector<8x512xf32>
    %cst_137 = arith.constant 1.000000e+00 : f32
    %425 = vector.broadcast %cst_137 : f32 to vector<8x512xf32>
    %426 = arith.addf %425, %424 : vector<8x512xf32>
    %427 = arith.divf %425, %426 : vector<8x512xf32>
    %428 = vector.extract_strided_slice %427 {offsets = [0, 0], sizes = [8, 256], strides = [1, 1]} : vector<8x512xf32> to vector<8x256xf32>
    %429 = vector.extract_strided_slice %427 {offsets = [0, 256], sizes = [8, 256], strides = [1, 1]} : vector<8x512xf32> to vector<8x256xf32>
    %430 = vector.extract_strided_slice %418 {offsets = [0, 512], sizes = [8, 256], strides = [1, 1]} : vector<8x768xf32> to vector<8x256xf32>
    %431 = vector.extract_strided_slice %419 {offsets = [0, 512], sizes = [8, 256], strides = [1, 1]} : vector<8x768xf32> to vector<8x256xf32>
    %432 = vector.broadcast %338 : vector<1x256xf32> to vector<8x256xf32>
    %433 = arith.addf %431, %432 : vector<8x256xf32>
    %434 = arith.mulf %428, %433 : vector<8x256xf32>
    %435 = arith.addf %430, %434 : vector<8x256xf32>
    %436 = math.tanh %435 : vector<8x256xf32>
    %cst_138 = arith.constant 1.000000e+00 : f32
    %437 = vector.broadcast %cst_138 : f32 to vector<8x256xf32>
    %438 = arith.subf %437, %429 : vector<8x256xf32>
    %439 = arith.mulf %438, %436 : vector<8x256xf32>
    %440 = arith.mulf %429, %405 : vector<8x256xf32>
    %441 = arith.addf %439, %440 : vector<8x256xf32>
    %442 = vector.extract_strided_slice %441 {offsets = [0, 0], sizes = [8, 128], strides = [1, 1]} : vector<8x256xf32> to vector<8x128xf32>
    %443 = vector.extract_strided_slice %441 {offsets = [0, 128], sizes = [8, 128], strides = [1, 1]} : vector<8x256xf32> to vector<8x128xf32>
    %444 = arith.index_cast %413 : i32 to index
    %c0_139 = arith.constant 0 : index
    %445 = vector.load %arg9[%444, %c0_139] : memref<64x256xf32, #tpu.memory_space<vmem>>, vector<8x128xf32>
    tpu.vector_store %arg9[%444, %c0_139], %442 {strides = array<i32>} : memref<64x256xf32, #tpu.memory_space<vmem>>, vector<8x128xf32>,
    %446 = arith.index_cast %416 : i32 to index
    %c128_140 = arith.constant 128 : index
    %447 = vector.load %arg9[%446, %c128_140] : memref<64x256xf32, #tpu.memory_space<vmem>>, vector<8x128xf32>
    tpu.vector_store %arg9[%446, %c128_140], %443 {strides = array<i32>} : memref<64x256xf32, #tpu.memory_space<vmem>>, vector<8x128xf32>,
    %c3_i32_141 = arith.constant 3 : i32
    %c8_i32_142 = arith.constant 8 : i32
    %448 = arith.muli %c3_i32_141, %c8_i32_142 : i32
    %449 = tpu.assume_multiple %448, 8 : i32
    %c7_i32_143 = arith.constant 7 : i32
    %450 = arith.subi %c7_i32_143, %c3_i32_141 : i32
    %c8_i32_144 = arith.constant 8 : i32
    %451 = arith.muli %450, %c8_i32_144 : i32
    %452 = tpu.assume_multiple %451, 8 : i32
    %453 = arith.index_cast %449 : i32 to index
    %c0_145 = arith.constant 0 : index
    %454 = vector.load %arg10[%453, %c0_145] : memref<64x768xf32, #tpu.memory_space<vmem>>, vector<8x768xf32>
    %cst_146 = arith.constant dense<0.000000e+00> : vector<8x768xf32>
    %455 = tpu.matmul %441, %337, %cst_146 {dimension_numbers = #tpu.dot_dimension_numbers<[1], [0], [0], [1], [0, 0, 1, 1], [], []>} : vector<8x256xf32>, vector<256x768xf32>, vector<8x768xf32> -> vector<8x768xf32>
    %456 = vector.extract_strided_slice %454 {offsets = [0, 0], sizes = [8, 512], strides = [1, 1]} : vector<8x768xf32> to vector<8x512xf32>
    %457 = vector.extract_strided_slice %455 {offsets = [0, 0], sizes = [8, 512], strides = [1, 1]} : vector<8x768xf32> to vector<8x512xf32>
    %458 = arith.addf %456, %457 : vector<8x512xf32>
    %459 = arith.negf %458 : vector<8x512xf32>
    %460 = math.exp %459 : vector<8x512xf32>
    %cst_147 = arith.constant 1.000000e+00 : f32
    %461 = vector.broadcast %cst_147 : f32 to vector<8x512xf32>
    %462 = arith.addf %461, %460 : vector<8x512xf32>
    %463 = arith.divf %461, %462 : vector<8x512xf32>
    %464 = vector.extract_strided_slice %463 {offsets = [0, 0], sizes = [8, 256], strides = [1, 1]} : vector<8x512xf32> to vector<8x256xf32>
    %465 = vector.extract_strided_slice %463 {offsets = [0, 256], sizes = [8, 256], strides = [1, 1]} : vector<8x512xf32> to vector<8x256xf32>
    %466 = vector.extract_strided_slice %454 {offsets = [0, 512], sizes = [8, 256], strides = [1, 1]} : vector<8x768xf32> to vector<8x256xf32>
    %467 = vector.extract_strided_slice %455 {offsets = [0, 512], sizes = [8, 256], strides = [1, 1]} : vector<8x768xf32> to vector<8x256xf32>
    %468 = vector.broadcast %338 : vector<1x256xf32> to vector<8x256xf32>
    %469 = arith.addf %467, %468 : vector<8x256xf32>
    %470 = arith.mulf %464, %469 : vector<8x256xf32>
    %471 = arith.addf %466, %470 : vector<8x256xf32>
    %472 = math.tanh %471 : vector<8x256xf32>
    %cst_148 = arith.constant 1.000000e+00 : f32
    %473 = vector.broadcast %cst_148 : f32 to vector<8x256xf32>
    %474 = arith.subf %473, %465 : vector<8x256xf32>
    %475 = arith.mulf %474, %472 : vector<8x256xf32>
    %476 = arith.mulf %465, %441 : vector<8x256xf32>
    %477 = arith.addf %475, %476 : vector<8x256xf32>
    %478 = vector.extract_strided_slice %477 {offsets = [0, 0], sizes = [8, 128], strides = [1, 1]} : vector<8x256xf32> to vector<8x128xf32>
    %479 = vector.extract_strided_slice %477 {offsets = [0, 128], sizes = [8, 128], strides = [1, 1]} : vector<8x256xf32> to vector<8x128xf32>
    %480 = arith.index_cast %449 : i32 to index
    %c0_149 = arith.constant 0 : index
    %481 = vector.load %arg9[%480, %c0_149] : memref<64x256xf32, #tpu.memory_space<vmem>>, vector<8x128xf32>
    tpu.vector_store %arg9[%480, %c0_149], %478 {strides = array<i32>} : memref<64x256xf32, #tpu.memory_space<vmem>>, vector<8x128xf32>,
    %482 = arith.index_cast %452 : i32 to index
    %c128_150 = arith.constant 128 : index
    %483 = vector.load %arg9[%482, %c128_150] : memref<64x256xf32, #tpu.memory_space<vmem>>, vector<8x128xf32>
    tpu.vector_store %arg9[%482, %c128_150], %479 {strides = array<i32>} : memref<64x256xf32, #tpu.memory_space<vmem>>, vector<8x128xf32>,
    %c4_i32_151 = arith.constant 4 : i32
    %c8_i32_152 = arith.constant 8 : i32
    %484 = arith.muli %c4_i32_151, %c8_i32_152 : i32
    %485 = tpu.assume_multiple %484, 8 : i32
    %c7_i32_153 = arith.constant 7 : i32
    %486 = arith.subi %c7_i32_153, %c4_i32_151 : i32
    %c8_i32_154 = arith.constant 8 : i32
    %487 = arith.muli %486, %c8_i32_154 : i32
    %488 = tpu.assume_multiple %487, 8 : i32
    %489 = arith.index_cast %485 : i32 to index
    %c0_155 = arith.constant 0 : index
    %490 = vector.load %arg10[%489, %c0_155] : memref<64x768xf32, #tpu.memory_space<vmem>>, vector<8x768xf32>
    %cst_156 = arith.constant dense<0.000000e+00> : vector<8x768xf32>
    %491 = tpu.matmul %477, %337, %cst_156 {dimension_numbers = #tpu.dot_dimension_numbers<[1], [0], [0], [1], [0, 0, 1, 1], [], []>} : vector<8x256xf32>, vector<256x768xf32>, vector<8x768xf32> -> vector<8x768xf32>
    %492 = vector.extract_strided_slice %490 {offsets = [0, 0], sizes = [8, 512], strides = [1, 1]} : vector<8x768xf32> to vector<8x512xf32>
    %493 = vector.extract_strided_slice %491 {offsets = [0, 0], sizes = [8, 512], strides = [1, 1]} : vector<8x768xf32> to vector<8x512xf32>
    %494 = arith.addf %492, %493 : vector<8x512xf32>
    %495 = arith.negf %494 : vector<8x512xf32>
    %496 = math.exp %495 : vector<8x512xf32>
    %cst_157 = arith.constant 1.000000e+00 : f32
    %497 = vector.broadcast %cst_157 : f32 to vector<8x512xf32>
    %498 = arith.addf %497, %496 : vector<8x512xf32>
    %499 = arith.divf %497, %498 : vector<8x512xf32>
    %500 = vector.extract_strided_slice %499 {offsets = [0, 0], sizes = [8, 256], strides = [1, 1]} : vector<8x512xf32> to vector<8x256xf32>
    %501 = vector.extract_strided_slice %499 {offsets = [0, 256], sizes = [8, 256], strides = [1, 1]} : vector<8x512xf32> to vector<8x256xf32>
    %502 = vector.extract_strided_slice %490 {offsets = [0, 512], sizes = [8, 256], strides = [1, 1]} : vector<8x768xf32> to vector<8x256xf32>
    %503 = vector.extract_strided_slice %491 {offsets = [0, 512], sizes = [8, 256], strides = [1, 1]} : vector<8x768xf32> to vector<8x256xf32>
    %504 = vector.broadcast %338 : vector<1x256xf32> to vector<8x256xf32>
    %505 = arith.addf %503, %504 : vector<8x256xf32>
    %506 = arith.mulf %500, %505 : vector<8x256xf32>
    %507 = arith.addf %502, %506 : vector<8x256xf32>
    %508 = math.tanh %507 : vector<8x256xf32>
    %cst_158 = arith.constant 1.000000e+00 : f32
    %509 = vector.broadcast %cst_158 : f32 to vector<8x256xf32>
    %510 = arith.subf %509, %501 : vector<8x256xf32>
    %511 = arith.mulf %510, %508 : vector<8x256xf32>
    %512 = arith.mulf %501, %477 : vector<8x256xf32>
    %513 = arith.addf %511, %512 : vector<8x256xf32>
    %514 = vector.extract_strided_slice %513 {offsets = [0, 0], sizes = [8, 128], strides = [1, 1]} : vector<8x256xf32> to vector<8x128xf32>
    %515 = vector.extract_strided_slice %513 {offsets = [0, 128], sizes = [8, 128], strides = [1, 1]} : vector<8x256xf32> to vector<8x128xf32>
    %516 = arith.index_cast %485 : i32 to index
    %c0_159 = arith.constant 0 : index
    %517 = vector.load %arg9[%516, %c0_159] : memref<64x256xf32, #tpu.memory_space<vmem>>, vector<8x128xf32>
    tpu.vector_store %arg9[%516, %c0_159], %514 {strides = array<i32>} : memref<64x256xf32, #tpu.memory_space<vmem>>, vector<8x128xf32>,
    %518 = arith.index_cast %488 : i32 to index
    %c128_160 = arith.constant 128 : index
    %519 = vector.load %arg9[%518, %c128_160] : memref<64x256xf32, #tpu.memory_space<vmem>>, vector<8x128xf32>
    tpu.vector_store %arg9[%518, %c128_160], %515 {strides = array<i32>} : memref<64x256xf32, #tpu.memory_space<vmem>>, vector<8x128xf32>,
    %c5_i32_161 = arith.constant 5 : i32
    %c8_i32_162 = arith.constant 8 : i32
    %520 = arith.muli %c5_i32_161, %c8_i32_162 : i32
    %521 = tpu.assume_multiple %520, 8 : i32
    %c7_i32_163 = arith.constant 7 : i32
    %522 = arith.subi %c7_i32_163, %c5_i32_161 : i32
    %c8_i32_164 = arith.constant 8 : i32
    %523 = arith.muli %522, %c8_i32_164 : i32
    %524 = tpu.assume_multiple %523, 8 : i32
    %525 = arith.index_cast %521 : i32 to index
    %c0_165 = arith.constant 0 : index
    %526 = vector.load %arg10[%525, %c0_165] : memref<64x768xf32, #tpu.memory_space<vmem>>, vector<8x768xf32>
    %cst_166 = arith.constant dense<0.000000e+00> : vector<8x768xf32>
    %527 = tpu.matmul %513, %337, %cst_166 {dimension_numbers = #tpu.dot_dimension_numbers<[1], [0], [0], [1], [0, 0, 1, 1], [], []>} : vector<8x256xf32>, vector<256x768xf32>, vector<8x768xf32> -> vector<8x768xf32>
    %528 = vector.extract_strided_slice %526 {offsets = [0, 0], sizes = [8, 512], strides = [1, 1]} : vector<8x768xf32> to vector<8x512xf32>
    %529 = vector.extract_strided_slice %527 {offsets = [0, 0], sizes = [8, 512], strides = [1, 1]} : vector<8x768xf32> to vector<8x512xf32>
    %530 = arith.addf %528, %529 : vector<8x512xf32>
    %531 = arith.negf %530 : vector<8x512xf32>
    %532 = math.exp %531 : vector<8x512xf32>
    %cst_167 = arith.constant 1.000000e+00 : f32
    %533 = vector.broadcast %cst_167 : f32 to vector<8x512xf32>
    %534 = arith.addf %533, %532 : vector<8x512xf32>
    %535 = arith.divf %533, %534 : vector<8x512xf32>
    %536 = vector.extract_strided_slice %535 {offsets = [0, 0], sizes = [8, 256], strides = [1, 1]} : vector<8x512xf32> to vector<8x256xf32>
    %537 = vector.extract_strided_slice %535 {offsets = [0, 256], sizes = [8, 256], strides = [1, 1]} : vector<8x512xf32> to vector<8x256xf32>
    %538 = vector.extract_strided_slice %526 {offsets = [0, 512], sizes = [8, 256], strides = [1, 1]} : vector<8x768xf32> to vector<8x256xf32>
    %539 = vector.extract_strided_slice %527 {offsets = [0, 512], sizes = [8, 256], strides = [1, 1]} : vector<8x768xf32> to vector<8x256xf32>
    %540 = vector.broadcast %338 : vector<1x256xf32> to vector<8x256xf32>
    %541 = arith.addf %539, %540 : vector<8x256xf32>
    %542 = arith.mulf %536, %541 : vector<8x256xf32>
    %543 = arith.addf %538, %542 : vector<8x256xf32>
    %544 = math.tanh %543 : vector<8x256xf32>
    %cst_168 = arith.constant 1.000000e+00 : f32
    %545 = vector.broadcast %cst_168 : f32 to vector<8x256xf32>
    %546 = arith.subf %545, %537 : vector<8x256xf32>
    %547 = arith.mulf %546, %544 : vector<8x256xf32>
    %548 = arith.mulf %537, %513 : vector<8x256xf32>
    %549 = arith.addf %547, %548 : vector<8x256xf32>
    %550 = vector.extract_strided_slice %549 {offsets = [0, 0], sizes = [8, 128], strides = [1, 1]} : vector<8x256xf32> to vector<8x128xf32>
    %551 = vector.extract_strided_slice %549 {offsets = [0, 128], sizes = [8, 128], strides = [1, 1]} : vector<8x256xf32> to vector<8x128xf32>
    %552 = arith.index_cast %521 : i32 to index
    %c0_169 = arith.constant 0 : index
    %553 = vector.load %arg9[%552, %c0_169] : memref<64x256xf32, #tpu.memory_space<vmem>>, vector<8x128xf32>
    tpu.vector_store %arg9[%552, %c0_169], %550 {strides = array<i32>} : memref<64x256xf32, #tpu.memory_space<vmem>>, vector<8x128xf32>,
    %554 = arith.index_cast %524 : i32 to index
    %c128_170 = arith.constant 128 : index
    %555 = vector.load %arg9[%554, %c128_170] : memref<64x256xf32, #tpu.memory_space<vmem>>, vector<8x128xf32>
    tpu.vector_store %arg9[%554, %c128_170], %551 {strides = array<i32>} : memref<64x256xf32, #tpu.memory_space<vmem>>, vector<8x128xf32>,
    %c6_i32_171 = arith.constant 6 : i32
    %c8_i32_172 = arith.constant 8 : i32
    %556 = arith.muli %c6_i32_171, %c8_i32_172 : i32
    %557 = tpu.assume_multiple %556, 8 : i32
    %c7_i32_173 = arith.constant 7 : i32
    %558 = arith.subi %c7_i32_173, %c6_i32_171 : i32
    %c8_i32_174 = arith.constant 8 : i32
    %559 = arith.muli %558, %c8_i32_174 : i32
    %560 = tpu.assume_multiple %559, 8 : i32
    %561 = arith.index_cast %557 : i32 to index
    %c0_175 = arith.constant 0 : index
    %562 = vector.load %arg10[%561, %c0_175] : memref<64x768xf32, #tpu.memory_space<vmem>>, vector<8x768xf32>
    %cst_176 = arith.constant dense<0.000000e+00> : vector<8x768xf32>
    %563 = tpu.matmul %549, %337, %cst_176 {dimension_numbers = #tpu.dot_dimension_numbers<[1], [0], [0], [1], [0, 0, 1, 1], [], []>} : vector<8x256xf32>, vector<256x768xf32>, vector<8x768xf32> -> vector<8x768xf32>
    %564 = vector.extract_strided_slice %562 {offsets = [0, 0], sizes = [8, 512], strides = [1, 1]} : vector<8x768xf32> to vector<8x512xf32>
    %565 = vector.extract_strided_slice %563 {offsets = [0, 0], sizes = [8, 512], strides = [1, 1]} : vector<8x768xf32> to vector<8x512xf32>
    %566 = arith.addf %564, %565 : vector<8x512xf32>
    %567 = arith.negf %566 : vector<8x512xf32>
    %568 = math.exp %567 : vector<8x512xf32>
    %cst_177 = arith.constant 1.000000e+00 : f32
    %569 = vector.broadcast %cst_177 : f32 to vector<8x512xf32>
    %570 = arith.addf %569, %568 : vector<8x512xf32>
    %571 = arith.divf %569, %570 : vector<8x512xf32>
    %572 = vector.extract_strided_slice %571 {offsets = [0, 0], sizes = [8, 256], strides = [1, 1]} : vector<8x512xf32> to vector<8x256xf32>
    %573 = vector.extract_strided_slice %571 {offsets = [0, 256], sizes = [8, 256], strides = [1, 1]} : vector<8x512xf32> to vector<8x256xf32>
    %574 = vector.extract_strided_slice %562 {offsets = [0, 512], sizes = [8, 256], strides = [1, 1]} : vector<8x768xf32> to vector<8x256xf32>
    %575 = vector.extract_strided_slice %563 {offsets = [0, 512], sizes = [8, 256], strides = [1, 1]} : vector<8x768xf32> to vector<8x256xf32>
    %576 = vector.broadcast %338 : vector<1x256xf32> to vector<8x256xf32>
    %577 = arith.addf %575, %576 : vector<8x256xf32>
    %578 = arith.mulf %572, %577 : vector<8x256xf32>
    %579 = arith.addf %574, %578 : vector<8x256xf32>
    %580 = math.tanh %579 : vector<8x256xf32>
    %cst_178 = arith.constant 1.000000e+00 : f32
    %581 = vector.broadcast %cst_178 : f32 to vector<8x256xf32>
    %582 = arith.subf %581, %573 : vector<8x256xf32>
    %583 = arith.mulf %582, %580 : vector<8x256xf32>
    %584 = arith.mulf %573, %549 : vector<8x256xf32>
    %585 = arith.addf %583, %584 : vector<8x256xf32>
    %586 = vector.extract_strided_slice %585 {offsets = [0, 0], sizes = [8, 128], strides = [1, 1]} : vector<8x256xf32> to vector<8x128xf32>
    %587 = vector.extract_strided_slice %585 {offsets = [0, 128], sizes = [8, 128], strides = [1, 1]} : vector<8x256xf32> to vector<8x128xf32>
    %588 = arith.index_cast %557 : i32 to index
    %c0_179 = arith.constant 0 : index
    %589 = vector.load %arg9[%588, %c0_179] : memref<64x256xf32, #tpu.memory_space<vmem>>, vector<8x128xf32>
    tpu.vector_store %arg9[%588, %c0_179], %586 {strides = array<i32>} : memref<64x256xf32, #tpu.memory_space<vmem>>, vector<8x128xf32>,
    %590 = arith.index_cast %560 : i32 to index
    %c128_180 = arith.constant 128 : index
    %591 = vector.load %arg9[%590, %c128_180] : memref<64x256xf32, #tpu.memory_space<vmem>>, vector<8x128xf32>
    tpu.vector_store %arg9[%590, %c128_180], %587 {strides = array<i32>} : memref<64x256xf32, #tpu.memory_space<vmem>>, vector<8x128xf32>,
    %c7_i32_181 = arith.constant 7 : i32
    %c8_i32_182 = arith.constant 8 : i32
    %592 = arith.muli %c7_i32_181, %c8_i32_182 : i32
    %593 = tpu.assume_multiple %592, 8 : i32
    %c7_i32_183 = arith.constant 7 : i32
    %594 = arith.subi %c7_i32_183, %c7_i32_181 : i32
    %c8_i32_184 = arith.constant 8 : i32
    %595 = arith.muli %594, %c8_i32_184 : i32
    %596 = tpu.assume_multiple %595, 8 : i32
    %597 = arith.index_cast %593 : i32 to index
    %c0_185 = arith.constant 0 : index
    %598 = vector.load %arg10[%597, %c0_185] : memref<64x768xf32, #tpu.memory_space<vmem>>, vector<8x768xf32>
    %cst_186 = arith.constant dense<0.000000e+00> : vector<8x768xf32>
    %599 = tpu.matmul %585, %337, %cst_186 {dimension_numbers = #tpu.dot_dimension_numbers<[1], [0], [0], [1], [0, 0, 1, 1], [], []>} : vector<8x256xf32>, vector<256x768xf32>, vector<8x768xf32> -> vector<8x768xf32>
    %600 = vector.extract_strided_slice %598 {offsets = [0, 0], sizes = [8, 512], strides = [1, 1]} : vector<8x768xf32> to vector<8x512xf32>
    %601 = vector.extract_strided_slice %599 {offsets = [0, 0], sizes = [8, 512], strides = [1, 1]} : vector<8x768xf32> to vector<8x512xf32>
    %602 = arith.addf %600, %601 : vector<8x512xf32>
    %603 = arith.negf %602 : vector<8x512xf32>
    %604 = math.exp %603 : vector<8x512xf32>
    %cst_187 = arith.constant 1.000000e+00 : f32
    %605 = vector.broadcast %cst_187 : f32 to vector<8x512xf32>
    %606 = arith.addf %605, %604 : vector<8x512xf32>
    %607 = arith.divf %605, %606 : vector<8x512xf32>
    %608 = vector.extract_strided_slice %607 {offsets = [0, 0], sizes = [8, 256], strides = [1, 1]} : vector<8x512xf32> to vector<8x256xf32>
    %609 = vector.extract_strided_slice %607 {offsets = [0, 256], sizes = [8, 256], strides = [1, 1]} : vector<8x512xf32> to vector<8x256xf32>
    %610 = vector.extract_strided_slice %598 {offsets = [0, 512], sizes = [8, 256], strides = [1, 1]} : vector<8x768xf32> to vector<8x256xf32>
    %611 = vector.extract_strided_slice %599 {offsets = [0, 512], sizes = [8, 256], strides = [1, 1]} : vector<8x768xf32> to vector<8x256xf32>
    %612 = vector.broadcast %338 : vector<1x256xf32> to vector<8x256xf32>
    %613 = arith.addf %611, %612 : vector<8x256xf32>
    %614 = arith.mulf %608, %613 : vector<8x256xf32>
    %615 = arith.addf %610, %614 : vector<8x256xf32>
    %616 = math.tanh %615 : vector<8x256xf32>
    %cst_188 = arith.constant 1.000000e+00 : f32
    %617 = vector.broadcast %cst_188 : f32 to vector<8x256xf32>
    %618 = arith.subf %617, %609 : vector<8x256xf32>
    %619 = arith.mulf %618, %616 : vector<8x256xf32>
    %620 = arith.mulf %609, %585 : vector<8x256xf32>
    %621 = arith.addf %619, %620 : vector<8x256xf32>
    %622 = vector.extract_strided_slice %621 {offsets = [0, 0], sizes = [8, 128], strides = [1, 1]} : vector<8x256xf32> to vector<8x128xf32>
    %623 = vector.extract_strided_slice %621 {offsets = [0, 128], sizes = [8, 128], strides = [1, 1]} : vector<8x256xf32> to vector<8x128xf32>
    %624 = arith.index_cast %593 : i32 to index
    %c0_189 = arith.constant 0 : index
    %625 = vector.load %arg9[%624, %c0_189] : memref<64x256xf32, #tpu.memory_space<vmem>>, vector<8x128xf32>
    tpu.vector_store %arg9[%624, %c0_189], %622 {strides = array<i32>} : memref<64x256xf32, #tpu.memory_space<vmem>>, vector<8x128xf32>,
    %626 = arith.index_cast %596 : i32 to index
    %c128_190 = arith.constant 128 : index
    %627 = vector.load %arg9[%626, %c128_190] : memref<64x256xf32, #tpu.memory_space<vmem>>, vector<8x128xf32>
    tpu.vector_store %arg9[%626, %c128_190], %623 {strides = array<i32>} : memref<64x256xf32, #tpu.memory_space<vmem>>, vector<8x128xf32>,
    %c8_i32_191 = arith.constant 8 : i32
    return
  }
}

</mosaic_0001>

<llo_original>
// kernel: tpu_custom_call.1
$region0: #{tpu_custom_call.1}
  #allocation0 [shape = 'u32[]', space=smem, size = 0x4, offset = 0x4, fixed_abs, tag = 'smem constant byte address 0x4 - core index']
  #allocation1 [shape = 'u32[72,128]{1,0:T(1,128)}', space=vmem, size = 0x9000, scoped, tag = 'internal scratch']
  #allocation2 [shape = 'f32[64,768]{1,0:T(8,128)}', space=vmem, size = 0x30000, scoped, tag = 'scratch operand']
  #allocation3 [shape = 'f32[64,512]{1,0:T(8,128)}', space=vmem, size = 0x20000, scoped, tag = 'scratch operand']
  %s0 = inlined_call_operand.hbm [shape: f32[64,128], index: 0, kind: input, shape index: {}]
  %s1 = inlined_call_operand.hbm [shape: f32[128,768], index: 1, kind: input, shape index: {}]
  %s2 = inlined_call_operand.hbm [shape: f32[1,768], index: 2, kind: input, shape index: {}]
  %s3 = inlined_call_operand.hbm [shape: f32[256,768], index: 3, kind: input, shape index: {}]
  %s4 = inlined_call_operand.hbm [shape: f32[1,256], index: 4, kind: input, shape index: {}]
  %s5 = inlined_call_operand.hbm [shape: f32[512,768], index: 5, kind: input, shape index: {}]
  %s6 = inlined_call_operand.hbm [shape: f32[1,768], index: 6, kind: input, shape index: {}]
  %s7 = inlined_call_operand.hbm [shape: f32[256,768], index: 7, kind: input, shape index: {}]
  %s8 = inlined_call_operand.hbm [shape: f32[1,256], index: 8, kind: input, shape index: {}]
  %s9 = inlined_call_operand.hbm [shape: f32[64,256], index: 9, kind: output, shape index: {}]
  %s10 = sld [smem:[#allocation0]]
  $region82: #{tpu_custom_call.1} parent=0
    _
  %s12 = ssub.s32 1, %s10
  %s13 = scalar_select 0, %s12, %s10
  $region1: #{tpu_custom_call.1} parent=0
    #allocation4 [shape = 'u8[32768]{0}', space=vmem, size = 0x8000, scoped, tag = 'input window, operand 0, single buffered']
    #allocation5 [shape = 's32[1]{0}', space=sflag, size = 0x4, scoped, tag = 'scoped memory for tpu_custom_call.1']
    #allocation6 [shape = 's32[1]{0}', space=sflag, size = 0x4, scoped, tag = 'scoped memory for tpu_custom_call.1']
    #allocation7 [shape = 'u8[393216]{0}', space=vmem, size = 0x60000, scoped, tag = 'input window, operand 1, single buffered']
    #allocation8 [shape = 's32[1]{0}', space=sflag, size = 0x4, scoped, tag = 'scoped memory for tpu_custom_call.1']
    #allocation9 [shape = 'u8[3072]{0}', space=vmem, size = 0xc00, scoped, tag = 'input window, operand 2, single buffered']
    #allocation10 [shape = 'u8[786432]{0}', space=vmem, size = 0xc0000, scoped, tag = 'input window, operand 3, single buffered']
    #allocation11 [shape = 's32[1]{0}', space=sflag, size = 0x4, scoped, tag = 'scoped memory for tpu_custom_call.1']
    #allocation12 [shape = 'u8[1024]{0}', space=vmem, size = 0x400, scoped, tag = 'input window, operand 4, single buffered']
    #allocation13 [shape = 'u8[1572864]{0}', space=vmem, size = 0x180000, scoped, tag = 'input window, operand 5, single buffered']
    #allocation14 [shape = 's32[1]{0}', space=sflag, size = 0x4, scoped, tag = 'scoped memory for tpu_custom_call.1']
    #allocation15 [shape = 'u8[3072]{0}', space=vmem, size = 0xc00, scoped, tag = 'input window, operand 6, single buffered']
    #allocation16 [shape = 'u8[786432]{0}', space=vmem, size = 0xc0000, scoped, tag = 'input window, operand 7, single buffered']
    #allocation17 [shape = 's32[1]{0}', space=sflag, size = 0x4, scoped, tag = 'scoped memory for tpu_custom_call.1']
    #allocation18 [shape = 'u8[1024]{0}', space=vmem, size = 0x400, scoped, tag = 'input window, operand 8, single buffered']
    #allocation19 [shape = 'u8[65536]{0}', space=vmem, size = 0x10000, scoped, tag = 'output window, operand 0, single buffered']
    %14 = vsyncpa [#allocation5], 0
    %15 = vsyncpa [#allocation8], 0
    %16 = vsyncpa [#allocation11], 0
    %17 = vsyncpa [#allocation14], 0
    %18 = vsyncpa [#allocation17], 0
    %19 = vsyncpa [#allocation6], 0
    // Predicated region
    $region2: #{tpu_custom_call.1} parent=1 // pred_check
      _
    $region3: #{tpu_custom_call.1} parent=1 // pred_check_branch
      %21 = sbr.rel (0) target = $region5
    $region4: #{tpu_custom_call.1} parent=1 // pred_region
      %23 = vsyncadd [#allocation5], 0
      %s24 = sshll.u32 %s0, 4
      %s25 = int_to_ptr.hbm [resolvable:$true] %s24
      %s26 = sshll.u32 [#allocation4], 4
      %s27 = int_to_ptr.vmem [resolvable:$true] %s26
      %32 = dma.hbm_to_vmem [thread:$0]  %s25, 1024, %s27, [#allocation5], 128, 128, 8
    $region5: #{tpu_custom_call.1} parent=1 // pred_fallthru
      _
    // Predicated region
    $region6: #{tpu_custom_call.1} parent=1 // pred_check
      _
    $region7: #{tpu_custom_call.1} parent=1 // pred_check_branch
      %34 = sbr.rel (0) target = $region9
    $region8: #{tpu_custom_call.1} parent=1 // pred_region
      %36 = vsyncadd [#allocation8], 0
      %s37 = sshll.u32 %s1, 4
      %s38 = int_to_ptr.hbm [resolvable:$true] %s37
      %s39 = sshll.u32 [#allocation7], 4
      %s40 = int_to_ptr.vmem [resolvable:$true] %s39
      %45 = dma.hbm_to_vmem [thread:$0]  %s38, 12288, %s40, [#allocation8], 768, 768, 48
    $region9: #{tpu_custom_call.1} parent=1 // pred_fallthru
      _
    // Predicated region
    $region10: #{tpu_custom_call.1} parent=1 // pred_check
      _
    $region11: #{tpu_custom_call.1} parent=1 // pred_check_branch
      %47 = sbr.rel (0) target = $region13
    $region12: #{tpu_custom_call.1} parent=1 // pred_region
      %49 = vsyncadd [#allocation8], 0
      %s51 = sshll.u32 %s2, 4
      %s52 = int_to_ptr.hbm [resolvable:$true] %s51
      %s53 = sshll.u32 [#allocation9], 4
      %s54 = int_to_ptr.vmem [resolvable:$true] %s53
      %56 = dma.hbm_to_vmem [thread:$0]  %s52, 96, %s54, [#allocation8]
    $region13: #{tpu_custom_call.1} parent=1 // pred_fallthru
      _
    // Predicated region
    $region14: #{tpu_custom_call.1} parent=1 // pred_check
      _
    $region15: #{tpu_custom_call.1} parent=1 // pred_check_branch
      %58 = sbr.rel (0) target = $region17
    $region16: #{tpu_custom_call.1} parent=1 // pred_region
      %60 = vsyncadd [#allocation11], 0
      %s61 = sshll.u32 %s3, 4
      %s62 = int_to_ptr.hbm [resolvable:$true] %s61
      %s63 = sshll.u32 [#allocation10], 4
      %s64 = int_to_ptr.vmem [resolvable:$true] %s63
      %69 = dma.hbm_to_vmem [thread:$0]  %s62, 24576, %s64, [#allocation11], 768, 768, 48
    $region17: #{tpu_custom_call.1} parent=1 // pred_fallthru
      _
    // Predicated region
    $region18: #{tpu_custom_call.1} parent=1 // pred_check
      _
    $region19: #{tpu_custom_call.1} parent=1 // pred_check_branch
      %71 = sbr.rel (0) target = $region21
    $region20: #{tpu_custom_call.1} parent=1 // pred_region
      %73 = vsyncadd [#allocation11], 0
      %s75 = sshll.u32 %s4, 4
      %s76 = int_to_ptr.hbm [resolvable:$true] %s75
      %s77 = sshll.u32 [#allocation12], 4
      %s78 = int_to_ptr.vmem [resolvable:$true] %s77
      %80 = dma.hbm_to_vmem [thread:$0]  %s76, 32, %s78, [#allocation11]
    $region21: #{tpu_custom_call.1} parent=1 // pred_fallthru
      _
    // Predicated region
    $region22: #{tpu_custom_call.1} parent=1 // pred_check
      _
    $region23: #{tpu_custom_call.1} parent=1 // pred_check_branch
      %82 = sbr.rel (0) target = $region25
    $region24: #{tpu_custom_call.1} parent=1 // pred_region
      %84 = vsyncadd [#allocation14], 0
      %s85 = sshll.u32 %s5, 4
      %s86 = int_to_ptr.hbm [resolvable:$true] %s85
      %s87 = sshll.u32 [#allocation13], 4
      %s88 = int_to_ptr.vmem [resolvable:$true] %s87
      %93 = dma.hbm_to_vmem [thread:$0]  %s86, 49152, %s88, [#allocation14], 768, 768, 48
    $region25: #{tpu_custom_call.1} parent=1 // pred_fallthru
      _
    // Predicated region
    $region26: #{tpu_custom_call.1} parent=1 // pred_check
      _
    $region27: #{tpu_custom_call.1} parent=1 // pred_check_branch
      %95 = sbr.rel (0) target = $region29
    $region28: #{tpu_custom_call.1} parent=1 // pred_region
      %97 = vsyncadd [#allocation14], 0
      %s99 = sshll.u32 %s6, 4
      %s100 = int_to_ptr.hbm [resolvable:$true] %s99
      %s101 = sshll.u32 [#allocation15], 4
      %s102 = int_to_ptr.vmem [resolvable:$true] %s101
      %104 = dma.hbm_to_vmem [thread:$0]  %s100, 96, %s102, [#allocation14]
    $region29: #{tpu_custom_call.1} parent=1 // pred_fallthru
      _
    // Predicated region
    $region30: #{tpu_custom_call.1} parent=1 // pred_check
      _
    $region31: #{tpu_custom_call.1} parent=1 // pred_check_branch
      %106 = sbr.rel (0) target = $region33
    $region32: #{tpu_custom_call.1} parent=1 // pred_region
      %108 = vsyncadd [#allocation17], 0
      %s109 = sshll.u32 %s7, 4
      %s110 = int_to_ptr.hbm [resolvable:$true] %s109
      %s111 = sshll.u32 [#allocation16], 4
      %s112 = int_to_ptr.vmem [resolvable:$true] %s111
      %117 = dma.hbm_to_vmem [thread:$0]  %s110, 24576, %s112, [#allocation17], 768, 768, 48
    $region33: #{tpu_custom_call.1} parent=1 // pred_fallthru
      _
    // Predicated region
    $region34: #{tpu_custom_call.1} parent=1 // pred_check
      _
    $region35: #{tpu_custom_call.1} parent=1 // pred_check_branch
      %119 = sbr.rel (0) target = $region37
    $region36: #{tpu_custom_call.1} parent=1 // pred_region
      %121 = vsyncadd [#allocation17], 0
      %s123 = sshll.u32 %s8, 4
      %s124 = int_to_ptr.hbm [resolvable:$true] %s123
      %s125 = sshll.u32 [#allocation18], 4
      %s126 = int_to_ptr.vmem [resolvable:$true] %s125
      %128 = dma.hbm_to_vmem [thread:$0]  %s124, 32, %s126, [#allocation17]
    $region37: #{tpu_custom_call.1} parent=1 // pred_fallthru
      _
    // Predicated region
    $region38: #{tpu_custom_call.1} parent=1 // pred_check
      _
    $region39: #{tpu_custom_call.1} parent=1 // pred_check_branch
      %130 = sbr.rel (0) target = $region41
    $region40: #{tpu_custom_call.1} parent=1 // pred_region
      %132 = dma.done [#allocation5], 1024
    $region41: #{tpu_custom_call.1} parent=1 // pred_fallthru
      _
    // Predicated region
    $region42: #{tpu_custom_call.1} parent=1 // pred_check
      _
    $region43: #{tpu_custom_call.1} parent=1 // pred_check_branch
      %134 = sbr.rel (0) target = $region45
    $region44: #{tpu_custom_call.1} parent=1 // pred_region
      %136 = dma.done [#allocation8], 12288
    $region45: #{tpu_custom_call.1} parent=1 // pred_fallthru
      _
    // Predicated region
    $region46: #{tpu_custom_call.1} parent=1 // pred_check
      _
    $region47: #{tpu_custom_call.1} parent=1 // pred_check_branch
      %138 = sbr.rel (0) target = $region49
    $region48: #{tpu_custom_call.1} parent=1 // pred_region
      %140 = dma.done [#allocation8], 96
    $region49: #{tpu_custom_call.1} parent=1 // pred_fallthru
      _
    // Predicated region
    $region50: #{tpu_custom_call.1} parent=1 // pred_check
      _
    $region51: #{tpu_custom_call.1} parent=1 // pred_check_branch
      %142 = sbr.rel (0) target = $region53
    $region52: #{tpu_custom_call.1} parent=1 // pred_region
      %144 = dma.done [#allocation11], 24576
    $region53: #{tpu_custom_call.1} parent=1 // pred_fallthru
      _
    // Predicated region
    $region54: #{tpu_custom_call.1} parent=1 // pred_check
      _
    $region55: #{tpu_custom_call.1} parent=1 // pred_check_branch
      %146 = sbr.rel (0) target = $region57
    $region56: #{tpu_custom_call.1} parent=1 // pred_region
      %148 = dma.done [#allocation11], 32
    $region57: #{tpu_custom_call.1} parent=1 // pred_fallthru
      _
    // Predicated region
    $region58: #{tpu_custom_call.1} parent=1 // pred_check
      _
    $region59: #{tpu_custom_call.1} parent=1 // pred_check_branch
      %150 = sbr.rel (0) target = $region61
    $region60: #{tpu_custom_call.1} parent=1 // pred_region
      %152 = dma.done [#allocation14], 49152
    $region61: #{tpu_custom_call.1} parent=1 // pred_fallthru
      _
    // Predicated region
    $region62: #{tpu_custom_call.1} parent=1 // pred_check
      _
    $region63: #{tpu_custom_call.1} parent=1 // pred_check_branch
      %154 = sbr.rel (0) target = $region65
    $region64: #{tpu_custom_call.1} parent=1 // pred_region
      %156 = dma.done [#allocation14], 96
    $region65: #{tpu_custom_call.1} parent=1 // pred_fallthru
      _
    // Predicated region
    $region66: #{tpu_custom_call.1} parent=1 // pred_check
      _
    $region67: #{tpu_custom_call.1} parent=1 // pred_check_branch
      %158 = sbr.rel (0) target = $region69
    $region68: #{tpu_custom_call.1} parent=1 // pred_region
      %160 = dma.done [#allocation17], 24576
    $region69: #{tpu_custom_call.1} parent=1 // pred_fallthru
      _
    // Predicated region
    $region70: #{tpu_custom_call.1} parent=1 // pred_check
      _
    $region71: #{tpu_custom_call.1} parent=1 // pred_check_branch
      %162 = sbr.rel (0) target = $region73
    $region72: #{tpu_custom_call.1} parent=1 // pred_region
      %164 = dma.done [#allocation17], 32
    $region73: #{tpu_custom_call.1} parent=1 // pred_fallthru
      _
    %v165 = vld [vmem:[#allocation4] sm:$0xff]
    %v166 = vld [vmem:[#allocation4 + $0x8] sm:$0xff]
    %v167 = vld [vmem:[#allocation4 + $0x10] sm:$0xff]
    %v168 = vld [vmem:[#allocation4 + $0x18] sm:$0xff]
    %v169 = vld [vmem:[#allocation4 + $0x20] sm:$0xff]
    %v170 = vld [vmem:[#allocation4 + $0x28] sm:$0xff]
    %v171 = vld [vmem:[#allocation4 + $0x30] sm:$0xff]
    %v172 = vld [vmem:[#allocation4 + $0x38] sm:$0xff]
    %v173 = vld [vmem:[#allocation7] sm:$0xff]
    %v174 = vld [vmem:[#allocation7 + $0x8] sm:$0xff]
    %v175 = vld [vmem:[#allocation7 + $0x10] sm:$0xff]
    %v176 = vld [vmem:[#allocation7 + $0x18] sm:$0xff]
    %v177 = vld [vmem:[#allocation7 + $0x20] sm:$0xff]
    %v178 = vld [vmem:[#allocation7 + $0x28] sm:$0xff]
    %v179 = vld [vmem:[#allocation7 + $0x30] sm:$0xff]
    %v180 = vld [vmem:[#allocation7 + $0x38] sm:$0xff]
    %v181 = vld [vmem:[#allocation7 + $0x40] sm:$0xff]
    %v182 = vld [vmem:[#allocation7 + $0x48] sm:$0xff]
    %v183 = vld [vmem:[#allocation7 + $0x50] sm:$0xff]
    %v184 = vld [vmem:[#allocation7 + $0x58] sm:$0xff]
    %v185 = vld [vmem:[#allocation7 + $0x60] sm:$0xff]
    %v186 = vld [vmem:[#allocation7 + $0x68] sm:$0xff]
    %v187 = vld [vmem:[#allocation7 + $0x70] sm:$0xff]
    %v188 = vld [vmem:[#allocation7 + $0x78] sm:$0xff]
    %v189 = vld [vmem:[#allocation7 + $0x80] sm:$0xff]
    %v190 = vld [vmem:[#allocation7 + $0x88] sm:$0xff]
    %v191 = vld [vmem:[#allocation7 + $0x90] sm:$0xff]
    %v192 = vld [vmem:[#allocation7 + $0x98] sm:$0xff]
    %v193 = vld [vmem:[#allocation7 + $0xa0] sm:$0xff]
    %v194 = vld [vmem:[#allocation7 + $0xa8] sm:$0xff]
    %v195 = vld [vmem:[#allocation7 + $0xb0] sm:$0xff]
    %v196 = vld [vmem:[#allocation7 + $0xb8] sm:$0xff]
    %v197 = vld [vmem:[#allocation7 + $0xc0] sm:$0xff]
    %v198 = vld [vmem:[#allocation7 + $0xc8] sm:$0xff]
    %v199 = vld [vmem:[#allocation7 + $0xd0] sm:$0xff]
    %v200 = vld [vmem:[#allocation7 + $0xd8] sm:$0xff]
    %v201 = vld [vmem:[#allocation7 + $0xe0] sm:$0xff]
    %v202 = vld [vmem:[#allocation7 + $0xe8] sm:$0xff]
    %v203 = vld [vmem:[#allocation7 + $0xf0] sm:$0xff]
    %v204 = vld [vmem:[#allocation7 + $0xf8] sm:$0xff]
    %v205 = vld [vmem:[#allocation7 + $0x100] sm:$0xff]
    %v206 = vld [vmem:[#allocation7 + $0x108] sm:$0xff]
    %v207 = vld [vmem:[#allocation7 + $0x110] sm:$0xff]
    %v208 = vld [vmem:[#allocation7 + $0x118] sm:$0xff]
    %v209 = vld [vmem:[#allocation7 + $0x120] sm:$0xff]
    %v210 = vld [vmem:[#allocation7 + $0x128] sm:$0xff]
    %v211 = vld [vmem:[#allocation7 + $0x130] sm:$0xff]
    %v212 = vld [vmem:[#allocation7 + $0x138] sm:$0xff]
    %v213 = vld [vmem:[#allocation7 + $0x140] sm:$0xff]
    %v214 = vld [vmem:[#allocation7 + $0x148] sm:$0xff]
    %v215 = vld [vmem:[#allocation7 + $0x150] sm:$0xff]
    %v216 = vld [vmem:[#allocation7 + $0x158] sm:$0xff]
    %v217 = vld [vmem:[#allocation7 + $0x160] sm:$0xff]
    %v218 = vld [vmem:[#allocation7 + $0x168] sm:$0xff]
    %v219 = vld [vmem:[#allocation7 + $0x170] sm:$0xff]
    %v220 = vld [vmem:[#allocation7 + $0x178] sm:$0xff]
    %v221 = vld [vmem:[#allocation7 + $0x180] sm:$0xff]
    %v222 = vld [vmem:[#allocation7 + $0x188] sm:$0xff]
    %v223 = vld [vmem:[#allocation7 + $0x190] sm:$0xff]
    %v224 = vld [vmem:[#allocation7 + $0x198] sm:$0xff]
    %v225 = vld [vmem:[#allocation7 + $0x1a0] sm:$0xff]
    %v226 = vld [vmem:[#allocation7 + $0x1a8] sm:$0xff]
    %v227 = vld [vmem:[#allocation7 + $0x1b0] sm:$0xff]
    %v228 = vld [vmem:[#allocation7 + $0x1b8] sm:$0xff]
    %v229 = vld [vmem:[#allocation7 + $0x1c0] sm:$0xff]
    %v230 = vld [vmem:[#allocation7 + $0x1c8] sm:$0xff]
    %v231 = vld [vmem:[#allocation7 + $0x1d0] sm:$0xff]
    %v232 = vld [vmem:[#allocation7 + $0x1d8] sm:$0xff]
    %v233 = vld [vmem:[#allocation7 + $0x1e0] sm:$0xff]
    %v234 = vld [vmem:[#allocation7 + $0x1e8] sm:$0xff]
    %v235 = vld [vmem:[#allocation7 + $0x1f0] sm:$0xff]
    %v236 = vld [vmem:[#allocation7 + $0x1f8] sm:$0xff]
    %v237 = vld [vmem:[#allocation7 + $0x200] sm:$0xff]
    %v238 = vld [vmem:[#allocation7 + $0x208] sm:$0xff]
    %v239 = vld [vmem:[#allocation7 + $0x210] sm:$0xff]
    %v240 = vld [vmem:[#allocation7 + $0x218] sm:$0xff]
    %v241 = vld [vmem:[#allocation7 + $0x220] sm:$0xff]
    %v242 = vld [vmem:[#allocation7 + $0x228] sm:$0xff]
    %v243 = vld [vmem:[#allocation7 + $0x230] sm:$0xff]
    %v244 = vld [vmem:[#allocation7 + $0x238] sm:$0xff]
    %v245 = vld [vmem:[#allocation7 + $0x240] sm:$0xff]
    %v246 = vld [vmem:[#allocation7 + $0x248] sm:$0xff]
    %v247 = vld [vmem:[#allocation7 + $0x250] sm:$0xff]
    %v248 = vld [vmem:[#allocation7 + $0x258] sm:$0xff]
    %v249 = vld [vmem:[#allocation7 + $0x260] sm:$0xff]
    %v250 = vld [vmem:[#allocation7 + $0x268] sm:$0xff]
    %v251 = vld [vmem:[#allocation7 + $0x270] sm:$0xff]
    %v252 = vld [vmem:[#allocation7 + $0x278] sm:$0xff]
    %v253 = vld [vmem:[#allocation7 + $0x280] sm:$0xff]
    %v254 = vld [vmem:[#allocation7 + $0x288] sm:$0xff]
    %v255 = vld [vmem:[#allocation7 + $0x290] sm:$0xff]
    %v256 = vld [vmem:[#allocation7 + $0x298] sm:$0xff]
    %v257 = vld [vmem:[#allocation7 + $0x2a0] sm:$0xff]
    %v258 = vld [vmem:[#allocation7 + $0x2a8] sm:$0xff]
    %v259 = vld [vmem:[#allocation7 + $0x2b0] sm:$0xff]
    %v260 = vld [vmem:[#allocation7 + $0x2b8] sm:$0xff]
    %v261 = vld [vmem:[#allocation7 + $0x2c0] sm:$0xff]
    %v262 = vld [vmem:[#allocation7 + $0x2c8] sm:$0xff]
    %v263 = vld [vmem:[#allocation7 + $0x2d0] sm:$0xff]
    %v264 = vld [vmem:[#allocation7 + $0x2d8] sm:$0xff]
    %v265 = vld [vmem:[#allocation7 + $0x2e0] sm:$0xff]
    %v266 = vld [vmem:[#allocation7 + $0x2e8] sm:$0xff]
    %v267 = vld [vmem:[#allocation7 + $0x2f0] sm:$0xff]
    %v268 = vld [vmem:[#allocation7 + $0x2f8] sm:$0xff]
    %v269 = vld [vmem:[#allocation9] sm:$0x3f]
    %v271 = vperm.slane %v269, 0
    %v272 = vperm.slane %v269, 1
    %v273 = vperm.slane %v269, 2
    %v274 = vperm.slane %v269, 3
    %v275 = vperm.slane %v269, 4
    %v276 = vperm.slane %v269, 5
    %283 = vmatpush.msra.mxu0 %v263
    %284 = vmatpush.msra.mxu0 %v257
    %285 = vmatpush.msra.mxu0 %v251
    %286 = vmatpush.msra.mxu0 %v245
    %287 = vmatpush.msra.mxu0 %v239
    %288 = vmatpush.msra.mxu0 %v233
    %289 = vmatpush.msra.mxu0 %v227
    %290 = vmatpush.msra.mxu0 %v221
    %291 = vmatpush.msra.mxu0 %v215
    %292 = vmatpush.msra.mxu0 %v209
    %293 = vmatpush.msra.mxu0 %v203
    %294 = vmatpush.msra.mxu0 %v197
    %295 = vmatpush.msra.mxu0 %v191
    %296 = vmatpush.msra.mxu0 %v185
    %297 = vmatpush.msra.mxu0 %v179
    %298 = vmatpush.msra.mxu0 %v173
    %299 = vmatmul.f32.gmra.mxu0 %v165
    %v300 = vpop.f32.mrf.mxu0
    %v301 = vadd.f32 %v271, %v300
    %302 = vmatmul.f32.gmra.mxu0 %v166
    %v303 = vpop.f32.mrf.mxu0
    %v304 = vadd.f32 %v271, %v303
    %305 = vmatmul.f32.gmra.mxu0 %v167
    %v306 = vpop.f32.mrf.mxu0
    %v307 = vadd.f32 %v271, %v306
    %308 = vmatmul.f32.gmra.mxu0 %v168
    %v309 = vpop.f32.mrf.mxu0
    %v310 = vadd.f32 %v271, %v309
    %311 = vmatmul.f32.gmra.mxu0 %v169
    %v312 = vpop.f32.mrf.mxu0
    %v313 = vadd.f32 %v271, %v312
    %314 = vmatmul.f32.gmra.mxu0 %v170
    %v315 = vpop.f32.mrf.mxu0
    %v316 = vadd.f32 %v271, %v315
    %317 = vmatmul.f32.gmra.mxu0 %v171
    %v318 = vpop.f32.mrf.mxu0
    %v319 = vadd.f32 %v271, %v318
    %320 = vmatmul.f32.gmra.mxu0 %v172
    %v321 = vpop.f32.mrf.mxu0
    %v322 = vadd.f32 %v271, %v321
    %323 = vdwg.mxu0
    %324 = vmatpush.msra.mxu0 %v264
    %325 = vmatpush.msra.mxu0 %v258
    %326 = vmatpush.msra.mxu0 %v252
    %327 = vmatpush.msra.mxu0 %v246
    %328 = vmatpush.msra.mxu0 %v240
    %329 = vmatpush.msra.mxu0 %v234
    %330 = vmatpush.msra.mxu0 %v228
    %331 = vmatpush.msra.mxu0 %v222
    %332 = vmatpush.msra.mxu0 %v216
    %333 = vmatpush.msra.mxu0 %v210
    %334 = vmatpush.msra.mxu0 %v204
    %335 = vmatpush.msra.mxu0 %v198
    %336 = vmatpush.msra.mxu0 %v192
    %337 = vmatpush.msra.mxu0 %v186
    %338 = vmatpush.msra.mxu0 %v180
    %339 = vmatpush.msra.mxu0 %v174
    %340 = vmatmul.f32.gmra.mxu0 %v165
    %v341 = vpop.f32.mrf.mxu0
    %v342 = vadd.f32 %v272, %v341
    %343 = vmatmul.f32.gmra.mxu0 %v166
    %v344 = vpop.f32.mrf.mxu0
    %v345 = vadd.f32 %v272, %v344
    %346 = vmatmul.f32.gmra.mxu0 %v167
    %v347 = vpop.f32.mrf.mxu0
    %v348 = vadd.f32 %v272, %v347
    %349 = vmatmul.f32.gmra.mxu0 %v168
    %v350 = vpop.f32.mrf.mxu0
    %v351 = vadd.f32 %v272, %v350
    %352 = vmatmul.f32.gmra.mxu0 %v169
    %v353 = vpop.f32.mrf.mxu0
    %v354 = vadd.f32 %v272, %v353
    %355 = vmatmul.f32.gmra.mxu0 %v170
    %v356 = vpop.f32.mrf.mxu0
    %v357 = vadd.f32 %v272, %v356
    %358 = vmatmul.f32.gmra.mxu0 %v171
    %v359 = vpop.f32.mrf.mxu0
    %v360 = vadd.f32 %v272, %v359
    %361 = vmatmul.f32.gmra.mxu0 %v172
    %v362 = vpop.f32.mrf.mxu0
    %v363 = vadd.f32 %v272, %v362
    %364 = vdwg.mxu0
    %365 = vmatpush.msra.mxu0 %v265
    %366 = vmatpush.msra.mxu0 %v259
    %367 = vmatpush.msra.mxu0 %v253
    %368 = vmatpush.msra.mxu0 %v247
    %369 = vmatpush.msra.mxu0 %v241
    %370 = vmatpush.msra.mxu0 %v235
    %371 = vmatpush.msra.mxu0 %v229
    %372 = vmatpush.msra.mxu0 %v223
    %373 = vmatpush.msra.mxu0 %v217
    %374 = vmatpush.msra.mxu0 %v211
    %375 = vmatpush.msra.mxu0 %v205
    %376 = vmatpush.msra.mxu0 %v199
    %377 = vmatpush.msra.mxu0 %v193
    %378 = vmatpush.msra.mxu0 %v187
    %379 = vmatpush.msra.mxu0 %v181
    %380 = vmatpush.msra.mxu0 %v175
    %381 = vmatmul.f32.gmra.mxu0 %v165
    %v382 = vpop.f32.mrf.mxu0
    %v383 = vadd.f32 %v273, %v382
    %384 = vmatmul.f32.gmra.mxu0 %v166
    %v385 = vpop.f32.mrf.mxu0
    %v386 = vadd.f32 %v273, %v385
    %387 = vmatmul.f32.gmra.mxu0 %v167
    %v388 = vpop.f32.mrf.mxu0
    %v389 = vadd.f32 %v273, %v388
    %390 = vmatmul.f32.gmra.mxu0 %v168
    %v391 = vpop.f32.mrf.mxu0
    %v392 = vadd.f32 %v273, %v391
    %393 = vmatmul.f32.gmra.mxu0 %v169
    %v394 = vpop.f32.mrf.mxu0
    %v395 = vadd.f32 %v273, %v394
    %396 = vmatmul.f32.gmra.mxu0 %v170
    %v397 = vpop.f32.mrf.mxu0
    %v398 = vadd.f32 %v273, %v397
    %399 = vmatmul.f32.gmra.mxu0 %v171
    %v400 = vpop.f32.mrf.mxu0
    %v401 = vadd.f32 %v273, %v400
    %402 = vmatmul.f32.gmra.mxu0 %v172
    %v403 = vpop.f32.mrf.mxu0
    %v404 = vadd.f32 %v273, %v403
    %405 = vdwg.mxu0
    %406 = vmatpush.msra.mxu0 %v266
    %407 = vmatpush.msra.mxu0 %v260
    %408 = vmatpush.msra.mxu0 %v254
    %409 = vmatpush.msra.mxu0 %v248
    %410 = vmatpush.msra.mxu0 %v242
    %411 = vmatpush.msra.mxu0 %v236
    %412 = vmatpush.msra.mxu0 %v230
    %413 = vmatpush.msra.mxu0 %v224
    %414 = vmatpush.msra.mxu0 %v218
    %415 = vmatpush.msra.mxu0 %v212
    %416 = vmatpush.msra.mxu0 %v206
    %417 = vmatpush.msra.mxu0 %v200
    %418 = vmatpush.msra.mxu0 %v194
    %419 = vmatpush.msra.mxu0 %v188
    %420 = vmatpush.msra.mxu0 %v182
    %421 = vmatpush.msra.mxu0 %v176
    %422 = vmatmul.f32.gmra.mxu0 %v165
    %v423 = vpop.f32.mrf.mxu0
    %v424 = vadd.f32 %v274, %v423
    %425 = vmatmul.f32.gmra.mxu0 %v166
    %v426 = vpop.f32.mrf.mxu0
    %v427 = vadd.f32 %v274, %v426
    %428 = vmatmul.f32.gmra.mxu0 %v167
    %v429 = vpop.f32.mrf.mxu0
    %v430 = vadd.f32 %v274, %v429
    %431 = vmatmul.f32.gmra.mxu0 %v168
    %v432 = vpop.f32.mrf.mxu0
    %v433 = vadd.f32 %v274, %v432
    %434 = vmatmul.f32.gmra.mxu0 %v169
    %v435 = vpop.f32.mrf.mxu0
    %v436 = vadd.f32 %v274, %v435
    %437 = vmatmul.f32.gmra.mxu0 %v170
    %v438 = vpop.f32.mrf.mxu0
    %v439 = vadd.f32 %v274, %v438
    %440 = vmatmul.f32.gmra.mxu0 %v171
    %v441 = vpop.f32.mrf.mxu0
    %v442 = vadd.f32 %v274, %v441
    %443 = vmatmul.f32.gmra.mxu0 %v172
    %v444 = vpop.f32.mrf.mxu0
    %v445 = vadd.f32 %v274, %v444
    %446 = vdwg.mxu0
    %447 = vmatpush.msra.mxu0 %v267
    %448 = vmatpush.msra.mxu0 %v261
    %449 = vmatpush.msra.mxu0 %v255
    %450 = vmatpush.msra.mxu0 %v249
    %451 = vmatpush.msra.mxu0 %v243
    %452 = vmatpush.msra.mxu0 %v237
    %453 = vmatpush.msra.mxu0 %v231
    %454 = vmatpush.msra.mxu0 %v225
    %455 = vmatpush.msra.mxu0 %v219
    %456 = vmatpush.msra.mxu0 %v213
    %457 = vmatpush.msra.mxu0 %v207
    %458 = vmatpush.msra.mxu0 %v201
    %459 = vmatpush.msra.mxu0 %v195
    %460 = vmatpush.msra.mxu0 %v189
    %461 = vmatpush.msra.mxu0 %v183
    %462 = vmatpush.msra.mxu0 %v177
    %463 = vmatmul.f32.gmra.mxu0 %v165
    %v464 = vpop.f32.mrf.mxu0
    %v465 = vadd.f32 %v275, %v464
    %466 = vmatmul.f32.gmra.mxu0 %v166
    %v467 = vpop.f32.mrf.mxu0
    %v468 = vadd.f32 %v275, %v467
    %469 = vmatmul.f32.gmra.mxu0 %v167
    %v470 = vpop.f32.mrf.mxu0
    %v471 = vadd.f32 %v275, %v470
    %472 = vmatmul.f32.gmra.mxu0 %v168
    %v473 = vpop.f32.mrf.mxu0
    %v474 = vadd.f32 %v275, %v473
    %475 = vmatmul.f32.gmra.mxu0 %v169
    %v476 = vpop.f32.mrf.mxu0
    %v477 = vadd.f32 %v275, %v476
    %478 = vmatmul.f32.gmra.mxu0 %v170
    %v479 = vpop.f32.mrf.mxu0
    %v480 = vadd.f32 %v275, %v479
    %481 = vmatmul.f32.gmra.mxu0 %v171
    %v482 = vpop.f32.mrf.mxu0
    %v483 = vadd.f32 %v275, %v482
    %484 = vmatmul.f32.gmra.mxu0 %v172
    %v485 = vpop.f32.mrf.mxu0
    %v486 = vadd.f32 %v275, %v485
    %487 = vdwg.mxu0
    %488 = vmatpush.msra.mxu0 %v268
    %489 = vmatpush.msra.mxu0 %v262
    %490 = vmatpush.msra.mxu0 %v256
    %491 = vmatpush.msra.mxu0 %v250
    %492 = vmatpush.msra.mxu0 %v244
    %493 = vmatpush.msra.mxu0 %v238
    %494 = vmatpush.msra.mxu0 %v232
    %495 = vmatpush.msra.mxu0 %v226
    %496 = vmatpush.msra.mxu0 %v220
    %497 = vmatpush.msra.mxu0 %v214
    %498 = vmatpush.msra.mxu0 %v208
    %499 = vmatpush.msra.mxu0 %v202
    %500 = vmatpush.msra.mxu0 %v196
    %501 = vmatpush.msra.mxu0 %v190
    %502 = vmatpush.msra.mxu0 %v184
    %503 = vmatpush.msra.mxu0 %v178
    %504 = vmatmul.f32.gmra.mxu0 %v165
    %v505 = vpop.f32.mrf.mxu0
    %v506 = vadd.f32 %v276, %v505
    %507 = vmatmul.f32.gmra.mxu0 %v166
    %v508 = vpop.f32.mrf.mxu0
    %v509 = vadd.f32 %v276, %v508
    %510 = vmatmul.f32.gmra.mxu0 %v167
    %v511 = vpop.f32.mrf.mxu0
    %v512 = vadd.f32 %v276, %v511
    %513 = vmatmul.f32.gmra.mxu0 %v168
    %v514 = vpop.f32.mrf.mxu0
    %v515 = vadd.f32 %v276, %v514
    %516 = vmatmul.f32.gmra.mxu0 %v169
    %v517 = vpop.f32.mrf.mxu0
    %v518 = vadd.f32 %v276, %v517
    %519 = vmatmul.f32.gmra.mxu0 %v170
    %v520 = vpop.f32.mrf.mxu0
    %v521 = vadd.f32 %v276, %v520
    %522 = vmatmul.f32.gmra.mxu0 %v171
    %v523 = vpop.f32.mrf.mxu0
    %v524 = vadd.f32 %v276, %v523
    %525 = vmatmul.f32.gmra.mxu0 %v172
    %v526 = vpop.f32.mrf.mxu0
    %v527 = vadd.f32 %v276, %v526
    %528 = vdwg.mxu0
    %529 = vst [vmem:[#allocation2] sm:$0xff] %v301
    %530 = vst [vmem:[#allocation2 + $0x8] sm:$0xff] %v342
    %531 = vst [vmem:[#allocation2 + $0x10] sm:$0xff] %v383
    %532 = vst [vmem:[#allocation2 + $0x18] sm:$0xff] %v424
    %533 = vst [vmem:[#allocation2 + $0x20] sm:$0xff] %v465
    %534 = vst [vmem:[#allocation2 + $0x28] sm:$0xff] %v506
    %535 = vst [vmem:[#allocation2 + $0x30] sm:$0xff] %v304
    %536 = vst [vmem:[#allocation2 + $0x38] sm:$0xff] %v345
    %537 = vst [vmem:[#allocation2 + $0x40] sm:$0xff] %v386
    %538 = vst [vmem:[#allocation2 + $0x48] sm:$0xff] %v427
    %539 = vst [vmem:[#allocation2 + $0x50] sm:$0xff] %v468
    %540 = vst [vmem:[#allocation2 + $0x58] sm:$0xff] %v509
    %541 = vst [vmem:[#allocation2 + $0x60] sm:$0xff] %v307
    %542 = vst [vmem:[#allocation2 + $0x68] sm:$0xff] %v348
    %543 = vst [vmem:[#allocation2 + $0x70] sm:$0xff] %v389
    %544 = vst [vmem:[#allocation2 + $0x78] sm:$0xff] %v430
    %545 = vst [vmem:[#allocation2 + $0x80] sm:$0xff] %v471
    %546 = vst [vmem:[#allocation2 + $0x88] sm:$0xff] %v512
    %547 = vst [vmem:[#allocation2 + $0x90] sm:$0xff] %v310
    %548 = vst [vmem:[#allocation2 + $0x98] sm:$0xff] %v351
    %549 = vst [vmem:[#allocation2 + $0xa0] sm:$0xff] %v392
    %550 = vst [vmem:[#allocation2 + $0xa8] sm:$0xff] %v433
    %551 = vst [vmem:[#allocation2 + $0xb0] sm:$0xff] %v474
    %552 = vst [vmem:[#allocation2 + $0xb8] sm:$0xff] %v515
    %553 = vst [vmem:[#allocation2 + $0xc0] sm:$0xff] %v313
    %554 = vst [vmem:[#allocation2 + $0xc8] sm:$0xff] %v354
    %555 = vst [vmem:[#allocation2 + $0xd0] sm:$0xff] %v395
    %556 = vst [vmem:[#allocation2 + $0xd8] sm:$0xff] %v436
    %557 = vst [vmem:[#allocation2 + $0xe0] sm:$0xff] %v477
    %558 = vst [vmem:[#allocation2 + $0xe8] sm:$0xff] %v518
    %559 = vst [vmem:[#allocation2 + $0xf0] sm:$0xff] %v316
    %560 = vst [vmem:[#allocation2 + $0xf8] sm:$0xff] %v357
    %561 = vst [vmem:[#allocation2 + $0x100] sm:$0xff] %v398
    %562 = vst [vmem:[#allocation2 + $0x108] sm:$0xff] %v439
    %563 = vst [vmem:[#allocation2 + $0x110] sm:$0xff] %v480
    %564 = vst [vmem:[#allocation2 + $0x118] sm:$0xff] %v521
    %565 = vst [vmem:[#allocation2 + $0x120] sm:$0xff] %v319
    %566 = vst [vmem:[#allocation2 + $0x128] sm:$0xff] %v360
    %567 = vst [vmem:[#allocation2 + $0x130] sm:$0xff] %v401
    %568 = vst [vmem:[#allocation2 + $0x138] sm:$0xff] %v442
    %569 = vst [vmem:[#allocation2 + $0x140] sm:$0xff] %v483
    %570 = vst [vmem:[#allocation2 + $0x148] sm:$0xff] %v524
    %571 = vst [vmem:[#allocation2 + $0x150] sm:$0xff] %v322
    %572 = vst [vmem:[#allocation2 + $0x158] sm:$0xff] %v363
    %573 = vst [vmem:[#allocation2 + $0x160] sm:$0xff] %v404
    %574 = vst [vmem:[#allocation2 + $0x168] sm:$0xff] %v445
    %575 = vst [vmem:[#allocation2 + $0x170] sm:$0xff] %v486
    %576 = vst [vmem:[#allocation2 + $0x178] sm:$0xff] %v527
    %v577 = vld [vmem:[#allocation10] sm:$0xff]
    %v578 = vld [vmem:[#allocation10 + $0x8] sm:$0xff]
    %v579 = vld [vmem:[#allocation10 + $0x10] sm:$0xff]
    %v580 = vld [vmem:[#allocation10 + $0x18] sm:$0xff]
    %v581 = vld [vmem:[#allocation10 + $0x20] sm:$0xff]
    %v582 = vld [vmem:[#allocation10 + $0x28] sm:$0xff]
    %v583 = vld [vmem:[#allocation10 + $0x30] sm:$0xff]
    %v584 = vld [vmem:[#allocation10 + $0x38] sm:$0xff]
    %v585 = vld [vmem:[#allocation10 + $0x40] sm:$0xff]
    %v586 = vld [vmem:[#allocation10 + $0x48] sm:$0xff]
    %v587 = vld [vmem:[#allocation10 + $0x50] sm:$0xff]
    %v588 = vld [vmem:[#allocation10 + $0x58] sm:$0xff]
    %v589 = vld [vmem:[#allocation10 + $0x60] sm:$0xff]
    %v590 = vld [vmem:[#allocation10 + $0x68] sm:$0xff]
    %v591 = vld [vmem:[#allocation10 + $0x70] sm:$0xff]
    %v592 = vld [vmem:[#allocation10 + $0x78] sm:$0xff]
    %v593 = vld [vmem:[#allocation10 + $0x80] sm:$0xff]
    %v594 = vld [vmem:[#allocation10 + $0x88] sm:$0xff]
    %v595 = vld [vmem:[#allocation10 + $0x90] sm:$0xff]
    %v596 = vld [vmem:[#allocation10 + $0x98] sm:$0xff]
    %v597 = vld [vmem:[#allocation10 + $0xa0] sm:$0xff]
    %v598 = vld [vmem:[#allocation10 + $0xa8] sm:$0xff]
    %v599 = vld [vmem:[#allocation10 + $0xb0] sm:$0xff]
    %v600 = vld [vmem:[#allocation10 + $0xb8] sm:$0xff]
    %v601 = vld [vmem:[#allocation10 + $0xc0] sm:$0xff]
    %v602 = vld [vmem:[#allocation10 + $0xc8] sm:$0xff]
    %v603 = vld [vmem:[#allocation10 + $0xd0] sm:$0xff]
    %v604 = vld [vmem:[#allocation10 + $0xd8] sm:$0xff]
    %v605 = vld [vmem:[#allocation10 + $0xe0] sm:$0xff]
    %v606 = vld [vmem:[#allocation10 + $0xe8] sm:$0xff]
    %v607 = vld [vmem:[#allocation10 + $0xf0] sm:$0xff]
    %v608 = vld [vmem:[#allocation10 + $0xf8] sm:$0xff]
    %v609 = vld [vmem:[#allocation10 + $0x100] sm:$0xff]
    %v610 = vld [vmem:[#allocation10 + $0x108] sm:$0xff]
    %v611 = vld [vmem:[#allocation10 + $0x110] sm:$0xff]
    %v612 = vld [vmem:[#allocation10 + $0x118] sm:$0xff]
    %v613 = vld [vmem:[#allocation10 + $0x120] sm:$0xff]
    %v614 = vld [vmem:[#allocation10 + $0x128] sm:$0xff]
    %v615 = vld [vmem:[#allocation10 + $0x130] sm:$0xff]
    %v616 = vld [vmem:[#allocation10 + $0x138] sm:$0xff]
    %v617 = vld [vmem:[#allocation10 + $0x140] sm:$0xff]
    %v618 = vld [vmem:[#allocation10 + $0x148] sm:$0xff]
    %v619 = vld [vmem:[#allocation10 + $0x150] sm:$0xff]
    %v620 = vld [vmem:[#allocation10 + $0x158] sm:$0xff]
    %v621 = vld [vmem:[#allocation10 + $0x160] sm:$0xff]
    %v622 = vld [vmem:[#allocation10 + $0x168] sm:$0xff]
    %v623 = vld [vmem:[#allocation10 + $0x170] sm:$0xff]
    %v624 = vld [vmem:[#allocation10 + $0x178] sm:$0xff]
    %v625 = vld [vmem:[#allocation10 + $0x180] sm:$0xff]
    %v626 = vld [vmem:[#allocation10 + $0x188] sm:$0xff]
    %v627 = vld [vmem:[#allocation10 + $0x190] sm:$0xff]
    %v628 = vld [vmem:[#allocation10 + $0x198] sm:$0xff]
    %v629 = vld [vmem:[#allocation10 + $0x1a0] sm:$0xff]
    %v630 = vld [vmem:[#allocation10 + $0x1a8] sm:$0xff]
    %v631 = vld [vmem:[#allocation10 + $0x1b0] sm:$0xff]
    %v632 = vld [vmem:[#allocation10 + $0x1b8] sm:$0xff]
    %v633 = vld [vmem:[#allocation10 + $0x1c0] sm:$0xff]
    %v634 = vld [vmem:[#allocation10 + $0x1c8] sm:$0xff]
    %v635 = vld [vmem:[#allocation10 + $0x1d0] sm:$0xff]
    %v636 = vld [vmem:[#allocation10 + $0x1d8] sm:$0xff]
    %v637 = vld [vmem:[#allocation10 + $0x1e0] sm:$0xff]
    %v638 = vld [vmem:[#allocation10 + $0x1e8] sm:$0xff]
    %v639 = vld [vmem:[#allocation10 + $0x1f0] sm:$0xff]
    %v640 = vld [vmem:[#allocation10 + $0x1f8] sm:$0xff]
    %v641 = vld [vmem:[#allocation10 + $0x200] sm:$0xff]
    %v642 = vld [vmem:[#allocation10 + $0x208] sm:$0xff]
    %v643 = vld [vmem:[#allocation10 + $0x210] sm:$0xff]
    %v644 = vld [vmem:[#allocation10 + $0x218] sm:$0xff]
    %v645 = vld [vmem:[#allocation10 + $0x220] sm:$0xff]
    %v646 = vld [vmem:[#allocation10 + $0x228] sm:$0xff]
    %v647 = vld [vmem:[#allocation10 + $0x230] sm:$0xff]
    %v648 = vld [vmem:[#allocation10 + $0x238] sm:$0xff]
    %v649 = vld [vmem:[#allocation10 + $0x240] sm:$0xff]
    %v650 = vld [vmem:[#allocation10 + $0x248] sm:$0xff]
    %v651 = vld [vmem:[#allocation10 + $0x250] sm:$0xff]
    %v652 = vld [vmem:[#allocation10 + $0x258] sm:$0xff]
    %v653 = vld [vmem:[#allocation10 + $0x260] sm:$0xff]
    %v654 = vld [vmem:[#allocation10 + $0x268] sm:$0xff]
    %v655 = vld [vmem:[#allocation10 + $0x270] sm:$0xff]
    %v656 = vld [vmem:[#allocation10 + $0x278] sm:$0xff]
    %v657 = vld [vmem:[#allocation10 + $0x280] sm:$0xff]
    %v658 = vld [vmem:[#allocation10 + $0x288] sm:$0xff]
    %v659 = vld [vmem:[#allocation10 + $0x290] sm:$0xff]
    %v660 = vld [vmem:[#allocation10 + $0x298] sm:$0xff]
    %v661 = vld [vmem:[#allocation10 + $0x2a0] sm:$0xff]
    %v662 = vld [vmem:[#allocation10 + $0x2a8] sm:$0xff]
    %v663 = vld [vmem:[#allocation10 + $0x2b0] sm:$0xff]
    %v664 = vld [vmem:[#allocation10 + $0x2b8] sm:$0xff]
    %v665 = vld [vmem:[#allocation10 + $0x2c0] sm:$0xff]
    %v666 = vld [vmem:[#allocation10 + $0x2c8] sm:$0xff]
    %v667 = vld [vmem:[#allocation10 + $0x2d0] sm:$0xff]
    %v668 = vld [vmem:[#allocation10 + $0x2d8] sm:$0xff]
    %v669 = vld [vmem:[#allocation10 + $0x2e0] sm:$0xff]
    %v670 = vld [vmem:[#allocation10 + $0x2e8] sm:$0xff]
    %v671 = vld [vmem:[#allocation10 + $0x2f0] sm:$0xff]
    %v672 = vld [vmem:[#allocation10 + $0x2f8] sm:$0xff]
    %v673 = vld [vmem:[#allocation10 + $0x300] sm:$0xff]
    %v674 = vld [vmem:[#allocation10 + $0x308] sm:$0xff]
    %v675 = vld [vmem:[#allocation10 + $0x310] sm:$0xff]
    %v676 = vld [vmem:[#allocation10 + $0x318] sm:$0xff]
    %v677 = vld [vmem:[#allocation10 + $0x320] sm:$0xff]
    %v678 = vld [vmem:[#allocation10 + $0x328] sm:$0xff]
    %v679 = vld [vmem:[#allocation10 + $0x330] sm:$0xff]
    %v680 = vld [vmem:[#allocation10 + $0x338] sm:$0xff]
    %v681 = vld [vmem:[#allocation10 + $0x340] sm:$0xff]
    %v682 = vld [vmem:[#allocation10 + $0x348] sm:$0xff]
    %v683 = vld [vmem:[#allocation10 + $0x350] sm:$0xff]
    %v684 = vld [vmem:[#allocation10 + $0x358] sm:$0xff]
    %v685 = vld [vmem:[#allocation10 + $0x360] sm:$0xff]
    %v686 = vld [vmem:[#allocation10 + $0x368] sm:$0xff]
    %v687 = vld [vmem:[#allocation10 + $0x370] sm:$0xff]
    %v688 = vld [vmem:[#allocation10 + $0x378] sm:$0xff]
    %v689 = vld [vmem:[#allocation10 + $0x380] sm:$0xff]
    %v690 = vld [vmem:[#allocation10 + $0x388] sm:$0xff]
    %v691 = vld [vmem:[#allocation10 + $0x390] sm:$0xff]
    %v692 = vld [vmem:[#allocation10 + $0x398] sm:$0xff]
    %v693 = vld [vmem:[#allocation10 + $0x3a0] sm:$0xff]
    %v694 = vld [vmem:[#allocation10 + $0x3a8] sm:$0xff]
    %v695 = vld [vmem:[#allocation10 + $0x3b0] sm:$0xff]
    %v696 = vld [vmem:[#allocation10 + $0x3b8] sm:$0xff]
    %v697 = vld [vmem:[#allocation10 + $0x3c0] sm:$0xff]
    %v698 = vld [vmem:[#allocation10 + $0x3c8] sm:$0xff]
    %v699 = vld [vmem:[#allocation10 + $0x3d0] sm:$0xff]
    %v700 = vld [vmem:[#allocation10 + $0x3d8] sm:$0xff]
    %v701 = vld [vmem:[#allocation10 + $0x3e0] sm:$0xff]
    %v702 = vld [vmem:[#allocation10 + $0x3e8] sm:$0xff]
    %v703 = vld [vmem:[#allocation10 + $0x3f0] sm:$0xff]
    %v704 = vld [vmem:[#allocation10 + $0x3f8] sm:$0xff]
    %v705 = vld [vmem:[#allocation10 + $0x400] sm:$0xff]
    %v706 = vld [vmem:[#allocation10 + $0x408] sm:$0xff]
    %v707 = vld [vmem:[#allocation10 + $0x410] sm:$0xff]
    %v708 = vld [vmem:[#allocation10 + $0x418] sm:$0xff]
    %v709 = vld [vmem:[#allocation10 + $0x420] sm:$0xff]
    %v710 = vld [vmem:[#allocation10 + $0x428] sm:$0xff]
    %v711 = vld [vmem:[#allocation10 + $0x430] sm:$0xff]
    %v712 = vld [vmem:[#allocation10 + $0x438] sm:$0xff]
    %v713 = vld [vmem:[#allocation10 + $0x440] sm:$0xff]
    %v714 = vld [vmem:[#allocation10 + $0x448] sm:$0xff]
    %v715 = vld [vmem:[#allocation10 + $0x450] sm:$0xff]
    %v716 = vld [vmem:[#allocation10 + $0x458] sm:$0xff]
    %v717 = vld [vmem:[#allocation10 + $0x460] sm:$0xff]
    %v718 = vld [vmem:[#allocation10 + $0x468] sm:$0xff]
    %v719 = vld [vmem:[#allocation10 + $0x470] sm:$0xff]
    %v720 = vld [vmem:[#allocation10 + $0x478] sm:$0xff]
    %v721 = vld [vmem:[#allocation10 + $0x480] sm:$0xff]
    %v722 = vld [vmem:[#allocation10 + $0x488] sm:$0xff]
    %v723 = vld [vmem:[#allocation10 + $0x490] sm:$0xff]
    %v724 = vld [vmem:[#allocation10 + $0x498] sm:$0xff]
    %v725 = vld [vmem:[#allocation10 + $0x4a0] sm:$0xff]
    %v726 = vld [vmem:[#allocation10 + $0x4a8] sm:$0xff]
    %v727 = vld [vmem:[#allocation10 + $0x4b0] sm:$0xff]
    %v728 = vld [vmem:[#allocation10 + $0x4b8] sm:$0xff]
    %v729 = vld [vmem:[#allocation10 + $0x4c0] sm:$0xff]
    %v730 = vld [vmem:[#allocation10 + $0x4c8] sm:$0xff]
    %v731 = vld [vmem:[#allocation10 + $0x4d0] sm:$0xff]
    %v732 = vld [vmem:[#allocation10 + $0x4d8] sm:$0xff]
    %v733 = vld [vmem:[#allocation10 + $0x4e0] sm:$0xff]
    %v734 = vld [vmem:[#allocation10 + $0x4e8] sm:$0xff]
    %v735 = vld [vmem:[#allocation10 + $0x4f0] sm:$0xff]
    %v736 = vld [vmem:[#allocation10 + $0x4f8] sm:$0xff]
    %v737 = vld [vmem:[#allocation10 + $0x500] sm:$0xff]
    %v738 = vld [vmem:[#allocation10 + $0x508] sm:$0xff]
    %v739 = vld [vmem:[#allocation10 + $0x510] sm:$0xff]
    %v740 = vld [vmem:[#allocation10 + $0x518] sm:$0xff]
    %v741 = vld [vmem:[#allocation10 + $0x520] sm:$0xff]
    %v742 = vld [vmem:[#allocation10 + $0x528] sm:$0xff]
    %v743 = vld [vmem:[#allocation10 + $0x530] sm:$0xff]
    %v744 = vld [vmem:[#allocation10 + $0x538] sm:$0xff]
    %v745 = vld [vmem:[#allocation10 + $0x540] sm:$0xff]
    %v746 = vld [vmem:[#allocation10 + $0x548] sm:$0xff]
    %v747 = vld [vmem:[#allocation10 + $0x550] sm:$0xff]
    %v748 = vld [vmem:[#allocation10 + $0x558] sm:$0xff]
    %v749 = vld [vmem:[#allocation10 + $0x560] sm:$0xff]
    %v750 = vld [vmem:[#allocation10 + $0x568] sm:$0xff]
    %v751 = vld [vmem:[#allocation10 + $0x570] sm:$0xff]
    %v752 = vld [vmem:[#allocation10 + $0x578] sm:$0xff]
    %v753 = vld [vmem:[#allocation10 + $0x580] sm:$0xff]
    %v754 = vld [vmem:[#allocation10 + $0x588] sm:$0xff]
    %v755 = vld [vmem:[#allocation10 + $0x590] sm:$0xff]
    %v756 = vld [vmem:[#allocation10 + $0x598] sm:$0xff]
    %v757 = vld [vmem:[#allocation10 + $0x5a0] sm:$0xff]
    %v758 = vld [vmem:[#allocation10 + $0x5a8] sm:$0xff]
    %v759 = vld [vmem:[#allocation10 + $0x5b0] sm:$0xff]
    %v760 = vld [vmem:[#allocation10 + $0x5b8] sm:$0xff]
    %v761 = vld [vmem:[#allocation10 + $0x5c0] sm:$0xff]
    %v762 = vld [vmem:[#allocation10 + $0x5c8] sm:$0xff]
    %v763 = vld [vmem:[#allocation10 + $0x5d0] sm:$0xff]
    %v764 = vld [vmem:[#allocation10 + $0x5d8] sm:$0xff]
    %v765 = vld [vmem:[#allocation10 + $0x5e0] sm:$0xff]
    %v766 = vld [vmem:[#allocation10 + $0x5e8] sm:$0xff]
    %v767 = vld [vmem:[#allocation10 + $0x5f0] sm:$0xff]
    %v768 = vld [vmem:[#allocation10 + $0x5f8] sm:$0xff]
    %v769 = vld [vmem:[#allocation12] sm:$0x3]
    %s770 = smul.u32 0, 6
    %s771 = smul.addr %s770, 8
    %s772 = scalar_lea.vmem [#allocation2], %s771
    %v773 = vld [vmem:[%s772] sm:$0xff]
    %v774 = vld [vmem:[%s772 + $0x8] sm:$0xff]
    %v775 = vld [vmem:[%s772 + $0x10] sm:$0xff]
    %v776 = vld [vmem:[%s772 + $0x18] sm:$0xff]
    %v777 = vld [vmem:[%s772 + $0x20] sm:$0xff]
    %v778 = vld [vmem:[%s772 + $0x28] sm:$0xff]
    %779 = vmatpush.msra.mxu0 %v667
    %780 = vmatpush.msra.mxu0 %v661
    %781 = vmatpush.msra.mxu0 %v655
    %782 = vmatpush.msra.mxu0 %v649
    %783 = vmatpush.msra.mxu0 %v643
    %784 = vmatpush.msra.mxu0 %v637
    %785 = vmatpush.msra.mxu0 %v631
    %786 = vmatpush.msra.mxu0 %v625
    %787 = vmatpush.msra.mxu0 %v619
    %788 = vmatpush.msra.mxu0 %v613
    %789 = vmatpush.msra.mxu0 %v607
    %790 = vmatpush.msra.mxu0 %v601
    %791 = vmatpush.msra.mxu0 %v595
    %792 = vmatpush.msra.mxu0 %v589
    %793 = vmatpush.msra.mxu0 %v583
    %794 = vmatpush.msra.mxu0 %v577
    %795 = vmatmul.f32.gmra.mxu0 0.0
    %v796 = vpop.f32.mrf.mxu0
    %v797 = vadd.f32 0.0, %v796
    %798 = vdwg.mxu0
    %799 = vmatpush.msra.mxu0 %v763
    %800 = vmatpush.msra.mxu0 %v757
    %801 = vmatpush.msra.mxu0 %v751
    %802 = vmatpush.msra.mxu0 %v745
    %803 = vmatpush.msra.mxu0 %v739
    %804 = vmatpush.msra.mxu0 %v733
    %805 = vmatpush.msra.mxu0 %v727
    %806 = vmatpush.msra.mxu0 %v721
    %807 = vmatpush.msra.mxu0 %v715
    %808 = vmatpush.msra.mxu0 %v709
    %809 = vmatpush.msra.mxu0 %v703
    %810 = vmatpush.msra.mxu0 %v697
    %811 = vmatpush.msra.mxu0 %v691
    %812 = vmatpush.msra.mxu0 %v685
    %813 = vmatpush.msra.mxu0 %v679
    %814 = vmatpush.msra.mxu0 %v673
    %815 = vmatmul.f32.gmra.mxu0 0.0
    %v816 = vpop.f32.mrf.mxu0
    %v817 = vadd.f32 %v797, %v816
    %818 = vdwg.mxu0
    %819 = vmatpush.msra.mxu0 %v668
    %820 = vmatpush.msra.mxu0 %v662
    %821 = vmatpush.msra.mxu0 %v656
    %822 = vmatpush.msra.mxu0 %v650
    %823 = vmatpush.msra.mxu0 %v644
    %824 = vmatpush.msra.mxu0 %v638
    %825 = vmatpush.msra.mxu0 %v632
    %826 = vmatpush.msra.mxu0 %v626
    %827 = vmatpush.msra.mxu0 %v620
    %828 = vmatpush.msra.mxu0 %v614
    %829 = vmatpush.msra.mxu0 %v608
    %830 = vmatpush.msra.mxu0 %v602
    %831 = vmatpush.msra.mxu0 %v596
    %832 = vmatpush.msra.mxu0 %v590
    %833 = vmatpush.msra.mxu0 %v584
    %834 = vmatpush.msra.mxu0 %v578
    %835 = vmatmul.f32.gmra.mxu0 0.0
    %v836 = vpop.f32.mrf.mxu0
    %v837 = vadd.f32 0.0, %v836
    %838 = vdwg.mxu0
    %839 = vmatpush.msra.mxu0 %v764
    %840 = vmatpush.msra.mxu0 %v758
    %841 = vmatpush.msra.mxu0 %v752
    %842 = vmatpush.msra.mxu0 %v746
    %843 = vmatpush.msra.mxu0 %v740
    %844 = vmatpush.msra.mxu0 %v734
    %845 = vmatpush.msra.mxu0 %v728
    %846 = vmatpush.msra.mxu0 %v722
    %847 = vmatpush.msra.mxu0 %v716
    %848 = vmatpush.msra.mxu0 %v710
    %849 = vmatpush.msra.mxu0 %v704
    %850 = vmatpush.msra.mxu0 %v698
    %851 = vmatpush.msra.mxu0 %v692
    %852 = vmatpush.msra.mxu0 %v686
    %853 = vmatpush.msra.mxu0 %v680
    %854 = vmatpush.msra.mxu0 %v674
    %855 = vmatmul.f32.gmra.mxu0 0.0
    %v856 = vpop.f32.mrf.mxu0
    %v857 = vadd.f32 %v837, %v856
    %858 = vdwg.mxu0
    %859 = vmatpush.msra.mxu0 %v669
    %860 = vmatpush.msra.mxu0 %v663
    %861 = vmatpush.msra.mxu0 %v657
    %862 = vmatpush.msra.mxu0 %v651
    %863 = vmatpush.msra.mxu0 %v645
    %864 = vmatpush.msra.mxu0 %v639
    %865 = vmatpush.msra.mxu0 %v633
    %866 = vmatpush.msra.mxu0 %v627
    %867 = vmatpush.msra.mxu0 %v621
    %868 = vmatpush.msra.mxu0 %v615
    %869 = vmatpush.msra.mxu0 %v609
    %870 = vmatpush.msra.mxu0 %v603
    %871 = vmatpush.msra.mxu0 %v597
    %872 = vmatpush.msra.mxu0 %v591
    %873 = vmatpush.msra.mxu0 %v585
    %874 = vmatpush.msra.mxu0 %v579
    %875 = vmatmul.f32.gmra.mxu0 0.0
    %v876 = vpop.f32.mrf.mxu0
    %v877 = vadd.f32 0.0, %v876
    %878 = vdwg.mxu0
    %879 = vmatpush.msra.mxu0 %v765
    %880 = vmatpush.msra.mxu0 %v759
    %881 = vmatpush.msra.mxu0 %v753
    %882 = vmatpush.msra.mxu0 %v747
    %883 = vmatpush.msra.mxu0 %v741
    %884 = vmatpush.msra.mxu0 %v735
    %885 = vmatpush.msra.mxu0 %v729
    %886 = vmatpush.msra.mxu0 %v723
    %887 = vmatpush.msra.mxu0 %v717
    %888 = vmatpush.msra.mxu0 %v711
    %889 = vmatpush.msra.mxu0 %v705
    %890 = vmatpush.msra.mxu0 %v699
    %891 = vmatpush.msra.mxu0 %v693
    %892 = vmatpush.msra.mxu0 %v687
    %893 = vmatpush.msra.mxu0 %v681
    %894 = vmatpush.msra.mxu0 %v675
    %895 = vmatmul.f32.gmra.mxu0 0.0
    %v896 = vpop.f32.mrf.mxu0
    %v897 = vadd.f32 %v877, %v896
    %898 = vdwg.mxu0
    %899 = vmatpush.msra.mxu0 %v670
    %900 = vmatpush.msra.mxu0 %v664
    %901 = vmatpush.msra.mxu0 %v658
    %902 = vmatpush.msra.mxu0 %v652
    %903 = vmatpush.msra.mxu0 %v646
    %904 = vmatpush.msra.mxu0 %v640
    %905 = vmatpush.msra.mxu0 %v634
    %906 = vmatpush.msra.mxu0 %v628
    %907 = vmatpush.msra.mxu0 %v622
    %908 = vmatpush.msra.mxu0 %v616
    %909 = vmatpush.msra.mxu0 %v610
    %910 = vmatpush.msra.mxu0 %v604
    %911 = vmatpush.msra.mxu0 %v598
    %912 = vmatpush.msra.mxu0 %v592
    %913 = vmatpush.msra.mxu0 %v586
    %914 = vmatpush.msra.mxu0 %v580
    %915 = vmatmul.f32.gmra.mxu0 0.0
    %v916 = vpop.f32.mrf.mxu0
    %v917 = vadd.f32 0.0, %v916
    %918 = vdwg.mxu0
    %919 = vmatpush.msra.mxu0 %v766
    %920 = vmatpush.msra.mxu0 %v760
    %921 = vmatpush.msra.mxu0 %v754
    %922 = vmatpush.msra.mxu0 %v748
    %923 = vmatpush.msra.mxu0 %v742
    %924 = vmatpush.msra.mxu0 %v736
    %925 = vmatpush.msra.mxu0 %v730
    %926 = vmatpush.msra.mxu0 %v724
    %927 = vmatpush.msra.mxu0 %v718
    %928 = vmatpush.msra.mxu0 %v712
    %929 = vmatpush.msra.mxu0 %v706
    %930 = vmatpush.msra.mxu0 %v700
    %931 = vmatpush.msra.mxu0 %v694
    %932 = vmatpush.msra.mxu0 %v688
    %933 = vmatpush.msra.mxu0 %v682
    %934 = vmatpush.msra.mxu0 %v676
    %935 = vmatmul.f32.gmra.mxu0 0.0
    %v936 = vpop.f32.mrf.mxu0
    %v937 = vadd.f32 %v917, %v936
    %938 = vdwg.mxu0
    %939 = vmatpush.msra.mxu0 %v671
    %940 = vmatpush.msra.mxu0 %v665
    %941 = vmatpush.msra.mxu0 %v659
    %942 = vmatpush.msra.mxu0 %v653
    %943 = vmatpush.msra.mxu0 %v647
    %944 = vmatpush.msra.mxu0 %v641
    %945 = vmatpush.msra.mxu0 %v635
    %946 = vmatpush.msra.mxu0 %v629
    %947 = vmatpush.msra.mxu0 %v623
    %948 = vmatpush.msra.mxu0 %v617
    %949 = vmatpush.msra.mxu0 %v611
    %950 = vmatpush.msra.mxu0 %v605
    %951 = vmatpush.msra.mxu0 %v599
    %952 = vmatpush.msra.mxu0 %v593
    %953 = vmatpush.msra.mxu0 %v587
    %954 = vmatpush.msra.mxu0 %v581
    %955 = vmatmul.f32.gmra.mxu0 0.0
    %v956 = vpop.f32.mrf.mxu0
    %v957 = vadd.f32 0.0, %v956
    %958 = vdwg.mxu0
    %959 = vmatpush.msra.mxu0 %v767
    %960 = vmatpush.msra.mxu0 %v761
    %961 = vmatpush.msra.mxu0 %v755
    %962 = vmatpush.msra.mxu0 %v749
    %963 = vmatpush.msra.mxu0 %v743
    %964 = vmatpush.msra.mxu0 %v737
    %965 = vmatpush.msra.mxu0 %v731
    %966 = vmatpush.msra.mxu0 %v725
    %967 = vmatpush.msra.mxu0 %v719
    %968 = vmatpush.msra.mxu0 %v713
    %969 = vmatpush.msra.mxu0 %v707
    %970 = vmatpush.msra.mxu0 %v701
    %971 = vmatpush.msra.mxu0 %v695
    %972 = vmatpush.msra.mxu0 %v689
    %973 = vmatpush.msra.mxu0 %v683
    %974 = vmatpush.msra.mxu0 %v677
    %975 = vmatmul.f32.gmra.mxu0 0.0
    %v976 = vpop.f32.mrf.mxu0
    %v977 = vadd.f32 %v957, %v976
    %978 = vdwg.mxu0
    %979 = vmatpush.msra.mxu0 %v672
    %980 = vmatpush.msra.mxu0 %v666
    %981 = vmatpush.msra.mxu0 %v660
    %982 = vmatpush.msra.mxu0 %v654
    %983 = vmatpush.msra.mxu0 %v648
    %984 = vmatpush.msra.mxu0 %v642
    %985 = vmatpush.msra.mxu0 %v636
    %986 = vmatpush.msra.mxu0 %v630
    %987 = vmatpush.msra.mxu0 %v624
    %988 = vmatpush.msra.mxu0 %v618
    %989 = vmatpush.msra.mxu0 %v612
    %990 = vmatpush.msra.mxu0 %v606
    %991 = vmatpush.msra.mxu0 %v600
    %992 = vmatpush.msra.mxu0 %v594
    %993 = vmatpush.msra.mxu0 %v588
    %994 = vmatpush.msra.mxu0 %v582
    %995 = vmatmul.f32.gmra.mxu0 0.0
    %v996 = vpop.f32.mrf.mxu0
    %v997 = vadd.f32 0.0, %v996
    %998 = vdwg.mxu0
    %999 = vmatpush.msra.mxu0 %v768
    %1000 = vmatpush.msra.mxu0 %v762
    %1001 = vmatpush.msra.mxu0 %v756
    %1002 = vmatpush.msra.mxu0 %v750
    %1003 = vmatpush.msra.mxu0 %v744
    %1004 = vmatpush.msra.mxu0 %v738
    %1005 = vmatpush.msra.mxu0 %v732
    %1006 = vmatpush.msra.mxu0 %v726
    %1007 = vmatpush.msra.mxu0 %v720
    %1008 = vmatpush.msra.mxu0 %v714
    %1009 = vmatpush.msra.mxu0 %v708
    %1010 = vmatpush.msra.mxu0 %v702
    %1011 = vmatpush.msra.mxu0 %v696
    %1012 = vmatpush.msra.mxu0 %v690
    %1013 = vmatpush.msra.mxu0 %v684
    %1014 = vmatpush.msra.mxu0 %v678
    %1015 = vmatmul.f32.gmra.mxu0 0.0
    %v1016 = vpop.f32.mrf.mxu0
    %v1017 = vadd.f32 %v997, %v1016
    %1018 = vdwg.mxu0
    %v1019 = vadd.f32 %v773, %v817
    %v1020 = vadd.f32 %v774, %v857
    %v1021 = vadd.f32 %v775, %v897
    %v1022 = vadd.f32 %v776, %v937
    %v1023 = vxor.u32 %v1019, 2147483648
    %v1024 = vxor.u32 %v1020, 2147483648
    %v1025 = vxor.u32 %v1021, 2147483648
    %v1026 = vxor.u32 %v1022, 2147483648
    %v1027 = vmul.f32 %v1023, 1.442695
    %v1028 = vpow.pop %v1027
    %v1029 = vmul.f32 %v1024, 1.442695
    %v1030 = vpow.pop %v1029
    %v1031 = vmul.f32 %v1025, 1.442695
    %v1032 = vpow.pop %v1031
    %v1033 = vmul.f32 %v1026, 1.442695
    %v1034 = vpow.pop %v1033
    %v1035 = vadd.f32 %v1028, 1.0
    %v1036 = vadd.f32 %v1030, 1.0
    %v1037 = vadd.f32 %v1032, 1.0
    %v1038 = vadd.f32 %v1034, 1.0
    %v1039 = vrcp.pop %v1035
    %v1040 = vmul.f32 %v1035, %v1039
    %v1041 = vsub.f32 1.0, %v1040
    %v1042 = vmul.f32 %v1039, %v1041
    %v1043 = vadd.f32 %v1039, %v1042
    %vm1044 = vweird.f32 %v1035
    %vm1045 = vweird.f32 %v1039
    %vm1046 = vmor %vm1044, %vm1045
    %v1047 = vsel %vm1046, %v1039, %v1043
    %v1048 = vand.u32 2147483647, %v1035
    %vm1049 = vcmp.eq.f32.partialorder %v1048, 8.507059e+37
    %v1050 = vand.u32 %v1035, 2147483648
    %v1051 = vor.u32 1.1754944e-38, %v1050
    %v1052 = vsel %vm1049, %v1051, %v1047
    %v1053 = vmul.f32 1.0, %v1052
    %v1054 = vrcp.pop %v1036
    %v1055 = vmul.f32 %v1036, %v1054
    %v1056 = vsub.f32 1.0, %v1055
    %v1057 = vmul.f32 %v1054, %v1056
    %v1058 = vadd.f32 %v1054, %v1057
    %vm1059 = vweird.f32 %v1036
    %vm1060 = vweird.f32 %v1054
    %vm1061 = vmor %vm1059, %vm1060
    %v1062 = vsel %vm1061, %v1054, %v1058
    %v1063 = vand.u32 2147483647, %v1036
    %vm1064 = vcmp.eq.f32.partialorder %v1063, 8.507059e+37
    %v1065 = vand.u32 %v1036, 2147483648
    %v1066 = vor.u32 1.1754944e-38, %v1065
    %v1067 = vsel %vm1064, %v1066, %v1062
    %v1068 = vmul.f32 1.0, %v1067
    %v1069 = vrcp.pop %v1037
    %v1070 = vmul.f32 %v1037, %v1069
    %v1071 = vsub.f32 1.0, %v1070
    %v1072 = vmul.f32 %v1069, %v1071
    %v1073 = vadd.f32 %v1069, %v1072
    %vm1074 = vweird.f32 %v1037
    %vm1075 = vweird.f32 %v1069
    %vm1076 = vmor %vm1074, %vm1075
    %v1077 = vsel %vm1076, %v1069, %v1073
    %v1078 = vand.u32 2147483647, %v1037
    %vm1079 = vcmp.eq.f32.partialorder %v1078, 8.507059e+37
    %v1080 = vand.u32 %v1037, 2147483648
    %v1081 = vor.u32 1.1754944e-38, %v1080
    %v1082 = vsel %vm1079, %v1081, %v1077
    %v1083 = vmul.f32 1.0, %v1082
    %v1084 = vrcp.pop %v1038
    %v1085 = vmul.f32 %v1038, %v1084
    %v1086 = vsub.f32 1.0, %v1085
    %v1087 = vmul.f32 %v1084, %v1086
    %v1088 = vadd.f32 %v1084, %v1087
    %vm1089 = vweird.f32 %v1038
    %vm1090 = vweird.f32 %v1084
    %vm1091 = vmor %vm1089, %vm1090
    %v1092 = vsel %vm1091, %v1084, %v1088
    %v1093 = vand.u32 2147483647, %v1038
    %vm1094 = vcmp.eq.f32.partialorder %v1093, 8.507059e+37
    %v1095 = vand.u32 %v1038, 2147483648
    %v1096 = vor.u32 1.1754944e-38, %v1095
    %v1097 = vsel %vm1094, %v1096, %v1092
    %v1098 = vmul.f32 1.0, %v1097
    %v1100 = vperm.slane %v769, 0
    %v1101 = vperm.slane %v769, 1
    %v1104 = vadd.f32 %v977, %v1100
    %v1105 = vadd.f32 %v1017, %v1101
    %v1106 = vmul.f32 %v1053, %v1104
    %v1107 = vmul.f32 %v1068, %v1105
    %v1108 = vadd.f32 %v777, %v1106
    %v1109 = vadd.f32 %v778, %v1107
    %v1110 = vtanh.pop %v1108
    %v1111 = vtanh.pop %v1109
    %v1112 = vsub.f32 1.0, %v1083
    %v1113 = vsub.f32 1.0, %v1098
    %v1114 = vmul.f32 %v1112, %v1110
    %v1115 = vmul.f32 %v1113, %v1111
    %v1116 = vmul.f32 %v1083, 0.0
    %v1117 = vmul.f32 %v1098, 0.0
    %v1118 = vadd.f32 %v1114, %v1116
    %v1119 = vadd.f32 %v1115, %v1117
    %s1120 = smul.u32 0, 4
    %s1121 = smul.addr %s1120, 8
    %s1122 = scalar_lea.vmem [#allocation3], %s1121
    %1123 = vst [vmem:[%s1122] sm:$0xff] %v1118
    %s1124 = smul.u32 7, 4
    %s1125 = smul.addr %s1124, 8
    %s1126 = scalar_lea.vmem [#allocation3], %s1125
    %1127 = vst [vmem:[%s1126 + $0x8] sm:$0xff] %v1119
    %1128 = vst [vmem:[%s1126 + $0x10] sm:$0xff] %v1118
    %1129 = vst [vmem:[%s1122 + $0x18] sm:$0xff] %v1119
    %s1130 = smul.u32 1, 6
    %s1131 = smul.addr %s1130, 8
    %s1132 = scalar_lea.vmem [#allocation2], %s1131
    %v1133 = vld [vmem:[%s1132] sm:$0xff]
    %v1134 = vld [vmem:[%s1132 + $0x8] sm:$0xff]
    %v1135 = vld [vmem:[%s1132 + $0x10] sm:$0xff]
    %v1136 = vld [vmem:[%s1132 + $0x18] sm:$0xff]
    %v1137 = vld [vmem:[%s1132 + $0x20] sm:$0xff]
    %v1138 = vld [vmem:[%s1132 + $0x28] sm:$0xff]
    %1139 = vmatpush.msra.mxu0 %v667
    %1140 = vmatpush.msra.mxu0 %v661
    %1141 = vmatpush.msra.mxu0 %v655
    %1142 = vmatpush.msra.mxu0 %v649
    %1143 = vmatpush.msra.mxu0 %v643
    %1144 = vmatpush.msra.mxu0 %v637
    %1145 = vmatpush.msra.mxu0 %v631
    %1146 = vmatpush.msra.mxu0 %v625
    %1147 = vmatpush.msra.mxu0 %v619
    %1148 = vmatpush.msra.mxu0 %v613
    %1149 = vmatpush.msra.mxu0 %v607
    %1150 = vmatpush.msra.mxu0 %v601
    %1151 = vmatpush.msra.mxu0 %v595
    %1152 = vmatpush.msra.mxu0 %v589
    %1153 = vmatpush.msra.mxu0 %v583
    %1154 = vmatpush.msra.mxu0 %v577
    %1155 = vmatmul.f32.gmra.mxu0 %v1118
    %v1156 = vpop.f32.mrf.mxu0
    %v1157 = vadd.f32 0.0, %v1156
    %1158 = vdwg.mxu0
    %1159 = vmatpush.msra.mxu0 %v763
    %1160 = vmatpush.msra.mxu0 %v757
    %1161 = vmatpush.msra.mxu0 %v751
    %1162 = vmatpush.msra.mxu0 %v745
    %1163 = vmatpush.msra.mxu0 %v739
    %1164 = vmatpush.msra.mxu0 %v733
    %1165 = vmatpush.msra.mxu0 %v727
    %1166 = vmatpush.msra.mxu0 %v721
    %1167 = vmatpush.msra.mxu0 %v715
    %1168 = vmatpush.msra.mxu0 %v709
    %1169 = vmatpush.msra.mxu0 %v703
    %1170 = vmatpush.msra.mxu0 %v697
    %1171 = vmatpush.msra.mxu0 %v691
    %1172 = vmatpush.msra.mxu0 %v685
    %1173 = vmatpush.msra.mxu0 %v679
    %1174 = vmatpush.msra.mxu0 %v673
    %1175 = vmatmul.f32.gmra.mxu0 %v1119
    %v1176 = vpop.f32.mrf.mxu0
    %v1177 = vadd.f32 %v1157, %v1176
    %1178 = vdwg.mxu0
    %1179 = vmatpush.msra.mxu0 %v668
    %1180 = vmatpush.msra.mxu0 %v662
    %1181 = vmatpush.msra.mxu0 %v656
    %1182 = vmatpush.msra.mxu0 %v650
    %1183 = vmatpush.msra.mxu0 %v644
    %1184 = vmatpush.msra.mxu0 %v638
    %1185 = vmatpush.msra.mxu0 %v632
    %1186 = vmatpush.msra.mxu0 %v626
    %1187 = vmatpush.msra.mxu0 %v620
    %1188 = vmatpush.msra.mxu0 %v614
    %1189 = vmatpush.msra.mxu0 %v608
    %1190 = vmatpush.msra.mxu0 %v602
    %1191 = vmatpush.msra.mxu0 %v596
    %1192 = vmatpush.msra.mxu0 %v590
    %1193 = vmatpush.msra.mxu0 %v584
    %1194 = vmatpush.msra.mxu0 %v578
    %1195 = vmatmul.f32.gmra.mxu0 %v1118
    %v1196 = vpop.f32.mrf.mxu0
    %v1197 = vadd.f32 0.0, %v1196
    %1198 = vdwg.mxu0
    %1199 = vmatpush.msra.mxu0 %v764
    %1200 = vmatpush.msra.mxu0 %v758
    %1201 = vmatpush.msra.mxu0 %v752
    %1202 = vmatpush.msra.mxu0 %v746
    %1203 = vmatpush.msra.mxu0 %v740
    %1204 = vmatpush.msra.mxu0 %v734
    %1205 = vmatpush.msra.mxu0 %v728
    %1206 = vmatpush.msra.mxu0 %v722
    %1207 = vmatpush.msra.mxu0 %v716
    %1208 = vmatpush.msra.mxu0 %v710
    %1209 = vmatpush.msra.mxu0 %v704
    %1210 = vmatpush.msra.mxu0 %v698
    %1211 = vmatpush.msra.mxu0 %v692
    %1212 = vmatpush.msra.mxu0 %v686
    %1213 = vmatpush.msra.mxu0 %v680
    %1214 = vmatpush.msra.mxu0 %v674
    %1215 = vmatmul.f32.gmra.mxu0 %v1119
    %v1216 = vpop.f32.mrf.mxu0
    %v1217 = vadd.f32 %v1197, %v1216
    %1218 = vdwg.mxu0
    %1219 = vmatpush.msra.mxu0 %v669
    %1220 = vmatpush.msra.mxu0 %v663
    %1221 = vmatpush.msra.mxu0 %v657
    %1222 = vmatpush.msra.mxu0 %v651
    %1223 = vmatpush.msra.mxu0 %v645
    %1224 = vmatpush.msra.mxu0 %v639
    %1225 = vmatpush.msra.mxu0 %v633
    %1226 = vmatpush.msra.mxu0 %v627
    %1227 = vmatpush.msra.mxu0 %v621
    %1228 = vmatpush.msra.mxu0 %v615
    %1229 = vmatpush.msra.mxu0 %v609
    %1230 = vmatpush.msra.mxu0 %v603
    %1231 = vmatpush.msra.mxu0 %v597
    %1232 = vmatpush.msra.mxu0 %v591
    %1233 = vmatpush.msra.mxu0 %v585
    %1234 = vmatpush.msra.mxu0 %v579
    %1235 = vmatmul.f32.gmra.mxu0 %v1118
    %v1236 = vpop.f32.mrf.mxu0
    %v1237 = vadd.f32 0.0, %v1236
    %1238 = vdwg.mxu0
    %1239 = vmatpush.msra.mxu0 %v765
    %1240 = vmatpush.msra.mxu0 %v759
    %1241 = vmatpush.msra.mxu0 %v753
    %1242 = vmatpush.msra.mxu0 %v747
    %1243 = vmatpush.msra.mxu0 %v741
    %1244 = vmatpush.msra.mxu0 %v735
    %1245 = vmatpush.msra.mxu0 %v729
    %1246 = vmatpush.msra.mxu0 %v723
    %1247 = vmatpush.msra.mxu0 %v717
    %1248 = vmatpush.msra.mxu0 %v711
    %1249 = vmatpush.msra.mxu0 %v705
    %1250 = vmatpush.msra.mxu0 %v699
    %1251 = vmatpush.msra.mxu0 %v693
    %1252 = vmatpush.msra.mxu0 %v687
    %1253 = vmatpush.msra.mxu0 %v681
    %1254 = vmatpush.msra.mxu0 %v675
    %1255 = vmatmul.f32.gmra.mxu0 %v1119
    %v1256 = vpop.f32.mrf.mxu0
    %v1257 = vadd.f32 %v1237, %v1256
    %1258 = vdwg.mxu0
    %1259 = vmatpush.msra.mxu0 %v670
    %1260 = vmatpush.msra.mxu0 %v664
    %1261 = vmatpush.msra.mxu0 %v658
    %1262 = vmatpush.msra.mxu0 %v652
    %1263 = vmatpush.msra.mxu0 %v646
    %1264 = vmatpush.msra.mxu0 %v640
    %1265 = vmatpush.msra.mxu0 %v634
    %1266 = vmatpush.msra.mxu0 %v628
    %1267 = vmatpush.msra.mxu0 %v622
    %1268 = vmatpush.msra.mxu0 %v616
    %1269 = vmatpush.msra.mxu0 %v610
    %1270 = vmatpush.msra.mxu0 %v604
    %1271 = vmatpush.msra.mxu0 %v598
    %1272 = vmatpush.msra.mxu0 %v592
    %1273 = vmatpush.msra.mxu0 %v586
    %1274 = vmatpush.msra.mxu0 %v580
    %1275 = vmatmul.f32.gmra.mxu0 %v1118
    %v1276 = vpop.f32.mrf.mxu0
    %v1277 = vadd.f32 0.0, %v1276
    %1278 = vdwg.mxu0
    %1279 = vmatpush.msra.mxu0 %v766
    %1280 = vmatpush.msra.mxu0 %v760
    %1281 = vmatpush.msra.mxu0 %v754
    %1282 = vmatpush.msra.mxu0 %v748
    %1283 = vmatpush.msra.mxu0 %v742
    %1284 = vmatpush.msra.mxu0 %v736
    %1285 = vmatpush.msra.mxu0 %v730
    %1286 = vmatpush.msra.mxu0 %v724
    %1287 = vmatpush.msra.mxu0 %v718
    %1288 = vmatpush.msra.mxu0 %v712
    %1289 = vmatpush.msra.mxu0 %v706
    %1290 = vmatpush.msra.mxu0 %v700
    %1291 = vmatpush.msra.mxu0 %v694
    %1292 = vmatpush.msra.mxu0 %v688
    %1293 = vmatpush.msra.mxu0 %v682
    %1294 = vmatpush.msra.mxu0 %v676
    %1295 = vmatmul.f32.gmra.mxu0 %v1119
    %v1296 = vpop.f32.mrf.mxu0
    %v1297 = vadd.f32 %v1277, %v1296
    %1298 = vdwg.mxu0
    %1299 = vmatpush.msra.mxu0 %v671
    %1300 = vmatpush.msra.mxu0 %v665
    %1301 = vmatpush.msra.mxu0 %v659
    %1302 = vmatpush.msra.mxu0 %v653
    %1303 = vmatpush.msra.mxu0 %v647
    %1304 = vmatpush.msra.mxu0 %v641
    %1305 = vmatpush.msra.mxu0 %v635
    %1306 = vmatpush.msra.mxu0 %v629
    %1307 = vmatpush.msra.mxu0 %v623
    %1308 = vmatpush.msra.mxu0 %v617
    %1309 = vmatpush.msra.mxu0 %v611
    %1310 = vmatpush.msra.mxu0 %v605
    %1311 = vmatpush.msra.mxu0 %v599
    %1312 = vmatpush.msra.mxu0 %v593
    %1313 = vmatpush.msra.mxu0 %v587
    %1314 = vmatpush.msra.mxu0 %v581
    %1315 = vmatmul.f32.gmra.mxu0 %v1118
    %v1316 = vpop.f32.mrf.mxu0
    %v1317 = vadd.f32 0.0, %v1316
    %1318 = vdwg.mxu0
    %1319 = vmatpush.msra.mxu0 %v767
    %1320 = vmatpush.msra.mxu0 %v761
    %1321 = vmatpush.msra.mxu0 %v755
    %1322 = vmatpush.msra.mxu0 %v749
    %1323 = vmatpush.msra.mxu0 %v743
    %1324 = vmatpush.msra.mxu0 %v737
    %1325 = vmatpush.msra.mxu0 %v731
    %1326 = vmatpush.msra.mxu0 %v725
    %1327 = vmatpush.msra.mxu0 %v719
    %1328 = vmatpush.msra.mxu0 %v713
    %1329 = vmatpush.msra.mxu0 %v707
    %1330 = vmatpush.msra.mxu0 %v701
    %1331 = vmatpush.msra.mxu0 %v695
    %1332 = vmatpush.msra.mxu0 %v689
    %1333 = vmatpush.msra.mxu0 %v683
    %1334 = vmatpush.msra.mxu0 %v677
    %1335 = vmatmul.f32.gmra.mxu0 %v1119
    %v1336 = vpop.f32.mrf.mxu0
    %v1337 = vadd.f32 %v1317, %v1336
    %1338 = vdwg.mxu0
    %1339 = vmatpush.msra.mxu0 %v672
    %1340 = vmatpush.msra.mxu0 %v666
    %1341 = vmatpush.msra.mxu0 %v660
    %1342 = vmatpush.msra.mxu0 %v654
    %1343 = vmatpush.msra.mxu0 %v648
    %1344 = vmatpush.msra.mxu0 %v642
    %1345 = vmatpush.msra.mxu0 %v636
    %1346 = vmatpush.msra.mxu0 %v630
    %1347 = vmatpush.msra.mxu0 %v624
    %1348 = vmatpush.msra.mxu0 %v618
    %1349 = vmatpush.msra.mxu0 %v612
    %1350 = vmatpush.msra.mxu0 %v606
    %1351 = vmatpush.msra.mxu0 %v600
    %1352 = vmatpush.msra.mxu0 %v594
    %1353 = vmatpush.msra.mxu0 %v588
    %1354 = vmatpush.msra.mxu0 %v582
    %1355 = vmatmul.f32.gmra.mxu0 %v1118
    %v1356 = vpop.f32.mrf.mxu0
    %v1357 = vadd.f32 0.0, %v1356
    %1358 = vdwg.mxu0
    %1359 = vmatpush.msra.mxu0 %v768
    %1360 = vmatpush.msra.mxu0 %v762
    %1361 = vmatpush.msra.mxu0 %v756
    %1362 = vmatpush.msra.mxu0 %v750
    %1363 = vmatpush.msra.mxu0 %v744
    %1364 = vmatpush.msra.mxu0 %v738
    %1365 = vmatpush.msra.mxu0 %v732
    %1366 = vmatpush.msra.mxu0 %v726
    %1367 = vmatpush.msra.mxu0 %v720
    %1368 = vmatpush.msra.mxu0 %v714
    %1369 = vmatpush.msra.mxu0 %v708
    %1370 = vmatpush.msra.mxu0 %v702
    %1371 = vmatpush.msra.mxu0 %v696
    %1372 = vmatpush.msra.mxu0 %v690
    %1373 = vmatpush.msra.mxu0 %v684
    %1374 = vmatpush.msra.mxu0 %v678
    %1375 = vmatmul.f32.gmra.mxu0 %v1119
    %v1376 = vpop.f32.mrf.mxu0
    %v1377 = vadd.f32 %v1357, %v1376
    %1378 = vdwg.mxu0
    %v1379 = vadd.f32 %v1133, %v1177
    %v1380 = vadd.f32 %v1134, %v1217
    %v1381 = vadd.f32 %v1135, %v1257
    %v1382 = vadd.f32 %v1136, %v1297
    %v1383 = vxor.u32 %v1379, 2147483648
    %v1384 = vxor.u32 %v1380, 2147483648
    %v1385 = vxor.u32 %v1381, 2147483648
    %v1386 = vxor.u32 %v1382, 2147483648
    %v1387 = vmul.f32 %v1383, 1.442695
    %v1388 = vpow.pop %v1387
    %v1389 = vmul.f32 %v1384, 1.442695
    %v1390 = vpow.pop %v1389
    %v1391 = vmul.f32 %v1385, 1.442695
    %v1392 = vpow.pop %v1391
    %v1393 = vmul.f32 %v1386, 1.442695
    %v1394 = vpow.pop %v1393
    %v1395 = vadd.f32 %v1388, 1.0
    %v1396 = vadd.f32 %v1390, 1.0
    %v1397 = vadd.f32 %v1392, 1.0
    %v1398 = vadd.f32 %v1394, 1.0
    %v1399 = vrcp.pop %v1395
    %v1400 = vmul.f32 %v1395, %v1399
    %v1401 = vsub.f32 1.0, %v1400
    %v1402 = vmul.f32 %v1399, %v1401
    %v1403 = vadd.f32 %v1399, %v1402
    %vm1404 = vweird.f32 %v1395
    %vm1405 = vweird.f32 %v1399
    %vm1406 = vmor %vm1404, %vm1405
    %v1407 = vsel %vm1406, %v1399, %v1403
    %v1408 = vand.u32 2147483647, %v1395
    %vm1409 = vcmp.eq.f32.partialorder %v1408, 8.507059e+37
    %v1410 = vand.u32 %v1395, 2147483648
    %v1411 = vor.u32 1.1754944e-38, %v1410
    %v1412 = vsel %vm1409, %v1411, %v1407
    %v1413 = vmul.f32 1.0, %v1412
    %v1414 = vrcp.pop %v1396
    %v1415 = vmul.f32 %v1396, %v1414
    %v1416 = vsub.f32 1.0, %v1415
    %v1417 = vmul.f32 %v1414, %v1416
    %v1418 = vadd.f32 %v1414, %v1417
    %vm1419 = vweird.f32 %v1396
    %vm1420 = vweird.f32 %v1414
    %vm1421 = vmor %vm1419, %vm1420
    %v1422 = vsel %vm1421, %v1414, %v1418
    %v1423 = vand.u32 2147483647, %v1396
    %vm1424 = vcmp.eq.f32.partialorder %v1423, 8.507059e+37
    %v1425 = vand.u32 %v1396, 2147483648
    %v1426 = vor.u32 1.1754944e-38, %v1425
    %v1427 = vsel %vm1424, %v1426, %v1422
    %v1428 = vmul.f32 1.0, %v1427
    %v1429 = vrcp.pop %v1397
    %v1430 = vmul.f32 %v1397, %v1429
    %v1431 = vsub.f32 1.0, %v1430
    %v1432 = vmul.f32 %v1429, %v1431
    %v1433 = vadd.f32 %v1429, %v1432
    %vm1434 = vweird.f32 %v1397
    %vm1435 = vweird.f32 %v1429
    %vm1436 = vmor %vm1434, %vm1435
    %v1437 = vsel %vm1436, %v1429, %v1433
    %v1438 = vand.u32 2147483647, %v1397
    %vm1439 = vcmp.eq.f32.partialorder %v1438, 8.507059e+37
    %v1440 = vand.u32 %v1397, 2147483648
    %v1441 = vor.u32 1.1754944e-38, %v1440
    %v1442 = vsel %vm1439, %v1441, %v1437
    %v1443 = vmul.f32 1.0, %v1442
    %v1444 = vrcp.pop %v1398
    %v1445 = vmul.f32 %v1398, %v1444
    %v1446 = vsub.f32 1.0, %v1445
    %v1447 = vmul.f32 %v1444, %v1446
    %v1448 = vadd.f32 %v1444, %v1447
    %vm1449 = vweird.f32 %v1398
    %vm1450 = vweird.f32 %v1444
    %vm1451 = vmor %vm1449, %vm1450
    %v1452 = vsel %vm1451, %v1444, %v1448
    %v1453 = vand.u32 2147483647, %v1398
    %vm1454 = vcmp.eq.f32.partialorder %v1453, 8.507059e+37
    %v1455 = vand.u32 %v1398, 2147483648
    %v1456 = vor.u32 1.1754944e-38, %v1455
    %v1457 = vsel %vm1454, %v1456, %v1452
    %v1458 = vmul.f32 1.0, %v1457
    %v1459 = vadd.f32 %v1337, %v1100
    %v1460 = vadd.f32 %v1377, %v1101
    %v1461 = vmul.f32 %v1413, %v1459
    %v1462 = vmul.f32 %v1428, %v1460
    %v1463 = vadd.f32 %v1137, %v1461
    %v1464 = vadd.f32 %v1138, %v1462
    %v1465 = vtanh.pop %v1463
    %v1466 = vtanh.pop %v1464
    %v1467 = vsub.f32 1.0, %v1443
    %v1468 = vsub.f32 1.0, %v1458
    %v1469 = vmul.f32 %v1467, %v1465
    %v1470 = vmul.f32 %v1468, %v1466
    %v1471 = vmul.f32 %v1443, %v1118
    %v1472 = vmul.f32 %v1458, %v1119
    %v1473 = vadd.f32 %v1469, %v1471
    %v1474 = vadd.f32 %v1470, %v1472
    %s1475 = smul.u32 1, 4
    %s1476 = smul.addr %s1475, 8
    %s1477 = scalar_lea.vmem [#allocation3], %s1476
    %1478 = vst [vmem:[%s1477] sm:$0xff] %v1473
    %s1479 = smul.u32 6, 4
    %s1480 = smul.addr %s1479, 8
    %s1481 = scalar_lea.vmem [#allocation3], %s1480
    %1482 = vst [vmem:[%s1481 + $0x8] sm:$0xff] %v1474
    %1483 = vst [vmem:[%s1481 + $0x10] sm:$0xff] %v1473
    %1484 = vst [vmem:[%s1477 + $0x18] sm:$0xff] %v1474
    %s1485 = smul.u32 2, 6
    %s1486 = smul.addr %s1485, 8
    %s1487 = scalar_lea.vmem [#allocation2], %s1486
    %v1488 = vld [vmem:[%s1487] sm:$0xff]
    %v1489 = vld [vmem:[%s1487 + $0x8] sm:$0xff]
    %v1490 = vld [vmem:[%s1487 + $0x10] sm:$0xff]
    %v1491 = vld [vmem:[%s1487 + $0x18] sm:$0xff]
    %v1492 = vld [vmem:[%s1487 + $0x20] sm:$0xff]
    %v1493 = vld [vmem:[%s1487 + $0x28] sm:$0xff]
    %1494 = vmatpush.msra.mxu0 %v667
    %1495 = vmatpush.msra.mxu0 %v661
    %1496 = vmatpush.msra.mxu0 %v655
    %1497 = vmatpush.msra.mxu0 %v649
    %1498 = vmatpush.msra.mxu0 %v643
    %1499 = vmatpush.msra.mxu0 %v637
    %1500 = vmatpush.msra.mxu0 %v631
    %1501 = vmatpush.msra.mxu0 %v625
    %1502 = vmatpush.msra.mxu0 %v619
    %1503 = vmatpush.msra.mxu0 %v613
    %1504 = vmatpush.msra.mxu0 %v607
    %1505 = vmatpush.msra.mxu0 %v601
    %1506 = vmatpush.msra.mxu0 %v595
    %1507 = vmatpush.msra.mxu0 %v589
    %1508 = vmatpush.msra.mxu0 %v583
    %1509 = vmatpush.msra.mxu0 %v577
    %1510 = vmatmul.f32.gmra.mxu0 %v1473
    %v1511 = vpop.f32.mrf.mxu0
    %v1512 = vadd.f32 0.0, %v1511
    %1513 = vdwg.mxu0
    %1514 = vmatpush.msra.mxu0 %v763
    %1515 = vmatpush.msra.mxu0 %v757
    %1516 = vmatpush.msra.mxu0 %v751
    %1517 = vmatpush.msra.mxu0 %v745
    %1518 = vmatpush.msra.mxu0 %v739
    %1519 = vmatpush.msra.mxu0 %v733
    %1520 = vmatpush.msra.mxu0 %v727
    %1521 = vmatpush.msra.mxu0 %v721
    %1522 = vmatpush.msra.mxu0 %v715
    %1523 = vmatpush.msra.mxu0 %v709
    %1524 = vmatpush.msra.mxu0 %v703
    %1525 = vmatpush.msra.mxu0 %v697
    %1526 = vmatpush.msra.mxu0 %v691
    %1527 = vmatpush.msra.mxu0 %v685
    %1528 = vmatpush.msra.mxu0 %v679
    %1529 = vmatpush.msra.mxu0 %v673
    %1530 = vmatmul.f32.gmra.mxu0 %v1474
    %v1531 = vpop.f32.mrf.mxu0
    %v1532 = vadd.f32 %v1512, %v1531
    %1533 = vdwg.mxu0
    %1534 = vmatpush.msra.mxu0 %v668
    %1535 = vmatpush.msra.mxu0 %v662
    %1536 = vmatpush.msra.mxu0 %v656
    %1537 = vmatpush.msra.mxu0 %v650
    %1538 = vmatpush.msra.mxu0 %v644
    %1539 = vmatpush.msra.mxu0 %v638
    %1540 = vmatpush.msra.mxu0 %v632
    %1541 = vmatpush.msra.mxu0 %v626
    %1542 = vmatpush.msra.mxu0 %v620
    %1543 = vmatpush.msra.mxu0 %v614
    %1544 = vmatpush.msra.mxu0 %v608
    %1545 = vmatpush.msra.mxu0 %v602
    %1546 = vmatpush.msra.mxu0 %v596
    %1547 = vmatpush.msra.mxu0 %v590
    %1548 = vmatpush.msra.mxu0 %v584
    %1549 = vmatpush.msra.mxu0 %v578
    %1550 = vmatmul.f32.gmra.mxu0 %v1473
    %v1551 = vpop.f32.mrf.mxu0
    %v1552 = vadd.f32 0.0, %v1551
    %1553 = vdwg.mxu0
    %1554 = vmatpush.msra.mxu0 %v764
    %1555 = vmatpush.msra.mxu0 %v758
    %1556 = vmatpush.msra.mxu0 %v752
    %1557 = vmatpush.msra.mxu0 %v746
    %1558 = vmatpush.msra.mxu0 %v740
    %1559 = vmatpush.msra.mxu0 %v734
    %1560 = vmatpush.msra.mxu0 %v728
    %1561 = vmatpush.msra.mxu0 %v722
    %1562 = vmatpush.msra.mxu0 %v716
    %1563 = vmatpush.msra.mxu0 %v710
    %1564 = vmatpush.msra.mxu0 %v704
    %1565 = vmatpush.msra.mxu0 %v698
    %1566 = vmatpush.msra.mxu0 %v692
    %1567 = vmatpush.msra.mxu0 %v686
    %1568 = vmatpush.msra.mxu0 %v680
    %1569 = vmatpush.msra.mxu0 %v674
    %1570 = vmatmul.f32.gmra.mxu0 %v1474
    %v1571 = vpop.f32.mrf.mxu0
    %v1572 = vadd.f32 %v1552, %v1571
    %1573 = vdwg.mxu0
    %1574 = vmatpush.msra.mxu0 %v669
    %1575 = vmatpush.msra.mxu0 %v663
    %1576 = vmatpush.msra.mxu0 %v657
    %1577 = vmatpush.msra.mxu0 %v651
    %1578 = vmatpush.msra.mxu0 %v645
    %1579 = vmatpush.msra.mxu0 %v639
    %1580 = vmatpush.msra.mxu0 %v633
    %1581 = vmatpush.msra.mxu0 %v627
    %1582 = vmatpush.msra.mxu0 %v621
    %1583 = vmatpush.msra.mxu0 %v615
    %1584 = vmatpush.msra.mxu0 %v609
    %1585 = vmatpush.msra.mxu0 %v603
    %1586 = vmatpush.msra.mxu0 %v597
    %1587 = vmatpush.msra.mxu0 %v591
    %1588 = vmatpush.msra.mxu0 %v585
    %1589 = vmatpush.msra.mxu0 %v579
    %1590 = vmatmul.f32.gmra.mxu0 %v1473
    %v1591 = vpop.f32.mrf.mxu0
    %v1592 = vadd.f32 0.0, %v1591
    %1593 = vdwg.mxu0
    %1594 = vmatpush.msra.mxu0 %v765
    %1595 = vmatpush.msra.mxu0 %v759
    %1596 = vmatpush.msra.mxu0 %v753
    %1597 = vmatpush.msra.mxu0 %v747
    %1598 = vmatpush.msra.mxu0 %v741
    %1599 = vmatpush.msra.mxu0 %v735
    %1600 = vmatpush.msra.mxu0 %v729
    %1601 = vmatpush.msra.mxu0 %v723
    %1602 = vmatpush.msra.mxu0 %v717
    %1603 = vmatpush.msra.mxu0 %v711
    %1604 = vmatpush.msra.mxu0 %v705
    %1605 = vmatpush.msra.mxu0 %v699
    %1606 = vmatpush.msra.mxu0 %v693
    %1607 = vmatpush.msra.mxu0 %v687
    %1608 = vmatpush.msra.mxu0 %v681
    %1609 = vmatpush.msra.mxu0 %v675
    %1610 = vmatmul.f32.gmra.mxu0 %v1474
    %v1611 = vpop.f32.mrf.mxu0
    %v1612 = vadd.f32 %v1592, %v1611
    %1613 = vdwg.mxu0
    %1614 = vmatpush.msra.mxu0 %v670
    %1615 = vmatpush.msra.mxu0 %v664
    %1616 = vmatpush.msra.mxu0 %v658
    %1617 = vmatpush.msra.mxu0 %v652
    %1618 = vmatpush.msra.mxu0 %v646
    %1619 = vmatpush.msra.mxu0 %v640
    %1620 = vmatpush.msra.mxu0 %v634
    %1621 = vmatpush.msra.mxu0 %v628
    %1622 = vmatpush.msra.mxu0 %v622
    %1623 = vmatpush.msra.mxu0 %v616
    %1624 = vmatpush.msra.mxu0 %v610
    %1625 = vmatpush.msra.mxu0 %v604
    %1626 = vmatpush.msra.mxu0 %v598
    %1627 = vmatpush.msra.mxu0 %v592
    %1628 = vmatpush.msra.mxu0 %v586
    %1629 = vmatpush.msra.mxu0 %v580
    %1630 = vmatmul.f32.gmra.mxu0 %v1473
    %v1631 = vpop.f32.mrf.mxu0
    %v1632 = vadd.f32 0.0, %v1631
    %1633 = vdwg.mxu0
    %1634 = vmatpush.msra.mxu0 %v766
    %1635 = vmatpush.msra.mxu0 %v760
    %1636 = vmatpush.msra.mxu0 %v754
    %1637 = vmatpush.msra.mxu0 %v748
    %1638 = vmatpush.msra.mxu0 %v742
    %1639 = vmatpush.msra.mxu0 %v736
    %1640 = vmatpush.msra.mxu0 %v730
    %1641 = vmatpush.msra.mxu0 %v724
    %1642 = vmatpush.msra.mxu0 %v718
    %1643 = vmatpush.msra.mxu0 %v712
    %1644 = vmatpush.msra.mxu0 %v706
    %1645 = vmatpush.msra.mxu0 %v700
    %1646 = vmatpush.msra.mxu0 %v694
    %1647 = vmatpush.msra.mxu0 %v688
    %1648 = vmatpush.msra.mxu0 %v682
    %1649 = vmatpush.msra.mxu0 %v676
    %1650 = vmatmul.f32.gmra.mxu0 %v1474
    %v1651 = vpop.f32.mrf.mxu0
    %v1652 = vadd.f32 %v1632, %v1651
    %1653 = vdwg.mxu0
    %1654 = vmatpush.msra.mxu0 %v671
    %1655 = vmatpush.msra.mxu0 %v665
    %1656 = vmatpush.msra.mxu0 %v659
    %1657 = vmatpush.msra.mxu0 %v653
    %1658 = vmatpush.msra.mxu0 %v647
    %1659 = vmatpush.msra.mxu0 %v641
    %1660 = vmatpush.msra.mxu0 %v635
    %1661 = vmatpush.msra.mxu0 %v629
    %1662 = vmatpush.msra.mxu0 %v623
    %1663 = vmatpush.msra.mxu0 %v617
    %1664 = vmatpush.msra.mxu0 %v611
    %1665 = vmatpush.msra.mxu0 %v605
    %1666 = vmatpush.msra.mxu0 %v599
    %1667 = vmatpush.msra.mxu0 %v593
    %1668 = vmatpush.msra.mxu0 %v587
    %1669 = vmatpush.msra.mxu0 %v581
    %1670 = vmatmul.f32.gmra.mxu0 %v1473
    %v1671 = vpop.f32.mrf.mxu0
    %v1672 = vadd.f32 0.0, %v1671
    %1673 = vdwg.mxu0
    %1674 = vmatpush.msra.mxu0 %v767
    %1675 = vmatpush.msra.mxu0 %v761
    %1676 = vmatpush.msra.mxu0 %v755
    %1677 = vmatpush.msra.mxu0 %v749
    %1678 = vmatpush.msra.mxu0 %v743
    %1679 = vmatpush.msra.mxu0 %v737
    %1680 = vmatpush.msra.mxu0 %v731
    %1681 = vmatpush.msra.mxu0 %v725
    %1682 = vmatpush.msra.mxu0 %v719
    %1683 = vmatpush.msra.mxu0 %v713
    %1684 = vmatpush.msra.mxu0 %v707
    %1685 = vmatpush.msra.mxu0 %v701
    %1686 = vmatpush.msra.mxu0 %v695
    %1687 = vmatpush.msra.mxu0 %v689
    %1688 = vmatpush.msra.mxu0 %v683
    %1689 = vmatpush.msra.mxu0 %v677
    %1690 = vmatmul.f32.gmra.mxu0 %v1474
    %v1691 = vpop.f32.mrf.mxu0
    %v1692 = vadd.f32 %v1672, %v1691
    %1693 = vdwg.mxu0
    %1694 = vmatpush.msra.mxu0 %v672
    %1695 = vmatpush.msra.mxu0 %v666
    %1696 = vmatpush.msra.mxu0 %v660
    %1697 = vmatpush.msra.mxu0 %v654
    %1698 = vmatpush.msra.mxu0 %v648
    %1699 = vmatpush.msra.mxu0 %v642
    %1700 = vmatpush.msra.mxu0 %v636
    %1701 = vmatpush.msra.mxu0 %v630
    %1702 = vmatpush.msra.mxu0 %v624
    %1703 = vmatpush.msra.mxu0 %v618
    %1704 = vmatpush.msra.mxu0 %v612
    %1705 = vmatpush.msra.mxu0 %v606
    %1706 = vmatpush.msra.mxu0 %v600
    %1707 = vmatpush.msra.mxu0 %v594
    %1708 = vmatpush.msra.mxu0 %v588
    %1709 = vmatpush.msra.mxu0 %v582
    %1710 = vmatmul.f32.gmra.mxu0 %v1473
    %v1711 = vpop.f32.mrf.mxu0
    %v1712 = vadd.f32 0.0, %v1711
    %1713 = vdwg.mxu0
    %1714 = vmatpush.msra.mxu0 %v768
    %1715 = vmatpush.msra.mxu0 %v762
    %1716 = vmatpush.msra.mxu0 %v756
    %1717 = vmatpush.msra.mxu0 %v750
    %1718 = vmatpush.msra.mxu0 %v744
    %1719 = vmatpush.msra.mxu0 %v738
    %1720 = vmatpush.msra.mxu0 %v732
    %1721 = vmatpush.msra.mxu0 %v726
    %1722 = vmatpush.msra.mxu0 %v720
    %1723 = vmatpush.msra.mxu0 %v714
    %1724 = vmatpush.msra.mxu0 %v708
    %1725 = vmatpush.msra.mxu0 %v702
    %1726 = vmatpush.msra.mxu0 %v696
    %1727 = vmatpush.msra.mxu0 %v690
    %1728 = vmatpush.msra.mxu0 %v684
    %1729 = vmatpush.msra.mxu0 %v678
    %1730 = vmatmul.f32.gmra.mxu0 %v1474
    %v1731 = vpop.f32.mrf.mxu0
    %v1732 = vadd.f32 %v1712, %v1731
    %1733 = vdwg.mxu0
    %v1734 = vadd.f32 %v1488, %v1532
    %v1735 = vadd.f32 %v1489, %v1572
    %v1736 = vadd.f32 %v1490, %v1612
    %v1737 = vadd.f32 %v1491, %v1652
    %v1738 = vxor.u32 %v1734, 2147483648
    %v1739 = vxor.u32 %v1735, 2147483648
    %v1740 = vxor.u32 %v1736, 2147483648
    %v1741 = vxor.u32 %v1737, 2147483648
    %v1742 = vmul.f32 %v1738, 1.442695
    %v1743 = vpow.pop %v1742
    %v1744 = vmul.f32 %v1739, 1.442695
    %v1745 = vpow.pop %v1744
    %v1746 = vmul.f32 %v1740, 1.442695
    %v1747 = vpow.pop %v1746
    %v1748 = vmul.f32 %v1741, 1.442695
    %v1749 = vpow.pop %v1748
    %v1750 = vadd.f32 %v1743, 1.0
    %v1751 = vadd.f32 %v1745, 1.0
    %v1752 = vadd.f32 %v1747, 1.0
    %v1753 = vadd.f32 %v1749, 1.0
    %v1754 = vrcp.pop %v1750
    %v1755 = vmul.f32 %v1750, %v1754
    %v1756 = vsub.f32 1.0, %v1755
    %v1757 = vmul.f32 %v1754, %v1756
    %v1758 = vadd.f32 %v1754, %v1757
    %vm1759 = vweird.f32 %v1750
    %vm1760 = vweird.f32 %v1754
    %vm1761 = vmor %vm1759, %vm1760
    %v1762 = vsel %vm1761, %v1754, %v1758
    %v1763 = vand.u32 2147483647, %v1750
    %vm1764 = vcmp.eq.f32.partialorder %v1763, 8.507059e+37
    %v1765 = vand.u32 %v1750, 2147483648
    %v1766 = vor.u32 1.1754944e-38, %v1765
    %v1767 = vsel %vm1764, %v1766, %v1762
    %v1768 = vmul.f32 1.0, %v1767
    %v1769 = vrcp.pop %v1751
    %v1770 = vmul.f32 %v1751, %v1769
    %v1771 = vsub.f32 1.0, %v1770
    %v1772 = vmul.f32 %v1769, %v1771
    %v1773 = vadd.f32 %v1769, %v1772
    %vm1774 = vweird.f32 %v1751
    %vm1775 = vweird.f32 %v1769
    %vm1776 = vmor %vm1774, %vm1775
    %v1777 = vsel %vm1776, %v1769, %v1773
    %v1778 = vand.u32 2147483647, %v1751
    %vm1779 = vcmp.eq.f32.partialorder %v1778, 8.507059e+37
    %v1780 = vand.u32 %v1751, 2147483648
    %v1781 = vor.u32 1.1754944e-38, %v1780
    %v1782 = vsel %vm1779, %v1781, %v1777
    %v1783 = vmul.f32 1.0, %v1782
    %v1784 = vrcp.pop %v1752
    %v1785 = vmul.f32 %v1752, %v1784
    %v1786 = vsub.f32 1.0, %v1785
    %v1787 = vmul.f32 %v1784, %v1786
    %v1788 = vadd.f32 %v1784, %v1787
    %vm1789 = vweird.f32 %v1752
    %vm1790 = vweird.f32 %v1784
    %vm1791 = vmor %vm1789, %vm1790
    %v1792 = vsel %vm1791, %v1784, %v1788
    %v1793 = vand.u32 2147483647, %v1752
    %vm1794 = vcmp.eq.f32.partialorder %v1793, 8.507059e+37
    %v1795 = vand.u32 %v1752, 2147483648
    %v1796 = vor.u32 1.1754944e-38, %v1795
    %v1797 = vsel %vm1794, %v1796, %v1792
    %v1798 = vmul.f32 1.0, %v1797
    %v1799 = vrcp.pop %v1753
    %v1800 = vmul.f32 %v1753, %v1799
    %v1801 = vsub.f32 1.0, %v1800
    %v1802 = vmul.f32 %v1799, %v1801
    %v1803 = vadd.f32 %v1799, %v1802
    %vm1804 = vweird.f32 %v1753
    %vm1805 = vweird.f32 %v1799
    %vm1806 = vmor %vm1804, %vm1805
    %v1807 = vsel %vm1806, %v1799, %v1803
    %v1808 = vand.u32 2147483647, %v1753
    %vm1809 = vcmp.eq.f32.partialorder %v1808, 8.507059e+37
    %v1810 = vand.u32 %v1753, 2147483648
    %v1811 = vor.u32 1.1754944e-38, %v1810
    %v1812 = vsel %vm1809, %v1811, %v1807
    %v1813 = vmul.f32 1.0, %v1812
    %v1814 = vadd.f32 %v1692, %v1100
    %v1815 = vadd.f32 %v1732, %v1101
    %v1816 = vmul.f32 %v1768, %v1814
    %v1817 = vmul.f32 %v1783, %v1815
    %v1818 = vadd.f32 %v1492, %v1816
    %v1819 = vadd.f32 %v1493, %v1817
    %v1820 = vtanh.pop %v1818
    %v1821 = vtanh.pop %v1819
    %v1822 = vsub.f32 1.0, %v1798
    %v1823 = vsub.f32 1.0, %v1813
    %v1824 = vmul.f32 %v1822, %v1820
    %v1825 = vmul.f32 %v1823, %v1821
    %v1826 = vmul.f32 %v1798, %v1473
    %v1827 = vmul.f32 %v1813, %v1474
    %v1828 = vadd.f32 %v1824, %v1826
    %v1829 = vadd.f32 %v1825, %v1827
    %s1830 = smul.u32 2, 4
    %s1831 = smul.addr %s1830, 8
    %s1832 = scalar_lea.vmem [#allocation3], %s1831
    %1833 = vst [vmem:[%s1832] sm:$0xff] %v1828
    %s1834 = smul.u32 5, 4
    %s1835 = smul.addr %s1834, 8
    %s1836 = scalar_lea.vmem [#allocation3], %s1835
    %1837 = vst [vmem:[%s1836 + $0x8] sm:$0xff] %v1829
    %1838 = vst [vmem:[%s1836 + $0x10] sm:$0xff] %v1828
    %1839 = vst [vmem:[%s1832 + $0x18] sm:$0xff] %v1829
    %s1840 = smul.u32 3, 6
    %s1841 = smul.addr %s1840, 8
    %s1842 = scalar_lea.vmem [#allocation2], %s1841
    %v1843 = vld [vmem:[%s1842] sm:$0xff]
    %v1844 = vld [vmem:[%s1842 + $0x8] sm:$0xff]
    %v1845 = vld [vmem:[%s1842 + $0x10] sm:$0xff]
    %v1846 = vld [vmem:[%s1842 + $0x18] sm:$0xff]
    %v1847 = vld [vmem:[%s1842 + $0x20] sm:$0xff]
    %v1848 = vld [vmem:[%s1842 + $0x28] sm:$0xff]
    %1849 = vmatpush.msra.mxu0 %v667
    %1850 = vmatpush.msra.mxu0 %v661
    %1851 = vmatpush.msra.mxu0 %v655
    %1852 = vmatpush.msra.mxu0 %v649
    %1853 = vmatpush.msra.mxu0 %v643
    %1854 = vmatpush.msra.mxu0 %v637
    %1855 = vmatpush.msra.mxu0 %v631
    %1856 = vmatpush.msra.mxu0 %v625
    %1857 = vmatpush.msra.mxu0 %v619
    %1858 = vmatpush.msra.mxu0 %v613
    %1859 = vmatpush.msra.mxu0 %v607
    %1860 = vmatpush.msra.mxu0 %v601
    %1861 = vmatpush.msra.mxu0 %v595
    %1862 = vmatpush.msra.mxu0 %v589
    %1863 = vmatpush.msra.mxu0 %v583
    %1864 = vmatpush.msra.mxu0 %v577
    %1865 = vmatmul.f32.gmra.mxu0 %v1828
    %v1866 = vpop.f32.mrf.mxu0
    %v1867 = vadd.f32 0.0, %v1866
    %1868 = vdwg.mxu0
    %1869 = vmatpush.msra.mxu0 %v763
    %1870 = vmatpush.msra.mxu0 %v757
    %1871 = vmatpush.msra.mxu0 %v751
    %1872 = vmatpush.msra.mxu0 %v745
    %1873 = vmatpush.msra.mxu0 %v739
    %1874 = vmatpush.msra.mxu0 %v733
    %1875 = vmatpush.msra.mxu0 %v727
    %1876 = vmatpush.msra.mxu0 %v721
    %1877 = vmatpush.msra.mxu0 %v715
    %1878 = vmatpush.msra.mxu0 %v709
    %1879 = vmatpush.msra.mxu0 %v703
    %1880 = vmatpush.msra.mxu0 %v697
    %1881 = vmatpush.msra.mxu0 %v691
    %1882 = vmatpush.msra.mxu0 %v685
    %1883 = vmatpush.msra.mxu0 %v679
    %1884 = vmatpush.msra.mxu0 %v673
    %1885 = vmatmul.f32.gmra.mxu0 %v1829
    %v1886 = vpop.f32.mrf.mxu0
    %v1887 = vadd.f32 %v1867, %v1886
    %1888 = vdwg.mxu0
    %1889 = vmatpush.msra.mxu0 %v668
    %1890 = vmatpush.msra.mxu0 %v662
    %1891 = vmatpush.msra.mxu0 %v656
    %1892 = vmatpush.msra.mxu0 %v650
    %1893 = vmatpush.msra.mxu0 %v644
    %1894 = vmatpush.msra.mxu0 %v638
    %1895 = vmatpush.msra.mxu0 %v632
    %1896 = vmatpush.msra.mxu0 %v626
    %1897 = vmatpush.msra.mxu0 %v620
    %1898 = vmatpush.msra.mxu0 %v614
    %1899 = vmatpush.msra.mxu0 %v608
    %1900 = vmatpush.msra.mxu0 %v602
    %1901 = vmatpush.msra.mxu0 %v596
    %1902 = vmatpush.msra.mxu0 %v590
    %1903 = vmatpush.msra.mxu0 %v584
    %1904 = vmatpush.msra.mxu0 %v578
    %1905 = vmatmul.f32.gmra.mxu0 %v1828
    %v1906 = vpop.f32.mrf.mxu0
    %v1907 = vadd.f32 0.0, %v1906
    %1908 = vdwg.mxu0
    %1909 = vmatpush.msra.mxu0 %v764
    %1910 = vmatpush.msra.mxu0 %v758
    %1911 = vmatpush.msra.mxu0 %v752
    %1912 = vmatpush.msra.mxu0 %v746
    %1913 = vmatpush.msra.mxu0 %v740
    %1914 = vmatpush.msra.mxu0 %v734
    %1915 = vmatpush.msra.mxu0 %v728
    %1916 = vmatpush.msra.mxu0 %v722
    %1917 = vmatpush.msra.mxu0 %v716
    %1918 = vmatpush.msra.mxu0 %v710
    %1919 = vmatpush.msra.mxu0 %v704
    %1920 = vmatpush.msra.mxu0 %v698
    %1921 = vmatpush.msra.mxu0 %v692
    %1922 = vmatpush.msra.mxu0 %v686
    %1923 = vmatpush.msra.mxu0 %v680
    %1924 = vmatpush.msra.mxu0 %v674
    %1925 = vmatmul.f32.gmra.mxu0 %v1829
    %v1926 = vpop.f32.mrf.mxu0
    %v1927 = vadd.f32 %v1907, %v1926
    %1928 = vdwg.mxu0
    %1929 = vmatpush.msra.mxu0 %v669
    %1930 = vmatpush.msra.mxu0 %v663
    %1931 = vmatpush.msra.mxu0 %v657
    %1932 = vmatpush.msra.mxu0 %v651
    %1933 = vmatpush.msra.mxu0 %v645
    %1934 = vmatpush.msra.mxu0 %v639
    %1935 = vmatpush.msra.mxu0 %v633
    %1936 = vmatpush.msra.mxu0 %v627
    %1937 = vmatpush.msra.mxu0 %v621
    %1938 = vmatpush.msra.mxu0 %v615
    %1939 = vmatpush.msra.mxu0 %v609
    %1940 = vmatpush.msra.mxu0 %v603
    %1941 = vmatpush.msra.mxu0 %v597
    %1942 = vmatpush.msra.mxu0 %v591
    %1943 = vmatpush.msra.mxu0 %v585
    %1944 = vmatpush.msra.mxu0 %v579
    %1945 = vmatmul.f32.gmra.mxu0 %v1828
    %v1946 = vpop.f32.mrf.mxu0
    %v1947 = vadd.f32 0.0, %v1946
    %1948 = vdwg.mxu0
    %1949 = vmatpush.msra.mxu0 %v765
    %1950 = vmatpush.msra.mxu0 %v759
    %1951 = vmatpush.msra.mxu0 %v753
    %1952 = vmatpush.msra.mxu0 %v747
    %1953 = vmatpush.msra.mxu0 %v741
    %1954 = vmatpush.msra.mxu0 %v735
    %1955 = vmatpush.msra.mxu0 %v729
    %1956 = vmatpush.msra.mxu0 %v723
    %1957 = vmatpush.msra.mxu0 %v717
    %1958 = vmatpush.msra.mxu0 %v711
    %1959 = vmatpush.msra.mxu0 %v705
    %1960 = vmatpush.msra.mxu0 %v699
    %1961 = vmatpush.msra.mxu0 %v693
    %1962 = vmatpush.msra.mxu0 %v687
    %1963 = vmatpush.msra.mxu0 %v681
    %1964 = vmatpush.msra.mxu0 %v675
    %1965 = vmatmul.f32.gmra.mxu0 %v1829
    %v1966 = vpop.f32.mrf.mxu0
    %v1967 = vadd.f32 %v1947, %v1966
    %1968 = vdwg.mxu0
    %1969 = vmatpush.msra.mxu0 %v670
    %1970 = vmatpush.msra.mxu0 %v664
    %1971 = vmatpush.msra.mxu0 %v658
    %1972 = vmatpush.msra.mxu0 %v652
    %1973 = vmatpush.msra.mxu0 %v646
    %1974 = vmatpush.msra.mxu0 %v640
    %1975 = vmatpush.msra.mxu0 %v634
    %1976 = vmatpush.msra.mxu0 %v628
    %1977 = vmatpush.msra.mxu0 %v622
    %1978 = vmatpush.msra.mxu0 %v616
    %1979 = vmatpush.msra.mxu0 %v610
    %1980 = vmatpush.msra.mxu0 %v604
    %1981 = vmatpush.msra.mxu0 %v598
    %1982 = vmatpush.msra.mxu0 %v592
    %1983 = vmatpush.msra.mxu0 %v586
    %1984 = vmatpush.msra.mxu0 %v580
    %1985 = vmatmul.f32.gmra.mxu0 %v1828
    %v1986 = vpop.f32.mrf.mxu0
    %v1987 = vadd.f32 0.0, %v1986
    %1988 = vdwg.mxu0
    %1989 = vmatpush.msra.mxu0 %v766
    %1990 = vmatpush.msra.mxu0 %v760
    %1991 = vmatpush.msra.mxu0 %v754
    %1992 = vmatpush.msra.mxu0 %v748
    %1993 = vmatpush.msra.mxu0 %v742
    %1994 = vmatpush.msra.mxu0 %v736
    %1995 = vmatpush.msra.mxu0 %v730
    %1996 = vmatpush.msra.mxu0 %v724
    %1997 = vmatpush.msra.mxu0 %v718
    %1998 = vmatpush.msra.mxu0 %v712
    %1999 = vmatpush.msra.mxu0 %v706
    %2000 = vmatpush.msra.mxu0 %v700
    %2001 = vmatpush.msra.mxu0 %v694
    %2002 = vmatpush.msra.mxu0 %v688
    %2003 = vmatpush.msra.mxu0 %v682
    %2004 = vmatpush.msra.mxu0 %v676
    %2005 = vmatmul.f32.gmra.mxu0 %v1829
    %v2006 = vpop.f32.mrf.mxu0
    %v2007 = vadd.f32 %v1987, %v2006
    %2008 = vdwg.mxu0
    %2009 = vmatpush.msra.mxu0 %v671
    %2010 = vmatpush.msra.mxu0 %v665
    %2011 = vmatpush.msra.mxu0 %v659
    %2012 = vmatpush.msra.mxu0 %v653
    %2013 = vmatpush.msra.mxu0 %v647
    %2014 = vmatpush.msra.mxu0 %v641
    %2015 = vmatpush.msra.mxu0 %v635
    %2016 = vmatpush.msra.mxu0 %v629
    %2017 = vmatpush.msra.mxu0 %v623
    %2018 = vmatpush.msra.mxu0 %v617
    %2019 = vmatpush.msra.mxu0 %v611
    %2020 = vmatpush.msra.mxu0 %v605
    %2021 = vmatpush.msra.mxu0 %v599
    %2022 = vmatpush.msra.mxu0 %v593
    %2023 = vmatpush.msra.mxu0 %v587
    %2024 = vmatpush.msra.mxu0 %v581
    %2025 = vmatmul.f32.gmra.mxu0 %v1828
    %v2026 = vpop.f32.mrf.mxu0
    %v2027 = vadd.f32 0.0, %v2026
    %2028 = vdwg.mxu0
    %2029 = vmatpush.msra.mxu0 %v767
    %2030 = vmatpush.msra.mxu0 %v761
    %2031 = vmatpush.msra.mxu0 %v755
    %2032 = vmatpush.msra.mxu0 %v749
    %2033 = vmatpush.msra.mxu0 %v743
    %2034 = vmatpush.msra.mxu0 %v737
    %2035 = vmatpush.msra.mxu0 %v731
    %2036 = vmatpush.msra.mxu0 %v725
    %2037 = vmatpush.msra.mxu0 %v719
    %2038 = vmatpush.msra.mxu0 %v713
    %2039 = vmatpush.msra.mxu0 %v707
    %2040 = vmatpush.msra.mxu0 %v701
    %2041 = vmatpush.msra.mxu0 %v695
    %2042 = vmatpush.msra.mxu0 %v689
    %2043 = vmatpush.msra.mxu0 %v683
    %2044 = vmatpush.msra.mxu0 %v677
    %2045 = vmatmul.f32.gmra.mxu0 %v1829
    %v2046 = vpop.f32.mrf.mxu0
    %v2047 = vadd.f32 %v2027, %v2046
    %2048 = vdwg.mxu0
    %2049 = vmatpush.msra.mxu0 %v672
    %2050 = vmatpush.msra.mxu0 %v666
    %2051 = vmatpush.msra.mxu0 %v660
    %2052 = vmatpush.msra.mxu0 %v654
    %2053 = vmatpush.msra.mxu0 %v648
    %2054 = vmatpush.msra.mxu0 %v642
    %2055 = vmatpush.msra.mxu0 %v636
    %2056 = vmatpush.msra.mxu0 %v630
    %2057 = vmatpush.msra.mxu0 %v624
    %2058 = vmatpush.msra.mxu0 %v618
    %2059 = vmatpush.msra.mxu0 %v612
    %2060 = vmatpush.msra.mxu0 %v606
    %2061 = vmatpush.msra.mxu0 %v600
    %2062 = vmatpush.msra.mxu0 %v594
    %2063 = vmatpush.msra.mxu0 %v588
    %2064 = vmatpush.msra.mxu0 %v582
    %2065 = vmatmul.f32.gmra.mxu0 %v1828
    %v2066 = vpop.f32.mrf.mxu0
    %v2067 = vadd.f32 0.0, %v2066
    %2068 = vdwg.mxu0
    %2069 = vmatpush.msra.mxu0 %v768
    %2070 = vmatpush.msra.mxu0 %v762
    %2071 = vmatpush.msra.mxu0 %v756
    %2072 = vmatpush.msra.mxu0 %v750
    %2073 = vmatpush.msra.mxu0 %v744
    %2074 = vmatpush.msra.mxu0 %v738
    %2075 = vmatpush.msra.mxu0 %v732
    %2076 = vmatpush.msra.mxu0 %v726
    %2077 = vmatpush.msra.mxu0 %v720
    %2078 = vmatpush.msra.mxu0 %v714
    %2079 = vmatpush.msra.mxu0 %v708
    %2080 = vmatpush.msra.mxu0 %v702
    %2081 = vmatpush.msra.mxu0 %v696
    %2082 = vmatpush.msra.mxu0 %v690
    %2083 = vmatpush.msra.mxu0 %v684
    %2084 = vmatpush.msra.mxu0 %v678
    %2085 = vmatmul.f32.gmra.mxu0 %v1829
    %v2086 = vpop.f32.mrf.mxu0
    %v2087 = vadd.f32 %v2067, %v2086
    %2088 = vdwg.mxu0
    %v2089 = vadd.f32 %v1843, %v1887
    %v2090 = vadd.f32 %v1844, %v1927
    %v2091 = vadd.f32 %v1845, %v1967
    %v2092 = vadd.f32 %v1846, %v2007
    %v2093 = vxor.u32 %v2089, 2147483648
    %v2094 = vxor.u32 %v2090, 2147483648
    %v2095 = vxor.u32 %v2091, 2147483648
    %v2096 = vxor.u32 %v2092, 2147483648
    %v2097 = vmul.f32 %v2093, 1.442695
    %v2098 = vpow.pop %v2097
    %v2099 = vmul.f32 %v2094, 1.442695
    %v2100 = vpow.pop %v2099
    %v2101 = vmul.f32 %v2095, 1.442695
    %v2102 = vpow.pop %v2101
    %v2103 = vmul.f32 %v2096, 1.442695
    %v2104 = vpow.pop %v2103
    %v2105 = vadd.f32 %v2098, 1.0
    %v2106 = vadd.f32 %v2100, 1.0
    %v2107 = vadd.f32 %v2102, 1.0
    %v2108 = vadd.f32 %v2104, 1.0
    %v2109 = vrcp.pop %v2105
    %v2110 = vmul.f32 %v2105, %v2109
    %v2111 = vsub.f32 1.0, %v2110
    %v2112 = vmul.f32 %v2109, %v2111
    %v2113 = vadd.f32 %v2109, %v2112
    %vm2114 = vweird.f32 %v2105
    %vm2115 = vweird.f32 %v2109
    %vm2116 = vmor %vm2114, %vm2115
    %v2117 = vsel %vm2116, %v2109, %v2113
    %v2118 = vand.u32 2147483647, %v2105
    %vm2119 = vcmp.eq.f32.partialorder %v2118, 8.507059e+37
    %v2120 = vand.u32 %v2105, 2147483648
    %v2121 = vor.u32 1.1754944e-38, %v2120
    %v2122 = vsel %vm2119, %v2121, %v2117
    %v2123 = vmul.f32 1.0, %v2122
    %v2124 = vrcp.pop %v2106
    %v2125 = vmul.f32 %v2106, %v2124
    %v2126 = vsub.f32 1.0, %v2125
    %v2127 = vmul.f32 %v2124, %v2126
    %v2128 = vadd.f32 %v2124, %v2127
    %vm2129 = vweird.f32 %v2106
    %vm2130 = vweird.f32 %v2124
    %vm2131 = vmor %vm2129, %vm2130
    %v2132 = vsel %vm2131, %v2124, %v2128
    %v2133 = vand.u32 2147483647, %v2106
    %vm2134 = vcmp.eq.f32.partialorder %v2133, 8.507059e+37
    %v2135 = vand.u32 %v2106, 2147483648
    %v2136 = vor.u32 1.1754944e-38, %v2135
    %v2137 = vsel %vm2134, %v2136, %v2132
    %v2138 = vmul.f32 1.0, %v2137
    %v2139 = vrcp.pop %v2107
    %v2140 = vmul.f32 %v2107, %v2139
    %v2141 = vsub.f32 1.0, %v2140
    %v2142 = vmul.f32 %v2139, %v2141
    %v2143 = vadd.f32 %v2139, %v2142
    %vm2144 = vweird.f32 %v2107
    %vm2145 = vweird.f32 %v2139
    %vm2146 = vmor %vm2144, %vm2145
    %v2147 = vsel %vm2146, %v2139, %v2143
    %v2148 = vand.u32 2147483647, %v2107
    %vm2149 = vcmp.eq.f32.partialorder %v2148, 8.507059e+37
    %v2150 = vand.u32 %v2107, 2147483648
    %v2151 = vor.u32 1.1754944e-38, %v2150
    %v2152 = vsel %vm2149, %v2151, %v2147
    %v2153 = vmul.f32 1.0, %v2152
    %v2154 = vrcp.pop %v2108
    %v2155 = vmul.f32 %v2108, %v2154
    %v2156 = vsub.f32 1.0, %v2155
    %v2157 = vmul.f32 %v2154, %v2156
    %v2158 = vadd.f32 %v2154, %v2157
    %vm2159 = vweird.f32 %v2108
    %vm2160 = vweird.f32 %v2154
    %vm2161 = vmor %vm2159, %vm2160
    %v2162 = vsel %vm2161, %v2154, %v2158
    %v2163 = vand.u32 2147483647, %v2108
    %vm2164 = vcmp.eq.f32.partialorder %v2163, 8.507059e+37
    %v2165 = vand.u32 %v2108, 2147483648
    %v2166 = vor.u32 1.1754944e-38, %v2165
    %v2167 = vsel %vm2164, %v2166, %v2162
    %v2168 = vmul.f32 1.0, %v2167
    %v2169 = vadd.f32 %v2047, %v1100
    %v2170 = vadd.f32 %v2087, %v1101
    %v2171 = vmul.f32 %v2123, %v2169
    %v2172 = vmul.f32 %v2138, %v2170
    %v2173 = vadd.f32 %v1847, %v2171
    %v2174 = vadd.f32 %v1848, %v2172
    %v2175 = vtanh.pop %v2173
    %v2176 = vtanh.pop %v2174
    %v2177 = vsub.f32 1.0, %v2153
    %v2178 = vsub.f32 1.0, %v2168
    %v2179 = vmul.f32 %v2177, %v2175
    %v2180 = vmul.f32 %v2178, %v2176
    %v2181 = vmul.f32 %v2153, %v1828
    %v2182 = vmul.f32 %v2168, %v1829
    %v2183 = vadd.f32 %v2179, %v2181
    %v2184 = vadd.f32 %v2180, %v2182
    %s2185 = smul.u32 3, 4
    %s2186 = smul.addr %s2185, 8
    %s2187 = scalar_lea.vmem [#allocation3], %s2186
    %2188 = vst [vmem:[%s2187] sm:$0xff] %v2183
    %s2189 = smul.u32 4, 4
    %s2190 = smul.addr %s2189, 8
    %s2191 = scalar_lea.vmem [#allocation3], %s2190
    %2192 = vst [vmem:[%s2191 + $0x8] sm:$0xff] %v2184
    %2193 = vst [vmem:[%s2191 + $0x10] sm:$0xff] %v2183
    %2194 = vst [vmem:[%s2187 + $0x18] sm:$0xff] %v2184
    %s2195 = smul.u32 4, 6
    %s2196 = smul.addr %s2195, 8
    %s2197 = scalar_lea.vmem [#allocation2], %s2196
    %v2198 = vld [vmem:[%s2197] sm:$0xff]
    %v2199 = vld [vmem:[%s2197 + $0x8] sm:$0xff]
    %v2200 = vld [vmem:[%s2197 + $0x10] sm:$0xff]
    %v2201 = vld [vmem:[%s2197 + $0x18] sm:$0xff]
    %v2202 = vld [vmem:[%s2197 + $0x20] sm:$0xff]
    %v2203 = vld [vmem:[%s2197 + $0x28] sm:$0xff]
    %2204 = vmatpush.msra.mxu0 %v667
    %2205 = vmatpush.msra.mxu0 %v661
    %2206 = vmatpush.msra.mxu0 %v655
    %2207 = vmatpush.msra.mxu0 %v649
    %2208 = vmatpush.msra.mxu0 %v643
    %2209 = vmatpush.msra.mxu0 %v637
    %2210 = vmatpush.msra.mxu0 %v631
    %2211 = vmatpush.msra.mxu0 %v625
    %2212 = vmatpush.msra.mxu0 %v619
    %2213 = vmatpush.msra.mxu0 %v613
    %2214 = vmatpush.msra.mxu0 %v607
    %2215 = vmatpush.msra.mxu0 %v601
    %2216 = vmatpush.msra.mxu0 %v595
    %2217 = vmatpush.msra.mxu0 %v589
    %2218 = vmatpush.msra.mxu0 %v583
    %2219 = vmatpush.msra.mxu0 %v577
    %2220 = vmatmul.f32.gmra.mxu0 %v2183
    %v2221 = vpop.f32.mrf.mxu0
    %v2222 = vadd.f32 0.0, %v2221
    %2223 = vdwg.mxu0
    %2224 = vmatpush.msra.mxu0 %v763
    %2225 = vmatpush.msra.mxu0 %v757
    %2226 = vmatpush.msra.mxu0 %v751
    %2227 = vmatpush.msra.mxu0 %v745
    %2228 = vmatpush.msra.mxu0 %v739
    %2229 = vmatpush.msra.mxu0 %v733
    %2230 = vmatpush.msra.mxu0 %v727
    %2231 = vmatpush.msra.mxu0 %v721
    %2232 = vmatpush.msra.mxu0 %v715
    %2233 = vmatpush.msra.mxu0 %v709
    %2234 = vmatpush.msra.mxu0 %v703
    %2235 = vmatpush.msra.mxu0 %v697
    %2236 = vmatpush.msra.mxu0 %v691
    %2237 = vmatpush.msra.mxu0 %v685
    %2238 = vmatpush.msra.mxu0 %v679
    %2239 = vmatpush.msra.mxu0 %v673
    %2240 = vmatmul.f32.gmra.mxu0 %v2184
    %v2241 = vpop.f32.mrf.mxu0
    %v2242 = vadd.f32 %v2222, %v2241
    %2243 = vdwg.mxu0
    %2244 = vmatpush.msra.mxu0 %v668
    %2245 = vmatpush.msra.mxu0 %v662
    %2246 = vmatpush.msra.mxu0 %v656
    %2247 = vmatpush.msra.mxu0 %v650
    %2248 = vmatpush.msra.mxu0 %v644
    %2249 = vmatpush.msra.mxu0 %v638
    %2250 = vmatpush.msra.mxu0 %v632
    %2251 = vmatpush.msra.mxu0 %v626
    %2252 = vmatpush.msra.mxu0 %v620
    %2253 = vmatpush.msra.mxu0 %v614
    %2254 = vmatpush.msra.mxu0 %v608
    %2255 = vmatpush.msra.mxu0 %v602
    %2256 = vmatpush.msra.mxu0 %v596
    %2257 = vmatpush.msra.mxu0 %v590
    %2258 = vmatpush.msra.mxu0 %v584
    %2259 = vmatpush.msra.mxu0 %v578
    %2260 = vmatmul.f32.gmra.mxu0 %v2183
    %v2261 = vpop.f32.mrf.mxu0
    %v2262 = vadd.f32 0.0, %v2261
    %2263 = vdwg.mxu0
    %2264 = vmatpush.msra.mxu0 %v764
    %2265 = vmatpush.msra.mxu0 %v758
    %2266 = vmatpush.msra.mxu0 %v752
    %2267 = vmatpush.msra.mxu0 %v746
    %2268 = vmatpush.msra.mxu0 %v740
    %2269 = vmatpush.msra.mxu0 %v734
    %2270 = vmatpush.msra.mxu0 %v728
    %2271 = vmatpush.msra.mxu0 %v722
    %2272 = vmatpush.msra.mxu0 %v716
    %2273 = vmatpush.msra.mxu0 %v710
    %2274 = vmatpush.msra.mxu0 %v704
    %2275 = vmatpush.msra.mxu0 %v698
    %2276 = vmatpush.msra.mxu0 %v692
    %2277 = vmatpush.msra.mxu0 %v686
    %2278 = vmatpush.msra.mxu0 %v680
    %2279 = vmatpush.msra.mxu0 %v674
    %2280 = vmatmul.f32.gmra.mxu0 %v2184
    %v2281 = vpop.f32.mrf.mxu0
    %v2282 = vadd.f32 %v2262, %v2281
    %2283 = vdwg.mxu0
    %2284 = vmatpush.msra.mxu0 %v669
    %2285 = vmatpush.msra.mxu0 %v663
    %2286 = vmatpush.msra.mxu0 %v657
    %2287 = vmatpush.msra.mxu0 %v651
    %2288 = vmatpush.msra.mxu0 %v645
    %2289 = vmatpush.msra.mxu0 %v639
    %2290 = vmatpush.msra.mxu0 %v633
    %2291 = vmatpush.msra.mxu0 %v627
    %2292 = vmatpush.msra.mxu0 %v621
    %2293 = vmatpush.msra.mxu0 %v615
    %2294 = vmatpush.msra.mxu0 %v609
    %2295 = vmatpush.msra.mxu0 %v603
    %2296 = vmatpush.msra.mxu0 %v597
    %2297 = vmatpush.msra.mxu0 %v591
    %2298 = vmatpush.msra.mxu0 %v585
    %2299 = vmatpush.msra.mxu0 %v579
    %2300 = vmatmul.f32.gmra.mxu0 %v2183
    %v2301 = vpop.f32.mrf.mxu0
    %v2302 = vadd.f32 0.0, %v2301
    %2303 = vdwg.mxu0
    %2304 = vmatpush.msra.mxu0 %v765
    %2305 = vmatpush.msra.mxu0 %v759
    %2306 = vmatpush.msra.mxu0 %v753
    %2307 = vmatpush.msra.mxu0 %v747
    %2308 = vmatpush.msra.mxu0 %v741
    %2309 = vmatpush.msra.mxu0 %v735
    %2310 = vmatpush.msra.mxu0 %v729
    %2311 = vmatpush.msra.mxu0 %v723
    %2312 = vmatpush.msra.mxu0 %v717
    %2313 = vmatpush.msra.mxu0 %v711
    %2314 = vmatpush.msra.mxu0 %v705
    %2315 = vmatpush.msra.mxu0 %v699
    %2316 = vmatpush.msra.mxu0 %v693
    %2317 = vmatpush.msra.mxu0 %v687
    %2318 = vmatpush.msra.mxu0 %v681
    %2319 = vmatpush.msra.mxu0 %v675
    %2320 = vmatmul.f32.gmra.mxu0 %v2184
    %v2321 = vpop.f32.mrf.mxu0
    %v2322 = vadd.f32 %v2302, %v2321
    %2323 = vdwg.mxu0
    %2324 = vmatpush.msra.mxu0 %v670
    %2325 = vmatpush.msra.mxu0 %v664
    %2326 = vmatpush.msra.mxu0 %v658
    %2327 = vmatpush.msra.mxu0 %v652
    %2328 = vmatpush.msra.mxu0 %v646
    %2329 = vmatpush.msra.mxu0 %v640
    %2330 = vmatpush.msra.mxu0 %v634
    %2331 = vmatpush.msra.mxu0 %v628
    %2332 = vmatpush.msra.mxu0 %v622
    %2333 = vmatpush.msra.mxu0 %v616
    %2334 = vmatpush.msra.mxu0 %v610
    %2335 = vmatpush.msra.mxu0 %v604
    %2336 = vmatpush.msra.mxu0 %v598
    %2337 = vmatpush.msra.mxu0 %v592
    %2338 = vmatpush.msra.mxu0 %v586
    %2339 = vmatpush.msra.mxu0 %v580
    %2340 = vmatmul.f32.gmra.mxu0 %v2183
    %v2341 = vpop.f32.mrf.mxu0
    %v2342 = vadd.f32 0.0, %v2341
    %2343 = vdwg.mxu0
    %2344 = vmatpush.msra.mxu0 %v766
    %2345 = vmatpush.msra.mxu0 %v760
    %2346 = vmatpush.msra.mxu0 %v754
    %2347 = vmatpush.msra.mxu0 %v748
    %2348 = vmatpush.msra.mxu0 %v742
    %2349 = vmatpush.msra.mxu0 %v736
    %2350 = vmatpush.msra.mxu0 %v730
    %2351 = vmatpush.msra.mxu0 %v724
    %2352 = vmatpush.msra.mxu0 %v718
    %2353 = vmatpush.msra.mxu0 %v712
    %2354 = vmatpush.msra.mxu0 %v706
    %2355 = vmatpush.msra.mxu0 %v700
    %2356 = vmatpush.msra.mxu0 %v694
    %2357 = vmatpush.msra.mxu0 %v688
    %2358 = vmatpush.msra.mxu0 %v682
    %2359 = vmatpush.msra.mxu0 %v676
    %2360 = vmatmul.f32.gmra.mxu0 %v2184
    %v2361 = vpop.f32.mrf.mxu0
    %v2362 = vadd.f32 %v2342, %v2361
    %2363 = vdwg.mxu0
    %2364 = vmatpush.msra.mxu0 %v671
    %2365 = vmatpush.msra.mxu0 %v665
    %2366 = vmatpush.msra.mxu0 %v659
    %2367 = vmatpush.msra.mxu0 %v653
    %2368 = vmatpush.msra.mxu0 %v647
    %2369 = vmatpush.msra.mxu0 %v641
    %2370 = vmatpush.msra.mxu0 %v635
    %2371 = vmatpush.msra.mxu0 %v629
    %2372 = vmatpush.msra.mxu0 %v623
    %2373 = vmatpush.msra.mxu0 %v617
    %2374 = vmatpush.msra.mxu0 %v611
    %2375 = vmatpush.msra.mxu0 %v605
    %2376 = vmatpush.msra.mxu0 %v599
    %2377 = vmatpush.msra.mxu0 %v593
    %2378 = vmatpush.msra.mxu0 %v587
    %2379 = vmatpush.msra.mxu0 %v581
    %2380 = vmatmul.f32.gmra.mxu0 %v2183
    %v2381 = vpop.f32.mrf.mxu0
    %v2382 = vadd.f32 0.0, %v2381
    %2383 = vdwg.mxu0
    %2384 = vmatpush.msra.mxu0 %v767
    %2385 = vmatpush.msra.mxu0 %v761
    %2386 = vmatpush.msra.mxu0 %v755
    %2387 = vmatpush.msra.mxu0 %v749
    %2388 = vmatpush.msra.mxu0 %v743
    %2389 = vmatpush.msra.mxu0 %v737
    %2390 = vmatpush.msra.mxu0 %v731
    %2391 = vmatpush.msra.mxu0 %v725
    %2392 = vmatpush.msra.mxu0 %v719
    %2393 = vmatpush.msra.mxu0 %v713
    %2394 = vmatpush.msra.mxu0 %v707
    %2395 = vmatpush.msra.mxu0 %v701
    %2396 = vmatpush.msra.mxu0 %v695
    %2397 = vmatpush.msra.mxu0 %v689
    %2398 = vmatpush.msra.mxu0 %v683
    %2399 = vmatpush.msra.mxu0 %v677
    %2400 = vmatmul.f32.gmra.mxu0 %v2184
    %v2401 = vpop.f32.mrf.mxu0
    %v2402 = vadd.f32 %v2382, %v2401
    %2403 = vdwg.mxu0
    %2404 = vmatpush.msra.mxu0 %v672
    %2405 = vmatpush.msra.mxu0 %v666
    %2406 = vmatpush.msra.mxu0 %v660
    %2407 = vmatpush.msra.mxu0 %v654
    %2408 = vmatpush.msra.mxu0 %v648
    %2409 = vmatpush.msra.mxu0 %v642
    %2410 = vmatpush.msra.mxu0 %v636
    %2411 = vmatpush.msra.mxu0 %v630
    %2412 = vmatpush.msra.mxu0 %v624
    %2413 = vmatpush.msra.mxu0 %v618
    %2414 = vmatpush.msra.mxu0 %v612
    %2415 = vmatpush.msra.mxu0 %v606
    %2416 = vmatpush.msra.mxu0 %v600
    %2417 = vmatpush.msra.mxu0 %v594
    %2418 = vmatpush.msra.mxu0 %v588
    %2419 = vmatpush.msra.mxu0 %v582
    %2420 = vmatmul.f32.gmra.mxu0 %v2183
    %v2421 = vpop.f32.mrf.mxu0
    %v2422 = vadd.f32 0.0, %v2421
    %2423 = vdwg.mxu0
    %2424 = vmatpush.msra.mxu0 %v768
    %2425 = vmatpush.msra.mxu0 %v762
    %2426 = vmatpush.msra.mxu0 %v756
    %2427 = vmatpush.msra.mxu0 %v750
    %2428 = vmatpush.msra.mxu0 %v744
    %2429 = vmatpush.msra.mxu0 %v738
    %2430 = vmatpush.msra.mxu0 %v732
    %2431 = vmatpush.msra.mxu0 %v726
    %2432 = vmatpush.msra.mxu0 %v720
    %2433 = vmatpush.msra.mxu0 %v714
    %2434 = vmatpush.msra.mxu0 %v708
    %2435 = vmatpush.msra.mxu0 %v702
    %2436 = vmatpush.msra.mxu0 %v696
    %2437 = vmatpush.msra.mxu0 %v690
    %2438 = vmatpush.msra.mxu0 %v684
    %2439 = vmatpush.msra.mxu0 %v678
    %2440 = vmatmul.f32.gmra.mxu0 %v2184
    %v2441 = vpop.f32.mrf.mxu0
    %v2442 = vadd.f32 %v2422, %v2441
    %2443 = vdwg.mxu0
    %v2444 = vadd.f32 %v2198, %v2242
    %v2445 = vadd.f32 %v2199, %v2282
    %v2446 = vadd.f32 %v2200, %v2322
    %v2447 = vadd.f32 %v2201, %v2362
    %v2448 = vxor.u32 %v2444, 2147483648
    %v2449 = vxor.u32 %v2445, 2147483648
    %v2450 = vxor.u32 %v2446, 2147483648
    %v2451 = vxor.u32 %v2447, 2147483648
    %v2452 = vmul.f32 %v2448, 1.442695
    %v2453 = vpow.pop %v2452
    %v2454 = vmul.f32 %v2449, 1.442695
    %v2455 = vpow.pop %v2454
    %v2456 = vmul.f32 %v2450, 1.442695
    %v2457 = vpow.pop %v2456
    %v2458 = vmul.f32 %v2451, 1.442695
    %v2459 = vpow.pop %v2458
    %v2460 = vadd.f32 %v2453, 1.0
    %v2461 = vadd.f32 %v2455, 1.0
    %v2462 = vadd.f32 %v2457, 1.0
    %v2463 = vadd.f32 %v2459, 1.0
    %v2464 = vrcp.pop %v2460
    %v2465 = vmul.f32 %v2460, %v2464
    %v2466 = vsub.f32 1.0, %v2465
    %v2467 = vmul.f32 %v2464, %v2466
    %v2468 = vadd.f32 %v2464, %v2467
    %vm2469 = vweird.f32 %v2460
    %vm2470 = vweird.f32 %v2464
    %vm2471 = vmor %vm2469, %vm2470
    %v2472 = vsel %vm2471, %v2464, %v2468
    %v2473 = vand.u32 2147483647, %v2460
    %vm2474 = vcmp.eq.f32.partialorder %v2473, 8.507059e+37
    %v2475 = vand.u32 %v2460, 2147483648
    %v2476 = vor.u32 1.1754944e-38, %v2475
    %v2477 = vsel %vm2474, %v2476, %v2472
    %v2478 = vmul.f32 1.0, %v2477
    %v2479 = vrcp.pop %v2461
    %v2480 = vmul.f32 %v2461, %v2479
    %v2481 = vsub.f32 1.0, %v2480
    %v2482 = vmul.f32 %v2479, %v2481
    %v2483 = vadd.f32 %v2479, %v2482
    %vm2484 = vweird.f32 %v2461
    %vm2485 = vweird.f32 %v2479
    %vm2486 = vmor %vm2484, %vm2485
    %v2487 = vsel %vm2486, %v2479, %v2483
    %v2488 = vand.u32 2147483647, %v2461
    %vm2489 = vcmp.eq.f32.partialorder %v2488, 8.507059e+37
    %v2490 = vand.u32 %v2461, 2147483648
    %v2491 = vor.u32 1.1754944e-38, %v2490
    %v2492 = vsel %vm2489, %v2491, %v2487
    %v2493 = vmul.f32 1.0, %v2492
    %v2494 = vrcp.pop %v2462
    %v2495 = vmul.f32 %v2462, %v2494
    %v2496 = vsub.f32 1.0, %v2495
    %v2497 = vmul.f32 %v2494, %v2496
    %v2498 = vadd.f32 %v2494, %v2497
    %vm2499 = vweird.f32 %v2462
    %vm2500 = vweird.f32 %v2494
    %vm2501 = vmor %vm2499, %vm2500
    %v2502 = vsel %vm2501, %v2494, %v2498
    %v2503 = vand.u32 2147483647, %v2462
    %vm2504 = vcmp.eq.f32.partialorder %v2503, 8.507059e+37
    %v2505 = vand.u32 %v2462, 2147483648
    %v2506 = vor.u32 1.1754944e-38, %v2505
    %v2507 = vsel %vm2504, %v2506, %v2502
    %v2508 = vmul.f32 1.0, %v2507
    %v2509 = vrcp.pop %v2463
    %v2510 = vmul.f32 %v2463, %v2509
    %v2511 = vsub.f32 1.0, %v2510
    %v2512 = vmul.f32 %v2509, %v2511
    %v2513 = vadd.f32 %v2509, %v2512
    %vm2514 = vweird.f32 %v2463
    %vm2515 = vweird.f32 %v2509
    %vm2516 = vmor %vm2514, %vm2515
    %v2517 = vsel %vm2516, %v2509, %v2513
    %v2518 = vand.u32 2147483647, %v2463
    %vm2519 = vcmp.eq.f32.partialorder %v2518, 8.507059e+37
    %v2520 = vand.u32 %v2463, 2147483648
    %v2521 = vor.u32 1.1754944e-38, %v2520
    %v2522 = vsel %vm2519, %v2521, %v2517
    %v2523 = vmul.f32 1.0, %v2522
    %v2524 = vadd.f32 %v2402, %v1100
    %v2525 = vadd.f32 %v2442, %v1101
    %v2526 = vmul.f32 %v2478, %v2524
    %v2527 = vmul.f32 %v2493, %v2525
    %v2528 = vadd.f32 %v2202, %v2526
    %v2529 = vadd.f32 %v2203, %v2527
    %v2530 = vtanh.pop %v2528
    %v2531 = vtanh.pop %v2529
    %v2532 = vsub.f32 1.0, %v2508
    %v2533 = vsub.f32 1.0, %v2523
    %v2534 = vmul.f32 %v2532, %v2530
    %v2535 = vmul.f32 %v2533, %v2531
    %v2536 = vmul.f32 %v2508, %v2183
    %v2537 = vmul.f32 %v2523, %v2184
    %v2538 = vadd.f32 %v2534, %v2536
    %v2539 = vadd.f32 %v2535, %v2537
    %2540 = vst [vmem:[%s2191] sm:$0xff] %v2538
    %2541 = vst [vmem:[%s2187 + $0x8] sm:$0xff] %v2539
    %2542 = vst [vmem:[%s2187 + $0x10] sm:$0xff] %v2538
    %2543 = vst [vmem:[%s2191 + $0x18] sm:$0xff] %v2539
    %s2544 = smul.u32 5, 6
    %s2545 = smul.addr %s2544, 8
    %s2546 = scalar_lea.vmem [#allocation2], %s2545
    %v2547 = vld [vmem:[%s2546] sm:$0xff]
    %v2548 = vld [vmem:[%s2546 + $0x8] sm:$0xff]
    %v2549 = vld [vmem:[%s2546 + $0x10] sm:$0xff]
    %v2550 = vld [vmem:[%s2546 + $0x18] sm:$0xff]
    %v2551 = vld [vmem:[%s2546 + $0x20] sm:$0xff]
    %v2552 = vld [vmem:[%s2546 + $0x28] sm:$0xff]
    %2553 = vmatpush.msra.mxu0 %v667
    %2554 = vmatpush.msra.mxu0 %v661
    %2555 = vmatpush.msra.mxu0 %v655
    %2556 = vmatpush.msra.mxu0 %v649
    %2557 = vmatpush.msra.mxu0 %v643
    %2558 = vmatpush.msra.mxu0 %v637
    %2559 = vmatpush.msra.mxu0 %v631
    %2560 = vmatpush.msra.mxu0 %v625
    %2561 = vmatpush.msra.mxu0 %v619
    %2562 = vmatpush.msra.mxu0 %v613
    %2563 = vmatpush.msra.mxu0 %v607
    %2564 = vmatpush.msra.mxu0 %v601
    %2565 = vmatpush.msra.mxu0 %v595
    %2566 = vmatpush.msra.mxu0 %v589
    %2567 = vmatpush.msra.mxu0 %v583
    %2568 = vmatpush.msra.mxu0 %v577
    %2569 = vmatmul.f32.gmra.mxu0 %v2538
    %v2570 = vpop.f32.mrf.mxu0
    %v2571 = vadd.f32 0.0, %v2570
    %2572 = vdwg.mxu0
    %2573 = vmatpush.msra.mxu0 %v763
    %2574 = vmatpush.msra.mxu0 %v757
    %2575 = vmatpush.msra.mxu0 %v751
    %2576 = vmatpush.msra.mxu0 %v745
    %2577 = vmatpush.msra.mxu0 %v739
    %2578 = vmatpush.msra.mxu0 %v733
    %2579 = vmatpush.msra.mxu0 %v727
    %2580 = vmatpush.msra.mxu0 %v721
    %2581 = vmatpush.msra.mxu0 %v715
    %2582 = vmatpush.msra.mxu0 %v709
    %2583 = vmatpush.msra.mxu0 %v703
    %2584 = vmatpush.msra.mxu0 %v697
    %2585 = vmatpush.msra.mxu0 %v691
    %2586 = vmatpush.msra.mxu0 %v685
    %2587 = vmatpush.msra.mxu0 %v679
    %2588 = vmatpush.msra.mxu0 %v673
    %2589 = vmatmul.f32.gmra.mxu0 %v2539
    %v2590 = vpop.f32.mrf.mxu0
    %v2591 = vadd.f32 %v2571, %v2590
    %2592 = vdwg.mxu0
    %2593 = vmatpush.msra.mxu0 %v668
    %2594 = vmatpush.msra.mxu0 %v662
    %2595 = vmatpush.msra.mxu0 %v656
    %2596 = vmatpush.msra.mxu0 %v650
    %2597 = vmatpush.msra.mxu0 %v644
    %2598 = vmatpush.msra.mxu0 %v638
    %2599 = vmatpush.msra.mxu0 %v632
    %2600 = vmatpush.msra.mxu0 %v626
    %2601 = vmatpush.msra.mxu0 %v620
    %2602 = vmatpush.msra.mxu0 %v614
    %2603 = vmatpush.msra.mxu0 %v608
    %2604 = vmatpush.msra.mxu0 %v602
    %2605 = vmatpush.msra.mxu0 %v596
    %2606 = vmatpush.msra.mxu0 %v590
    %2607 = vmatpush.msra.mxu0 %v584
    %2608 = vmatpush.msra.mxu0 %v578
    %2609 = vmatmul.f32.gmra.mxu0 %v2538
    %v2610 = vpop.f32.mrf.mxu0
    %v2611 = vadd.f32 0.0, %v2610
    %2612 = vdwg.mxu0
    %2613 = vmatpush.msra.mxu0 %v764
    %2614 = vmatpush.msra.mxu0 %v758
    %2615 = vmatpush.msra.mxu0 %v752
    %2616 = vmatpush.msra.mxu0 %v746
    %2617 = vmatpush.msra.mxu0 %v740
    %2618 = vmatpush.msra.mxu0 %v734
    %2619 = vmatpush.msra.mxu0 %v728
    %2620 = vmatpush.msra.mxu0 %v722
    %2621 = vmatpush.msra.mxu0 %v716
    %2622 = vmatpush.msra.mxu0 %v710
    %2623 = vmatpush.msra.mxu0 %v704
    %2624 = vmatpush.msra.mxu0 %v698
    %2625 = vmatpush.msra.mxu0 %v692
    %2626 = vmatpush.msra.mxu0 %v686
    %2627 = vmatpush.msra.mxu0 %v680
    %2628 = vmatpush.msra.mxu0 %v674
    %2629 = vmatmul.f32.gmra.mxu0 %v2539
    %v2630 = vpop.f32.mrf.mxu0
    %v2631 = vadd.f32 %v2611, %v2630
    %2632 = vdwg.mxu0
    %2633 = vmatpush.msra.mxu0 %v669
    %2634 = vmatpush.msra.mxu0 %v663
    %2635 = vmatpush.msra.mxu0 %v657
    %2636 = vmatpush.msra.mxu0 %v651
    %2637 = vmatpush.msra.mxu0 %v645
    %2638 = vmatpush.msra.mxu0 %v639
    %2639 = vmatpush.msra.mxu0 %v633
    %2640 = vmatpush.msra.mxu0 %v627
    %2641 = vmatpush.msra.mxu0 %v621
    %2642 = vmatpush.msra.mxu0 %v615
    %2643 = vmatpush.msra.mxu0 %v609
    %2644 = vmatpush.msra.mxu0 %v603
    %2645 = vmatpush.msra.mxu0 %v597
    %2646 = vmatpush.msra.mxu0 %v591
    %2647 = vmatpush.msra.mxu0 %v585
    %2648 = vmatpush.msra.mxu0 %v579
    %2649 = vmatmul.f32.gmra.mxu0 %v2538
    %v2650 = vpop.f32.mrf.mxu0
    %v2651 = vadd.f32 0.0, %v2650
    %2652 = vdwg.mxu0
    %2653 = vmatpush.msra.mxu0 %v765
    %2654 = vmatpush.msra.mxu0 %v759
    %2655 = vmatpush.msra.mxu0 %v753
    %2656 = vmatpush.msra.mxu0 %v747
    %2657 = vmatpush.msra.mxu0 %v741
    %2658 = vmatpush.msra.mxu0 %v735
    %2659 = vmatpush.msra.mxu0 %v729
    %2660 = vmatpush.msra.mxu0 %v723
    %2661 = vmatpush.msra.mxu0 %v717
    %2662 = vmatpush.msra.mxu0 %v711
    %2663 = vmatpush.msra.mxu0 %v705
    %2664 = vmatpush.msra.mxu0 %v699
    %2665 = vmatpush.msra.mxu0 %v693
    %2666 = vmatpush.msra.mxu0 %v687
    %2667 = vmatpush.msra.mxu0 %v681
    %2668 = vmatpush.msra.mxu0 %v675
    %2669 = vmatmul.f32.gmra.mxu0 %v2539
    %v2670 = vpop.f32.mrf.mxu0
    %v2671 = vadd.f32 %v2651, %v2670
    %2672 = vdwg.mxu0
    %2673 = vmatpush.msra.mxu0 %v670
    %2674 = vmatpush.msra.mxu0 %v664
    %2675 = vmatpush.msra.mxu0 %v658
    %2676 = vmatpush.msra.mxu0 %v652
    %2677 = vmatpush.msra.mxu0 %v646
    %2678 = vmatpush.msra.mxu0 %v640
    %2679 = vmatpush.msra.mxu0 %v634
    %2680 = vmatpush.msra.mxu0 %v628
    %2681 = vmatpush.msra.mxu0 %v622
    %2682 = vmatpush.msra.mxu0 %v616
    %2683 = vmatpush.msra.mxu0 %v610
    %2684 = vmatpush.msra.mxu0 %v604
    %2685 = vmatpush.msra.mxu0 %v598
    %2686 = vmatpush.msra.mxu0 %v592
    %2687 = vmatpush.msra.mxu0 %v586
    %2688 = vmatpush.msra.mxu0 %v580
    %2689 = vmatmul.f32.gmra.mxu0 %v2538
    %v2690 = vpop.f32.mrf.mxu0
    %v2691 = vadd.f32 0.0, %v2690
    %2692 = vdwg.mxu0
    %2693 = vmatpush.msra.mxu0 %v766
    %2694 = vmatpush.msra.mxu0 %v760
    %2695 = vmatpush.msra.mxu0 %v754
    %2696 = vmatpush.msra.mxu0 %v748
    %2697 = vmatpush.msra.mxu0 %v742
    %2698 = vmatpush.msra.mxu0 %v736
    %2699 = vmatpush.msra.mxu0 %v730
    %2700 = vmatpush.msra.mxu0 %v724
    %2701 = vmatpush.msra.mxu0 %v718
    %2702 = vmatpush.msra.mxu0 %v712
    %2703 = vmatpush.msra.mxu0 %v706
    %2704 = vmatpush.msra.mxu0 %v700
    %2705 = vmatpush.msra.mxu0 %v694
    %2706 = vmatpush.msra.mxu0 %v688
    %2707 = vmatpush.msra.mxu0 %v682
    %2708 = vmatpush.msra.mxu0 %v676
    %2709 = vmatmul.f32.gmra.mxu0 %v2539
    %v2710 = vpop.f32.mrf.mxu0
    %v2711 = vadd.f32 %v2691, %v2710
    %2712 = vdwg.mxu0
    %2713 = vmatpush.msra.mxu0 %v671
    %2714 = vmatpush.msra.mxu0 %v665
    %2715 = vmatpush.msra.mxu0 %v659
    %2716 = vmatpush.msra.mxu0 %v653
    %2717 = vmatpush.msra.mxu0 %v647
    %2718 = vmatpush.msra.mxu0 %v641
    %2719 = vmatpush.msra.mxu0 %v635
    %2720 = vmatpush.msra.mxu0 %v629
    %2721 = vmatpush.msra.mxu0 %v623
    %2722 = vmatpush.msra.mxu0 %v617
    %2723 = vmatpush.msra.mxu0 %v611
    %2724 = vmatpush.msra.mxu0 %v605
    %2725 = vmatpush.msra.mxu0 %v599
    %2726 = vmatpush.msra.mxu0 %v593
    %2727 = vmatpush.msra.mxu0 %v587
    %2728 = vmatpush.msra.mxu0 %v581
    %2729 = vmatmul.f32.gmra.mxu0 %v2538
    %v2730 = vpop.f32.mrf.mxu0
    %v2731 = vadd.f32 0.0, %v2730
    %2732 = vdwg.mxu0
    %2733 = vmatpush.msra.mxu0 %v767
    %2734 = vmatpush.msra.mxu0 %v761
    %2735 = vmatpush.msra.mxu0 %v755
    %2736 = vmatpush.msra.mxu0 %v749
    %2737 = vmatpush.msra.mxu0 %v743
    %2738 = vmatpush.msra.mxu0 %v737
    %2739 = vmatpush.msra.mxu0 %v731
    %2740 = vmatpush.msra.mxu0 %v725
    %2741 = vmatpush.msra.mxu0 %v719
    %2742 = vmatpush.msra.mxu0 %v713
    %2743 = vmatpush.msra.mxu0 %v707
    %2744 = vmatpush.msra.mxu0 %v701
    %2745 = vmatpush.msra.mxu0 %v695
    %2746 = vmatpush.msra.mxu0 %v689
    %2747 = vmatpush.msra.mxu0 %v683
    %2748 = vmatpush.msra.mxu0 %v677
    %2749 = vmatmul.f32.gmra.mxu0 %v2539
    %v2750 = vpop.f32.mrf.mxu0
    %v2751 = vadd.f32 %v2731, %v2750
    %2752 = vdwg.mxu0
    %2753 = vmatpush.msra.mxu0 %v672
    %2754 = vmatpush.msra.mxu0 %v666
    %2755 = vmatpush.msra.mxu0 %v660
    %2756 = vmatpush.msra.mxu0 %v654
    %2757 = vmatpush.msra.mxu0 %v648
    %2758 = vmatpush.msra.mxu0 %v642
    %2759 = vmatpush.msra.mxu0 %v636
    %2760 = vmatpush.msra.mxu0 %v630
    %2761 = vmatpush.msra.mxu0 %v624
    %2762 = vmatpush.msra.mxu0 %v618
    %2763 = vmatpush.msra.mxu0 %v612
    %2764 = vmatpush.msra.mxu0 %v606
    %2765 = vmatpush.msra.mxu0 %v600
    %2766 = vmatpush.msra.mxu0 %v594
    %2767 = vmatpush.msra.mxu0 %v588
    %2768 = vmatpush.msra.mxu0 %v582
    %2769 = vmatmul.f32.gmra.mxu0 %v2538
    %v2770 = vpop.f32.mrf.mxu0
    %v2771 = vadd.f32 0.0, %v2770
    %2772 = vdwg.mxu0
    %2773 = vmatpush.msra.mxu0 %v768
    %2774 = vmatpush.msra.mxu0 %v762
    %2775 = vmatpush.msra.mxu0 %v756
    %2776 = vmatpush.msra.mxu0 %v750
    %2777 = vmatpush.msra.mxu0 %v744
    %2778 = vmatpush.msra.mxu0 %v738
    %2779 = vmatpush.msra.mxu0 %v732
    %2780 = vmatpush.msra.mxu0 %v726
    %2781 = vmatpush.msra.mxu0 %v720
    %2782 = vmatpush.msra.mxu0 %v714
    %2783 = vmatpush.msra.mxu0 %v708
    %2784 = vmatpush.msra.mxu0 %v702
    %2785 = vmatpush.msra.mxu0 %v696
    %2786 = vmatpush.msra.mxu0 %v690
    %2787 = vmatpush.msra.mxu0 %v684
    %2788 = vmatpush.msra.mxu0 %v678
    %2789 = vmatmul.f32.gmra.mxu0 %v2539
    %v2790 = vpop.f32.mrf.mxu0
    %v2791 = vadd.f32 %v2771, %v2790
    %2792 = vdwg.mxu0
    %v2793 = vadd.f32 %v2547, %v2591
    %v2794 = vadd.f32 %v2548, %v2631
    %v2795 = vadd.f32 %v2549, %v2671
    %v2796 = vadd.f32 %v2550, %v2711
    %v2797 = vxor.u32 %v2793, 2147483648
    %v2798 = vxor.u32 %v2794, 2147483648
    %v2799 = vxor.u32 %v2795, 2147483648
    %v2800 = vxor.u32 %v2796, 2147483648
    %v2801 = vmul.f32 %v2797, 1.442695
    %v2802 = vpow.pop %v2801
    %v2803 = vmul.f32 %v2798, 1.442695
    %v2804 = vpow.pop %v2803
    %v2805 = vmul.f32 %v2799, 1.442695
    %v2806 = vpow.pop %v2805
    %v2807 = vmul.f32 %v2800, 1.442695
    %v2808 = vpow.pop %v2807
    %v2809 = vadd.f32 %v2802, 1.0
    %v2810 = vadd.f32 %v2804, 1.0
    %v2811 = vadd.f32 %v2806, 1.0
    %v2812 = vadd.f32 %v2808, 1.0
    %v2813 = vrcp.pop %v2809
    %v2814 = vmul.f32 %v2809, %v2813
    %v2815 = vsub.f32 1.0, %v2814
    %v2816 = vmul.f32 %v2813, %v2815
    %v2817 = vadd.f32 %v2813, %v2816
    %vm2818 = vweird.f32 %v2809
    %vm2819 = vweird.f32 %v2813
    %vm2820 = vmor %vm2818, %vm2819
    %v2821 = vsel %vm2820, %v2813, %v2817
    %v2822 = vand.u32 2147483647, %v2809
    %vm2823 = vcmp.eq.f32.partialorder %v2822, 8.507059e+37
    %v2824 = vand.u32 %v2809, 2147483648
    %v2825 = vor.u32 1.1754944e-38, %v2824
    %v2826 = vsel %vm2823, %v2825, %v2821
    %v2827 = vmul.f32 1.0, %v2826
    %v2828 = vrcp.pop %v2810
    %v2829 = vmul.f32 %v2810, %v2828
    %v2830 = vsub.f32 1.0, %v2829
    %v2831 = vmul.f32 %v2828, %v2830
    %v2832 = vadd.f32 %v2828, %v2831
    %vm2833 = vweird.f32 %v2810
    %vm2834 = vweird.f32 %v2828
    %vm2835 = vmor %vm2833, %vm2834
    %v2836 = vsel %vm2835, %v2828, %v2832
    %v2837 = vand.u32 2147483647, %v2810
    %vm2838 = vcmp.eq.f32.partialorder %v2837, 8.507059e+37
    %v2839 = vand.u32 %v2810, 2147483648
    %v2840 = vor.u32 1.1754944e-38, %v2839
    %v2841 = vsel %vm2838, %v2840, %v2836
    %v2842 = vmul.f32 1.0, %v2841
    %v2843 = vrcp.pop %v2811
    %v2844 = vmul.f32 %v2811, %v2843
    %v2845 = vsub.f32 1.0, %v2844
    %v2846 = vmul.f32 %v2843, %v2845
    %v2847 = vadd.f32 %v2843, %v2846
    %vm2848 = vweird.f32 %v2811
    %vm2849 = vweird.f32 %v2843
    %vm2850 = vmor %vm2848, %vm2849
    %v2851 = vsel %vm2850, %v2843, %v2847
    %v2852 = vand.u32 2147483647, %v2811
    %vm2853 = vcmp.eq.f32.partialorder %v2852, 8.507059e+37
    %v2854 = vand.u32 %v2811, 2147483648
    %v2855 = vor.u32 1.1754944e-38, %v2854
    %v2856 = vsel %vm2853, %v2855, %v2851
    %v2857 = vmul.f32 1.0, %v2856
    %v2858 = vrcp.pop %v2812
    %v2859 = vmul.f32 %v2812, %v2858
    %v2860 = vsub.f32 1.0, %v2859
    %v2861 = vmul.f32 %v2858, %v2860
    %v2862 = vadd.f32 %v2858, %v2861
    %vm2863 = vweird.f32 %v2812
    %vm2864 = vweird.f32 %v2858
    %vm2865 = vmor %vm2863, %vm2864
    %v2866 = vsel %vm2865, %v2858, %v2862
    %v2867 = vand.u32 2147483647, %v2812
    %vm2868 = vcmp.eq.f32.partialorder %v2867, 8.507059e+37
    %v2869 = vand.u32 %v2812, 2147483648
    %v2870 = vor.u32 1.1754944e-38, %v2869
    %v2871 = vsel %vm2868, %v2870, %v2866
    %v2872 = vmul.f32 1.0, %v2871
    %v2873 = vadd.f32 %v2751, %v1100
    %v2874 = vadd.f32 %v2791, %v1101
    %v2875 = vmul.f32 %v2827, %v2873
    %v2876 = vmul.f32 %v2842, %v2874
    %v2877 = vadd.f32 %v2551, %v2875
    %v2878 = vadd.f32 %v2552, %v2876
    %v2879 = vtanh.pop %v2877
    %v2880 = vtanh.pop %v2878
    %v2881 = vsub.f32 1.0, %v2857
    %v2882 = vsub.f32 1.0, %v2872
    %v2883 = vmul.f32 %v2881, %v2879
    %v2884 = vmul.f32 %v2882, %v2880
    %v2885 = vmul.f32 %v2857, %v2538
    %v2886 = vmul.f32 %v2872, %v2539
    %v2887 = vadd.f32 %v2883, %v2885
    %v2888 = vadd.f32 %v2884, %v2886
    %2889 = vst [vmem:[%s1836] sm:$0xff] %v2887
    %2890 = vst [vmem:[%s1832 + $0x8] sm:$0xff] %v2888
    %2891 = vst [vmem:[%s1832 + $0x10] sm:$0xff] %v2887
    %2892 = vst [vmem:[%s1836 + $0x18] sm:$0xff] %v2888
    %s2893 = smul.u32 6, 6
    %s2894 = smul.addr %s2893, 8
    %s2895 = scalar_lea.vmem [#allocation2], %s2894
    %v2896 = vld [vmem:[%s2895] sm:$0xff]
    %v2897 = vld [vmem:[%s2895 + $0x8] sm:$0xff]
    %v2898 = vld [vmem:[%s2895 + $0x10] sm:$0xff]
    %v2899 = vld [vmem:[%s2895 + $0x18] sm:$0xff]
    %v2900 = vld [vmem:[%s2895 + $0x20] sm:$0xff]
    %v2901 = vld [vmem:[%s2895 + $0x28] sm:$0xff]
    %2902 = vmatpush.msra.mxu0 %v667
    %2903 = vmatpush.msra.mxu0 %v661
    %2904 = vmatpush.msra.mxu0 %v655
    %2905 = vmatpush.msra.mxu0 %v649
    %2906 = vmatpush.msra.mxu0 %v643
    %2907 = vmatpush.msra.mxu0 %v637
    %2908 = vmatpush.msra.mxu0 %v631
    %2909 = vmatpush.msra.mxu0 %v625
    %2910 = vmatpush.msra.mxu0 %v619
    %2911 = vmatpush.msra.mxu0 %v613
    %2912 = vmatpush.msra.mxu0 %v607
    %2913 = vmatpush.msra.mxu0 %v601
    %2914 = vmatpush.msra.mxu0 %v595
    %2915 = vmatpush.msra.mxu0 %v589
    %2916 = vmatpush.msra.mxu0 %v583
    %2917 = vmatpush.msra.mxu0 %v577
    %2918 = vmatmul.f32.gmra.mxu0 %v2887
    %v2919 = vpop.f32.mrf.mxu0
    %v2920 = vadd.f32 0.0, %v2919
    %2921 = vdwg.mxu0
    %2922 = vmatpush.msra.mxu0 %v763
    %2923 = vmatpush.msra.mxu0 %v757
    %2924 = vmatpush.msra.mxu0 %v751
    %2925 = vmatpush.msra.mxu0 %v745
    %2926 = vmatpush.msra.mxu0 %v739
    %2927 = vmatpush.msra.mxu0 %v733
    %2928 = vmatpush.msra.mxu0 %v727
    %2929 = vmatpush.msra.mxu0 %v721
    %2930 = vmatpush.msra.mxu0 %v715
    %2931 = vmatpush.msra.mxu0 %v709
    %2932 = vmatpush.msra.mxu0 %v703
    %2933 = vmatpush.msra.mxu0 %v697
    %2934 = vmatpush.msra.mxu0 %v691
    %2935 = vmatpush.msra.mxu0 %v685
    %2936 = vmatpush.msra.mxu0 %v679
    %2937 = vmatpush.msra.mxu0 %v673
    %2938 = vmatmul.f32.gmra.mxu0 %v2888
    %v2939 = vpop.f32.mrf.mxu0
    %v2940 = vadd.f32 %v2920, %v2939
    %2941 = vdwg.mxu0
    %2942 = vmatpush.msra.mxu0 %v668
    %2943 = vmatpush.msra.mxu0 %v662
    %2944 = vmatpush.msra.mxu0 %v656
    %2945 = vmatpush.msra.mxu0 %v650
    %2946 = vmatpush.msra.mxu0 %v644
    %2947 = vmatpush.msra.mxu0 %v638
    %2948 = vmatpush.msra.mxu0 %v632
    %2949 = vmatpush.msra.mxu0 %v626
    %2950 = vmatpush.msra.mxu0 %v620
    %2951 = vmatpush.msra.mxu0 %v614
    %2952 = vmatpush.msra.mxu0 %v608
    %2953 = vmatpush.msra.mxu0 %v602
    %2954 = vmatpush.msra.mxu0 %v596
    %2955 = vmatpush.msra.mxu0 %v590
    %2956 = vmatpush.msra.mxu0 %v584
    %2957 = vmatpush.msra.mxu0 %v578
    %2958 = vmatmul.f32.gmra.mxu0 %v2887
    %v2959 = vpop.f32.mrf.mxu0
    %v2960 = vadd.f32 0.0, %v2959
    %2961 = vdwg.mxu0
    %2962 = vmatpush.msra.mxu0 %v764
    %2963 = vmatpush.msra.mxu0 %v758
    %2964 = vmatpush.msra.mxu0 %v752
    %2965 = vmatpush.msra.mxu0 %v746
    %2966 = vmatpush.msra.mxu0 %v740
    %2967 = vmatpush.msra.mxu0 %v734
    %2968 = vmatpush.msra.mxu0 %v728
    %2969 = vmatpush.msra.mxu0 %v722
    %2970 = vmatpush.msra.mxu0 %v716
    %2971 = vmatpush.msra.mxu0 %v710
    %2972 = vmatpush.msra.mxu0 %v704
    %2973 = vmatpush.msra.mxu0 %v698
    %2974 = vmatpush.msra.mxu0 %v692
    %2975 = vmatpush.msra.mxu0 %v686
    %2976 = vmatpush.msra.mxu0 %v680
    %2977 = vmatpush.msra.mxu0 %v674
    %2978 = vmatmul.f32.gmra.mxu0 %v2888
    %v2979 = vpop.f32.mrf.mxu0
    %v2980 = vadd.f32 %v2960, %v2979
    %2981 = vdwg.mxu0
    %2982 = vmatpush.msra.mxu0 %v669
    %2983 = vmatpush.msra.mxu0 %v663
    %2984 = vmatpush.msra.mxu0 %v657
    %2985 = vmatpush.msra.mxu0 %v651
    %2986 = vmatpush.msra.mxu0 %v645
    %2987 = vmatpush.msra.mxu0 %v639
    %2988 = vmatpush.msra.mxu0 %v633
    %2989 = vmatpush.msra.mxu0 %v627
    %2990 = vmatpush.msra.mxu0 %v621
    %2991 = vmatpush.msra.mxu0 %v615
    %2992 = vmatpush.msra.mxu0 %v609
    %2993 = vmatpush.msra.mxu0 %v603
    %2994 = vmatpush.msra.mxu0 %v597
    %2995 = vmatpush.msra.mxu0 %v591
    %2996 = vmatpush.msra.mxu0 %v585
    %2997 = vmatpush.msra.mxu0 %v579
    %2998 = vmatmul.f32.gmra.mxu0 %v2887
    %v2999 = vpop.f32.mrf.mxu0
    %v3000 = vadd.f32 0.0, %v2999
    %3001 = vdwg.mxu0
    %3002 = vmatpush.msra.mxu0 %v765
    %3003 = vmatpush.msra.mxu0 %v759
    %3004 = vmatpush.msra.mxu0 %v753
    %3005 = vmatpush.msra.mxu0 %v747
    %3006 = vmatpush.msra.mxu0 %v741
    %3007 = vmatpush.msra.mxu0 %v735
    %3008 = vmatpush.msra.mxu0 %v729
    %3009 = vmatpush.msra.mxu0 %v723
    %3010 = vmatpush.msra.mxu0 %v717
    %3011 = vmatpush.msra.mxu0 %v711
    %3012 = vmatpush.msra.mxu0 %v705
    %3013 = vmatpush.msra.mxu0 %v699
    %3014 = vmatpush.msra.mxu0 %v693
    %3015 = vmatpush.msra.mxu0 %v687
    %3016 = vmatpush.msra.mxu0 %v681
    %3017 = vmatpush.msra.mxu0 %v675
    %3018 = vmatmul.f32.gmra.mxu0 %v2888
    %v3019 = vpop.f32.mrf.mxu0
    %v3020 = vadd.f32 %v3000, %v3019
    %3021 = vdwg.mxu0
    %3022 = vmatpush.msra.mxu0 %v670
    %3023 = vmatpush.msra.mxu0 %v664
    %3024 = vmatpush.msra.mxu0 %v658
    %3025 = vmatpush.msra.mxu0 %v652
    %3026 = vmatpush.msra.mxu0 %v646
    %3027 = vmatpush.msra.mxu0 %v640
    %3028 = vmatpush.msra.mxu0 %v634
    %3029 = vmatpush.msra.mxu0 %v628
    %3030 = vmatpush.msra.mxu0 %v622
    %3031 = vmatpush.msra.mxu0 %v616
    %3032 = vmatpush.msra.mxu0 %v610
    %3033 = vmatpush.msra.mxu0 %v604
    %3034 = vmatpush.msra.mxu0 %v598
    %3035 = vmatpush.msra.mxu0 %v592
    %3036 = vmatpush.msra.mxu0 %v586
    %3037 = vmatpush.msra.mxu0 %v580
    %3038 = vmatmul.f32.gmra.mxu0 %v2887
    %v3039 = vpop.f32.mrf.mxu0
    %v3040 = vadd.f32 0.0, %v3039
    %3041 = vdwg.mxu0
    %3042 = vmatpush.msra.mxu0 %v766
    %3043 = vmatpush.msra.mxu0 %v760
    %3044 = vmatpush.msra.mxu0 %v754
    %3045 = vmatpush.msra.mxu0 %v748
    %3046 = vmatpush.msra.mxu0 %v742
    %3047 = vmatpush.msra.mxu0 %v736
    %3048 = vmatpush.msra.mxu0 %v730
    %3049 = vmatpush.msra.mxu0 %v724
    %3050 = vmatpush.msra.mxu0 %v718
    %3051 = vmatpush.msra.mxu0 %v712
    %3052 = vmatpush.msra.mxu0 %v706
    %3053 = vmatpush.msra.mxu0 %v700
    %3054 = vmatpush.msra.mxu0 %v694
    %3055 = vmatpush.msra.mxu0 %v688
    %3056 = vmatpush.msra.mxu0 %v682
    %3057 = vmatpush.msra.mxu0 %v676
    %3058 = vmatmul.f32.gmra.mxu0 %v2888
    %v3059 = vpop.f32.mrf.mxu0
    %v3060 = vadd.f32 %v3040, %v3059
    %3061 = vdwg.mxu0
    %3062 = vmatpush.msra.mxu0 %v671
    %3063 = vmatpush.msra.mxu0 %v665
    %3064 = vmatpush.msra.mxu0 %v659
    %3065 = vmatpush.msra.mxu0 %v653
    %3066 = vmatpush.msra.mxu0 %v647
    %3067 = vmatpush.msra.mxu0 %v641
    %3068 = vmatpush.msra.mxu0 %v635
    %3069 = vmatpush.msra.mxu0 %v629
    %3070 = vmatpush.msra.mxu0 %v623
    %3071 = vmatpush.msra.mxu0 %v617
    %3072 = vmatpush.msra.mxu0 %v611
    %3073 = vmatpush.msra.mxu0 %v605
    %3074 = vmatpush.msra.mxu0 %v599
    %3075 = vmatpush.msra.mxu0 %v593
    %3076 = vmatpush.msra.mxu0 %v587
    %3077 = vmatpush.msra.mxu0 %v581
    %3078 = vmatmul.f32.gmra.mxu0 %v2887
    %v3079 = vpop.f32.mrf.mxu0
    %v3080 = vadd.f32 0.0, %v3079
    %3081 = vdwg.mxu0
    %3082 = vmatpush.msra.mxu0 %v767
    %3083 = vmatpush.msra.mxu0 %v761
    %3084 = vmatpush.msra.mxu0 %v755
    %3085 = vmatpush.msra.mxu0 %v749
    %3086 = vmatpush.msra.mxu0 %v743
    %3087 = vmatpush.msra.mxu0 %v737
    %3088 = vmatpush.msra.mxu0 %v731
    %3089 = vmatpush.msra.mxu0 %v725
    %3090 = vmatpush.msra.mxu0 %v719
    %3091 = vmatpush.msra.mxu0 %v713
    %3092 = vmatpush.msra.mxu0 %v707
    %3093 = vmatpush.msra.mxu0 %v701
    %3094 = vmatpush.msra.mxu0 %v695
    %3095 = vmatpush.msra.mxu0 %v689
    %3096 = vmatpush.msra.mxu0 %v683
    %3097 = vmatpush.msra.mxu0 %v677
    %3098 = vmatmul.f32.gmra.mxu0 %v2888
    %v3099 = vpop.f32.mrf.mxu0
    %v3100 = vadd.f32 %v3080, %v3099
    %3101 = vdwg.mxu0
    %3102 = vmatpush.msra.mxu0 %v672
    %3103 = vmatpush.msra.mxu0 %v666
    %3104 = vmatpush.msra.mxu0 %v660
    %3105 = vmatpush.msra.mxu0 %v654
    %3106 = vmatpush.msra.mxu0 %v648
    %3107 = vmatpush.msra.mxu0 %v642
    %3108 = vmatpush.msra.mxu0 %v636
    %3109 = vmatpush.msra.mxu0 %v630
    %3110 = vmatpush.msra.mxu0 %v624
    %3111 = vmatpush.msra.mxu0 %v618
    %3112 = vmatpush.msra.mxu0 %v612
    %3113 = vmatpush.msra.mxu0 %v606
    %3114 = vmatpush.msra.mxu0 %v600
    %3115 = vmatpush.msra.mxu0 %v594
    %3116 = vmatpush.msra.mxu0 %v588
    %3117 = vmatpush.msra.mxu0 %v582
    %3118 = vmatmul.f32.gmra.mxu0 %v2887
    %v3119 = vpop.f32.mrf.mxu0
    %v3120 = vadd.f32 0.0, %v3119
    %3121 = vdwg.mxu0
    %3122 = vmatpush.msra.mxu0 %v768
    %3123 = vmatpush.msra.mxu0 %v762
    %3124 = vmatpush.msra.mxu0 %v756
    %3125 = vmatpush.msra.mxu0 %v750
    %3126 = vmatpush.msra.mxu0 %v744
    %3127 = vmatpush.msra.mxu0 %v738
    %3128 = vmatpush.msra.mxu0 %v732
    %3129 = vmatpush.msra.mxu0 %v726
    %3130 = vmatpush.msra.mxu0 %v720
    %3131 = vmatpush.msra.mxu0 %v714
    %3132 = vmatpush.msra.mxu0 %v708
    %3133 = vmatpush.msra.mxu0 %v702
    %3134 = vmatpush.msra.mxu0 %v696
    %3135 = vmatpush.msra.mxu0 %v690
    %3136 = vmatpush.msra.mxu0 %v684
    %3137 = vmatpush.msra.mxu0 %v678
    %3138 = vmatmul.f32.gmra.mxu0 %v2888
    %v3139 = vpop.f32.mrf.mxu0
    %v3140 = vadd.f32 %v3120, %v3139
    %3141 = vdwg.mxu0
    %v3142 = vadd.f32 %v2896, %v2940
    %v3143 = vadd.f32 %v2897, %v2980
    %v3144 = vadd.f32 %v2898, %v3020
    %v3145 = vadd.f32 %v2899, %v3060
    %v3146 = vxor.u32 %v3142, 2147483648
    %v3147 = vxor.u32 %v3143, 2147483648
    %v3148 = vxor.u32 %v3144, 2147483648
    %v3149 = vxor.u32 %v3145, 2147483648
    %v3150 = vmul.f32 %v3146, 1.442695
    %v3151 = vpow.pop %v3150
    %v3152 = vmul.f32 %v3147, 1.442695
    %v3153 = vpow.pop %v3152
    %v3154 = vmul.f32 %v3148, 1.442695
    %v3155 = vpow.pop %v3154
    %v3156 = vmul.f32 %v3149, 1.442695
    %v3157 = vpow.pop %v3156
    %v3158 = vadd.f32 %v3151, 1.0
    %v3159 = vadd.f32 %v3153, 1.0
    %v3160 = vadd.f32 %v3155, 1.0
    %v3161 = vadd.f32 %v3157, 1.0
    %v3162 = vrcp.pop %v3158
    %v3163 = vmul.f32 %v3158, %v3162
    %v3164 = vsub.f32 1.0, %v3163
    %v3165 = vmul.f32 %v3162, %v3164
    %v3166 = vadd.f32 %v3162, %v3165
    %vm3167 = vweird.f32 %v3158
    %vm3168 = vweird.f32 %v3162
    %vm3169 = vmor %vm3167, %vm3168
    %v3170 = vsel %vm3169, %v3162, %v3166
    %v3171 = vand.u32 2147483647, %v3158
    %vm3172 = vcmp.eq.f32.partialorder %v3171, 8.507059e+37
    %v3173 = vand.u32 %v3158, 2147483648
    %v3174 = vor.u32 1.1754944e-38, %v3173
    %v3175 = vsel %vm3172, %v3174, %v3170
    %v3176 = vmul.f32 1.0, %v3175
    %v3177 = vrcp.pop %v3159
    %v3178 = vmul.f32 %v3159, %v3177
    %v3179 = vsub.f32 1.0, %v3178
    %v3180 = vmul.f32 %v3177, %v3179
    %v3181 = vadd.f32 %v3177, %v3180
    %vm3182 = vweird.f32 %v3159
    %vm3183 = vweird.f32 %v3177
    %vm3184 = vmor %vm3182, %vm3183
    %v3185 = vsel %vm3184, %v3177, %v3181
    %v3186 = vand.u32 2147483647, %v3159
    %vm3187 = vcmp.eq.f32.partialorder %v3186, 8.507059e+37
    %v3188 = vand.u32 %v3159, 2147483648
    %v3189 = vor.u32 1.1754944e-38, %v3188
    %v3190 = vsel %vm3187, %v3189, %v3185
    %v3191 = vmul.f32 1.0, %v3190
    %v3192 = vrcp.pop %v3160
    %v3193 = vmul.f32 %v3160, %v3192
    %v3194 = vsub.f32 1.0, %v3193
    %v3195 = vmul.f32 %v3192, %v3194
    %v3196 = vadd.f32 %v3192, %v3195
    %vm3197 = vweird.f32 %v3160
    %vm3198 = vweird.f32 %v3192
    %vm3199 = vmor %vm3197, %vm3198
    %v3200 = vsel %vm3199, %v3192, %v3196
    %v3201 = vand.u32 2147483647, %v3160
    %vm3202 = vcmp.eq.f32.partialorder %v3201, 8.507059e+37
    %v3203 = vand.u32 %v3160, 2147483648
    %v3204 = vor.u32 1.1754944e-38, %v3203
    %v3205 = vsel %vm3202, %v3204, %v3200
    %v3206 = vmul.f32 1.0, %v3205
    %v3207 = vrcp.pop %v3161
    %v3208 = vmul.f32 %v3161, %v3207
    %v3209 = vsub.f32 1.0, %v3208
    %v3210 = vmul.f32 %v3207, %v3209
    %v3211 = vadd.f32 %v3207, %v3210
    %vm3212 = vweird.f32 %v3161
    %vm3213 = vweird.f32 %v3207
    %vm3214 = vmor %vm3212, %vm3213
    %v3215 = vsel %vm3214, %v3207, %v3211
    %v3216 = vand.u32 2147483647, %v3161
    %vm3217 = vcmp.eq.f32.partialorder %v3216, 8.507059e+37
    %v3218 = vand.u32 %v3161, 2147483648
    %v3219 = vor.u32 1.1754944e-38, %v3218
    %v3220 = vsel %vm3217, %v3219, %v3215
    %v3221 = vmul.f32 1.0, %v3220
    %v3222 = vadd.f32 %v3100, %v1100
    %v3223 = vadd.f32 %v3140, %v1101
    %v3224 = vmul.f32 %v3176, %v3222
    %v3225 = vmul.f32 %v3191, %v3223
    %v3226 = vadd.f32 %v2900, %v3224
    %v3227 = vadd.f32 %v2901, %v3225
    %v3228 = vtanh.pop %v3226
    %v3229 = vtanh.pop %v3227
    %v3230 = vsub.f32 1.0, %v3206
    %v3231 = vsub.f32 1.0, %v3221
    %v3232 = vmul.f32 %v3230, %v3228
    %v3233 = vmul.f32 %v3231, %v3229
    %v3234 = vmul.f32 %v3206, %v2887
    %v3235 = vmul.f32 %v3221, %v2888
    %v3236 = vadd.f32 %v3232, %v3234
    %v3237 = vadd.f32 %v3233, %v3235
    %3238 = vst [vmem:[%s1481] sm:$0xff] %v3236
    %3239 = vst [vmem:[%s1477 + $0x8] sm:$0xff] %v3237
    %3240 = vst [vmem:[%s1477 + $0x10] sm:$0xff] %v3236
    %3241 = vst [vmem:[%s1481 + $0x18] sm:$0xff] %v3237
    %s3242 = smul.u32 7, 6
    %s3243 = smul.addr %s3242, 8
    %s3244 = scalar_lea.vmem [#allocation2], %s3243
    %v3245 = vld [vmem:[%s3244] sm:$0xff]
    %v3246 = vld [vmem:[%s3244 + $0x8] sm:$0xff]
    %v3247 = vld [vmem:[%s3244 + $0x10] sm:$0xff]
    %v3248 = vld [vmem:[%s3244 + $0x18] sm:$0xff]
    %v3249 = vld [vmem:[%s3244 + $0x20] sm:$0xff]
    %v3250 = vld [vmem:[%s3244 + $0x28] sm:$0xff]
    %3251 = vmatpush.msra.mxu0 %v667
    %3252 = vmatpush.msra.mxu0 %v661
    %3253 = vmatpush.msra.mxu0 %v655
    %3254 = vmatpush.msra.mxu0 %v649
    %3255 = vmatpush.msra.mxu0 %v643
    %3256 = vmatpush.msra.mxu0 %v637
    %3257 = vmatpush.msra.mxu0 %v631
    %3258 = vmatpush.msra.mxu0 %v625
    %3259 = vmatpush.msra.mxu0 %v619
    %3260 = vmatpush.msra.mxu0 %v613
    %3261 = vmatpush.msra.mxu0 %v607
    %3262 = vmatpush.msra.mxu0 %v601
    %3263 = vmatpush.msra.mxu0 %v595
    %3264 = vmatpush.msra.mxu0 %v589
    %3265 = vmatpush.msra.mxu0 %v583
    %3266 = vmatpush.msra.mxu0 %v577
    %3267 = vmatmul.f32.gmra.mxu0 %v3236
    %v3268 = vpop.f32.mrf.mxu0
    %v3269 = vadd.f32 0.0, %v3268
    %3270 = vdwg.mxu0
    %3271 = vmatpush.msra.mxu0 %v763
    %3272 = vmatpush.msra.mxu0 %v757
    %3273 = vmatpush.msra.mxu0 %v751
    %3274 = vmatpush.msra.mxu0 %v745
    %3275 = vmatpush.msra.mxu0 %v739
    %3276 = vmatpush.msra.mxu0 %v733
    %3277 = vmatpush.msra.mxu0 %v727
    %3278 = vmatpush.msra.mxu0 %v721
    %3279 = vmatpush.msra.mxu0 %v715
    %3280 = vmatpush.msra.mxu0 %v709
    %3281 = vmatpush.msra.mxu0 %v703
    %3282 = vmatpush.msra.mxu0 %v697
    %3283 = vmatpush.msra.mxu0 %v691
    %3284 = vmatpush.msra.mxu0 %v685
    %3285 = vmatpush.msra.mxu0 %v679
    %3286 = vmatpush.msra.mxu0 %v673
    %3287 = vmatmul.f32.gmra.mxu0 %v3237
    %v3288 = vpop.f32.mrf.mxu0
    %v3289 = vadd.f32 %v3269, %v3288
    %3290 = vdwg.mxu0
    %3291 = vmatpush.msra.mxu0 %v668
    %3292 = vmatpush.msra.mxu0 %v662
    %3293 = vmatpush.msra.mxu0 %v656
    %3294 = vmatpush.msra.mxu0 %v650
    %3295 = vmatpush.msra.mxu0 %v644
    %3296 = vmatpush.msra.mxu0 %v638
    %3297 = vmatpush.msra.mxu0 %v632
    %3298 = vmatpush.msra.mxu0 %v626
    %3299 = vmatpush.msra.mxu0 %v620
    %3300 = vmatpush.msra.mxu0 %v614
    %3301 = vmatpush.msra.mxu0 %v608
    %3302 = vmatpush.msra.mxu0 %v602
    %3303 = vmatpush.msra.mxu0 %v596
    %3304 = vmatpush.msra.mxu0 %v590
    %3305 = vmatpush.msra.mxu0 %v584
    %3306 = vmatpush.msra.mxu0 %v578
    %3307 = vmatmul.f32.gmra.mxu0 %v3236
    %v3308 = vpop.f32.mrf.mxu0
    %v3309 = vadd.f32 0.0, %v3308
    %3310 = vdwg.mxu0
    %3311 = vmatpush.msra.mxu0 %v764
    %3312 = vmatpush.msra.mxu0 %v758
    %3313 = vmatpush.msra.mxu0 %v752
    %3314 = vmatpush.msra.mxu0 %v746
    %3315 = vmatpush.msra.mxu0 %v740
    %3316 = vmatpush.msra.mxu0 %v734
    %3317 = vmatpush.msra.mxu0 %v728
    %3318 = vmatpush.msra.mxu0 %v722
    %3319 = vmatpush.msra.mxu0 %v716
    %3320 = vmatpush.msra.mxu0 %v710
    %3321 = vmatpush.msra.mxu0 %v704
    %3322 = vmatpush.msra.mxu0 %v698
    %3323 = vmatpush.msra.mxu0 %v692
    %3324 = vmatpush.msra.mxu0 %v686
    %3325 = vmatpush.msra.mxu0 %v680
    %3326 = vmatpush.msra.mxu0 %v674
    %3327 = vmatmul.f32.gmra.mxu0 %v3237
    %v3328 = vpop.f32.mrf.mxu0
    %v3329 = vadd.f32 %v3309, %v3328
    %3330 = vdwg.mxu0
    %3331 = vmatpush.msra.mxu0 %v669
    %3332 = vmatpush.msra.mxu0 %v663
    %3333 = vmatpush.msra.mxu0 %v657
    %3334 = vmatpush.msra.mxu0 %v651
    %3335 = vmatpush.msra.mxu0 %v645
    %3336 = vmatpush.msra.mxu0 %v639
    %3337 = vmatpush.msra.mxu0 %v633
    %3338 = vmatpush.msra.mxu0 %v627
    %3339 = vmatpush.msra.mxu0 %v621
    %3340 = vmatpush.msra.mxu0 %v615
    %3341 = vmatpush.msra.mxu0 %v609
    %3342 = vmatpush.msra.mxu0 %v603
    %3343 = vmatpush.msra.mxu0 %v597
    %3344 = vmatpush.msra.mxu0 %v591
    %3345 = vmatpush.msra.mxu0 %v585
    %3346 = vmatpush.msra.mxu0 %v579
    %3347 = vmatmul.f32.gmra.mxu0 %v3236
    %v3348 = vpop.f32.mrf.mxu0
    %v3349 = vadd.f32 0.0, %v3348
    %3350 = vdwg.mxu0
    %3351 = vmatpush.msra.mxu0 %v765
    %3352 = vmatpush.msra.mxu0 %v759
    %3353 = vmatpush.msra.mxu0 %v753
    %3354 = vmatpush.msra.mxu0 %v747
    %3355 = vmatpush.msra.mxu0 %v741
    %3356 = vmatpush.msra.mxu0 %v735
    %3357 = vmatpush.msra.mxu0 %v729
    %3358 = vmatpush.msra.mxu0 %v723
    %3359 = vmatpush.msra.mxu0 %v717
    %3360 = vmatpush.msra.mxu0 %v711
    %3361 = vmatpush.msra.mxu0 %v705
    %3362 = vmatpush.msra.mxu0 %v699
    %3363 = vmatpush.msra.mxu0 %v693
    %3364 = vmatpush.msra.mxu0 %v687
    %3365 = vmatpush.msra.mxu0 %v681
    %3366 = vmatpush.msra.mxu0 %v675
    %3367 = vmatmul.f32.gmra.mxu0 %v3237
    %v3368 = vpop.f32.mrf.mxu0
    %v3369 = vadd.f32 %v3349, %v3368
    %3370 = vdwg.mxu0
    %3371 = vmatpush.msra.mxu0 %v670
    %3372 = vmatpush.msra.mxu0 %v664
    %3373 = vmatpush.msra.mxu0 %v658
    %3374 = vmatpush.msra.mxu0 %v652
    %3375 = vmatpush.msra.mxu0 %v646
    %3376 = vmatpush.msra.mxu0 %v640
    %3377 = vmatpush.msra.mxu0 %v634
    %3378 = vmatpush.msra.mxu0 %v628
    %3379 = vmatpush.msra.mxu0 %v622
    %3380 = vmatpush.msra.mxu0 %v616
    %3381 = vmatpush.msra.mxu0 %v610
    %3382 = vmatpush.msra.mxu0 %v604
    %3383 = vmatpush.msra.mxu0 %v598
    %3384 = vmatpush.msra.mxu0 %v592
    %3385 = vmatpush.msra.mxu0 %v586
    %3386 = vmatpush.msra.mxu0 %v580
    %3387 = vmatmul.f32.gmra.mxu0 %v3236
    %v3388 = vpop.f32.mrf.mxu0
    %v3389 = vadd.f32 0.0, %v3388
    %3390 = vdwg.mxu0
    %3391 = vmatpush.msra.mxu0 %v766
    %3392 = vmatpush.msra.mxu0 %v760
    %3393 = vmatpush.msra.mxu0 %v754
    %3394 = vmatpush.msra.mxu0 %v748
    %3395 = vmatpush.msra.mxu0 %v742
    %3396 = vmatpush.msra.mxu0 %v736
    %3397 = vmatpush.msra.mxu0 %v730
    %3398 = vmatpush.msra.mxu0 %v724
    %3399 = vmatpush.msra.mxu0 %v718
    %3400 = vmatpush.msra.mxu0 %v712
    %3401 = vmatpush.msra.mxu0 %v706
    %3402 = vmatpush.msra.mxu0 %v700
    %3403 = vmatpush.msra.mxu0 %v694
    %3404 = vmatpush.msra.mxu0 %v688
    %3405 = vmatpush.msra.mxu0 %v682
    %3406 = vmatpush.msra.mxu0 %v676
    %3407 = vmatmul.f32.gmra.mxu0 %v3237
    %v3408 = vpop.f32.mrf.mxu0
    %v3409 = vadd.f32 %v3389, %v3408
    %3410 = vdwg.mxu0
    %3411 = vmatpush.msra.mxu0 %v671
    %3412 = vmatpush.msra.mxu0 %v665
    %3413 = vmatpush.msra.mxu0 %v659
    %3414 = vmatpush.msra.mxu0 %v653
    %3415 = vmatpush.msra.mxu0 %v647
    %3416 = vmatpush.msra.mxu0 %v641
    %3417 = vmatpush.msra.mxu0 %v635
    %3418 = vmatpush.msra.mxu0 %v629
    %3419 = vmatpush.msra.mxu0 %v623
    %3420 = vmatpush.msra.mxu0 %v617
    %3421 = vmatpush.msra.mxu0 %v611
    %3422 = vmatpush.msra.mxu0 %v605
    %3423 = vmatpush.msra.mxu0 %v599
    %3424 = vmatpush.msra.mxu0 %v593
    %3425 = vmatpush.msra.mxu0 %v587
    %3426 = vmatpush.msra.mxu0 %v581
    %3427 = vmatmul.f32.gmra.mxu0 %v3236
    %v3428 = vpop.f32.mrf.mxu0
    %v3429 = vadd.f32 0.0, %v3428
    %3430 = vdwg.mxu0
    %3431 = vmatpush.msra.mxu0 %v767
    %3432 = vmatpush.msra.mxu0 %v761
    %3433 = vmatpush.msra.mxu0 %v755
    %3434 = vmatpush.msra.mxu0 %v749
    %3435 = vmatpush.msra.mxu0 %v743
    %3436 = vmatpush.msra.mxu0 %v737
    %3437 = vmatpush.msra.mxu0 %v731
    %3438 = vmatpush.msra.mxu0 %v725
    %3439 = vmatpush.msra.mxu0 %v719
    %3440 = vmatpush.msra.mxu0 %v713
    %3441 = vmatpush.msra.mxu0 %v707
    %3442 = vmatpush.msra.mxu0 %v701
    %3443 = vmatpush.msra.mxu0 %v695
    %3444 = vmatpush.msra.mxu0 %v689
    %3445 = vmatpush.msra.mxu0 %v683
    %3446 = vmatpush.msra.mxu0 %v677
    %3447 = vmatmul.f32.gmra.mxu0 %v3237
    %v3448 = vpop.f32.mrf.mxu0
    %v3449 = vadd.f32 %v3429, %v3448
    %3450 = vdwg.mxu0
    %3451 = vmatpush.msra.mxu0 %v672
    %3452 = vmatpush.msra.mxu0 %v666
    %3453 = vmatpush.msra.mxu0 %v660
    %3454 = vmatpush.msra.mxu0 %v654
    %3455 = vmatpush.msra.mxu0 %v648
    %3456 = vmatpush.msra.mxu0 %v642
    %3457 = vmatpush.msra.mxu0 %v636
    %3458 = vmatpush.msra.mxu0 %v630
    %3459 = vmatpush.msra.mxu0 %v624
    %3460 = vmatpush.msra.mxu0 %v618
    %3461 = vmatpush.msra.mxu0 %v612
    %3462 = vmatpush.msra.mxu0 %v606
    %3463 = vmatpush.msra.mxu0 %v600
    %3464 = vmatpush.msra.mxu0 %v594
    %3465 = vmatpush.msra.mxu0 %v588
    %3466 = vmatpush.msra.mxu0 %v582
    %3467 = vmatmul.f32.gmra.mxu0 %v3236
    %v3468 = vpop.f32.mrf.mxu0
    %v3469 = vadd.f32 0.0, %v3468
    %3470 = vdwg.mxu0
    %3471 = vmatpush.msra.mxu0 %v768
    %3472 = vmatpush.msra.mxu0 %v762
    %3473 = vmatpush.msra.mxu0 %v756
    %3474 = vmatpush.msra.mxu0 %v750
    %3475 = vmatpush.msra.mxu0 %v744
    %3476 = vmatpush.msra.mxu0 %v738
    %3477 = vmatpush.msra.mxu0 %v732
    %3478 = vmatpush.msra.mxu0 %v726
    %3479 = vmatpush.msra.mxu0 %v720
    %3480 = vmatpush.msra.mxu0 %v714
    %3481 = vmatpush.msra.mxu0 %v708
    %3482 = vmatpush.msra.mxu0 %v702
    %3483 = vmatpush.msra.mxu0 %v696
    %3484 = vmatpush.msra.mxu0 %v690
    %3485 = vmatpush.msra.mxu0 %v684
    %3486 = vmatpush.msra.mxu0 %v678
    %3487 = vmatmul.f32.gmra.mxu0 %v3237
    %v3488 = vpop.f32.mrf.mxu0
    %v3489 = vadd.f32 %v3469, %v3488
    %3490 = vdwg.mxu0
    %v3491 = vadd.f32 %v3245, %v3289
    %v3492 = vadd.f32 %v3246, %v3329
    %v3493 = vadd.f32 %v3247, %v3369
    %v3494 = vadd.f32 %v3248, %v3409
    %v3495 = vxor.u32 %v3491, 2147483648
    %v3496 = vxor.u32 %v3492, 2147483648
    %v3497 = vxor.u32 %v3493, 2147483648
    %v3498 = vxor.u32 %v3494, 2147483648
    %v3499 = vmul.f32 %v3495, 1.442695
    %v3500 = vpow.pop %v3499
    %v3501 = vmul.f32 %v3496, 1.442695
    %v3502 = vpow.pop %v3501
    %v3503 = vmul.f32 %v3497, 1.442695
    %v3504 = vpow.pop %v3503
    %v3505 = vmul.f32 %v3498, 1.442695
    %v3506 = vpow.pop %v3505
    %v3507 = vadd.f32 %v3500, 1.0
    %v3508 = vadd.f32 %v3502, 1.0
    %v3509 = vadd.f32 %v3504, 1.0
    %v3510 = vadd.f32 %v3506, 1.0
    %v3511 = vrcp.pop %v3507
    %v3512 = vmul.f32 %v3507, %v3511
    %v3513 = vsub.f32 1.0, %v3512
    %v3514 = vmul.f32 %v3511, %v3513
    %v3515 = vadd.f32 %v3511, %v3514
    %vm3516 = vweird.f32 %v3507
    %vm3517 = vweird.f32 %v3511
    %vm3518 = vmor %vm3516, %vm3517
    %v3519 = vsel %vm3518, %v3511, %v3515
    %v3520 = vand.u32 2147483647, %v3507
    %vm3521 = vcmp.eq.f32.partialorder %v3520, 8.507059e+37
    %v3522 = vand.u32 %v3507, 2147483648
    %v3523 = vor.u32 1.1754944e-38, %v3522
    %v3524 = vsel %vm3521, %v3523, %v3519
    %v3525 = vmul.f32 1.0, %v3524
    %v3526 = vrcp.pop %v3508
    %v3527 = vmul.f32 %v3508, %v3526
    %v3528 = vsub.f32 1.0, %v3527
    %v3529 = vmul.f32 %v3526, %v3528
    %v3530 = vadd.f32 %v3526, %v3529
    %vm3531 = vweird.f32 %v3508
    %vm3532 = vweird.f32 %v3526
    %vm3533 = vmor %vm3531, %vm3532
    %v3534 = vsel %vm3533, %v3526, %v3530
    %v3535 = vand.u32 2147483647, %v3508
    %vm3536 = vcmp.eq.f32.partialorder %v3535, 8.507059e+37
    %v3537 = vand.u32 %v3508, 2147483648
    %v3538 = vor.u32 1.1754944e-38, %v3537
    %v3539 = vsel %vm3536, %v3538, %v3534
    %v3540 = vmul.f32 1.0, %v3539
    %v3541 = vrcp.pop %v3509
    %v3542 = vmul.f32 %v3509, %v3541
    %v3543 = vsub.f32 1.0, %v3542
    %v3544 = vmul.f32 %v3541, %v3543
    %v3545 = vadd.f32 %v3541, %v3544
    %vm3546 = vweird.f32 %v3509
    %vm3547 = vweird.f32 %v3541
    %vm3548 = vmor %vm3546, %vm3547
    %v3549 = vsel %vm3548, %v3541, %v3545
    %v3550 = vand.u32 2147483647, %v3509
    %vm3551 = vcmp.eq.f32.partialorder %v3550, 8.507059e+37
    %v3552 = vand.u32 %v3509, 2147483648
    %v3553 = vor.u32 1.1754944e-38, %v3552
    %v3554 = vsel %vm3551, %v3553, %v3549
    %v3555 = vmul.f32 1.0, %v3554
    %v3556 = vrcp.pop %v3510
    %v3557 = vmul.f32 %v3510, %v3556
    %v3558 = vsub.f32 1.0, %v3557
    %v3559 = vmul.f32 %v3556, %v3558
    %v3560 = vadd.f32 %v3556, %v3559
    %vm3561 = vweird.f32 %v3510
    %vm3562 = vweird.f32 %v3556
    %vm3563 = vmor %vm3561, %vm3562
    %v3564 = vsel %vm3563, %v3556, %v3560
    %v3565 = vand.u32 2147483647, %v3510
    %vm3566 = vcmp.eq.f32.partialorder %v3565, 8.507059e+37
    %v3567 = vand.u32 %v3510, 2147483648
    %v3568 = vor.u32 1.1754944e-38, %v3567
    %v3569 = vsel %vm3566, %v3568, %v3564
    %v3570 = vmul.f32 1.0, %v3569
    %v3571 = vadd.f32 %v3449, %v1100
    %v3572 = vadd.f32 %v3489, %v1101
    %v3573 = vmul.f32 %v3525, %v3571
    %v3574 = vmul.f32 %v3540, %v3572
    %v3575 = vadd.f32 %v3249, %v3573
    %v3576 = vadd.f32 %v3250, %v3574
    %v3577 = vtanh.pop %v3575
    %v3578 = vtanh.pop %v3576
    %v3579 = vsub.f32 1.0, %v3555
    %v3580 = vsub.f32 1.0, %v3570
    %v3581 = vmul.f32 %v3579, %v3577
    %v3582 = vmul.f32 %v3580, %v3578
    %v3583 = vmul.f32 %v3555, %v3236
    %v3584 = vmul.f32 %v3570, %v3237
    %v3585 = vadd.f32 %v3581, %v3583
    %v3586 = vadd.f32 %v3582, %v3584
    %3587 = vst [vmem:[%s1126] sm:$0xff] %v3585
    %3588 = vst [vmem:[%s1122 + $0x8] sm:$0xff] %v3586
    %3589 = vst [vmem:[%s1122 + $0x10] sm:$0xff] %v3585
    %3590 = vst [vmem:[%s1126 + $0x18] sm:$0xff] %v3586
    %v3591 = vld [vmem:[#allocation3] sm:$0xff]
    %v3592 = vld [vmem:[#allocation3 + $0x8] sm:$0xff]
    %v3593 = vld [vmem:[#allocation3 + $0x10] sm:$0xff]
    %v3594 = vld [vmem:[#allocation3 + $0x18] sm:$0xff]
    %v3595 = vld [vmem:[#allocation3 + $0x20] sm:$0xff]
    %v3596 = vld [vmem:[#allocation3 + $0x28] sm:$0xff]
    %v3597 = vld [vmem:[#allocation3 + $0x30] sm:$0xff]
    %v3598 = vld [vmem:[#allocation3 + $0x38] sm:$0xff]
    %v3599 = vld [vmem:[#allocation3 + $0x40] sm:$0xff]
    %v3600 = vld [vmem:[#allocation3 + $0x48] sm:$0xff]
    %v3601 = vld [vmem:[#allocation3 + $0x50] sm:$0xff]
    %v3602 = vld [vmem:[#allocation3 + $0x58] sm:$0xff]
    %v3603 = vld [vmem:[#allocation3 + $0x60] sm:$0xff]
    %v3604 = vld [vmem:[#allocation3 + $0x68] sm:$0xff]
    %v3605 = vld [vmem:[#allocation3 + $0x70] sm:$0xff]
    %v3606 = vld [vmem:[#allocation3 + $0x78] sm:$0xff]
    %v3607 = vld [vmem:[#allocation3 + $0x80] sm:$0xff]
    %v3608 = vld [vmem:[#allocation3 + $0x88] sm:$0xff]
    %v3609 = vld [vmem:[#allocation3 + $0x90] sm:$0xff]
    %v3610 = vld [vmem:[#allocation3 + $0x98] sm:$0xff]
    %v3611 = vld [vmem:[#allocation3 + $0xa0] sm:$0xff]
    %v3612 = vld [vmem:[#allocation3 + $0xa8] sm:$0xff]
    %v3613 = vld [vmem:[#allocation3 + $0xb0] sm:$0xff]
    %v3614 = vld [vmem:[#allocation3 + $0xb8] sm:$0xff]
    %v3615 = vld [vmem:[#allocation3 + $0xc0] sm:$0xff]
    %v3616 = vld [vmem:[#allocation3 + $0xc8] sm:$0xff]
    %v3617 = vld [vmem:[#allocation3 + $0xd0] sm:$0xff]
    %v3618 = vld [vmem:[#allocation3 + $0xd8] sm:$0xff]
    %v3619 = vld [vmem:[#allocation3 + $0xe0] sm:$0xff]
    %v3620 = vld [vmem:[#allocation3 + $0xe8] sm:$0xff]
    %v3621 = vld [vmem:[#allocation3 + $0xf0] sm:$0xff]
    %v3622 = vld [vmem:[#allocation3 + $0xf8] sm:$0xff]
    %v3623 = vld [vmem:[#allocation13] sm:$0xff]
    %v3624 = vld [vmem:[#allocation13 + $0x8] sm:$0xff]
    %v3625 = vld [vmem:[#allocation13 + $0x10] sm:$0xff]
    %v3626 = vld [vmem:[#allocation13 + $0x18] sm:$0xff]
    %v3627 = vld [vmem:[#allocation13 + $0x20] sm:$0xff]
    %v3628 = vld [vmem:[#allocation13 + $0x28] sm:$0xff]
    %v3629 = vld [vmem:[#allocation13 + $0x30] sm:$0xff]
    %v3630 = vld [vmem:[#allocation13 + $0x38] sm:$0xff]
    %v3631 = vld [vmem:[#allocation13 + $0x40] sm:$0xff]
    %v3632 = vld [vmem:[#allocation13 + $0x48] sm:$0xff]
    %v3633 = vld [vmem:[#allocation13 + $0x50] sm:$0xff]
    %v3634 = vld [vmem:[#allocation13 + $0x58] sm:$0xff]
    %v3635 = vld [vmem:[#allocation13 + $0x60] sm:$0xff]
    %v3636 = vld [vmem:[#allocation13 + $0x68] sm:$0xff]
    %v3637 = vld [vmem:[#allocation13 + $0x70] sm:$0xff]
    %v3638 = vld [vmem:[#allocation13 + $0x78] sm:$0xff]
    %v3639 = vld [vmem:[#allocation13 + $0x80] sm:$0xff]
    %v3640 = vld [vmem:[#allocation13 + $0x88] sm:$0xff]
    %v3641 = vld [vmem:[#allocation13 + $0x90] sm:$0xff]
    %v3642 = vld [vmem:[#allocation13 + $0x98] sm:$0xff]
    %v3643 = vld [vmem:[#allocation13 + $0xa0] sm:$0xff]
    %v3644 = vld [vmem:[#allocation13 + $0xa8] sm:$0xff]
    %v3645 = vld [vmem:[#allocation13 + $0xb0] sm:$0xff]
    %v3646 = vld [vmem:[#allocation13 + $0xb8] sm:$0xff]
    %v3647 = vld [vmem:[#allocation13 + $0xc0] sm:$0xff]
    %v3648 = vld [vmem:[#allocation13 + $0xc8] sm:$0xff]
    %v3649 = vld [vmem:[#allocation13 + $0xd0] sm:$0xff]
    %v3650 = vld [vmem:[#allocation13 + $0xd8] sm:$0xff]
    %v3651 = vld [vmem:[#allocation13 + $0xe0] sm:$0xff]
    %v3652 = vld [vmem:[#allocation13 + $0xe8] sm:$0xff]
    %v3653 = vld [vmem:[#allocation13 + $0xf0] sm:$0xff]
    %v3654 = vld [vmem:[#allocation13 + $0xf8] sm:$0xff]
    %v3655 = vld [vmem:[#allocation13 + $0x100] sm:$0xff]
    %v3656 = vld [vmem:[#allocation13 + $0x108] sm:$0xff]
    %v3657 = vld [vmem:[#allocation13 + $0x110] sm:$0xff]
    %v3658 = vld [vmem:[#allocation13 + $0x118] sm:$0xff]
    %v3659 = vld [vmem:[#allocation13 + $0x120] sm:$0xff]
    %v3660 = vld [vmem:[#allocation13 + $0x128] sm:$0xff]
    %v3661 = vld [vmem:[#allocation13 + $0x130] sm:$0xff]
    %v3662 = vld [vmem:[#allocation13 + $0x138] sm:$0xff]
    %v3663 = vld [vmem:[#allocation13 + $0x140] sm:$0xff]
    %v3664 = vld [vmem:[#allocation13 + $0x148] sm:$0xff]
    %v3665 = vld [vmem:[#allocation13 + $0x150] sm:$0xff]
    %v3666 = vld [vmem:[#allocation13 + $0x158] sm:$0xff]
    %v3667 = vld [vmem:[#allocation13 + $0x160] sm:$0xff]
    %v3668 = vld [vmem:[#allocation13 + $0x168] sm:$0xff]
    %v3669 = vld [vmem:[#allocation13 + $0x170] sm:$0xff]
    %v3670 = vld [vmem:[#allocation13 + $0x178] sm:$0xff]
    %v3671 = vld [vmem:[#allocation13 + $0x180] sm:$0xff]
    %v3672 = vld [vmem:[#allocation13 + $0x188] sm:$0xff]
    %v3673 = vld [vmem:[#allocation13 + $0x190] sm:$0xff]
    %v3674 = vld [vmem:[#allocation13 + $0x198] sm:$0xff]
    %v3675 = vld [vmem:[#allocation13 + $0x1a0] sm:$0xff]
    %v3676 = vld [vmem:[#allocation13 + $0x1a8] sm:$0xff]
    %v3677 = vld [vmem:[#allocation13 + $0x1b0] sm:$0xff]
    %v3678 = vld [vmem:[#allocation13 + $0x1b8] sm:$0xff]
    %v3679 = vld [vmem:[#allocation13 + $0x1c0] sm:$0xff]
    %v3680 = vld [vmem:[#allocation13 + $0x1c8] sm:$0xff]
    %v3681 = vld [vmem:[#allocation13 + $0x1d0] sm:$0xff]
    %v3682 = vld [vmem:[#allocation13 + $0x1d8] sm:$0xff]
    %v3683 = vld [vmem:[#allocation13 + $0x1e0] sm:$0xff]
    %v3684 = vld [vmem:[#allocation13 + $0x1e8] sm:$0xff]
    %v3685 = vld [vmem:[#allocation13 + $0x1f0] sm:$0xff]
    %v3686 = vld [vmem:[#allocation13 + $0x1f8] sm:$0xff]
    %v3687 = vld [vmem:[#allocation13 + $0x200] sm:$0xff]
    %v3688 = vld [vmem:[#allocation13 + $0x208] sm:$0xff]
    %v3689 = vld [vmem:[#allocation13 + $0x210] sm:$0xff]
    %v3690 = vld [vmem:[#allocation13 + $0x218] sm:$0xff]
    %v3691 = vld [vmem:[#allocation13 + $0x220] sm:$0xff]
    %v3692 = vld [vmem:[#allocation13 + $0x228] sm:$0xff]
    %v3693 = vld [vmem:[#allocation13 + $0x230] sm:$0xff]
    %v3694 = vld [vmem:[#allocation13 + $0x238] sm:$0xff]
    %v3695 = vld [vmem:[#allocation13 + $0x240] sm:$0xff]
    %v3696 = vld [vmem:[#allocation13 + $0x248] sm:$0xff]
    %v3697 = vld [vmem:[#allocation13 + $0x250] sm:$0xff]
    %v3698 = vld [vmem:[#allocation13 + $0x258] sm:$0xff]
    %v3699 = vld [vmem:[#allocation13 + $0x260] sm:$0xff]
    %v3700 = vld [vmem:[#allocation13 + $0x268] sm:$0xff]
    %v3701 = vld [vmem:[#allocation13 + $0x270] sm:$0xff]
    %v3702 = vld [vmem:[#allocation13 + $0x278] sm:$0xff]
    %v3703 = vld [vmem:[#allocation13 + $0x280] sm:$0xff]
    %v3704 = vld [vmem:[#allocation13 + $0x288] sm:$0xff]
    %v3705 = vld [vmem:[#allocation13 + $0x290] sm:$0xff]
    %v3706 = vld [vmem:[#allocation13 + $0x298] sm:$0xff]
    %v3707 = vld [vmem:[#allocation13 + $0x2a0] sm:$0xff]
    %v3708 = vld [vmem:[#allocation13 + $0x2a8] sm:$0xff]
    %v3709 = vld [vmem:[#allocation13 + $0x2b0] sm:$0xff]
    %v3710 = vld [vmem:[#allocation13 + $0x2b8] sm:$0xff]
    %v3711 = vld [vmem:[#allocation13 + $0x2c0] sm:$0xff]
    %v3712 = vld [vmem:[#allocation13 + $0x2c8] sm:$0xff]
    %v3713 = vld [vmem:[#allocation13 + $0x2d0] sm:$0xff]
    %v3714 = vld [vmem:[#allocation13 + $0x2d8] sm:$0xff]
    %v3715 = vld [vmem:[#allocation13 + $0x2e0] sm:$0xff]
    %v3716 = vld [vmem:[#allocation13 + $0x2e8] sm:$0xff]
    %v3717 = vld [vmem:[#allocation13 + $0x2f0] sm:$0xff]
    %v3718 = vld [vmem:[#allocation13 + $0x2f8] sm:$0xff]
    %v3719 = vld [vmem:[#allocation13 + $0x300] sm:$0xff]
    %v3720 = vld [vmem:[#allocation13 + $0x308] sm:$0xff]
    %v3721 = vld [vmem:[#allocation13 + $0x310] sm:$0xff]
    %v3722 = vld [vmem:[#allocation13 + $0x318] sm:$0xff]
    %v3723 = vld [vmem:[#allocation13 + $0x320] sm:$0xff]
    %v3724 = vld [vmem:[#allocation13 + $0x328] sm:$0xff]
    %v3725 = vld [vmem:[#allocation13 + $0x330] sm:$0xff]
    %v3726 = vld [vmem:[#allocation13 + $0x338] sm:$0xff]
    %v3727 = vld [vmem:[#allocation13 + $0x340] sm:$0xff]
    %v3728 = vld [vmem:[#allocation13 + $0x348] sm:$0xff]
    %v3729 = vld [vmem:[#allocation13 + $0x350] sm:$0xff]
    %v3730 = vld [vmem:[#allocation13 + $0x358] sm:$0xff]
    %v3731 = vld [vmem:[#allocation13 + $0x360] sm:$0xff]
    %v3732 = vld [vmem:[#allocation13 + $0x368] sm:$0xff]
    %v3733 = vld [vmem:[#allocation13 + $0x370] sm:$0xff]
    %v3734 = vld [vmem:[#allocation13 + $0x378] sm:$0xff]
    %v3735 = vld [vmem:[#allocation13 + $0x380] sm:$0xff]
    %v3736 = vld [vmem:[#allocation13 + $0x388] sm:$0xff]
    %v3737 = vld [vmem:[#allocation13 + $0x390] sm:$0xff]
    %v3738 = vld [vmem:[#allocation13 + $0x398] sm:$0xff]
    %v3739 = vld [vmem:[#allocation13 + $0x3a0] sm:$0xff]
    %v3740 = vld [vmem:[#allocation13 + $0x3a8] sm:$0xff]
    %v3741 = vld [vmem:[#allocation13 + $0x3b0] sm:$0xff]
    %v3742 = vld [vmem:[#allocation13 + $0x3b8] sm:$0xff]
    %v3743 = vld [vmem:[#allocation13 + $0x3c0] sm:$0xff]
    %v3744 = vld [vmem:[#allocation13 + $0x3c8] sm:$0xff]
    %v3745 = vld [vmem:[#allocation13 + $0x3d0] sm:$0xff]
    %v3746 = vld [vmem:[#allocation13 + $0x3d8] sm:$0xff]
    %v3747 = vld [vmem:[#allocation13 + $0x3e0] sm:$0xff]
    %v3748 = vld [vmem:[#allocation13 + $0x3e8] sm:$0xff]
    %v3749 = vld [vmem:[#allocation13 + $0x3f0] sm:$0xff]
    %v3750 = vld [vmem:[#allocation13 + $0x3f8] sm:$0xff]
    %v3751 = vld [vmem:[#allocation13 + $0x400] sm:$0xff]
    %v3752 = vld [vmem:[#allocation13 + $0x408] sm:$0xff]
    %v3753 = vld [vmem:[#allocation13 + $0x410] sm:$0xff]
    %v3754 = vld [vmem:[#allocation13 + $0x418] sm:$0xff]
    %v3755 = vld [vmem:[#allocation13 + $0x420] sm:$0xff]
    %v3756 = vld [vmem:[#allocation13 + $0x428] sm:$0xff]
    %v3757 = vld [vmem:[#allocation13 + $0x430] sm:$0xff]
    %v3758 = vld [vmem:[#allocation13 + $0x438] sm:$0xff]
    %v3759 = vld [vmem:[#allocation13 + $0x440] sm:$0xff]
    %v3760 = vld [vmem:[#allocation13 + $0x448] sm:$0xff]
    %v3761 = vld [vmem:[#allocation13 + $0x450] sm:$0xff]
    %v3762 = vld [vmem:[#allocation13 + $0x458] sm:$0xff]
    %v3763 = vld [vmem:[#allocation13 + $0x460] sm:$0xff]
    %v3764 = vld [vmem:[#allocation13 + $0x468] sm:$0xff]
    %v3765 = vld [vmem:[#allocation13 + $0x470] sm:$0xff]
    %v3766 = vld [vmem:[#allocation13 + $0x478] sm:$0xff]
    %v3767 = vld [vmem:[#allocation13 + $0x480] sm:$0xff]
    %v3768 = vld [vmem:[#allocation13 + $0x488] sm:$0xff]
    %v3769 = vld [vmem:[#allocation13 + $0x490] sm:$0xff]
    %v3770 = vld [vmem:[#allocation13 + $0x498] sm:$0xff]
    %v3771 = vld [vmem:[#allocation13 + $0x4a0] sm:$0xff]
    %v3772 = vld [vmem:[#allocation13 + $0x4a8] sm:$0xff]
    %v3773 = vld [vmem:[#allocation13 + $0x4b0] sm:$0xff]
    %v3774 = vld [vmem:[#allocation13 + $0x4b8] sm:$0xff]
    %v3775 = vld [vmem:[#allocation13 + $0x4c0] sm:$0xff]
    %v3776 = vld [vmem:[#allocation13 + $0x4c8] sm:$0xff]
    %v3777 = vld [vmem:[#allocation13 + $0x4d0] sm:$0xff]
    %v3778 = vld [vmem:[#allocation13 + $0x4d8] sm:$0xff]
    %v3779 = vld [vmem:[#allocation13 + $0x4e0] sm:$0xff]
    %v3780 = vld [vmem:[#allocation13 + $0x4e8] sm:$0xff]
    %v3781 = vld [vmem:[#allocation13 + $0x4f0] sm:$0xff]
    %v3782 = vld [vmem:[#allocation13 + $0x4f8] sm:$0xff]
    %v3783 = vld [vmem:[#allocation13 + $0x500] sm:$0xff]
    %v3784 = vld [vmem:[#allocation13 + $0x508] sm:$0xff]
    %v3785 = vld [vmem:[#allocation13 + $0x510] sm:$0xff]
    %v3786 = vld [vmem:[#allocation13 + $0x518] sm:$0xff]
    %v3787 = vld [vmem:[#allocation13 + $0x520] sm:$0xff]
    %v3788 = vld [vmem:[#allocation13 + $0x528] sm:$0xff]
    %v3789 = vld [vmem:[#allocation13 + $0x530] sm:$0xff]
    %v3790 = vld [vmem:[#allocation13 + $0x538] sm:$0xff]
    %v3791 = vld [vmem:[#allocation13 + $0x540] sm:$0xff]
    %v3792 = vld [vmem:[#allocation13 + $0x548] sm:$0xff]
    %v3793 = vld [vmem:[#allocation13 + $0x550] sm:$0xff]
    %v3794 = vld [vmem:[#allocation13 + $0x558] sm:$0xff]
    %v3795 = vld [vmem:[#allocation13 + $0x560] sm:$0xff]
    %v3796 = vld [vmem:[#allocation13 + $0x568] sm:$0xff]
    %v3797 = vld [vmem:[#allocation13 + $0x570] sm:$0xff]
    %v3798 = vld [vmem:[#allocation13 + $0x578] sm:$0xff]
    %v3799 = vld [vmem:[#allocation13 + $0x580] sm:$0xff]
    %v3800 = vld [vmem:[#allocation13 + $0x588] sm:$0xff]
    %v3801 = vld [vmem:[#allocation13 + $0x590] sm:$0xff]
    %v3802 = vld [vmem:[#allocation13 + $0x598] sm:$0xff]
    %v3803 = vld [vmem:[#allocation13 + $0x5a0] sm:$0xff]
    %v3804 = vld [vmem:[#allocation13 + $0x5a8] sm:$0xff]
    %v3805 = vld [vmem:[#allocation13 + $0x5b0] sm:$0xff]
    %v3806 = vld [vmem:[#allocation13 + $0x5b8] sm:$0xff]
    %v3807 = vld [vmem:[#allocation13 + $0x5c0] sm:$0xff]
    %v3808 = vld [vmem:[#allocation13 + $0x5c8] sm:$0xff]
    %v3809 = vld [vmem:[#allocation13 + $0x5d0] sm:$0xff]
    %v3810 = vld [vmem:[#allocation13 + $0x5d8] sm:$0xff]
    %v3811 = vld [vmem:[#allocation13 + $0x5e0] sm:$0xff]
    %v3812 = vld [vmem:[#allocation13 + $0x5e8] sm:$0xff]
    %v3813 = vld [vmem:[#allocation13 + $0x5f0] sm:$0xff]
    %v3814 = vld [vmem:[#allocation13 + $0x5f8] sm:$0xff]
    %v3815 = vld [vmem:[#allocation13 + $0x600] sm:$0xff]
    %v3816 = vld [vmem:[#allocation13 + $0x608] sm:$0xff]
    %v3817 = vld [vmem:[#allocation13 + $0x610] sm:$0xff]
    %v3818 = vld [vmem:[#allocation13 + $0x618] sm:$0xff]
    %v3819 = vld [vmem:[#allocation13 + $0x620] sm:$0xff]
    %v3820 = vld [vmem:[#allocation13 + $0x628] sm:$0xff]
    %v3821 = vld [vmem:[#allocation13 + $0x630] sm:$0xff]
    %v3822 = vld [vmem:[#allocation13 + $0x638] sm:$0xff]
    %v3823 = vld [vmem:[#allocation13 + $0x640] sm:$0xff]
    %v3824 = vld [vmem:[#allocation13 + $0x648] sm:$0xff]
    %v3825 = vld [vmem:[#allocation13 + $0x650] sm:$0xff]
    %v3826 = vld [vmem:[#allocation13 + $0x658] sm:$0xff]
    %v3827 = vld [vmem:[#allocation13 + $0x660] sm:$0xff]
    %v3828 = vld [vmem:[#allocation13 + $0x668] sm:$0xff]
    %v3829 = vld [vmem:[#allocation13 + $0x670] sm:$0xff]
    %v3830 = vld [vmem:[#allocation13 + $0x678] sm:$0xff]
    %v3831 = vld [vmem:[#allocation13 + $0x680] sm:$0xff]
    %v3832 = vld [vmem:[#allocation13 + $0x688] sm:$0xff]
    %v3833 = vld [vmem:[#allocation13 + $0x690] sm:$0xff]
    %v3834 = vld [vmem:[#allocation13 + $0x698] sm:$0xff]
    %v3835 = vld [vmem:[#allocation13 + $0x6a0] sm:$0xff]
    %v3836 = vld [vmem:[#allocation13 + $0x6a8] sm:$0xff]
    %v3837 = vld [vmem:[#allocation13 + $0x6b0] sm:$0xff]
    %v3838 = vld [vmem:[#allocation13 + $0x6b8] sm:$0xff]
    %v3839 = vld [vmem:[#allocation13 + $0x6c0] sm:$0xff]
    %v3840 = vld [vmem:[#allocation13 + $0x6c8] sm:$0xff]
    %v3841 = vld [vmem:[#allocation13 + $0x6d0] sm:$0xff]
    %v3842 = vld [vmem:[#allocation13 + $0x6d8] sm:$0xff]
    %v3843 = vld [vmem:[#allocation13 + $0x6e0] sm:$0xff]
    %v3844 = vld [vmem:[#allocation13 + $0x6e8] sm:$0xff]
    %v3845 = vld [vmem:[#allocation13 + $0x6f0] sm:$0xff]
    %v3846 = vld [vmem:[#allocation13 + $0x6f8] sm:$0xff]
    %v3847 = vld [vmem:[#allocation13 + $0x700] sm:$0xff]
    %v3848 = vld [vmem:[#allocation13 + $0x708] sm:$0xff]
    %v3849 = vld [vmem:[#allocation13 + $0x710] sm:$0xff]
    %v3850 = vld [vmem:[#allocation13 + $0x718] sm:$0xff]
    %v3851 = vld [vmem:[#allocation13 + $0x720] sm:$0xff]
    %v3852 = vld [vmem:[#allocation13 + $0x728] sm:$0xff]
    %v3853 = vld [vmem:[#allocation13 + $0x730] sm:$0xff]
    %v3854 = vld [vmem:[#allocation13 + $0x738] sm:$0xff]
    %v3855 = vld [vmem:[#allocation13 + $0x740] sm:$0xff]
    %v3856 = vld [vmem:[#allocation13 + $0x748] sm:$0xff]
    %v3857 = vld [vmem:[#allocation13 + $0x750] sm:$0xff]
    %v3858 = vld [vmem:[#allocation13 + $0x758] sm:$0xff]
    %v3859 = vld [vmem:[#allocation13 + $0x760] sm:$0xff]
    %v3860 = vld [vmem:[#allocation13 + $0x768] sm:$0xff]
    %v3861 = vld [vmem:[#allocation13 + $0x770] sm:$0xff]
    %v3862 = vld [vmem:[#allocation13 + $0x778] sm:$0xff]
    %v3863 = vld [vmem:[#allocation13 + $0x780] sm:$0xff]
    %v3864 = vld [vmem:[#allocation13 + $0x788] sm:$0xff]
    %v3865 = vld [vmem:[#allocation13 + $0x790] sm:$0xff]
    %v3866 = vld [vmem:[#allocation13 + $0x798] sm:$0xff]
    %v3867 = vld [vmem:[#allocation13 + $0x7a0] sm:$0xff]
    %v3868 = vld [vmem:[#allocation13 + $0x7a8] sm:$0xff]
    %v3869 = vld [vmem:[#allocation13 + $0x7b0] sm:$0xff]
    %v3870 = vld [vmem:[#allocation13 + $0x7b8] sm:$0xff]
    %v3871 = vld [vmem:[#allocation13 + $0x7c0] sm:$0xff]
    %v3872 = vld [vmem:[#allocation13 + $0x7c8] sm:$0xff]
    %v3873 = vld [vmem:[#allocation13 + $0x7d0] sm:$0xff]
    %v3874 = vld [vmem:[#allocation13 + $0x7d8] sm:$0xff]
    %v3875 = vld [vmem:[#allocation13 + $0x7e0] sm:$0xff]
    %v3876 = vld [vmem:[#allocation13 + $0x7e8] sm:$0xff]
    %v3877 = vld [vmem:[#allocation13 + $0x7f0] sm:$0xff]
    %v3878 = vld [vmem:[#allocation13 + $0x7f8] sm:$0xff]
    %v3879 = vld [vmem:[#allocation13 + $0x800] sm:$0xff]
    %v3880 = vld [vmem:[#allocation13 + $0x808] sm:$0xff]
    %v3881 = vld [vmem:[#allocation13 + $0x810] sm:$0xff]
    %v3882 = vld [vmem:[#allocation13 + $0x818] sm:$0xff]
    %v3883 = vld [vmem:[#allocation13 + $0x820] sm:$0xff]
    %v3884 = vld [vmem:[#allocation13 + $0x828] sm:$0xff]
    %v3885 = vld [vmem:[#allocation13 + $0x830] sm:$0xff]
    %v3886 = vld [vmem:[#allocation13 + $0x838] sm:$0xff]
    %v3887 = vld [vmem:[#allocation13 + $0x840] sm:$0xff]
    %v3888 = vld [vmem:[#allocation13 + $0x848] sm:$0xff]
    %v3889 = vld [vmem:[#allocation13 + $0x850] sm:$0xff]
    %v3890 = vld [vmem:[#allocation13 + $0x858] sm:$0xff]
    %v3891 = vld [vmem:[#allocation13 + $0x860] sm:$0xff]
    %v3892 = vld [vmem:[#allocation13 + $0x868] sm:$0xff]
    %v3893 = vld [vmem:[#allocation13 + $0x870] sm:$0xff]
    %v3894 = vld [vmem:[#allocation13 + $0x878] sm:$0xff]
    %v3895 = vld [vmem:[#allocation13 + $0x880] sm:$0xff]
    %v3896 = vld [vmem:[#allocation13 + $0x888] sm:$0xff]
    %v3897 = vld [vmem:[#allocation13 + $0x890] sm:$0xff]
    %v3898 = vld [vmem:[#allocation13 + $0x898] sm:$0xff]
    %v3899 = vld [vmem:[#allocation13 + $0x8a0] sm:$0xff]
    %v3900 = vld [vmem:[#allocation13 + $0x8a8] sm:$0xff]
    %v3901 = vld [vmem:[#allocation13 + $0x8b0] sm:$0xff]
    %v3902 = vld [vmem:[#allocation13 + $0x8b8] sm:$0xff]
    %v3903 = vld [vmem:[#allocation13 + $0x8c0] sm:$0xff]
    %v3904 = vld [vmem:[#allocation13 + $0x8c8] sm:$0xff]
    %v3905 = vld [vmem:[#allocation13 + $0x8d0] sm:$0xff]
    %v3906 = vld [vmem:[#allocation13 + $0x8d8] sm:$0xff]
    %v3907 = vld [vmem:[#allocation13 + $0x8e0] sm:$0xff]
    %v3908 = vld [vmem:[#allocation13 + $0x8e8] sm:$0xff]
    %v3909 = vld [vmem:[#allocation13 + $0x8f0] sm:$0xff]
    %v3910 = vld [vmem:[#allocation13 + $0x8f8] sm:$0xff]
    %v3911 = vld [vmem:[#allocation13 + $0x900] sm:$0xff]
    %v3912 = vld [vmem:[#allocation13 + $0x908] sm:$0xff]
    %v3913 = vld [vmem:[#allocation13 + $0x910] sm:$0xff]
    %v3914 = vld [vmem:[#allocation13 + $0x918] sm:$0xff]
    %v3915 = vld [vmem:[#allocation13 + $0x920] sm:$0xff]
    %v3916 = vld [vmem:[#allocation13 + $0x928] sm:$0xff]
    %v3917 = vld [vmem:[#allocation13 + $0x930] sm:$0xff]
    %v3918 = vld [vmem:[#allocation13 + $0x938] sm:$0xff]
    %v3919 = vld [vmem:[#allocation13 + $0x940] sm:$0xff]
    %v3920 = vld [vmem:[#allocation13 + $0x948] sm:$0xff]
    %v3921 = vld [vmem:[#allocation13 + $0x950] sm:$0xff]
    %v3922 = vld [vmem:[#allocation13 + $0x958] sm:$0xff]
    %v3923 = vld [vmem:[#allocation13 + $0x960] sm:$0xff]
    %v3924 = vld [vmem:[#allocation13 + $0x968] sm:$0xff]
    %v3925 = vld [vmem:[#allocation13 + $0x970] sm:$0xff]
    %v3926 = vld [vmem:[#allocation13 + $0x978] sm:$0xff]
    %v3927 = vld [vmem:[#allocation13 + $0x980] sm:$0xff]
    %v3928 = vld [vmem:[#allocation13 + $0x988] sm:$0xff]
    %v3929 = vld [vmem:[#allocation13 + $0x990] sm:$0xff]
    %v3930 = vld [vmem:[#allocation13 + $0x998] sm:$0xff]
    %v3931 = vld [vmem:[#allocation13 + $0x9a0] sm:$0xff]
    %v3932 = vld [vmem:[#allocation13 + $0x9a8] sm:$0xff]
    %v3933 = vld [vmem:[#allocation13 + $0x9b0] sm:$0xff]
    %v3934 = vld [vmem:[#allocation13 + $0x9b8] sm:$0xff]
    %v3935 = vld [vmem:[#allocation13 + $0x9c0] sm:$0xff]
    %v3936 = vld [vmem:[#allocation13 + $0x9c8] sm:$0xff]
    %v3937 = vld [vmem:[#allocation13 + $0x9d0] sm:$0xff]
    %v3938 = vld [vmem:[#allocation13 + $0x9d8] sm:$0xff]
    %v3939 = vld [vmem:[#allocation13 + $0x9e0] sm:$0xff]
    %v3940 = vld [vmem:[#allocation13 + $0x9e8] sm:$0xff]
    %v3941 = vld [vmem:[#allocation13 + $0x9f0] sm:$0xff]
    %v3942 = vld [vmem:[#allocation13 + $0x9f8] sm:$0xff]
    %v3943 = vld [vmem:[#allocation13 + $0xa00] sm:$0xff]
    %v3944 = vld [vmem:[#allocation13 + $0xa08] sm:$0xff]
    %v3945 = vld [vmem:[#allocation13 + $0xa10] sm:$0xff]
    %v3946 = vld [vmem:[#allocation13 + $0xa18] sm:$0xff]
    %v3947 = vld [vmem:[#allocation13 + $0xa20] sm:$0xff]
    %v3948 = vld [vmem:[#allocation13 + $0xa28] sm:$0xff]
    %v3949 = vld [vmem:[#allocation13 + $0xa30] sm:$0xff]
    %v3950 = vld [vmem:[#allocation13 + $0xa38] sm:$0xff]
    %v3951 = vld [vmem:[#allocation13 + $0xa40] sm:$0xff]
    %v3952 = vld [vmem:[#allocation13 + $0xa48] sm:$0xff]
    %v3953 = vld [vmem:[#allocation13 + $0xa50] sm:$0xff]
    %v3954 = vld [vmem:[#allocation13 + $0xa58] sm:$0xff]
    %v3955 = vld [vmem:[#allocation13 + $0xa60] sm:$0xff]
    %v3956 = vld [vmem:[#allocation13 + $0xa68] sm:$0xff]
    %v3957 = vld [vmem:[#allocation13 + $0xa70] sm:$0xff]
    %v3958 = vld [vmem:[#allocation13 + $0xa78] sm:$0xff]
    %v3959 = vld [vmem:[#allocation13 + $0xa80] sm:$0xff]
    %v3960 = vld [vmem:[#allocation13 + $0xa88] sm:$0xff]
    %v3961 = vld [vmem:[#allocation13 + $0xa90] sm:$0xff]
    %v3962 = vld [vmem:[#allocation13 + $0xa98] sm:$0xff]
    %v3963 = vld [vmem:[#allocation13 + $0xaa0] sm:$0xff]
    %v3964 = vld [vmem:[#allocation13 + $0xaa8] sm:$0xff]
    %v3965 = vld [vmem:[#allocation13 + $0xab0] sm:$0xff]
    %v3966 = vld [vmem:[#allocation13 + $0xab8] sm:$0xff]
    %v3967 = vld [vmem:[#allocation13 + $0xac0] sm:$0xff]
    %v3968 = vld [vmem:[#allocation13 + $0xac8] sm:$0xff]
    %v3969 = vld [vmem:[#allocation13 + $0xad0] sm:$0xff]
    %v3970 = vld [vmem:[#allocation13 + $0xad8] sm:$0xff]
    %v3971 = vld [vmem:[#allocation13 + $0xae0] sm:$0xff]
    %v3972 = vld [vmem:[#allocation13 + $0xae8] sm:$0xff]
    %v3973 = vld [vmem:[#allocation13 + $0xaf0] sm:$0xff]
    %v3974 = vld [vmem:[#allocation13 + $0xaf8] sm:$0xff]
    %v3975 = vld [vmem:[#allocation13 + $0xb00] sm:$0xff]
    %v3976 = vld [vmem:[#allocation13 + $0xb08] sm:$0xff]
    %v3977 = vld [vmem:[#allocation13 + $0xb10] sm:$0xff]
    %v3978 = vld [vmem:[#allocation13 + $0xb18] sm:$0xff]
    %v3979 = vld [vmem:[#allocation13 + $0xb20] sm:$0xff]
    %v3980 = vld [vmem:[#allocation13 + $0xb28] sm:$0xff]
    %v3981 = vld [vmem:[#allocation13 + $0xb30] sm:$0xff]
    %v3982 = vld [vmem:[#allocation13 + $0xb38] sm:$0xff]
    %v3983 = vld [vmem:[#allocation13 + $0xb40] sm:$0xff]
    %v3984 = vld [vmem:[#allocation13 + $0xb48] sm:$0xff]
    %v3985 = vld [vmem:[#allocation13 + $0xb50] sm:$0xff]
    %v3986 = vld [vmem:[#allocation13 + $0xb58] sm:$0xff]
    %v3987 = vld [vmem:[#allocation13 + $0xb60] sm:$0xff]
    %v3988 = vld [vmem:[#allocation13 + $0xb68] sm:$0xff]
    %v3989 = vld [vmem:[#allocation13 + $0xb70] sm:$0xff]
    %v3990 = vld [vmem:[#allocation13 + $0xb78] sm:$0xff]
    %v3991 = vld [vmem:[#allocation13 + $0xb80] sm:$0xff]
    %v3992 = vld [vmem:[#allocation13 + $0xb88] sm:$0xff]
    %v3993 = vld [vmem:[#allocation13 + $0xb90] sm:$0xff]
    %v3994 = vld [vmem:[#allocation13 + $0xb98] sm:$0xff]
    %v3995 = vld [vmem:[#allocation13 + $0xba0] sm:$0xff]
    %v3996 = vld [vmem:[#allocation13 + $0xba8] sm:$0xff]
    %v3997 = vld [vmem:[#allocation13 + $0xbb0] sm:$0xff]
    %v3998 = vld [vmem:[#allocation13 + $0xbb8] sm:$0xff]
    %v3999 = vld [vmem:[#allocation13 + $0xbc0] sm:$0xff]
    %v4000 = vld [vmem:[#allocation13 + $0xbc8] sm:$0xff]
    %v4001 = vld [vmem:[#allocation13 + $0xbd0] sm:$0xff]
    %v4002 = vld [vmem:[#allocation13 + $0xbd8] sm:$0xff]
    %v4003 = vld [vmem:[#allocation13 + $0xbe0] sm:$0xff]
    %v4004 = vld [vmem:[#allocation13 + $0xbe8] sm:$0xff]
    %v4005 = vld [vmem:[#allocation13 + $0xbf0] sm:$0xff]
    %v4006 = vld [vmem:[#allocation13 + $0xbf8] sm:$0xff]
    %v4007 = vld [vmem:[#allocation15] sm:$0x3f]
    %v4009 = vperm.slane %v4007, 0
    %v4010 = vperm.slane %v4007, 1
    %v4011 = vperm.slane %v4007, 2
    %v4012 = vperm.slane %v4007, 3
    %v4013 = vperm.slane %v4007, 4
    %v4014 = vperm.slane %v4007, 5
    %4021 = vmatpush.msra.mxu0 %v3713
    %4022 = vmatpush.msra.mxu0 %v3707
    %4023 = vmatpush.msra.mxu0 %v3701
    %4024 = vmatpush.msra.mxu0 %v3695
    %4025 = vmatpush.msra.mxu0 %v3689
    %4026 = vmatpush.msra.mxu0 %v3683
    %4027 = vmatpush.msra.mxu0 %v3677
    %4028 = vmatpush.msra.mxu0 %v3671
    %4029 = vmatpush.msra.mxu0 %v3665
    %4030 = vmatpush.msra.mxu0 %v3659
    %4031 = vmatpush.msra.mxu0 %v3653
    %4032 = vmatpush.msra.mxu0 %v3647
    %4033 = vmatpush.msra.mxu0 %v3641
    %4034 = vmatpush.msra.mxu0 %v3635
    %4035 = vmatpush.msra.mxu0 %v3629
    %4036 = vmatpush.msra.mxu0 %v3623
    %4037 = vmatmul.f32.gmra.mxu0 %v3591
    %v4038 = vpop.f32.mrf.mxu0
    %v4039 = vadd.f32 %v4009, %v4038
    %4040 = vmatmul.f32.gmra.mxu0 %v3595
    %v4041 = vpop.f32.mrf.mxu0
    %v4042 = vadd.f32 %v4009, %v4041
    %4043 = vmatmul.f32.gmra.mxu0 %v3599
    %v4044 = vpop.f32.mrf.mxu0
    %v4045 = vadd.f32 %v4009, %v4044
    %4046 = vmatmul.f32.gmra.mxu0 %v3603
    %v4047 = vpop.f32.mrf.mxu0
    %v4048 = vadd.f32 %v4009, %v4047
    %4049 = vmatmul.f32.gmra.mxu0 %v3607
    %v4050 = vpop.f32.mrf.mxu0
    %v4051 = vadd.f32 %v4009, %v4050
    %4052 = vmatmul.f32.gmra.mxu0 %v3611
    %v4053 = vpop.f32.mrf.mxu0
    %v4054 = vadd.f32 %v4009, %v4053
    %4055 = vmatmul.f32.gmra.mxu0 %v3615
    %v4056 = vpop.f32.mrf.mxu0
    %v4057 = vadd.f32 %v4009, %v4056
    %4058 = vmatmul.f32.gmra.mxu0 %v3619
    %v4059 = vpop.f32.mrf.mxu0
    %v4060 = vadd.f32 %v4009, %v4059
    %4061 = vdwg.mxu0
    %4062 = vmatpush.msra.mxu0 %v3809
    %4063 = vmatpush.msra.mxu0 %v3803
    %4064 = vmatpush.msra.mxu0 %v3797
    %4065 = vmatpush.msra.mxu0 %v3791
    %4066 = vmatpush.msra.mxu0 %v3785
    %4067 = vmatpush.msra.mxu0 %v3779
    %4068 = vmatpush.msra.mxu0 %v3773
    %4069 = vmatpush.msra.mxu0 %v3767
    %4070 = vmatpush.msra.mxu0 %v3761
    %4071 = vmatpush.msra.mxu0 %v3755
    %4072 = vmatpush.msra.mxu0 %v3749
    %4073 = vmatpush.msra.mxu0 %v3743
    %4074 = vmatpush.msra.mxu0 %v3737
    %4075 = vmatpush.msra.mxu0 %v3731
    %4076 = vmatpush.msra.mxu0 %v3725
    %4077 = vmatpush.msra.mxu0 %v3719
    %4078 = vmatmul.f32.gmra.mxu0 %v3592
    %v4079 = vpop.f32.mrf.mxu0
    %v4080 = vadd.f32 %v4039, %v4079
    %4081 = vmatmul.f32.gmra.mxu0 %v3596
    %v4082 = vpop.f32.mrf.mxu0
    %v4083 = vadd.f32 %v4042, %v4082
    %4084 = vmatmul.f32.gmra.mxu0 %v3600
    %v4085 = vpop.f32.mrf.mxu0
    %v4086 = vadd.f32 %v4045, %v4085
    %4087 = vmatmul.f32.gmra.mxu0 %v3604
    %v4088 = vpop.f32.mrf.mxu0
    %v4089 = vadd.f32 %v4048, %v4088
    %4090 = vmatmul.f32.gmra.mxu0 %v3608
    %v4091 = vpop.f32.mrf.mxu0
    %v4092 = vadd.f32 %v4051, %v4091
    %4093 = vmatmul.f32.gmra.mxu0 %v3612
    %v4094 = vpop.f32.mrf.mxu0
    %v4095 = vadd.f32 %v4054, %v4094
    %4096 = vmatmul.f32.gmra.mxu0 %v3616
    %v4097 = vpop.f32.mrf.mxu0
    %v4098 = vadd.f32 %v4057, %v4097
    %4099 = vmatmul.f32.gmra.mxu0 %v3620
    %v4100 = vpop.f32.mrf.mxu0
    %v4101 = vadd.f32 %v4060, %v4100
    %4102 = vdwg.mxu0
    %4103 = vmatpush.msra.mxu0 %v3905
    %4104 = vmatpush.msra.mxu0 %v3899
    %4105 = vmatpush.msra.mxu0 %v3893
    %4106 = vmatpush.msra.mxu0 %v3887
    %4107 = vmatpush.msra.mxu0 %v3881
    %4108 = vmatpush.msra.mxu0 %v3875
    %4109 = vmatpush.msra.mxu0 %v3869
    %4110 = vmatpush.msra.mxu0 %v3863
    %4111 = vmatpush.msra.mxu0 %v3857
    %4112 = vmatpush.msra.mxu0 %v3851
    %4113 = vmatpush.msra.mxu0 %v3845
    %4114 = vmatpush.msra.mxu0 %v3839
    %4115 = vmatpush.msra.mxu0 %v3833
    %4116 = vmatpush.msra.mxu0 %v3827
    %4117 = vmatpush.msra.mxu0 %v3821
    %4118 = vmatpush.msra.mxu0 %v3815
    %4119 = vmatmul.f32.gmra.mxu0 %v3593
    %v4120 = vpop.f32.mrf.mxu0
    %v4121 = vadd.f32 %v4080, %v4120
    %4122 = vmatmul.f32.gmra.mxu0 %v3597
    %v4123 = vpop.f32.mrf.mxu0
    %v4124 = vadd.f32 %v4083, %v4123
    %4125 = vmatmul.f32.gmra.mxu0 %v3601
    %v4126 = vpop.f32.mrf.mxu0
    %v4127 = vadd.f32 %v4086, %v4126
    %4128 = vmatmul.f32.gmra.mxu0 %v3605
    %v4129 = vpop.f32.mrf.mxu0
    %v4130 = vadd.f32 %v4089, %v4129
    %4131 = vmatmul.f32.gmra.mxu0 %v3609
    %v4132 = vpop.f32.mrf.mxu0
    %v4133 = vadd.f32 %v4092, %v4132
    %4134 = vmatmul.f32.gmra.mxu0 %v3613
    %v4135 = vpop.f32.mrf.mxu0
    %v4136 = vadd.f32 %v4095, %v4135
    %4137 = vmatmul.f32.gmra.mxu0 %v3617
    %v4138 = vpop.f32.mrf.mxu0
    %v4139 = vadd.f32 %v4098, %v4138
    %4140 = vmatmul.f32.gmra.mxu0 %v3621
    %v4141 = vpop.f32.mrf.mxu0
    %v4142 = vadd.f32 %v4101, %v4141
    %4143 = vdwg.mxu0
    %4144 = vmatpush.msra.mxu0 %v4001
    %4145 = vmatpush.msra.mxu0 %v3995
    %4146 = vmatpush.msra.mxu0 %v3989
    %4147 = vmatpush.msra.mxu0 %v3983
    %4148 = vmatpush.msra.mxu0 %v3977
    %4149 = vmatpush.msra.mxu0 %v3971
    %4150 = vmatpush.msra.mxu0 %v3965
    %4151 = vmatpush.msra.mxu0 %v3959
    %4152 = vmatpush.msra.mxu0 %v3953
    %4153 = vmatpush.msra.mxu0 %v3947
    %4154 = vmatpush.msra.mxu0 %v3941
    %4155 = vmatpush.msra.mxu0 %v3935
    %4156 = vmatpush.msra.mxu0 %v3929
    %4157 = vmatpush.msra.mxu0 %v3923
    %4158 = vmatpush.msra.mxu0 %v3917
    %4159 = vmatpush.msra.mxu0 %v3911
    %4160 = vmatmul.f32.gmra.mxu0 %v3594
    %v4161 = vpop.f32.mrf.mxu0
    %v4162 = vadd.f32 %v4121, %v4161
    %4163 = vmatmul.f32.gmra.mxu0 %v3598
    %v4164 = vpop.f32.mrf.mxu0
    %v4165 = vadd.f32 %v4124, %v4164
    %4166 = vmatmul.f32.gmra.mxu0 %v3602
    %v4167 = vpop.f32.mrf.mxu0
    %v4168 = vadd.f32 %v4127, %v4167
    %4169 = vmatmul.f32.gmra.mxu0 %v3606
    %v4170 = vpop.f32.mrf.mxu0
    %v4171 = vadd.f32 %v4130, %v4170
    %4172 = vmatmul.f32.gmra.mxu0 %v3610
    %v4173 = vpop.f32.mrf.mxu0
    %v4174 = vadd.f32 %v4133, %v4173
    %4175 = vmatmul.f32.gmra.mxu0 %v3614
    %v4176 = vpop.f32.mrf.mxu0
    %v4177 = vadd.f32 %v4136, %v4176
    %4178 = vmatmul.f32.gmra.mxu0 %v3618
    %v4179 = vpop.f32.mrf.mxu0
    %v4180 = vadd.f32 %v4139, %v4179
    %4181 = vmatmul.f32.gmra.mxu0 %v3622
    %v4182 = vpop.f32.mrf.mxu0
    %v4183 = vadd.f32 %v4142, %v4182
    %4184 = vdwg.mxu0
    %4185 = vmatpush.msra.mxu0 %v3714
    %4186 = vmatpush.msra.mxu0 %v3708
    %4187 = vmatpush.msra.mxu0 %v3702
    %4188 = vmatpush.msra.mxu0 %v3696
    %4189 = vmatpush.msra.mxu0 %v3690
    %4190 = vmatpush.msra.mxu0 %v3684
    %4191 = vmatpush.msra.mxu0 %v3678
    %4192 = vmatpush.msra.mxu0 %v3672
    %4193 = vmatpush.msra.mxu0 %v3666
    %4194 = vmatpush.msra.mxu0 %v3660
    %4195 = vmatpush.msra.mxu0 %v3654
    %4196 = vmatpush.msra.mxu0 %v3648
    %4197 = vmatpush.msra.mxu0 %v3642
    %4198 = vmatpush.msra.mxu0 %v3636
    %4199 = vmatpush.msra.mxu0 %v3630
    %4200 = vmatpush.msra.mxu0 %v3624
    %4201 = vmatmul.f32.gmra.mxu0 %v3591
    %v4202 = vpop.f32.mrf.mxu0
    %v4203 = vadd.f32 %v4010, %v4202
    %4204 = vmatmul.f32.gmra.mxu0 %v3595
    %v4205 = vpop.f32.mrf.mxu0
    %v4206 = vadd.f32 %v4010, %v4205
    %4207 = vmatmul.f32.gmra.mxu0 %v3599
    %v4208 = vpop.f32.mrf.mxu0
    %v4209 = vadd.f32 %v4010, %v4208
    %4210 = vmatmul.f32.gmra.mxu0 %v3603
    %v4211 = vpop.f32.mrf.mxu0
    %v4212 = vadd.f32 %v4010, %v4211
    %4213 = vmatmul.f32.gmra.mxu0 %v3607
    %v4214 = vpop.f32.mrf.mxu0
    %v4215 = vadd.f32 %v4010, %v4214
    %4216 = vmatmul.f32.gmra.mxu0 %v3611
    %v4217 = vpop.f32.mrf.mxu0
    %v4218 = vadd.f32 %v4010, %v4217
    %4219 = vmatmul.f32.gmra.mxu0 %v3615
    %v4220 = vpop.f32.mrf.mxu0
    %v4221 = vadd.f32 %v4010, %v4220
    %4222 = vmatmul.f32.gmra.mxu0 %v3619
    %v4223 = vpop.f32.mrf.mxu0
    %v4224 = vadd.f32 %v4010, %v4223
    %4225 = vdwg.mxu0
    %4226 = vmatpush.msra.mxu0 %v3810
    %4227 = vmatpush.msra.mxu0 %v3804
    %4228 = vmatpush.msra.mxu0 %v3798
    %4229 = vmatpush.msra.mxu0 %v3792
    %4230 = vmatpush.msra.mxu0 %v3786
    %4231 = vmatpush.msra.mxu0 %v3780
    %4232 = vmatpush.msra.mxu0 %v3774
    %4233 = vmatpush.msra.mxu0 %v3768
    %4234 = vmatpush.msra.mxu0 %v3762
    %4235 = vmatpush.msra.mxu0 %v3756
    %4236 = vmatpush.msra.mxu0 %v3750
    %4237 = vmatpush.msra.mxu0 %v3744
    %4238 = vmatpush.msra.mxu0 %v3738
    %4239 = vmatpush.msra.mxu0 %v3732
    %4240 = vmatpush.msra.mxu0 %v3726
    %4241 = vmatpush.msra.mxu0 %v3720
    %4242 = vmatmul.f32.gmra.mxu0 %v3592
    %v4243 = vpop.f32.mrf.mxu0
    %v4244 = vadd.f32 %v4203, %v4243
    %4245 = vmatmul.f32.gmra.mxu0 %v3596
    %v4246 = vpop.f32.mrf.mxu0
    %v4247 = vadd.f32 %v4206, %v4246
    %4248 = vmatmul.f32.gmra.mxu0 %v3600
    %v4249 = vpop.f32.mrf.mxu0
    %v4250 = vadd.f32 %v4209, %v4249
    %4251 = vmatmul.f32.gmra.mxu0 %v3604
    %v4252 = vpop.f32.mrf.mxu0
    %v4253 = vadd.f32 %v4212, %v4252
    %4254 = vmatmul.f32.gmra.mxu0 %v3608
    %v4255 = vpop.f32.mrf.mxu0
    %v4256 = vadd.f32 %v4215, %v4255
    %4257 = vmatmul.f32.gmra.mxu0 %v3612
    %v4258 = vpop.f32.mrf.mxu0
    %v4259 = vadd.f32 %v4218, %v4258
    %4260 = vmatmul.f32.gmra.mxu0 %v3616
    %v4261 = vpop.f32.mrf.mxu0
    %v4262 = vadd.f32 %v4221, %v4261
    %4263 = vmatmul.f32.gmra.mxu0 %v3620
    %v4264 = vpop.f32.mrf.mxu0
    %v4265 = vadd.f32 %v4224, %v4264
    %4266 = vdwg.mxu0
    %4267 = vmatpush.msra.mxu0 %v3906
    %4268 = vmatpush.msra.mxu0 %v3900
    %4269 = vmatpush.msra.mxu0 %v3894
    %4270 = vmatpush.msra.mxu0 %v3888
    %4271 = vmatpush.msra.mxu0 %v3882
    %4272 = vmatpush.msra.mxu0 %v3876
    %4273 = vmatpush.msra.mxu0 %v3870
    %4274 = vmatpush.msra.mxu0 %v3864
    %4275 = vmatpush.msra.mxu0 %v3858
    %4276 = vmatpush.msra.mxu0 %v3852
    %4277 = vmatpush.msra.mxu0 %v3846
    %4278 = vmatpush.msra.mxu0 %v3840
    %4279 = vmatpush.msra.mxu0 %v3834
    %4280 = vmatpush.msra.mxu0 %v3828
    %4281 = vmatpush.msra.mxu0 %v3822
    %4282 = vmatpush.msra.mxu0 %v3816
    %4283 = vmatmul.f32.gmra.mxu0 %v3593
    %v4284 = vpop.f32.mrf.mxu0
    %v4285 = vadd.f32 %v4244, %v4284
    %4286 = vmatmul.f32.gmra.mxu0 %v3597
    %v4287 = vpop.f32.mrf.mxu0
    %v4288 = vadd.f32 %v4247, %v4287
    %4289 = vmatmul.f32.gmra.mxu0 %v3601
    %v4290 = vpop.f32.mrf.mxu0
    %v4291 = vadd.f32 %v4250, %v4290
    %4292 = vmatmul.f32.gmra.mxu0 %v3605
    %v4293 = vpop.f32.mrf.mxu0
    %v4294 = vadd.f32 %v4253, %v4293
    %4295 = vmatmul.f32.gmra.mxu0 %v3609
    %v4296 = vpop.f32.mrf.mxu0
    %v4297 = vadd.f32 %v4256, %v4296
    %4298 = vmatmul.f32.gmra.mxu0 %v3613
    %v4299 = vpop.f32.mrf.mxu0
    %v4300 = vadd.f32 %v4259, %v4299
    %4301 = vmatmul.f32.gmra.mxu0 %v3617
    %v4302 = vpop.f32.mrf.mxu0
    %v4303 = vadd.f32 %v4262, %v4302
    %4304 = vmatmul.f32.gmra.mxu0 %v3621
    %v4305 = vpop.f32.mrf.mxu0
    %v4306 = vadd.f32 %v4265, %v4305
    %4307 = vdwg.mxu0
    %4308 = vmatpush.msra.mxu0 %v4002
    %4309 = vmatpush.msra.mxu0 %v3996
    %4310 = vmatpush.msra.mxu0 %v3990
    %4311 = vmatpush.msra.mxu0 %v3984
    %4312 = vmatpush.msra.mxu0 %v3978
    %4313 = vmatpush.msra.mxu0 %v3972
    %4314 = vmatpush.msra.mxu0 %v3966
    %4315 = vmatpush.msra.mxu0 %v3960
    %4316 = vmatpush.msra.mxu0 %v3954
    %4317 = vmatpush.msra.mxu0 %v3948
    %4318 = vmatpush.msra.mxu0 %v3942
    %4319 = vmatpush.msra.mxu0 %v3936
    %4320 = vmatpush.msra.mxu0 %v3930
    %4321 = vmatpush.msra.mxu0 %v3924
    %4322 = vmatpush.msra.mxu0 %v3918
    %4323 = vmatpush.msra.mxu0 %v3912
    %4324 = vmatmul.f32.gmra.mxu0 %v3594
    %v4325 = vpop.f32.mrf.mxu0
    %v4326 = vadd.f32 %v4285, %v4325
    %4327 = vmatmul.f32.gmra.mxu0 %v3598
    %v4328 = vpop.f32.mrf.mxu0
    %v4329 = vadd.f32 %v4288, %v4328
    %4330 = vmatmul.f32.gmra.mxu0 %v3602
    %v4331 = vpop.f32.mrf.mxu0
    %v4332 = vadd.f32 %v4291, %v4331
    %4333 = vmatmul.f32.gmra.mxu0 %v3606
    %v4334 = vpop.f32.mrf.mxu0
    %v4335 = vadd.f32 %v4294, %v4334
    %4336 = vmatmul.f32.gmra.mxu0 %v3610
    %v4337 = vpop.f32.mrf.mxu0
    %v4338 = vadd.f32 %v4297, %v4337
    %4339 = vmatmul.f32.gmra.mxu0 %v3614
    %v4340 = vpop.f32.mrf.mxu0
    %v4341 = vadd.f32 %v4300, %v4340
    %4342 = vmatmul.f32.gmra.mxu0 %v3618
    %v4343 = vpop.f32.mrf.mxu0
    %v4344 = vadd.f32 %v4303, %v4343
    %4345 = vmatmul.f32.gmra.mxu0 %v3622
    %v4346 = vpop.f32.mrf.mxu0
    %v4347 = vadd.f32 %v4306, %v4346
    %4348 = vdwg.mxu0
    %4349 = vmatpush.msra.mxu0 %v3715
    %4350 = vmatpush.msra.mxu0 %v3709
    %4351 = vmatpush.msra.mxu0 %v3703
    %4352 = vmatpush.msra.mxu0 %v3697
    %4353 = vmatpush.msra.mxu0 %v3691
    %4354 = vmatpush.msra.mxu0 %v3685
    %4355 = vmatpush.msra.mxu0 %v3679
    %4356 = vmatpush.msra.mxu0 %v3673
    %4357 = vmatpush.msra.mxu0 %v3667
    %4358 = vmatpush.msra.mxu0 %v3661
    %4359 = vmatpush.msra.mxu0 %v3655
    %4360 = vmatpush.msra.mxu0 %v3649
    %4361 = vmatpush.msra.mxu0 %v3643
    %4362 = vmatpush.msra.mxu0 %v3637
    %4363 = vmatpush.msra.mxu0 %v3631
    %4364 = vmatpush.msra.mxu0 %v3625
    %4365 = vmatmul.f32.gmra.mxu0 %v3591
    %v4366 = vpop.f32.mrf.mxu0
    %v4367 = vadd.f32 %v4011, %v4366
    %4368 = vmatmul.f32.gmra.mxu0 %v3595
    %v4369 = vpop.f32.mrf.mxu0
    %v4370 = vadd.f32 %v4011, %v4369
    %4371 = vmatmul.f32.gmra.mxu0 %v3599
    %v4372 = vpop.f32.mrf.mxu0
    %v4373 = vadd.f32 %v4011, %v4372
    %4374 = vmatmul.f32.gmra.mxu0 %v3603
    %v4375 = vpop.f32.mrf.mxu0
    %v4376 = vadd.f32 %v4011, %v4375
    %4377 = vmatmul.f32.gmra.mxu0 %v3607
    %v4378 = vpop.f32.mrf.mxu0
    %v4379 = vadd.f32 %v4011, %v4378
    %4380 = vmatmul.f32.gmra.mxu0 %v3611
    %v4381 = vpop.f32.mrf.mxu0
    %v4382 = vadd.f32 %v4011, %v4381
    %4383 = vmatmul.f32.gmra.mxu0 %v3615
    %v4384 = vpop.f32.mrf.mxu0
    %v4385 = vadd.f32 %v4011, %v4384
    %4386 = vmatmul.f32.gmra.mxu0 %v3619
    %v4387 = vpop.f32.mrf.mxu0
    %v4388 = vadd.f32 %v4011, %v4387
    %4389 = vdwg.mxu0
    %4390 = vmatpush.msra.mxu0 %v3811
    %4391 = vmatpush.msra.mxu0 %v3805
    %4392 = vmatpush.msra.mxu0 %v3799
    %4393 = vmatpush.msra.mxu0 %v3793
    %4394 = vmatpush.msra.mxu0 %v3787
    %4395 = vmatpush.msra.mxu0 %v3781
    %4396 = vmatpush.msra.mxu0 %v3775
    %4397 = vmatpush.msra.mxu0 %v3769
    %4398 = vmatpush.msra.mxu0 %v3763
    %4399 = vmatpush.msra.mxu0 %v3757
    %4400 = vmatpush.msra.mxu0 %v3751
    %4401 = vmatpush.msra.mxu0 %v3745
    %4402 = vmatpush.msra.mxu0 %v3739
    %4403 = vmatpush.msra.mxu0 %v3733
    %4404 = vmatpush.msra.mxu0 %v3727
    %4405 = vmatpush.msra.mxu0 %v3721
    %4406 = vmatmul.f32.gmra.mxu0 %v3592
    %v4407 = vpop.f32.mrf.mxu0
    %v4408 = vadd.f32 %v4367, %v4407
    %4409 = vmatmul.f32.gmra.mxu0 %v3596
    %v4410 = vpop.f32.mrf.mxu0
    %v4411 = vadd.f32 %v4370, %v4410
    %4412 = vmatmul.f32.gmra.mxu0 %v3600
    %v4413 = vpop.f32.mrf.mxu0
    %v4414 = vadd.f32 %v4373, %v4413
    %4415 = vmatmul.f32.gmra.mxu0 %v3604
    %v4416 = vpop.f32.mrf.mxu0
    %v4417 = vadd.f32 %v4376, %v4416
    %4418 = vmatmul.f32.gmra.mxu0 %v3608
    %v4419 = vpop.f32.mrf.mxu0
    %v4420 = vadd.f32 %v4379, %v4419
    %4421 = vmatmul.f32.gmra.mxu0 %v3612
    %v4422 = vpop.f32.mrf.mxu0
    %v4423 = vadd.f32 %v4382, %v4422
    %4424 = vmatmul.f32.gmra.mxu0 %v3616
    %v4425 = vpop.f32.mrf.mxu0
    %v4426 = vadd.f32 %v4385, %v4425
    %4427 = vmatmul.f32.gmra.mxu0 %v3620
    %v4428 = vpop.f32.mrf.mxu0
    %v4429 = vadd.f32 %v4388, %v4428
    %4430 = vdwg.mxu0
    %4431 = vmatpush.msra.mxu0 %v3907
    %4432 = vmatpush.msra.mxu0 %v3901
    %4433 = vmatpush.msra.mxu0 %v3895
    %4434 = vmatpush.msra.mxu0 %v3889
    %4435 = vmatpush.msra.mxu0 %v3883
    %4436 = vmatpush.msra.mxu0 %v3877
    %4437 = vmatpush.msra.mxu0 %v3871
    %4438 = vmatpush.msra.mxu0 %v3865
    %4439 = vmatpush.msra.mxu0 %v3859
    %4440 = vmatpush.msra.mxu0 %v3853
    %4441 = vmatpush.msra.mxu0 %v3847
    %4442 = vmatpush.msra.mxu0 %v3841
    %4443 = vmatpush.msra.mxu0 %v3835
    %4444 = vmatpush.msra.mxu0 %v3829
    %4445 = vmatpush.msra.mxu0 %v3823
    %4446 = vmatpush.msra.mxu0 %v3817
    %4447 = vmatmul.f32.gmra.mxu0 %v3593
    %v4448 = vpop.f32.mrf.mxu0
    %v4449 = vadd.f32 %v4408, %v4448
    %4450 = vmatmul.f32.gmra.mxu0 %v3597
    %v4451 = vpop.f32.mrf.mxu0
    %v4452 = vadd.f32 %v4411, %v4451
    %4453 = vmatmul.f32.gmra.mxu0 %v3601
    %v4454 = vpop.f32.mrf.mxu0
    %v4455 = vadd.f32 %v4414, %v4454
    %4456 = vmatmul.f32.gmra.mxu0 %v3605
    %v4457 = vpop.f32.mrf.mxu0
    %v4458 = vadd.f32 %v4417, %v4457
    %4459 = vmatmul.f32.gmra.mxu0 %v3609
    %v4460 = vpop.f32.mrf.mxu0
    %v4461 = vadd.f32 %v4420, %v4460
    %4462 = vmatmul.f32.gmra.mxu0 %v3613
    %v4463 = vpop.f32.mrf.mxu0
    %v4464 = vadd.f32 %v4423, %v4463
    %4465 = vmatmul.f32.gmra.mxu0 %v3617
    %v4466 = vpop.f32.mrf.mxu0
    %v4467 = vadd.f32 %v4426, %v4466
    %4468 = vmatmul.f32.gmra.mxu0 %v3621
    %v4469 = vpop.f32.mrf.mxu0
    %v4470 = vadd.f32 %v4429, %v4469
    %4471 = vdwg.mxu0
    %4472 = vmatpush.msra.mxu0 %v4003
    %4473 = vmatpush.msra.mxu0 %v3997
    %4474 = vmatpush.msra.mxu0 %v3991
    %4475 = vmatpush.msra.mxu0 %v3985
    %4476 = vmatpush.msra.mxu0 %v3979
    %4477 = vmatpush.msra.mxu0 %v3973
    %4478 = vmatpush.msra.mxu0 %v3967
    %4479 = vmatpush.msra.mxu0 %v3961
    %4480 = vmatpush.msra.mxu0 %v3955
    %4481 = vmatpush.msra.mxu0 %v3949
    %4482 = vmatpush.msra.mxu0 %v3943
    %4483 = vmatpush.msra.mxu0 %v3937
    %4484 = vmatpush.msra.mxu0 %v3931
    %4485 = vmatpush.msra.mxu0 %v3925
    %4486 = vmatpush.msra.mxu0 %v3919
    %4487 = vmatpush.msra.mxu0 %v3913
    %4488 = vmatmul.f32.gmra.mxu0 %v3594
    %v4489 = vpop.f32.mrf.mxu0
    %v4490 = vadd.f32 %v4449, %v4489
    %4491 = vmatmul.f32.gmra.mxu0 %v3598
    %v4492 = vpop.f32.mrf.mxu0
    %v4493 = vadd.f32 %v4452, %v4492
    %4494 = vmatmul.f32.gmra.mxu0 %v3602
    %v4495 = vpop.f32.mrf.mxu0
    %v4496 = vadd.f32 %v4455, %v4495
    %4497 = vmatmul.f32.gmra.mxu0 %v3606
    %v4498 = vpop.f32.mrf.mxu0
    %v4499 = vadd.f32 %v4458, %v4498
    %4500 = vmatmul.f32.gmra.mxu0 %v3610
    %v4501 = vpop.f32.mrf.mxu0
    %v4502 = vadd.f32 %v4461, %v4501
    %4503 = vmatmul.f32.gmra.mxu0 %v3614
    %v4504 = vpop.f32.mrf.mxu0
    %v4505 = vadd.f32 %v4464, %v4504
    %4506 = vmatmul.f32.gmra.mxu0 %v3618
    %v4507 = vpop.f32.mrf.mxu0
    %v4508 = vadd.f32 %v4467, %v4507
    %4509 = vmatmul.f32.gmra.mxu0 %v3622
    %v4510 = vpop.f32.mrf.mxu0
    %v4511 = vadd.f32 %v4470, %v4510
    %4512 = vdwg.mxu0
    %4513 = vmatpush.msra.mxu0 %v3716
    %4514 = vmatpush.msra.mxu0 %v3710
    %4515 = vmatpush.msra.mxu0 %v3704
    %4516 = vmatpush.msra.mxu0 %v3698
    %4517 = vmatpush.msra.mxu0 %v3692
    %4518 = vmatpush.msra.mxu0 %v3686
    %4519 = vmatpush.msra.mxu0 %v3680
    %4520 = vmatpush.msra.mxu0 %v3674
    %4521 = vmatpush.msra.mxu0 %v3668
    %4522 = vmatpush.msra.mxu0 %v3662
    %4523 = vmatpush.msra.mxu0 %v3656
    %4524 = vmatpush.msra.mxu0 %v3650
    %4525 = vmatpush.msra.mxu0 %v3644
    %4526 = vmatpush.msra.mxu0 %v3638
    %4527 = vmatpush.msra.mxu0 %v3632
    %4528 = vmatpush.msra.mxu0 %v3626
    %4529 = vmatmul.f32.gmra.mxu0 %v3591
    %v4530 = vpop.f32.mrf.mxu0
    %v4531 = vadd.f32 %v4012, %v4530
    %4532 = vmatmul.f32.gmra.mxu0 %v3595
    %v4533 = vpop.f32.mrf.mxu0
    %v4534 = vadd.f32 %v4012, %v4533
    %4535 = vmatmul.f32.gmra.mxu0 %v3599
    %v4536 = vpop.f32.mrf.mxu0
    %v4537 = vadd.f32 %v4012, %v4536
    %4538 = vmatmul.f32.gmra.mxu0 %v3603
    %v4539 = vpop.f32.mrf.mxu0
    %v4540 = vadd.f32 %v4012, %v4539
    %4541 = vmatmul.f32.gmra.mxu0 %v3607
    %v4542 = vpop.f32.mrf.mxu0
    %v4543 = vadd.f32 %v4012, %v4542
    %4544 = vmatmul.f32.gmra.mxu0 %v3611
    %v4545 = vpop.f32.mrf.mxu0
    %v4546 = vadd.f32 %v4012, %v4545
    %4547 = vmatmul.f32.gmra.mxu0 %v3615
    %v4548 = vpop.f32.mrf.mxu0
    %v4549 = vadd.f32 %v4012, %v4548
    %4550 = vmatmul.f32.gmra.mxu0 %v3619
    %v4551 = vpop.f32.mrf.mxu0
    %v4552 = vadd.f32 %v4012, %v4551
    %4553 = vdwg.mxu0
    %4554 = vmatpush.msra.mxu0 %v3812
    %4555 = vmatpush.msra.mxu0 %v3806
    %4556 = vmatpush.msra.mxu0 %v3800
    %4557 = vmatpush.msra.mxu0 %v3794
    %4558 = vmatpush.msra.mxu0 %v3788
    %4559 = vmatpush.msra.mxu0 %v3782
    %4560 = vmatpush.msra.mxu0 %v3776
    %4561 = vmatpush.msra.mxu0 %v3770
    %4562 = vmatpush.msra.mxu0 %v3764
    %4563 = vmatpush.msra.mxu0 %v3758
    %4564 = vmatpush.msra.mxu0 %v3752
    %4565 = vmatpush.msra.mxu0 %v3746
    %4566 = vmatpush.msra.mxu0 %v3740
    %4567 = vmatpush.msra.mxu0 %v3734
    %4568 = vmatpush.msra.mxu0 %v3728
    %4569 = vmatpush.msra.mxu0 %v3722
    %4570 = vmatmul.f32.gmra.mxu0 %v3592
    %v4571 = vpop.f32.mrf.mxu0
    %v4572 = vadd.f32 %v4531, %v4571
    %4573 = vmatmul.f32.gmra.mxu0 %v3596
    %v4574 = vpop.f32.mrf.mxu0
    %v4575 = vadd.f32 %v4534, %v4574
    %4576 = vmatmul.f32.gmra.mxu0 %v3600
    %v4577 = vpop.f32.mrf.mxu0
    %v4578 = vadd.f32 %v4537, %v4577
    %4579 = vmatmul.f32.gmra.mxu0 %v3604
    %v4580 = vpop.f32.mrf.mxu0
    %v4581 = vadd.f32 %v4540, %v4580
    %4582 = vmatmul.f32.gmra.mxu0 %v3608
    %v4583 = vpop.f32.mrf.mxu0
    %v4584 = vadd.f32 %v4543, %v4583
    %4585 = vmatmul.f32.gmra.mxu0 %v3612
    %v4586 = vpop.f32.mrf.mxu0
    %v4587 = vadd.f32 %v4546, %v4586
    %4588 = vmatmul.f32.gmra.mxu0 %v3616
    %v4589 = vpop.f32.mrf.mxu0
    %v4590 = vadd.f32 %v4549, %v4589
    %4591 = vmatmul.f32.gmra.mxu0 %v3620
    %v4592 = vpop.f32.mrf.mxu0
    %v4593 = vadd.f32 %v4552, %v4592
    %4594 = vdwg.mxu0
    %4595 = vmatpush.msra.mxu0 %v3908
    %4596 = vmatpush.msra.mxu0 %v3902
    %4597 = vmatpush.msra.mxu0 %v3896
    %4598 = vmatpush.msra.mxu0 %v3890
    %4599 = vmatpush.msra.mxu0 %v3884
    %4600 = vmatpush.msra.mxu0 %v3878
    %4601 = vmatpush.msra.mxu0 %v3872
    %4602 = vmatpush.msra.mxu0 %v3866
    %4603 = vmatpush.msra.mxu0 %v3860
    %4604 = vmatpush.msra.mxu0 %v3854
    %4605 = vmatpush.msra.mxu0 %v3848
    %4606 = vmatpush.msra.mxu0 %v3842
    %4607 = vmatpush.msra.mxu0 %v3836
    %4608 = vmatpush.msra.mxu0 %v3830
    %4609 = vmatpush.msra.mxu0 %v3824
    %4610 = vmatpush.msra.mxu0 %v3818
    %4611 = vmatmul.f32.gmra.mxu0 %v3593
    %v4612 = vpop.f32.mrf.mxu0
    %v4613 = vadd.f32 %v4572, %v4612
    %4614 = vmatmul.f32.gmra.mxu0 %v3597
    %v4615 = vpop.f32.mrf.mxu0
    %v4616 = vadd.f32 %v4575, %v4615
    %4617 = vmatmul.f32.gmra.mxu0 %v3601
    %v4618 = vpop.f32.mrf.mxu0
    %v4619 = vadd.f32 %v4578, %v4618
    %4620 = vmatmul.f32.gmra.mxu0 %v3605
    %v4621 = vpop.f32.mrf.mxu0
    %v4622 = vadd.f32 %v4581, %v4621
    %4623 = vmatmul.f32.gmra.mxu0 %v3609
    %v4624 = vpop.f32.mrf.mxu0
    %v4625 = vadd.f32 %v4584, %v4624
    %4626 = vmatmul.f32.gmra.mxu0 %v3613
    %v4627 = vpop.f32.mrf.mxu0
    %v4628 = vadd.f32 %v4587, %v4627
    %4629 = vmatmul.f32.gmra.mxu0 %v3617
    %v4630 = vpop.f32.mrf.mxu0
    %v4631 = vadd.f32 %v4590, %v4630
    %4632 = vmatmul.f32.gmra.mxu0 %v3621
    %v4633 = vpop.f32.mrf.mxu0
    %v4634 = vadd.f32 %v4593, %v4633
    %4635 = vdwg.mxu0
    %4636 = vmatpush.msra.mxu0 %v4004
    %4637 = vmatpush.msra.mxu0 %v3998
    %4638 = vmatpush.msra.mxu0 %v3992
    %4639 = vmatpush.msra.mxu0 %v3986
    %4640 = vmatpush.msra.mxu0 %v3980
    %4641 = vmatpush.msra.mxu0 %v3974
    %4642 = vmatpush.msra.mxu0 %v3968
    %4643 = vmatpush.msra.mxu0 %v3962
    %4644 = vmatpush.msra.mxu0 %v3956
    %4645 = vmatpush.msra.mxu0 %v3950
    %4646 = vmatpush.msra.mxu0 %v3944
    %4647 = vmatpush.msra.mxu0 %v3938
    %4648 = vmatpush.msra.mxu0 %v3932
    %4649 = vmatpush.msra.mxu0 %v3926
    %4650 = vmatpush.msra.mxu0 %v3920
    %4651 = vmatpush.msra.mxu0 %v3914
    %4652 = vmatmul.f32.gmra.mxu0 %v3594
    %v4653 = vpop.f32.mrf.mxu0
    %v4654 = vadd.f32 %v4613, %v4653
    %4655 = vmatmul.f32.gmra.mxu0 %v3598
    %v4656 = vpop.f32.mrf.mxu0
    %v4657 = vadd.f32 %v4616, %v4656
    %4658 = vmatmul.f32.gmra.mxu0 %v3602
    %v4659 = vpop.f32.mrf.mxu0
    %v4660 = vadd.f32 %v4619, %v4659
    %4661 = vmatmul.f32.gmra.mxu0 %v3606
    %v4662 = vpop.f32.mrf.mxu0
    %v4663 = vadd.f32 %v4622, %v4662
    %4664 = vmatmul.f32.gmra.mxu0 %v3610
    %v4665 = vpop.f32.mrf.mxu0
    %v4666 = vadd.f32 %v4625, %v4665
    %4667 = vmatmul.f32.gmra.mxu0 %v3614
    %v4668 = vpop.f32.mrf.mxu0
    %v4669 = vadd.f32 %v4628, %v4668
    %4670 = vmatmul.f32.gmra.mxu0 %v3618
    %v4671 = vpop.f32.mrf.mxu0
    %v4672 = vadd.f32 %v4631, %v4671
    %4673 = vmatmul.f32.gmra.mxu0 %v3622
    %v4674 = vpop.f32.mrf.mxu0
    %v4675 = vadd.f32 %v4634, %v4674
    %4676 = vdwg.mxu0
    %4677 = vmatpush.msra.mxu0 %v3717
    %4678 = vmatpush.msra.mxu0 %v3711
    %4679 = vmatpush.msra.mxu0 %v3705
    %4680 = vmatpush.msra.mxu0 %v3699
    %4681 = vmatpush.msra.mxu0 %v3693
    %4682 = vmatpush.msra.mxu0 %v3687
    %4683 = vmatpush.msra.mxu0 %v3681
    %4684 = vmatpush.msra.mxu0 %v3675
    %4685 = vmatpush.msra.mxu0 %v3669
    %4686 = vmatpush.msra.mxu0 %v3663
    %4687 = vmatpush.msra.mxu0 %v3657
    %4688 = vmatpush.msra.mxu0 %v3651
    %4689 = vmatpush.msra.mxu0 %v3645
    %4690 = vmatpush.msra.mxu0 %v3639
    %4691 = vmatpush.msra.mxu0 %v3633
    %4692 = vmatpush.msra.mxu0 %v3627
    %4693 = vmatmul.f32.gmra.mxu0 %v3591
    %v4694 = vpop.f32.mrf.mxu0
    %v4695 = vadd.f32 %v4013, %v4694
    %4696 = vmatmul.f32.gmra.mxu0 %v3595
    %v4697 = vpop.f32.mrf.mxu0
    %v4698 = vadd.f32 %v4013, %v4697
    %4699 = vmatmul.f32.gmra.mxu0 %v3599
    %v4700 = vpop.f32.mrf.mxu0
    %v4701 = vadd.f32 %v4013, %v4700
    %4702 = vmatmul.f32.gmra.mxu0 %v3603
    %v4703 = vpop.f32.mrf.mxu0
    %v4704 = vadd.f32 %v4013, %v4703
    %4705 = vmatmul.f32.gmra.mxu0 %v3607
    %v4706 = vpop.f32.mrf.mxu0
    %v4707 = vadd.f32 %v4013, %v4706
    %4708 = vmatmul.f32.gmra.mxu0 %v3611
    %v4709 = vpop.f32.mrf.mxu0
    %v4710 = vadd.f32 %v4013, %v4709
    %4711 = vmatmul.f32.gmra.mxu0 %v3615
    %v4712 = vpop.f32.mrf.mxu0
    %v4713 = vadd.f32 %v4013, %v4712
    %4714 = vmatmul.f32.gmra.mxu0 %v3619
    %v4715 = vpop.f32.mrf.mxu0
    %v4716 = vadd.f32 %v4013, %v4715
    %4717 = vdwg.mxu0
    %4718 = vmatpush.msra.mxu0 %v3813
    %4719 = vmatpush.msra.mxu0 %v3807
    %4720 = vmatpush.msra.mxu0 %v3801
    %4721 = vmatpush.msra.mxu0 %v3795
    %4722 = vmatpush.msra.mxu0 %v3789
    %4723 = vmatpush.msra.mxu0 %v3783
    %4724 = vmatpush.msra.mxu0 %v3777
    %4725 = vmatpush.msra.mxu0 %v3771
    %4726 = vmatpush.msra.mxu0 %v3765
    %4727 = vmatpush.msra.mxu0 %v3759
    %4728 = vmatpush.msra.mxu0 %v3753
    %4729 = vmatpush.msra.mxu0 %v3747
    %4730 = vmatpush.msra.mxu0 %v3741
    %4731 = vmatpush.msra.mxu0 %v3735
    %4732 = vmatpush.msra.mxu0 %v3729
    %4733 = vmatpush.msra.mxu0 %v3723
    %4734 = vmatmul.f32.gmra.mxu0 %v3592
    %v4735 = vpop.f32.mrf.mxu0
    %v4736 = vadd.f32 %v4695, %v4735
    %4737 = vmatmul.f32.gmra.mxu0 %v3596
    %v4738 = vpop.f32.mrf.mxu0
    %v4739 = vadd.f32 %v4698, %v4738
    %4740 = vmatmul.f32.gmra.mxu0 %v3600
    %v4741 = vpop.f32.mrf.mxu0
    %v4742 = vadd.f32 %v4701, %v4741
    %4743 = vmatmul.f32.gmra.mxu0 %v3604
    %v4744 = vpop.f32.mrf.mxu0
    %v4745 = vadd.f32 %v4704, %v4744
    %4746 = vmatmul.f32.gmra.mxu0 %v3608
    %v4747 = vpop.f32.mrf.mxu0
    %v4748 = vadd.f32 %v4707, %v4747
    %4749 = vmatmul.f32.gmra.mxu0 %v3612
    %v4750 = vpop.f32.mrf.mxu0
    %v4751 = vadd.f32 %v4710, %v4750
    %4752 = vmatmul.f32.gmra.mxu0 %v3616
    %v4753 = vpop.f32.mrf.mxu0
    %v4754 = vadd.f32 %v4713, %v4753
    %4755 = vmatmul.f32.gmra.mxu0 %v3620
    %v4756 = vpop.f32.mrf.mxu0
    %v4757 = vadd.f32 %v4716, %v4756
    %4758 = vdwg.mxu0
    %4759 = vmatpush.msra.mxu0 %v3909
    %4760 = vmatpush.msra.mxu0 %v3903
    %4761 = vmatpush.msra.mxu0 %v3897
    %4762 = vmatpush.msra.mxu0 %v3891
    %4763 = vmatpush.msra.mxu0 %v3885
    %4764 = vmatpush.msra.mxu0 %v3879
    %4765 = vmatpush.msra.mxu0 %v3873
    %4766 = vmatpush.msra.mxu0 %v3867
    %4767 = vmatpush.msra.mxu0 %v3861
    %4768 = vmatpush.msra.mxu0 %v3855
    %4769 = vmatpush.msra.mxu0 %v3849
    %4770 = vmatpush.msra.mxu0 %v3843
    %4771 = vmatpush.msra.mxu0 %v3837
    %4772 = vmatpush.msra.mxu0 %v3831
    %4773 = vmatpush.msra.mxu0 %v3825
    %4774 = vmatpush.msra.mxu0 %v3819
    %4775 = vmatmul.f32.gmra.mxu0 %v3593
    %v4776 = vpop.f32.mrf.mxu0
    %v4777 = vadd.f32 %v4736, %v4776
    %4778 = vmatmul.f32.gmra.mxu0 %v3597
    %v4779 = vpop.f32.mrf.mxu0
    %v4780 = vadd.f32 %v4739, %v4779
    %4781 = vmatmul.f32.gmra.mxu0 %v3601
    %v4782 = vpop.f32.mrf.mxu0
    %v4783 = vadd.f32 %v4742, %v4782
    %4784 = vmatmul.f32.gmra.mxu0 %v3605
    %v4785 = vpop.f32.mrf.mxu0
    %v4786 = vadd.f32 %v4745, %v4785
    %4787 = vmatmul.f32.gmra.mxu0 %v3609
    %v4788 = vpop.f32.mrf.mxu0
    %v4789 = vadd.f32 %v4748, %v4788
    %4790 = vmatmul.f32.gmra.mxu0 %v3613
    %v4791 = vpop.f32.mrf.mxu0
    %v4792 = vadd.f32 %v4751, %v4791
    %4793 = vmatmul.f32.gmra.mxu0 %v3617
    %v4794 = vpop.f32.mrf.mxu0
    %v4795 = vadd.f32 %v4754, %v4794
    %4796 = vmatmul.f32.gmra.mxu0 %v3621
    %v4797 = vpop.f32.mrf.mxu0
    %v4798 = vadd.f32 %v4757, %v4797
    %4799 = vdwg.mxu0
    %4800 = vmatpush.msra.mxu0 %v4005
    %4801 = vmatpush.msra.mxu0 %v3999
    %4802 = vmatpush.msra.mxu0 %v3993
    %4803 = vmatpush.msra.mxu0 %v3987
    %4804 = vmatpush.msra.mxu0 %v3981
    %4805 = vmatpush.msra.mxu0 %v3975
    %4806 = vmatpush.msra.mxu0 %v3969
    %4807 = vmatpush.msra.mxu0 %v3963
    %4808 = vmatpush.msra.mxu0 %v3957
    %4809 = vmatpush.msra.mxu0 %v3951
    %4810 = vmatpush.msra.mxu0 %v3945
    %4811 = vmatpush.msra.mxu0 %v3939
    %4812 = vmatpush.msra.mxu0 %v3933
    %4813 = vmatpush.msra.mxu0 %v3927
    %4814 = vmatpush.msra.mxu0 %v3921
    %4815 = vmatpush.msra.mxu0 %v3915
    %4816 = vmatmul.f32.gmra.mxu0 %v3594
    %v4817 = vpop.f32.mrf.mxu0
    %v4818 = vadd.f32 %v4777, %v4817
    %4819 = vmatmul.f32.gmra.mxu0 %v3598
    %v4820 = vpop.f32.mrf.mxu0
    %v4821 = vadd.f32 %v4780, %v4820
    %4822 = vmatmul.f32.gmra.mxu0 %v3602
    %v4823 = vpop.f32.mrf.mxu0
    %v4824 = vadd.f32 %v4783, %v4823
    %4825 = vmatmul.f32.gmra.mxu0 %v3606
    %v4826 = vpop.f32.mrf.mxu0
    %v4827 = vadd.f32 %v4786, %v4826
    %4828 = vmatmul.f32.gmra.mxu0 %v3610
    %v4829 = vpop.f32.mrf.mxu0
    %v4830 = vadd.f32 %v4789, %v4829
    %4831 = vmatmul.f32.gmra.mxu0 %v3614
    %v4832 = vpop.f32.mrf.mxu0
    %v4833 = vadd.f32 %v4792, %v4832
    %4834 = vmatmul.f32.gmra.mxu0 %v3618
    %v4835 = vpop.f32.mrf.mxu0
    %v4836 = vadd.f32 %v4795, %v4835
    %4837 = vmatmul.f32.gmra.mxu0 %v3622
    %v4838 = vpop.f32.mrf.mxu0
    %v4839 = vadd.f32 %v4798, %v4838
    %4840 = vdwg.mxu0
    %4841 = vmatpush.msra.mxu0 %v3718
    %4842 = vmatpush.msra.mxu0 %v3712
    %4843 = vmatpush.msra.mxu0 %v3706
    %4844 = vmatpush.msra.mxu0 %v3700
    %4845 = vmatpush.msra.mxu0 %v3694
    %4846 = vmatpush.msra.mxu0 %v3688
    %4847 = vmatpush.msra.mxu0 %v3682
    %4848 = vmatpush.msra.mxu0 %v3676
    %4849 = vmatpush.msra.mxu0 %v3670
    %4850 = vmatpush.msra.mxu0 %v3664
    %4851 = vmatpush.msra.mxu0 %v3658
    %4852 = vmatpush.msra.mxu0 %v3652
    %4853 = vmatpush.msra.mxu0 %v3646
    %4854 = vmatpush.msra.mxu0 %v3640
    %4855 = vmatpush.msra.mxu0 %v3634
    %4856 = vmatpush.msra.mxu0 %v3628
    %4857 = vmatmul.f32.gmra.mxu0 %v3591
    %v4858 = vpop.f32.mrf.mxu0
    %v4859 = vadd.f32 %v4014, %v4858
    %4860 = vmatmul.f32.gmra.mxu0 %v3595
    %v4861 = vpop.f32.mrf.mxu0
    %v4862 = vadd.f32 %v4014, %v4861
    %4863 = vmatmul.f32.gmra.mxu0 %v3599
    %v4864 = vpop.f32.mrf.mxu0
    %v4865 = vadd.f32 %v4014, %v4864
    %4866 = vmatmul.f32.gmra.mxu0 %v3603
    %v4867 = vpop.f32.mrf.mxu0
    %v4868 = vadd.f32 %v4014, %v4867
    %4869 = vmatmul.f32.gmra.mxu0 %v3607
    %v4870 = vpop.f32.mrf.mxu0
    %v4871 = vadd.f32 %v4014, %v4870
    %4872 = vmatmul.f32.gmra.mxu0 %v3611
    %v4873 = vpop.f32.mrf.mxu0
    %v4874 = vadd.f32 %v4014, %v4873
    %4875 = vmatmul.f32.gmra.mxu0 %v3615
    %v4876 = vpop.f32.mrf.mxu0
    %v4877 = vadd.f32 %v4014, %v4876
    %4878 = vmatmul.f32.gmra.mxu0 %v3619
    %v4879 = vpop.f32.mrf.mxu0
    %v4880 = vadd.f32 %v4014, %v4879
    %4881 = vdwg.mxu0
    %4882 = vmatpush.msra.mxu0 %v3814
    %4883 = vmatpush.msra.mxu0 %v3808
    %4884 = vmatpush.msra.mxu0 %v3802
    %4885 = vmatpush.msra.mxu0 %v3796
    %4886 = vmatpush.msra.mxu0 %v3790
    %4887 = vmatpush.msra.mxu0 %v3784
    %4888 = vmatpush.msra.mxu0 %v3778
    %4889 = vmatpush.msra.mxu0 %v3772
    %4890 = vmatpush.msra.mxu0 %v3766
    %4891 = vmatpush.msra.mxu0 %v3760
    %4892 = vmatpush.msra.mxu0 %v3754
    %4893 = vmatpush.msra.mxu0 %v3748
    %4894 = vmatpush.msra.mxu0 %v3742
    %4895 = vmatpush.msra.mxu0 %v3736
    %4896 = vmatpush.msra.mxu0 %v3730
    %4897 = vmatpush.msra.mxu0 %v3724
    %4898 = vmatmul.f32.gmra.mxu0 %v3592
    %v4899 = vpop.f32.mrf.mxu0
    %v4900 = vadd.f32 %v4859, %v4899
    %4901 = vmatmul.f32.gmra.mxu0 %v3596
    %v4902 = vpop.f32.mrf.mxu0
    %v4903 = vadd.f32 %v4862, %v4902
    %4904 = vmatmul.f32.gmra.mxu0 %v3600
    %v4905 = vpop.f32.mrf.mxu0
    %v4906 = vadd.f32 %v4865, %v4905
    %4907 = vmatmul.f32.gmra.mxu0 %v3604
    %v4908 = vpop.f32.mrf.mxu0
    %v4909 = vadd.f32 %v4868, %v4908
    %4910 = vmatmul.f32.gmra.mxu0 %v3608
    %v4911 = vpop.f32.mrf.mxu0
    %v4912 = vadd.f32 %v4871, %v4911
    %4913 = vmatmul.f32.gmra.mxu0 %v3612
    %v4914 = vpop.f32.mrf.mxu0
    %v4915 = vadd.f32 %v4874, %v4914
    %4916 = vmatmul.f32.gmra.mxu0 %v3616
    %v4917 = vpop.f32.mrf.mxu0
    %v4918 = vadd.f32 %v4877, %v4917
    %4919 = vmatmul.f32.gmra.mxu0 %v3620
    %v4920 = vpop.f32.mrf.mxu0
    %v4921 = vadd.f32 %v4880, %v4920
    %4922 = vdwg.mxu0
    %4923 = vmatpush.msra.mxu0 %v3910
    %4924 = vmatpush.msra.mxu0 %v3904
    %4925 = vmatpush.msra.mxu0 %v3898
    %4926 = vmatpush.msra.mxu0 %v3892
    %4927 = vmatpush.msra.mxu0 %v3886
    %4928 = vmatpush.msra.mxu0 %v3880
    %4929 = vmatpush.msra.mxu0 %v3874
    %4930 = vmatpush.msra.mxu0 %v3868
    %4931 = vmatpush.msra.mxu0 %v3862
    %4932 = vmatpush.msra.mxu0 %v3856
    %4933 = vmatpush.msra.mxu0 %v3850
    %4934 = vmatpush.msra.mxu0 %v3844
    %4935 = vmatpush.msra.mxu0 %v3838
    %4936 = vmatpush.msra.mxu0 %v3832
    %4937 = vmatpush.msra.mxu0 %v3826
    %4938 = vmatpush.msra.mxu0 %v3820
    %4939 = vmatmul.f32.gmra.mxu0 %v3593
    %v4940 = vpop.f32.mrf.mxu0
    %v4941 = vadd.f32 %v4900, %v4940
    %4942 = vmatmul.f32.gmra.mxu0 %v3597
    %v4943 = vpop.f32.mrf.mxu0
    %v4944 = vadd.f32 %v4903, %v4943
    %4945 = vmatmul.f32.gmra.mxu0 %v3601
    %v4946 = vpop.f32.mrf.mxu0
    %v4947 = vadd.f32 %v4906, %v4946
    %4948 = vmatmul.f32.gmra.mxu0 %v3605
    %v4949 = vpop.f32.mrf.mxu0
    %v4950 = vadd.f32 %v4909, %v4949
    %4951 = vmatmul.f32.gmra.mxu0 %v3609
    %v4952 = vpop.f32.mrf.mxu0
    %v4953 = vadd.f32 %v4912, %v4952
    %4954 = vmatmul.f32.gmra.mxu0 %v3613
    %v4955 = vpop.f32.mrf.mxu0
    %v4956 = vadd.f32 %v4915, %v4955
    %4957 = vmatmul.f32.gmra.mxu0 %v3617
    %v4958 = vpop.f32.mrf.mxu0
    %v4959 = vadd.f32 %v4918, %v4958
    %4960 = vmatmul.f32.gmra.mxu0 %v3621
    %v4961 = vpop.f32.mrf.mxu0
    %v4962 = vadd.f32 %v4921, %v4961
    %4963 = vdwg.mxu0
    %4964 = vmatpush.msra.mxu0 %v4006
    %4965 = vmatpush.msra.mxu0 %v4000
    %4966 = vmatpush.msra.mxu0 %v3994
    %4967 = vmatpush.msra.mxu0 %v3988
    %4968 = vmatpush.msra.mxu0 %v3982
    %4969 = vmatpush.msra.mxu0 %v3976
    %4970 = vmatpush.msra.mxu0 %v3970
    %4971 = vmatpush.msra.mxu0 %v3964
    %4972 = vmatpush.msra.mxu0 %v3958
    %4973 = vmatpush.msra.mxu0 %v3952
    %4974 = vmatpush.msra.mxu0 %v3946
    %4975 = vmatpush.msra.mxu0 %v3940
    %4976 = vmatpush.msra.mxu0 %v3934
    %4977 = vmatpush.msra.mxu0 %v3928
    %4978 = vmatpush.msra.mxu0 %v3922
    %4979 = vmatpush.msra.mxu0 %v3916
    %4980 = vmatmul.f32.gmra.mxu0 %v3594
    %v4981 = vpop.f32.mrf.mxu0
    %v4982 = vadd.f32 %v4941, %v4981
    %4983 = vmatmul.f32.gmra.mxu0 %v3598
    %v4984 = vpop.f32.mrf.mxu0
    %v4985 = vadd.f32 %v4944, %v4984
    %4986 = vmatmul.f32.gmra.mxu0 %v3602
    %v4987 = vpop.f32.mrf.mxu0
    %v4988 = vadd.f32 %v4947, %v4987
    %4989 = vmatmul.f32.gmra.mxu0 %v3606
    %v4990 = vpop.f32.mrf.mxu0
    %v4991 = vadd.f32 %v4950, %v4990
    %4992 = vmatmul.f32.gmra.mxu0 %v3610
    %v4993 = vpop.f32.mrf.mxu0
    %v4994 = vadd.f32 %v4953, %v4993
    %4995 = vmatmul.f32.gmra.mxu0 %v3614
    %v4996 = vpop.f32.mrf.mxu0
    %v4997 = vadd.f32 %v4956, %v4996
    %4998 = vmatmul.f32.gmra.mxu0 %v3618
    %v4999 = vpop.f32.mrf.mxu0
    %v5000 = vadd.f32 %v4959, %v4999
    %5001 = vmatmul.f32.gmra.mxu0 %v3622
    %v5002 = vpop.f32.mrf.mxu0
    %v5003 = vadd.f32 %v4962, %v5002
    %5004 = vdwg.mxu0
    %5005 = vst [vmem:[#allocation2] sm:$0xff] %v4162
    %5006 = vst [vmem:[#allocation2 + $0x8] sm:$0xff] %v4326
    %5007 = vst [vmem:[#allocation2 + $0x10] sm:$0xff] %v4490
    %5008 = vst [vmem:[#allocation2 + $0x18] sm:$0xff] %v4654
    %5009 = vst [vmem:[#allocation2 + $0x20] sm:$0xff] %v4818
    %5010 = vst [vmem:[#allocation2 + $0x28] sm:$0xff] %v4982
    %5011 = vst [vmem:[#allocation2 + $0x30] sm:$0xff] %v4165
    %5012 = vst [vmem:[#allocation2 + $0x38] sm:$0xff] %v4329
    %5013 = vst [vmem:[#allocation2 + $0x40] sm:$0xff] %v4493
    %5014 = vst [vmem:[#allocation2 + $0x48] sm:$0xff] %v4657
    %5015 = vst [vmem:[#allocation2 + $0x50] sm:$0xff] %v4821
    %5016 = vst [vmem:[#allocation2 + $0x58] sm:$0xff] %v4985
    %5017 = vst [vmem:[#allocation2 + $0x60] sm:$0xff] %v4168
    %5018 = vst [vmem:[#allocation2 + $0x68] sm:$0xff] %v4332
    %5019 = vst [vmem:[#allocation2 + $0x70] sm:$0xff] %v4496
    %5020 = vst [vmem:[#allocation2 + $0x78] sm:$0xff] %v4660
    %5021 = vst [vmem:[#allocation2 + $0x80] sm:$0xff] %v4824
    %5022 = vst [vmem:[#allocation2 + $0x88] sm:$0xff] %v4988
    %5023 = vst [vmem:[#allocation2 + $0x90] sm:$0xff] %v4171
    %5024 = vst [vmem:[#allocation2 + $0x98] sm:$0xff] %v4335
    %5025 = vst [vmem:[#allocation2 + $0xa0] sm:$0xff] %v4499
    %5026 = vst [vmem:[#allocation2 + $0xa8] sm:$0xff] %v4663
    %5027 = vst [vmem:[#allocation2 + $0xb0] sm:$0xff] %v4827
    %5028 = vst [vmem:[#allocation2 + $0xb8] sm:$0xff] %v4991
    %5029 = vst [vmem:[#allocation2 + $0xc0] sm:$0xff] %v4174
    %5030 = vst [vmem:[#allocation2 + $0xc8] sm:$0xff] %v4338
    %5031 = vst [vmem:[#allocation2 + $0xd0] sm:$0xff] %v4502
    %5032 = vst [vmem:[#allocation2 + $0xd8] sm:$0xff] %v4666
    %5033 = vst [vmem:[#allocation2 + $0xe0] sm:$0xff] %v4830
    %5034 = vst [vmem:[#allocation2 + $0xe8] sm:$0xff] %v4994
    %5035 = vst [vmem:[#allocation2 + $0xf0] sm:$0xff] %v4177
    %5036 = vst [vmem:[#allocation2 + $0xf8] sm:$0xff] %v4341
    %5037 = vst [vmem:[#allocation2 + $0x100] sm:$0xff] %v4505
    %5038 = vst [vmem:[#allocation2 + $0x108] sm:$0xff] %v4669
    %5039 = vst [vmem:[#allocation2 + $0x110] sm:$0xff] %v4833
    %5040 = vst [vmem:[#allocation2 + $0x118] sm:$0xff] %v4997
    %5041 = vst [vmem:[#allocation2 + $0x120] sm:$0xff] %v4180
    %5042 = vst [vmem:[#allocation2 + $0x128] sm:$0xff] %v4344
    %5043 = vst [vmem:[#allocation2 + $0x130] sm:$0xff] %v4508
    %5044 = vst [vmem:[#allocation2 + $0x138] sm:$0xff] %v4672
    %5045 = vst [vmem:[#allocation2 + $0x140] sm:$0xff] %v4836
    %5046 = vst [vmem:[#allocation2 + $0x148] sm:$0xff] %v5000
    %5047 = vst [vmem:[#allocation2 + $0x150] sm:$0xff] %v4183
    %5048 = vst [vmem:[#allocation2 + $0x158] sm:$0xff] %v4347
    %5049 = vst [vmem:[#allocation2 + $0x160] sm:$0xff] %v4511
    %5050 = vst [vmem:[#allocation2 + $0x168] sm:$0xff] %v4675
    %5051 = vst [vmem:[#allocation2 + $0x170] sm:$0xff] %v4839
    %5052 = vst [vmem:[#allocation2 + $0x178] sm:$0xff] %v5003
    %v5053 = vld [vmem:[#allocation16] sm:$0xff]
    %v5054 = vld [vmem:[#allocation16 + $0x8] sm:$0xff]
    %v5055 = vld [vmem:[#allocation16 + $0x10] sm:$0xff]
    %v5056 = vld [vmem:[#allocation16 + $0x18] sm:$0xff]
    %v5057 = vld [vmem:[#allocation16 + $0x20] sm:$0xff]
    %v5058 = vld [vmem:[#allocation16 + $0x28] sm:$0xff]
    %v5059 = vld [vmem:[#allocation16 + $0x30] sm:$0xff]
    %v5060 = vld [vmem:[#allocation16 + $0x38] sm:$0xff]
    %v5061 = vld [vmem:[#allocation16 + $0x40] sm:$0xff]
    %v5062 = vld [vmem:[#allocation16 + $0x48] sm:$0xff]
    %v5063 = vld [vmem:[#allocation16 + $0x50] sm:$0xff]
    %v5064 = vld [vmem:[#allocation16 + $0x58] sm:$0xff]
    %v5065 = vld [vmem:[#allocation16 + $0x60] sm:$0xff]
    %v5066 = vld [vmem:[#allocation16 + $0x68] sm:$0xff]
    %v5067 = vld [vmem:[#allocation16 + $0x70] sm:$0xff]
    %v5068 = vld [vmem:[#allocation16 + $0x78] sm:$0xff]
    %v5069 = vld [vmem:[#allocation16 + $0x80] sm:$0xff]
    %v5070 = vld [vmem:[#allocation16 + $0x88] sm:$0xff]
    %v5071 = vld [vmem:[#allocation16 + $0x90] sm:$0xff]
    %v5072 = vld [vmem:[#allocation16 + $0x98] sm:$0xff]
    %v5073 = vld [vmem:[#allocation16 + $0xa0] sm:$0xff]
    %v5074 = vld [vmem:[#allocation16 + $0xa8] sm:$0xff]
    %v5075 = vld [vmem:[#allocation16 + $0xb0] sm:$0xff]
    %v5076 = vld [vmem:[#allocation16 + $0xb8] sm:$0xff]
    %v5077 = vld [vmem:[#allocation16 + $0xc0] sm:$0xff]
    %v5078 = vld [vmem:[#allocation16 + $0xc8] sm:$0xff]
    %v5079 = vld [vmem:[#allocation16 + $0xd0] sm:$0xff]
    %v5080 = vld [vmem:[#allocation16 + $0xd8] sm:$0xff]
    %v5081 = vld [vmem:[#allocation16 + $0xe0] sm:$0xff]
    %v5082 = vld [vmem:[#allocation16 + $0xe8] sm:$0xff]
    %v5083 = vld [vmem:[#allocation16 + $0xf0] sm:$0xff]
    %v5084 = vld [vmem:[#allocation16 + $0xf8] sm:$0xff]
    %v5085 = vld [vmem:[#allocation16 + $0x100] sm:$0xff]
    %v5086 = vld [vmem:[#allocation16 + $0x108] sm:$0xff]
    %v5087 = vld [vmem:[#allocation16 + $0x110] sm:$0xff]
    %v5088 = vld [vmem:[#allocation16 + $0x118] sm:$0xff]
    %v5089 = vld [vmem:[#allocation16 + $0x120] sm:$0xff]
    %v5090 = vld [vmem:[#allocation16 + $0x128] sm:$0xff]
    %v5091 = vld [vmem:[#allocation16 + $0x130] sm:$0xff]
    %v5092 = vld [vmem:[#allocation16 + $0x138] sm:$0xff]
    %v5093 = vld [vmem:[#allocation16 + $0x140] sm:$0xff]
    %v5094 = vld [vmem:[#allocation16 + $0x148] sm:$0xff]
    %v5095 = vld [vmem:[#allocation16 + $0x150] sm:$0xff]
    %v5096 = vld [vmem:[#allocation16 + $0x158] sm:$0xff]
    %v5097 = vld [vmem:[#allocation16 + $0x160] sm:$0xff]
    %v5098 = vld [vmem:[#allocation16 + $0x168] sm:$0xff]
    %v5099 = vld [vmem:[#allocation16 + $0x170] sm:$0xff]
    %v5100 = vld [vmem:[#allocation16 + $0x178] sm:$0xff]
    %v5101 = vld [vmem:[#allocation16 + $0x180] sm:$0xff]
    %v5102 = vld [vmem:[#allocation16 + $0x188] sm:$0xff]
    %v5103 = vld [vmem:[#allocation16 + $0x190] sm:$0xff]
    %v5104 = vld [vmem:[#allocation16 + $0x198] sm:$0xff]
    %v5105 = vld [vmem:[#allocation16 + $0x1a0] sm:$0xff]
    %v5106 = vld [vmem:[#allocation16 + $0x1a8] sm:$0xff]
    %v5107 = vld [vmem:[#allocation16 + $0x1b0] sm:$0xff]
    %v5108 = vld [vmem:[#allocation16 + $0x1b8] sm:$0xff]
    %v5109 = vld [vmem:[#allocation16 + $0x1c0] sm:$0xff]
    %v5110 = vld [vmem:[#allocation16 + $0x1c8] sm:$0xff]
    %v5111 = vld [vmem:[#allocation16 + $0x1d0] sm:$0xff]
    %v5112 = vld [vmem:[#allocation16 + $0x1d8] sm:$0xff]
    %v5113 = vld [vmem:[#allocation16 + $0x1e0] sm:$0xff]
    %v5114 = vld [vmem:[#allocation16 + $0x1e8] sm:$0xff]
    %v5115 = vld [vmem:[#allocation16 + $0x1f0] sm:$0xff]
    %v5116 = vld [vmem:[#allocation16 + $0x1f8] sm:$0xff]
    %v5117 = vld [vmem:[#allocation16 + $0x200] sm:$0xff]
    %v5118 = vld [vmem:[#allocation16 + $0x208] sm:$0xff]
    %v5119 = vld [vmem:[#allocation16 + $0x210] sm:$0xff]
    %v5120 = vld [vmem:[#allocation16 + $0x218] sm:$0xff]
    %v5121 = vld [vmem:[#allocation16 + $0x220] sm:$0xff]
    %v5122 = vld [vmem:[#allocation16 + $0x228] sm:$0xff]
    %v5123 = vld [vmem:[#allocation16 + $0x230] sm:$0xff]
    %v5124 = vld [vmem:[#allocation16 + $0x238] sm:$0xff]
    %v5125 = vld [vmem:[#allocation16 + $0x240] sm:$0xff]
    %v5126 = vld [vmem:[#allocation16 + $0x248] sm:$0xff]
    %v5127 = vld [vmem:[#allocation16 + $0x250] sm:$0xff]
    %v5128 = vld [vmem:[#allocation16 + $0x258] sm:$0xff]
    %v5129 = vld [vmem:[#allocation16 + $0x260] sm:$0xff]
    %v5130 = vld [vmem:[#allocation16 + $0x268] sm:$0xff]
    %v5131 = vld [vmem:[#allocation16 + $0x270] sm:$0xff]
    %v5132 = vld [vmem:[#allocation16 + $0x278] sm:$0xff]
    %v5133 = vld [vmem:[#allocation16 + $0x280] sm:$0xff]
    %v5134 = vld [vmem:[#allocation16 + $0x288] sm:$0xff]
    %v5135 = vld [vmem:[#allocation16 + $0x290] sm:$0xff]
    %v5136 = vld [vmem:[#allocation16 + $0x298] sm:$0xff]
    %v5137 = vld [vmem:[#allocation16 + $0x2a0] sm:$0xff]
    %v5138 = vld [vmem:[#allocation16 + $0x2a8] sm:$0xff]
    %v5139 = vld [vmem:[#allocation16 + $0x2b0] sm:$0xff]
    %v5140 = vld [vmem:[#allocation16 + $0x2b8] sm:$0xff]
    %v5141 = vld [vmem:[#allocation16 + $0x2c0] sm:$0xff]
    %v5142 = vld [vmem:[#allocation16 + $0x2c8] sm:$0xff]
    %v5143 = vld [vmem:[#allocation16 + $0x2d0] sm:$0xff]
    %v5144 = vld [vmem:[#allocation16 + $0x2d8] sm:$0xff]
    %v5145 = vld [vmem:[#allocation16 + $0x2e0] sm:$0xff]
    %v5146 = vld [vmem:[#allocation16 + $0x2e8] sm:$0xff]
    %v5147 = vld [vmem:[#allocation16 + $0x2f0] sm:$0xff]
    %v5148 = vld [vmem:[#allocation16 + $0x2f8] sm:$0xff]
    %v5149 = vld [vmem:[#allocation16 + $0x300] sm:$0xff]
    %v5150 = vld [vmem:[#allocation16 + $0x308] sm:$0xff]
    %v5151 = vld [vmem:[#allocation16 + $0x310] sm:$0xff]
    %v5152 = vld [vmem:[#allocation16 + $0x318] sm:$0xff]
    %v5153 = vld [vmem:[#allocation16 + $0x320] sm:$0xff]
    %v5154 = vld [vmem:[#allocation16 + $0x328] sm:$0xff]
    %v5155 = vld [vmem:[#allocation16 + $0x330] sm:$0xff]
    %v5156 = vld [vmem:[#allocation16 + $0x338] sm:$0xff]
    %v5157 = vld [vmem:[#allocation16 + $0x340] sm:$0xff]
    %v5158 = vld [vmem:[#allocation16 + $0x348] sm:$0xff]
    %v5159 = vld [vmem:[#allocation16 + $0x350] sm:$0xff]
    %v5160 = vld [vmem:[#allocation16 + $0x358] sm:$0xff]
    %v5161 = vld [vmem:[#allocation16 + $0x360] sm:$0xff]
    %v5162 = vld [vmem:[#allocation16 + $0x368] sm:$0xff]
    %v5163 = vld [vmem:[#allocation16 + $0x370] sm:$0xff]
    %v5164 = vld [vmem:[#allocation16 + $0x378] sm:$0xff]
    %v5165 = vld [vmem:[#allocation16 + $0x380] sm:$0xff]
    %v5166 = vld [vmem:[#allocation16 + $0x388] sm:$0xff]
    %v5167 = vld [vmem:[#allocation16 + $0x390] sm:$0xff]
    %v5168 = vld [vmem:[#allocation16 + $0x398] sm:$0xff]
    %v5169 = vld [vmem:[#allocation16 + $0x3a0] sm:$0xff]
    %v5170 = vld [vmem:[#allocation16 + $0x3a8] sm:$0xff]
    %v5171 = vld [vmem:[#allocation16 + $0x3b0] sm:$0xff]
    %v5172 = vld [vmem:[#allocation16 + $0x3b8] sm:$0xff]
    %v5173 = vld [vmem:[#allocation16 + $0x3c0] sm:$0xff]
    %v5174 = vld [vmem:[#allocation16 + $0x3c8] sm:$0xff]
    %v5175 = vld [vmem:[#allocation16 + $0x3d0] sm:$0xff]
    %v5176 = vld [vmem:[#allocation16 + $0x3d8] sm:$0xff]
    %v5177 = vld [vmem:[#allocation16 + $0x3e0] sm:$0xff]
    %v5178 = vld [vmem:[#allocation16 + $0x3e8] sm:$0xff]
    %v5179 = vld [vmem:[#allocation16 + $0x3f0] sm:$0xff]
    %v5180 = vld [vmem:[#allocation16 + $0x3f8] sm:$0xff]
    %v5181 = vld [vmem:[#allocation16 + $0x400] sm:$0xff]
    %v5182 = vld [vmem:[#allocation16 + $0x408] sm:$0xff]
    %v5183 = vld [vmem:[#allocation16 + $0x410] sm:$0xff]
    %v5184 = vld [vmem:[#allocation16 + $0x418] sm:$0xff]
    %v5185 = vld [vmem:[#allocation16 + $0x420] sm:$0xff]
    %v5186 = vld [vmem:[#allocation16 + $0x428] sm:$0xff]
    %v5187 = vld [vmem:[#allocation16 + $0x430] sm:$0xff]
    %v5188 = vld [vmem:[#allocation16 + $0x438] sm:$0xff]
    %v5189 = vld [vmem:[#allocation16 + $0x440] sm:$0xff]
    %v5190 = vld [vmem:[#allocation16 + $0x448] sm:$0xff]
    %v5191 = vld [vmem:[#allocation16 + $0x450] sm:$0xff]
    %v5192 = vld [vmem:[#allocation16 + $0x458] sm:$0xff]
    %v5193 = vld [vmem:[#allocation16 + $0x460] sm:$0xff]
    %v5194 = vld [vmem:[#allocation16 + $0x468] sm:$0xff]
    %v5195 = vld [vmem:[#allocation16 + $0x470] sm:$0xff]
    %v5196 = vld [vmem:[#allocation16 + $0x478] sm:$0xff]
    %v5197 = vld [vmem:[#allocation16 + $0x480] sm:$0xff]
    %v5198 = vld [vmem:[#allocation16 + $0x488] sm:$0xff]
    %v5199 = vld [vmem:[#allocation16 + $0x490] sm:$0xff]
    %v5200 = vld [vmem:[#allocation16 + $0x498] sm:$0xff]
    %v5201 = vld [vmem:[#allocation16 + $0x4a0] sm:$0xff]
    %v5202 = vld [vmem:[#allocation16 + $0x4a8] sm:$0xff]
    %v5203 = vld [vmem:[#allocation16 + $0x4b0] sm:$0xff]
    %v5204 = vld [vmem:[#allocation16 + $0x4b8] sm:$0xff]
    %v5205 = vld [vmem:[#allocation16 + $0x4c0] sm:$0xff]
    %v5206 = vld [vmem:[#allocation16 + $0x4c8] sm:$0xff]
    %v5207 = vld [vmem:[#allocation16 + $0x4d0] sm:$0xff]
    %v5208 = vld [vmem:[#allocation16 + $0x4d8] sm:$0xff]
    %v5209 = vld [vmem:[#allocation16 + $0x4e0] sm:$0xff]
    %v5210 = vld [vmem:[#allocation16 + $0x4e8] sm:$0xff]
    %v5211 = vld [vmem:[#allocation16 + $0x4f0] sm:$0xff]
    %v5212 = vld [vmem:[#allocation16 + $0x4f8] sm:$0xff]
    %v5213 = vld [vmem:[#allocation16 + $0x500] sm:$0xff]
    %v5214 = vld [vmem:[#allocation16 + $0x508] sm:$0xff]
    %v5215 = vld [vmem:[#allocation16 + $0x510] sm:$0xff]
    %v5216 = vld [vmem:[#allocation16 + $0x518] sm:$0xff]
    %v5217 = vld [vmem:[#allocation16 + $0x520] sm:$0xff]
    %v5218 = vld [vmem:[#allocation16 + $0x528] sm:$0xff]
    %v5219 = vld [vmem:[#allocation16 + $0x530] sm:$0xff]
    %v5220 = vld [vmem:[#allocation16 + $0x538] sm:$0xff]
    %v5221 = vld [vmem:[#allocation16 + $0x540] sm:$0xff]
    %v5222 = vld [vmem:[#allocation16 + $0x548] sm:$0xff]
    %v5223 = vld [vmem:[#allocation16 + $0x550] sm:$0xff]
    %v5224 = vld [vmem:[#allocation16 + $0x558] sm:$0xff]
    %v5225 = vld [vmem:[#allocation16 + $0x560] sm:$0xff]
    %v5226 = vld [vmem:[#allocation16 + $0x568] sm:$0xff]
    %v5227 = vld [vmem:[#allocation16 + $0x570] sm:$0xff]
    %v5228 = vld [vmem:[#allocation16 + $0x578] sm:$0xff]
    %v5229 = vld [vmem:[#allocation16 + $0x580] sm:$0xff]
    %v5230 = vld [vmem:[#allocation16 + $0x588] sm:$0xff]
    %v5231 = vld [vmem:[#allocation16 + $0x590] sm:$0xff]
    %v5232 = vld [vmem:[#allocation16 + $0x598] sm:$0xff]
    %v5233 = vld [vmem:[#allocation16 + $0x5a0] sm:$0xff]
    %v5234 = vld [vmem:[#allocation16 + $0x5a8] sm:$0xff]
    %v5235 = vld [vmem:[#allocation16 + $0x5b0] sm:$0xff]
    %v5236 = vld [vmem:[#allocation16 + $0x5b8] sm:$0xff]
    %v5237 = vld [vmem:[#allocation16 + $0x5c0] sm:$0xff]
    %v5238 = vld [vmem:[#allocation16 + $0x5c8] sm:$0xff]
    %v5239 = vld [vmem:[#allocation16 + $0x5d0] sm:$0xff]
    %v5240 = vld [vmem:[#allocation16 + $0x5d8] sm:$0xff]
    %v5241 = vld [vmem:[#allocation16 + $0x5e0] sm:$0xff]
    %v5242 = vld [vmem:[#allocation16 + $0x5e8] sm:$0xff]
    %v5243 = vld [vmem:[#allocation16 + $0x5f0] sm:$0xff]
    %v5244 = vld [vmem:[#allocation16 + $0x5f8] sm:$0xff]
    %v5245 = vld [vmem:[#allocation18] sm:$0x3]
    %v5246 = vld [vmem:[%s772] sm:$0xff]
    %v5247 = vld [vmem:[%s772 + $0x8] sm:$0xff]
    %v5248 = vld [vmem:[%s772 + $0x10] sm:$0xff]
    %v5249 = vld [vmem:[%s772 + $0x18] sm:$0xff]
    %v5250 = vld [vmem:[%s772 + $0x20] sm:$0xff]
    %v5251 = vld [vmem:[%s772 + $0x28] sm:$0xff]
    %5252 = vmatpush.msra.mxu0 %v5143
    %5253 = vmatpush.msra.mxu0 %v5137
    %5254 = vmatpush.msra.mxu0 %v5131
    %5255 = vmatpush.msra.mxu0 %v5125
    %5256 = vmatpush.msra.mxu0 %v5119
    %5257 = vmatpush.msra.mxu0 %v5113
    %5258 = vmatpush.msra.mxu0 %v5107
    %5259 = vmatpush.msra.mxu0 %v5101
    %5260 = vmatpush.msra.mxu0 %v5095
    %5261 = vmatpush.msra.mxu0 %v5089
    %5262 = vmatpush.msra.mxu0 %v5083
    %5263 = vmatpush.msra.mxu0 %v5077
    %5264 = vmatpush.msra.mxu0 %v5071
    %5265 = vmatpush.msra.mxu0 %v5065
    %5266 = vmatpush.msra.mxu0 %v5059
    %5267 = vmatpush.msra.mxu0 %v5053
    %5268 = vmatmul.f32.gmra.mxu0 0.0
    %v5269 = vpop.f32.mrf.mxu0
    %v5270 = vadd.f32 0.0, %v5269
    %5271 = vdwg.mxu0
    %5272 = vmatpush.msra.mxu0 %v5239
    %5273 = vmatpush.msra.mxu0 %v5233
    %5274 = vmatpush.msra.mxu0 %v5227
    %5275 = vmatpush.msra.mxu0 %v5221
    %5276 = vmatpush.msra.mxu0 %v5215
    %5277 = vmatpush.msra.mxu0 %v5209
    %5278 = vmatpush.msra.mxu0 %v5203
    %5279 = vmatpush.msra.mxu0 %v5197
    %5280 = vmatpush.msra.mxu0 %v5191
    %5281 = vmatpush.msra.mxu0 %v5185
    %5282 = vmatpush.msra.mxu0 %v5179
    %5283 = vmatpush.msra.mxu0 %v5173
    %5284 = vmatpush.msra.mxu0 %v5167
    %5285 = vmatpush.msra.mxu0 %v5161
    %5286 = vmatpush.msra.mxu0 %v5155
    %5287 = vmatpush.msra.mxu0 %v5149
    %5288 = vmatmul.f32.gmra.mxu0 0.0
    %v5289 = vpop.f32.mrf.mxu0
    %v5290 = vadd.f32 %v5270, %v5289
    %5291 = vdwg.mxu0
    %5292 = vmatpush.msra.mxu0 %v5144
    %5293 = vmatpush.msra.mxu0 %v5138
    %5294 = vmatpush.msra.mxu0 %v5132
    %5295 = vmatpush.msra.mxu0 %v5126
    %5296 = vmatpush.msra.mxu0 %v5120
    %5297 = vmatpush.msra.mxu0 %v5114
    %5298 = vmatpush.msra.mxu0 %v5108
    %5299 = vmatpush.msra.mxu0 %v5102
    %5300 = vmatpush.msra.mxu0 %v5096
    %5301 = vmatpush.msra.mxu0 %v5090
    %5302 = vmatpush.msra.mxu0 %v5084
    %5303 = vmatpush.msra.mxu0 %v5078
    %5304 = vmatpush.msra.mxu0 %v5072
    %5305 = vmatpush.msra.mxu0 %v5066
    %5306 = vmatpush.msra.mxu0 %v5060
    %5307 = vmatpush.msra.mxu0 %v5054
    %5308 = vmatmul.f32.gmra.mxu0 0.0
    %v5309 = vpop.f32.mrf.mxu0
    %v5310 = vadd.f32 0.0, %v5309
    %5311 = vdwg.mxu0
    %5312 = vmatpush.msra.mxu0 %v5240
    %5313 = vmatpush.msra.mxu0 %v5234
    %5314 = vmatpush.msra.mxu0 %v5228
    %5315 = vmatpush.msra.mxu0 %v5222
    %5316 = vmatpush.msra.mxu0 %v5216
    %5317 = vmatpush.msra.mxu0 %v5210
    %5318 = vmatpush.msra.mxu0 %v5204
    %5319 = vmatpush.msra.mxu0 %v5198
    %5320 = vmatpush.msra.mxu0 %v5192
    %5321 = vmatpush.msra.mxu0 %v5186
    %5322 = vmatpush.msra.mxu0 %v5180
    %5323 = vmatpush.msra.mxu0 %v5174
    %5324 = vmatpush.msra.mxu0 %v5168
    %5325 = vmatpush.msra.mxu0 %v5162
    %5326 = vmatpush.msra.mxu0 %v5156
    %5327 = vmatpush.msra.mxu0 %v5150
    %5328 = vmatmul.f32.gmra.mxu0 0.0
    %v5329 = vpop.f32.mrf.mxu0
    %v5330 = vadd.f32 %v5310, %v5329
    %5331 = vdwg.mxu0
    %5332 = vmatpush.msra.mxu0 %v5145
    %5333 = vmatpush.msra.mxu0 %v5139
    %5334 = vmatpush.msra.mxu0 %v5133
    %5335 = vmatpush.msra.mxu0 %v5127
    %5336 = vmatpush.msra.mxu0 %v5121
    %5337 = vmatpush.msra.mxu0 %v5115
    %5338 = vmatpush.msra.mxu0 %v5109
    %5339 = vmatpush.msra.mxu0 %v5103
    %5340 = vmatpush.msra.mxu0 %v5097
    %5341 = vmatpush.msra.mxu0 %v5091
    %5342 = vmatpush.msra.mxu0 %v5085
    %5343 = vmatpush.msra.mxu0 %v5079
    %5344 = vmatpush.msra.mxu0 %v5073
    %5345 = vmatpush.msra.mxu0 %v5067
    %5346 = vmatpush.msra.mxu0 %v5061
    %5347 = vmatpush.msra.mxu0 %v5055
    %5348 = vmatmul.f32.gmra.mxu0 0.0
    %v5349 = vpop.f32.mrf.mxu0
    %v5350 = vadd.f32 0.0, %v5349
    %5351 = vdwg.mxu0
    %5352 = vmatpush.msra.mxu0 %v5241
    %5353 = vmatpush.msra.mxu0 %v5235
    %5354 = vmatpush.msra.mxu0 %v5229
    %5355 = vmatpush.msra.mxu0 %v5223
    %5356 = vmatpush.msra.mxu0 %v5217
    %5357 = vmatpush.msra.mxu0 %v5211
    %5358 = vmatpush.msra.mxu0 %v5205
    %5359 = vmatpush.msra.mxu0 %v5199
    %5360 = vmatpush.msra.mxu0 %v5193
    %5361 = vmatpush.msra.mxu0 %v5187
    %5362 = vmatpush.msra.mxu0 %v5181
    %5363 = vmatpush.msra.mxu0 %v5175
    %5364 = vmatpush.msra.mxu0 %v5169
    %5365 = vmatpush.msra.mxu0 %v5163
    %5366 = vmatpush.msra.mxu0 %v5157
    %5367 = vmatpush.msra.mxu0 %v5151
    %5368 = vmatmul.f32.gmra.mxu0 0.0
    %v5369 = vpop.f32.mrf.mxu0
    %v5370 = vadd.f32 %v5350, %v5369
    %5371 = vdwg.mxu0
    %5372 = vmatpush.msra.mxu0 %v5146
    %5373 = vmatpush.msra.mxu0 %v5140
    %5374 = vmatpush.msra.mxu0 %v5134
    %5375 = vmatpush.msra.mxu0 %v5128
    %5376 = vmatpush.msra.mxu0 %v5122
    %5377 = vmatpush.msra.mxu0 %v5116
    %5378 = vmatpush.msra.mxu0 %v5110
    %5379 = vmatpush.msra.mxu0 %v5104
    %5380 = vmatpush.msra.mxu0 %v5098
    %5381 = vmatpush.msra.mxu0 %v5092
    %5382 = vmatpush.msra.mxu0 %v5086
    %5383 = vmatpush.msra.mxu0 %v5080
    %5384 = vmatpush.msra.mxu0 %v5074
    %5385 = vmatpush.msra.mxu0 %v5068
    %5386 = vmatpush.msra.mxu0 %v5062
    %5387 = vmatpush.msra.mxu0 %v5056
    %5388 = vmatmul.f32.gmra.mxu0 0.0
    %v5389 = vpop.f32.mrf.mxu0
    %v5390 = vadd.f32 0.0, %v5389
    %5391 = vdwg.mxu0
    %5392 = vmatpush.msra.mxu0 %v5242
    %5393 = vmatpush.msra.mxu0 %v5236
    %5394 = vmatpush.msra.mxu0 %v5230
    %5395 = vmatpush.msra.mxu0 %v5224
    %5396 = vmatpush.msra.mxu0 %v5218
    %5397 = vmatpush.msra.mxu0 %v5212
    %5398 = vmatpush.msra.mxu0 %v5206
    %5399 = vmatpush.msra.mxu0 %v5200
    %5400 = vmatpush.msra.mxu0 %v5194
    %5401 = vmatpush.msra.mxu0 %v5188
    %5402 = vmatpush.msra.mxu0 %v5182
    %5403 = vmatpush.msra.mxu0 %v5176
    %5404 = vmatpush.msra.mxu0 %v5170
    %5405 = vmatpush.msra.mxu0 %v5164
    %5406 = vmatpush.msra.mxu0 %v5158
    %5407 = vmatpush.msra.mxu0 %v5152
    %5408 = vmatmul.f32.gmra.mxu0 0.0
    %v5409 = vpop.f32.mrf.mxu0
    %v5410 = vadd.f32 %v5390, %v5409
    %5411 = vdwg.mxu0
    %5412 = vmatpush.msra.mxu0 %v5147
    %5413 = vmatpush.msra.mxu0 %v5141
    %5414 = vmatpush.msra.mxu0 %v5135
    %5415 = vmatpush.msra.mxu0 %v5129
    %5416 = vmatpush.msra.mxu0 %v5123
    %5417 = vmatpush.msra.mxu0 %v5117
    %5418 = vmatpush.msra.mxu0 %v5111
    %5419 = vmatpush.msra.mxu0 %v5105
    %5420 = vmatpush.msra.mxu0 %v5099
    %5421 = vmatpush.msra.mxu0 %v5093
    %5422 = vmatpush.msra.mxu0 %v5087
    %5423 = vmatpush.msra.mxu0 %v5081
    %5424 = vmatpush.msra.mxu0 %v5075
    %5425 = vmatpush.msra.mxu0 %v5069
    %5426 = vmatpush.msra.mxu0 %v5063
    %5427 = vmatpush.msra.mxu0 %v5057
    %5428 = vmatmul.f32.gmra.mxu0 0.0
    %v5429 = vpop.f32.mrf.mxu0
    %v5430 = vadd.f32 0.0, %v5429
    %5431 = vdwg.mxu0
    %5432 = vmatpush.msra.mxu0 %v5243
    %5433 = vmatpush.msra.mxu0 %v5237
    %5434 = vmatpush.msra.mxu0 %v5231
    %5435 = vmatpush.msra.mxu0 %v5225
    %5436 = vmatpush.msra.mxu0 %v5219
    %5437 = vmatpush.msra.mxu0 %v5213
    %5438 = vmatpush.msra.mxu0 %v5207
    %5439 = vmatpush.msra.mxu0 %v5201
    %5440 = vmatpush.msra.mxu0 %v5195
    %5441 = vmatpush.msra.mxu0 %v5189
    %5442 = vmatpush.msra.mxu0 %v5183
    %5443 = vmatpush.msra.mxu0 %v5177
    %5444 = vmatpush.msra.mxu0 %v5171
    %5445 = vmatpush.msra.mxu0 %v5165
    %5446 = vmatpush.msra.mxu0 %v5159
    %5447 = vmatpush.msra.mxu0 %v5153
    %5448 = vmatmul.f32.gmra.mxu0 0.0
    %v5449 = vpop.f32.mrf.mxu0
    %v5450 = vadd.f32 %v5430, %v5449
    %5451 = vdwg.mxu0
    %5452 = vmatpush.msra.mxu0 %v5148
    %5453 = vmatpush.msra.mxu0 %v5142
    %5454 = vmatpush.msra.mxu0 %v5136
    %5455 = vmatpush.msra.mxu0 %v5130
    %5456 = vmatpush.msra.mxu0 %v5124
    %5457 = vmatpush.msra.mxu0 %v5118
    %5458 = vmatpush.msra.mxu0 %v5112
    %5459 = vmatpush.msra.mxu0 %v5106
    %5460 = vmatpush.msra.mxu0 %v5100
    %5461 = vmatpush.msra.mxu0 %v5094
    %5462 = vmatpush.msra.mxu0 %v5088
    %5463 = vmatpush.msra.mxu0 %v5082
    %5464 = vmatpush.msra.mxu0 %v5076
    %5465 = vmatpush.msra.mxu0 %v5070
    %5466 = vmatpush.msra.mxu0 %v5064
    %5467 = vmatpush.msra.mxu0 %v5058
    %5468 = vmatmul.f32.gmra.mxu0 0.0
    %v5469 = vpop.f32.mrf.mxu0
    %v5470 = vadd.f32 0.0, %v5469
    %5471 = vdwg.mxu0
    %5472 = vmatpush.msra.mxu0 %v5244
    %5473 = vmatpush.msra.mxu0 %v5238
    %5474 = vmatpush.msra.mxu0 %v5232
    %5475 = vmatpush.msra.mxu0 %v5226
    %5476 = vmatpush.msra.mxu0 %v5220
    %5477 = vmatpush.msra.mxu0 %v5214
    %5478 = vmatpush.msra.mxu0 %v5208
    %5479 = vmatpush.msra.mxu0 %v5202
    %5480 = vmatpush.msra.mxu0 %v5196
    %5481 = vmatpush.msra.mxu0 %v5190
    %5482 = vmatpush.msra.mxu0 %v5184
    %5483 = vmatpush.msra.mxu0 %v5178
    %5484 = vmatpush.msra.mxu0 %v5172
    %5485 = vmatpush.msra.mxu0 %v5166
    %5486 = vmatpush.msra.mxu0 %v5160
    %5487 = vmatpush.msra.mxu0 %v5154
    %5488 = vmatmul.f32.gmra.mxu0 0.0
    %v5489 = vpop.f32.mrf.mxu0
    %v5490 = vadd.f32 %v5470, %v5489
    %5491 = vdwg.mxu0
    %v5492 = vadd.f32 %v5246, %v5290
    %v5493 = vadd.f32 %v5247, %v5330
    %v5494 = vadd.f32 %v5248, %v5370
    %v5495 = vadd.f32 %v5249, %v5410
    %v5496 = vxor.u32 %v5492, 2147483648
    %v5497 = vxor.u32 %v5493, 2147483648
    %v5498 = vxor.u32 %v5494, 2147483648
    %v5499 = vxor.u32 %v5495, 2147483648
    %v5500 = vmul.f32 %v5496, 1.442695
    %v5501 = vpow.pop %v5500
    %v5502 = vmul.f32 %v5497, 1.442695
    %v5503 = vpow.pop %v5502
    %v5504 = vmul.f32 %v5498, 1.442695
    %v5505 = vpow.pop %v5504
    %v5506 = vmul.f32 %v5499, 1.442695
    %v5507 = vpow.pop %v5506
    %v5508 = vadd.f32 %v5501, 1.0
    %v5509 = vadd.f32 %v5503, 1.0
    %v5510 = vadd.f32 %v5505, 1.0
    %v5511 = vadd.f32 %v5507, 1.0
    %v5512 = vrcp.pop %v5508
    %v5513 = vmul.f32 %v5508, %v5512
    %v5514 = vsub.f32 1.0, %v5513
    %v5515 = vmul.f32 %v5512, %v5514
    %v5516 = vadd.f32 %v5512, %v5515
    %vm5517 = vweird.f32 %v5508
    %vm5518 = vweird.f32 %v5512
    %vm5519 = vmor %vm5517, %vm5518
    %v5520 = vsel %vm5519, %v5512, %v5516
    %v5521 = vand.u32 2147483647, %v5508
    %vm5522 = vcmp.eq.f32.partialorder %v5521, 8.507059e+37
    %v5523 = vand.u32 %v5508, 2147483648
    %v5524 = vor.u32 1.1754944e-38, %v5523
    %v5525 = vsel %vm5522, %v5524, %v5520
    %v5526 = vmul.f32 1.0, %v5525
    %v5527 = vrcp.pop %v5509
    %v5528 = vmul.f32 %v5509, %v5527
    %v5529 = vsub.f32 1.0, %v5528
    %v5530 = vmul.f32 %v5527, %v5529
    %v5531 = vadd.f32 %v5527, %v5530
    %vm5532 = vweird.f32 %v5509
    %vm5533 = vweird.f32 %v5527
    %vm5534 = vmor %vm5532, %vm5533
    %v5535 = vsel %vm5534, %v5527, %v5531
    %v5536 = vand.u32 2147483647, %v5509
    %vm5537 = vcmp.eq.f32.partialorder %v5536, 8.507059e+37
    %v5538 = vand.u32 %v5509, 2147483648
    %v5539 = vor.u32 1.1754944e-38, %v5538
    %v5540 = vsel %vm5537, %v5539, %v5535
    %v5541 = vmul.f32 1.0, %v5540
    %v5542 = vrcp.pop %v5510
    %v5543 = vmul.f32 %v5510, %v5542
    %v5544 = vsub.f32 1.0, %v5543
    %v5545 = vmul.f32 %v5542, %v5544
    %v5546 = vadd.f32 %v5542, %v5545
    %vm5547 = vweird.f32 %v5510
    %vm5548 = vweird.f32 %v5542
    %vm5549 = vmor %vm5547, %vm5548
    %v5550 = vsel %vm5549, %v5542, %v5546
    %v5551 = vand.u32 2147483647, %v5510
    %vm5552 = vcmp.eq.f32.partialorder %v5551, 8.507059e+37
    %v5553 = vand.u32 %v5510, 2147483648
    %v5554 = vor.u32 1.1754944e-38, %v5553
    %v5555 = vsel %vm5552, %v5554, %v5550
    %v5556 = vmul.f32 1.0, %v5555
    %v5557 = vrcp.pop %v5511
    %v5558 = vmul.f32 %v5511, %v5557
    %v5559 = vsub.f32 1.0, %v5558
    %v5560 = vmul.f32 %v5557, %v5559
    %v5561 = vadd.f32 %v5557, %v5560
    %vm5562 = vweird.f32 %v5511
    %vm5563 = vweird.f32 %v5557
    %vm5564 = vmor %vm5562, %vm5563
    %v5565 = vsel %vm5564, %v5557, %v5561
    %v5566 = vand.u32 2147483647, %v5511
    %vm5567 = vcmp.eq.f32.partialorder %v5566, 8.507059e+37
    %v5568 = vand.u32 %v5511, 2147483648
    %v5569 = vor.u32 1.1754944e-38, %v5568
    %v5570 = vsel %vm5567, %v5569, %v5565
    %v5571 = vmul.f32 1.0, %v5570
    %v5573 = vperm.slane %v5245, 0
    %v5574 = vperm.slane %v5245, 1
    %v5577 = vadd.f32 %v5450, %v5573
    %v5578 = vadd.f32 %v5490, %v5574
    %v5579 = vmul.f32 %v5526, %v5577
    %v5580 = vmul.f32 %v5541, %v5578
    %v5581 = vadd.f32 %v5250, %v5579
    %v5582 = vadd.f32 %v5251, %v5580
    %v5583 = vtanh.pop %v5581
    %v5584 = vtanh.pop %v5582
    %v5585 = vsub.f32 1.0, %v5556
    %v5586 = vsub.f32 1.0, %v5571
    %v5587 = vmul.f32 %v5585, %v5583
    %v5588 = vmul.f32 %v5586, %v5584
    %v5589 = vmul.f32 %v5556, 0.0
    %v5590 = vmul.f32 %v5571, 0.0
    %v5591 = vadd.f32 %v5587, %v5589
    %v5592 = vadd.f32 %v5588, %v5590
    %s5593 = smul.u32 0, 2
    %s5594 = smul.addr %s5593, 8
    %s5595 = scalar_lea.vmem [#allocation19], %s5594
    %5596 = vst [vmem:[%s5595] sm:$0xff] %v5591
    %s5597 = smul.u32 7, 2
    %s5598 = smul.addr %s5597, 8
    %s5599 = scalar_lea.vmem [#allocation19], %s5598
    %5600 = vst [vmem:[%s5599 + $0x8] sm:$0xff] %v5592
    %v5601 = vld [vmem:[%s1132] sm:$0xff]
    %v5602 = vld [vmem:[%s1132 + $0x8] sm:$0xff]
    %v5603 = vld [vmem:[%s1132 + $0x10] sm:$0xff]
    %v5604 = vld [vmem:[%s1132 + $0x18] sm:$0xff]
    %v5605 = vld [vmem:[%s1132 + $0x20] sm:$0xff]
    %v5606 = vld [vmem:[%s1132 + $0x28] sm:$0xff]
    %5607 = vmatpush.msra.mxu0 %v5143
    %5608 = vmatpush.msra.mxu0 %v5137
    %5609 = vmatpush.msra.mxu0 %v5131
    %5610 = vmatpush.msra.mxu0 %v5125
    %5611 = vmatpush.msra.mxu0 %v5119
    %5612 = vmatpush.msra.mxu0 %v5113
    %5613 = vmatpush.msra.mxu0 %v5107
    %5614 = vmatpush.msra.mxu0 %v5101
    %5615 = vmatpush.msra.mxu0 %v5095
    %5616 = vmatpush.msra.mxu0 %v5089
    %5617 = vmatpush.msra.mxu0 %v5083
    %5618 = vmatpush.msra.mxu0 %v5077
    %5619 = vmatpush.msra.mxu0 %v5071
    %5620 = vmatpush.msra.mxu0 %v5065
    %5621 = vmatpush.msra.mxu0 %v5059
    %5622 = vmatpush.msra.mxu0 %v5053
    %5623 = vmatmul.f32.gmra.mxu0 %v5591
    %v5624 = vpop.f32.mrf.mxu0
    %v5625 = vadd.f32 0.0, %v5624
    %5626 = vdwg.mxu0
    %5627 = vmatpush.msra.mxu0 %v5239
    %5628 = vmatpush.msra.mxu0 %v5233
    %5629 = vmatpush.msra.mxu0 %v5227
    %5630 = vmatpush.msra.mxu0 %v5221
    %5631 = vmatpush.msra.mxu0 %v5215
    %5632 = vmatpush.msra.mxu0 %v5209
    %5633 = vmatpush.msra.mxu0 %v5203
    %5634 = vmatpush.msra.mxu0 %v5197
    %5635 = vmatpush.msra.mxu0 %v5191
    %5636 = vmatpush.msra.mxu0 %v5185
    %5637 = vmatpush.msra.mxu0 %v5179
    %5638 = vmatpush.msra.mxu0 %v5173
    %5639 = vmatpush.msra.mxu0 %v5167
    %5640 = vmatpush.msra.mxu0 %v5161
    %5641 = vmatpush.msra.mxu0 %v5155
    %5642 = vmatpush.msra.mxu0 %v5149
    %5643 = vmatmul.f32.gmra.mxu0 %v5592
    %v5644 = vpop.f32.mrf.mxu0
    %v5645 = vadd.f32 %v5625, %v5644
    %5646 = vdwg.mxu0
    %5647 = vmatpush.msra.mxu0 %v5144
    %5648 = vmatpush.msra.mxu0 %v5138
    %5649 = vmatpush.msra.mxu0 %v5132
    %5650 = vmatpush.msra.mxu0 %v5126
    %5651 = vmatpush.msra.mxu0 %v5120
    %5652 = vmatpush.msra.mxu0 %v5114
    %5653 = vmatpush.msra.mxu0 %v5108
    %5654 = vmatpush.msra.mxu0 %v5102
    %5655 = vmatpush.msra.mxu0 %v5096
    %5656 = vmatpush.msra.mxu0 %v5090
    %5657 = vmatpush.msra.mxu0 %v5084
    %5658 = vmatpush.msra.mxu0 %v5078
    %5659 = vmatpush.msra.mxu0 %v5072
    %5660 = vmatpush.msra.mxu0 %v5066
    %5661 = vmatpush.msra.mxu0 %v5060
    %5662 = vmatpush.msra.mxu0 %v5054
    %5663 = vmatmul.f32.gmra.mxu0 %v5591
    %v5664 = vpop.f32.mrf.mxu0
    %v5665 = vadd.f32 0.0, %v5664
    %5666 = vdwg.mxu0
    %5667 = vmatpush.msra.mxu0 %v5240
    %5668 = vmatpush.msra.mxu0 %v5234
    %5669 = vmatpush.msra.mxu0 %v5228
    %5670 = vmatpush.msra.mxu0 %v5222
    %5671 = vmatpush.msra.mxu0 %v5216
    %5672 = vmatpush.msra.mxu0 %v5210
    %5673 = vmatpush.msra.mxu0 %v5204
    %5674 = vmatpush.msra.mxu0 %v5198
    %5675 = vmatpush.msra.mxu0 %v5192
    %5676 = vmatpush.msra.mxu0 %v5186
    %5677 = vmatpush.msra.mxu0 %v5180
    %5678 = vmatpush.msra.mxu0 %v5174
    %5679 = vmatpush.msra.mxu0 %v5168
    %5680 = vmatpush.msra.mxu0 %v5162
    %5681 = vmatpush.msra.mxu0 %v5156
    %5682 = vmatpush.msra.mxu0 %v5150
    %5683 = vmatmul.f32.gmra.mxu0 %v5592
    %v5684 = vpop.f32.mrf.mxu0
    %v5685 = vadd.f32 %v5665, %v5684
    %5686 = vdwg.mxu0
    %5687 = vmatpush.msra.mxu0 %v5145
    %5688 = vmatpush.msra.mxu0 %v5139
    %5689 = vmatpush.msra.mxu0 %v5133
    %5690 = vmatpush.msra.mxu0 %v5127
    %5691 = vmatpush.msra.mxu0 %v5121
    %5692 = vmatpush.msra.mxu0 %v5115
    %5693 = vmatpush.msra.mxu0 %v5109
    %5694 = vmatpush.msra.mxu0 %v5103
    %5695 = vmatpush.msra.mxu0 %v5097
    %5696 = vmatpush.msra.mxu0 %v5091
    %5697 = vmatpush.msra.mxu0 %v5085
    %5698 = vmatpush.msra.mxu0 %v5079
    %5699 = vmatpush.msra.mxu0 %v5073
    %5700 = vmatpush.msra.mxu0 %v5067
    %5701 = vmatpush.msra.mxu0 %v5061
    %5702 = vmatpush.msra.mxu0 %v5055
    %5703 = vmatmul.f32.gmra.mxu0 %v5591
    %v5704 = vpop.f32.mrf.mxu0
    %v5705 = vadd.f32 0.0, %v5704
    %5706 = vdwg.mxu0
    %5707 = vmatpush.msra.mxu0 %v5241
    %5708 = vmatpush.msra.mxu0 %v5235
    %5709 = vmatpush.msra.mxu0 %v5229
    %5710 = vmatpush.msra.mxu0 %v5223
    %5711 = vmatpush.msra.mxu0 %v5217
    %5712 = vmatpush.msra.mxu0 %v5211
    %5713 = vmatpush.msra.mxu0 %v5205
    %5714 = vmatpush.msra.mxu0 %v5199
    %5715 = vmatpush.msra.mxu0 %v5193
    %5716 = vmatpush.msra.mxu0 %v5187
    %5717 = vmatpush.msra.mxu0 %v5181
    %5718 = vmatpush.msra.mxu0 %v5175
    %5719 = vmatpush.msra.mxu0 %v5169
    %5720 = vmatpush.msra.mxu0 %v5163
    %5721 = vmatpush.msra.mxu0 %v5157
    %5722 = vmatpush.msra.mxu0 %v5151
    %5723 = vmatmul.f32.gmra.mxu0 %v5592
    %v5724 = vpop.f32.mrf.mxu0
    %v5725 = vadd.f32 %v5705, %v5724
    %5726 = vdwg.mxu0
    %5727 = vmatpush.msra.mxu0 %v5146
    %5728 = vmatpush.msra.mxu0 %v5140
    %5729 = vmatpush.msra.mxu0 %v5134
    %5730 = vmatpush.msra.mxu0 %v5128
    %5731 = vmatpush.msra.mxu0 %v5122
    %5732 = vmatpush.msra.mxu0 %v5116
    %5733 = vmatpush.msra.mxu0 %v5110
    %5734 = vmatpush.msra.mxu0 %v5104
    %5735 = vmatpush.msra.mxu0 %v5098
    %5736 = vmatpush.msra.mxu0 %v5092
    %5737 = vmatpush.msra.mxu0 %v5086
    %5738 = vmatpush.msra.mxu0 %v5080
    %5739 = vmatpush.msra.mxu0 %v5074
    %5740 = vmatpush.msra.mxu0 %v5068
    %5741 = vmatpush.msra.mxu0 %v5062
    %5742 = vmatpush.msra.mxu0 %v5056
    %5743 = vmatmul.f32.gmra.mxu0 %v5591
    %v5744 = vpop.f32.mrf.mxu0
    %v5745 = vadd.f32 0.0, %v5744
    %5746 = vdwg.mxu0
    %5747 = vmatpush.msra.mxu0 %v5242
    %5748 = vmatpush.msra.mxu0 %v5236
    %5749 = vmatpush.msra.mxu0 %v5230
    %5750 = vmatpush.msra.mxu0 %v5224
    %5751 = vmatpush.msra.mxu0 %v5218
    %5752 = vmatpush.msra.mxu0 %v5212
    %5753 = vmatpush.msra.mxu0 %v5206
    %5754 = vmatpush.msra.mxu0 %v5200
    %5755 = vmatpush.msra.mxu0 %v5194
    %5756 = vmatpush.msra.mxu0 %v5188
    %5757 = vmatpush.msra.mxu0 %v5182
    %5758 = vmatpush.msra.mxu0 %v5176
    %5759 = vmatpush.msra.mxu0 %v5170
    %5760 = vmatpush.msra.mxu0 %v5164
    %5761 = vmatpush.msra.mxu0 %v5158
    %5762 = vmatpush.msra.mxu0 %v5152
    %5763 = vmatmul.f32.gmra.mxu0 %v5592
    %v5764 = vpop.f32.mrf.mxu0
    %v5765 = vadd.f32 %v5745, %v5764
    %5766 = vdwg.mxu0
    %5767 = vmatpush.msra.mxu0 %v5147
    %5768 = vmatpush.msra.mxu0 %v5141
    %5769 = vmatpush.msra.mxu0 %v5135
    %5770 = vmatpush.msra.mxu0 %v5129
    %5771 = vmatpush.msra.mxu0 %v5123
    %5772 = vmatpush.msra.mxu0 %v5117
    %5773 = vmatpush.msra.mxu0 %v5111
    %5774 = vmatpush.msra.mxu0 %v5105
    %5775 = vmatpush.msra.mxu0 %v5099
    %5776 = vmatpush.msra.mxu0 %v5093
    %5777 = vmatpush.msra.mxu0 %v5087
    %5778 = vmatpush.msra.mxu0 %v5081
    %5779 = vmatpush.msra.mxu0 %v5075
    %5780 = vmatpush.msra.mxu0 %v5069
    %5781 = vmatpush.msra.mxu0 %v5063
    %5782 = vmatpush.msra.mxu0 %v5057
    %5783 = vmatmul.f32.gmra.mxu0 %v5591
    %v5784 = vpop.f32.mrf.mxu0
    %v5785 = vadd.f32 0.0, %v5784
    %5786 = vdwg.mxu0
    %5787 = vmatpush.msra.mxu0 %v5243
    %5788 = vmatpush.msra.mxu0 %v5237
    %5789 = vmatpush.msra.mxu0 %v5231
    %5790 = vmatpush.msra.mxu0 %v5225
    %5791 = vmatpush.msra.mxu0 %v5219
    %5792 = vmatpush.msra.mxu0 %v5213
    %5793 = vmatpush.msra.mxu0 %v5207
    %5794 = vmatpush.msra.mxu0 %v5201
    %5795 = vmatpush.msra.mxu0 %v5195
    %5796 = vmatpush.msra.mxu0 %v5189
    %5797 = vmatpush.msra.mxu0 %v5183
    %5798 = vmatpush.msra.mxu0 %v5177
    %5799 = vmatpush.msra.mxu0 %v5171
    %5800 = vmatpush.msra.mxu0 %v5165
    %5801 = vmatpush.msra.mxu0 %v5159
    %5802 = vmatpush.msra.mxu0 %v5153
    %5803 = vmatmul.f32.gmra.mxu0 %v5592
    %v5804 = vpop.f32.mrf.mxu0
    %v5805 = vadd.f32 %v5785, %v5804
    %5806 = vdwg.mxu0
    %5807 = vmatpush.msra.mxu0 %v5148
    %5808 = vmatpush.msra.mxu0 %v5142
    %5809 = vmatpush.msra.mxu0 %v5136
    %5810 = vmatpush.msra.mxu0 %v5130
    %5811 = vmatpush.msra.mxu0 %v5124
    %5812 = vmatpush.msra.mxu0 %v5118
    %5813 = vmatpush.msra.mxu0 %v5112
    %5814 = vmatpush.msra.mxu0 %v5106
    %5815 = vmatpush.msra.mxu0 %v5100
    %5816 = vmatpush.msra.mxu0 %v5094
    %5817 = vmatpush.msra.mxu0 %v5088
    %5818 = vmatpush.msra.mxu0 %v5082
    %5819 = vmatpush.msra.mxu0 %v5076
    %5820 = vmatpush.msra.mxu0 %v5070
    %5821 = vmatpush.msra.mxu0 %v5064
    %5822 = vmatpush.msra.mxu0 %v5058
    %5823 = vmatmul.f32.gmra.mxu0 %v5591
    %v5824 = vpop.f32.mrf.mxu0
    %v5825 = vadd.f32 0.0, %v5824
    %5826 = vdwg.mxu0
    %5827 = vmatpush.msra.mxu0 %v5244
    %5828 = vmatpush.msra.mxu0 %v5238
    %5829 = vmatpush.msra.mxu0 %v5232
    %5830 = vmatpush.msra.mxu0 %v5226
    %5831 = vmatpush.msra.mxu0 %v5220
    %5832 = vmatpush.msra.mxu0 %v5214
    %5833 = vmatpush.msra.mxu0 %v5208
    %5834 = vmatpush.msra.mxu0 %v5202
    %5835 = vmatpush.msra.mxu0 %v5196
    %5836 = vmatpush.msra.mxu0 %v5190
    %5837 = vmatpush.msra.mxu0 %v5184
    %5838 = vmatpush.msra.mxu0 %v5178
    %5839 = vmatpush.msra.mxu0 %v5172
    %5840 = vmatpush.msra.mxu0 %v5166
    %5841 = vmatpush.msra.mxu0 %v5160
    %5842 = vmatpush.msra.mxu0 %v5154
    %5843 = vmatmul.f32.gmra.mxu0 %v5592
    %v5844 = vpop.f32.mrf.mxu0
    %v5845 = vadd.f32 %v5825, %v5844
    %5846 = vdwg.mxu0
    %v5847 = vadd.f32 %v5601, %v5645
    %v5848 = vadd.f32 %v5602, %v5685
    %v5849 = vadd.f32 %v5603, %v5725
    %v5850 = vadd.f32 %v5604, %v5765
    %v5851 = vxor.u32 %v5847, 2147483648
    %v5852 = vxor.u32 %v5848, 2147483648
    %v5853 = vxor.u32 %v5849, 2147483648
    %v5854 = vxor.u32 %v5850, 2147483648
    %v5855 = vmul.f32 %v5851, 1.442695
    %v5856 = vpow.pop %v5855
    %v5857 = vmul.f32 %v5852, 1.442695
    %v5858 = vpow.pop %v5857
    %v5859 = vmul.f32 %v5853, 1.442695
    %v5860 = vpow.pop %v5859
    %v5861 = vmul.f32 %v5854, 1.442695
    %v5862 = vpow.pop %v5861
    %v5863 = vadd.f32 %v5856, 1.0
    %v5864 = vadd.f32 %v5858, 1.0
    %v5865 = vadd.f32 %v5860, 1.0
    %v5866 = vadd.f32 %v5862, 1.0
    %v5867 = vrcp.pop %v5863
    %v5868 = vmul.f32 %v5863, %v5867
    %v5869 = vsub.f32 1.0, %v5868
    %v5870 = vmul.f32 %v5867, %v5869
    %v5871 = vadd.f32 %v5867, %v5870
    %vm5872 = vweird.f32 %v5863
    %vm5873 = vweird.f32 %v5867
    %vm5874 = vmor %vm5872, %vm5873
    %v5875 = vsel %vm5874, %v5867, %v5871
    %v5876 = vand.u32 2147483647, %v5863
    %vm5877 = vcmp.eq.f32.partialorder %v5876, 8.507059e+37
    %v5878 = vand.u32 %v5863, 2147483648
    %v5879 = vor.u32 1.1754944e-38, %v5878
    %v5880 = vsel %vm5877, %v5879, %v5875
    %v5881 = vmul.f32 1.0, %v5880
    %v5882 = vrcp.pop %v5864
    %v5883 = vmul.f32 %v5864, %v5882
    %v5884 = vsub.f32 1.0, %v5883
    %v5885 = vmul.f32 %v5882, %v5884
    %v5886 = vadd.f32 %v5882, %v5885
    %vm5887 = vweird.f32 %v5864
    %vm5888 = vweird.f32 %v5882
    %vm5889 = vmor %vm5887, %vm5888
    %v5890 = vsel %vm5889, %v5882, %v5886
    %v5891 = vand.u32 2147483647, %v5864
    %vm5892 = vcmp.eq.f32.partialorder %v5891, 8.507059e+37
    %v5893 = vand.u32 %v5864, 2147483648
    %v5894 = vor.u32 1.1754944e-38, %v5893
    %v5895 = vsel %vm5892, %v5894, %v5890
    %v5896 = vmul.f32 1.0, %v5895
    %v5897 = vrcp.pop %v5865
    %v5898 = vmul.f32 %v5865, %v5897
    %v5899 = vsub.f32 1.0, %v5898
    %v5900 = vmul.f32 %v5897, %v5899
    %v5901 = vadd.f32 %v5897, %v5900
    %vm5902 = vweird.f32 %v5865
    %vm5903 = vweird.f32 %v5897
    %vm5904 = vmor %vm5902, %vm5903
    %v5905 = vsel %vm5904, %v5897, %v5901
    %v5906 = vand.u32 2147483647, %v5865
    %vm5907 = vcmp.eq.f32.partialorder %v5906, 8.507059e+37
    %v5908 = vand.u32 %v5865, 2147483648
    %v5909 = vor.u32 1.1754944e-38, %v5908
    %v5910 = vsel %vm5907, %v5909, %v5905
    %v5911 = vmul.f32 1.0, %v5910
    %v5912 = vrcp.pop %v5866
    %v5913 = vmul.f32 %v5866, %v5912
    %v5914 = vsub.f32 1.0, %v5913
    %v5915 = vmul.f32 %v5912, %v5914
    %v5916 = vadd.f32 %v5912, %v5915
    %vm5917 = vweird.f32 %v5866
    %vm5918 = vweird.f32 %v5912
    %vm5919 = vmor %vm5917, %vm5918
    %v5920 = vsel %vm5919, %v5912, %v5916
    %v5921 = vand.u32 2147483647, %v5866
    %vm5922 = vcmp.eq.f32.partialorder %v5921, 8.507059e+37
    %v5923 = vand.u32 %v5866, 2147483648
    %v5924 = vor.u32 1.1754944e-38, %v5923
    %v5925 = vsel %vm5922, %v5924, %v5920
    %v5926 = vmul.f32 1.0, %v5925
    %v5927 = vadd.f32 %v5805, %v5573
    %v5928 = vadd.f32 %v5845, %v5574
    %v5929 = vmul.f32 %v5881, %v5927
    %v5930 = vmul.f32 %v5896, %v5928
    %v5931 = vadd.f32 %v5605, %v5929
    %v5932 = vadd.f32 %v5606, %v5930
    %v5933 = vtanh.pop %v5931
    %v5934 = vtanh.pop %v5932
    %v5935 = vsub.f32 1.0, %v5911
    %v5936 = vsub.f32 1.0, %v5926
    %v5937 = vmul.f32 %v5935, %v5933
    %v5938 = vmul.f32 %v5936, %v5934
    %v5939 = vmul.f32 %v5911, %v5591
    %v5940 = vmul.f32 %v5926, %v5592
    %v5941 = vadd.f32 %v5937, %v5939
    %v5942 = vadd.f32 %v5938, %v5940
    %s5943 = smul.u32 1, 2
    %s5944 = smul.addr %s5943, 8
    %s5945 = scalar_lea.vmem [#allocation19], %s5944
    %5946 = vst [vmem:[%s5945] sm:$0xff] %v5941
    %s5947 = smul.u32 6, 2
    %s5948 = smul.addr %s5947, 8
    %s5949 = scalar_lea.vmem [#allocation19], %s5948
    %5950 = vst [vmem:[%s5949 + $0x8] sm:$0xff] %v5942
    %v5951 = vld [vmem:[%s1487] sm:$0xff]
    %v5952 = vld [vmem:[%s1487 + $0x8] sm:$0xff]
    %v5953 = vld [vmem:[%s1487 + $0x10] sm:$0xff]
    %v5954 = vld [vmem:[%s1487 + $0x18] sm:$0xff]
    %v5955 = vld [vmem:[%s1487 + $0x20] sm:$0xff]
    %v5956 = vld [vmem:[%s1487 + $0x28] sm:$0xff]
    %5957 = vmatpush.msra.mxu0 %v5143
    %5958 = vmatpush.msra.mxu0 %v5137
    %5959 = vmatpush.msra.mxu0 %v5131
    %5960 = vmatpush.msra.mxu0 %v5125
    %5961 = vmatpush.msra.mxu0 %v5119
    %5962 = vmatpush.msra.mxu0 %v5113
    %5963 = vmatpush.msra.mxu0 %v5107
    %5964 = vmatpush.msra.mxu0 %v5101
    %5965 = vmatpush.msra.mxu0 %v5095
    %5966 = vmatpush.msra.mxu0 %v5089
    %5967 = vmatpush.msra.mxu0 %v5083
    %5968 = vmatpush.msra.mxu0 %v5077
    %5969 = vmatpush.msra.mxu0 %v5071
    %5970 = vmatpush.msra.mxu0 %v5065
    %5971 = vmatpush.msra.mxu0 %v5059
    %5972 = vmatpush.msra.mxu0 %v5053
    %5973 = vmatmul.f32.gmra.mxu0 %v5941
    %v5974 = vpop.f32.mrf.mxu0
    %v5975 = vadd.f32 0.0, %v5974
    %5976 = vdwg.mxu0
    %5977 = vmatpush.msra.mxu0 %v5239
    %5978 = vmatpush.msra.mxu0 %v5233
    %5979 = vmatpush.msra.mxu0 %v5227
    %5980 = vmatpush.msra.mxu0 %v5221
    %5981 = vmatpush.msra.mxu0 %v5215
    %5982 = vmatpush.msra.mxu0 %v5209
    %5983 = vmatpush.msra.mxu0 %v5203
    %5984 = vmatpush.msra.mxu0 %v5197
    %5985 = vmatpush.msra.mxu0 %v5191
    %5986 = vmatpush.msra.mxu0 %v5185
    %5987 = vmatpush.msra.mxu0 %v5179
    %5988 = vmatpush.msra.mxu0 %v5173
    %5989 = vmatpush.msra.mxu0 %v5167
    %5990 = vmatpush.msra.mxu0 %v5161
    %5991 = vmatpush.msra.mxu0 %v5155
    %5992 = vmatpush.msra.mxu0 %v5149
    %5993 = vmatmul.f32.gmra.mxu0 %v5942
    %v5994 = vpop.f32.mrf.mxu0
    %v5995 = vadd.f32 %v5975, %v5994
    %5996 = vdwg.mxu0
    %5997 = vmatpush.msra.mxu0 %v5144
    %5998 = vmatpush.msra.mxu0 %v5138
    %5999 = vmatpush.msra.mxu0 %v5132
    %6000 = vmatpush.msra.mxu0 %v5126
    %6001 = vmatpush.msra.mxu0 %v5120
    %6002 = vmatpush.msra.mxu0 %v5114
    %6003 = vmatpush.msra.mxu0 %v5108
    %6004 = vmatpush.msra.mxu0 %v5102
    %6005 = vmatpush.msra.mxu0 %v5096
    %6006 = vmatpush.msra.mxu0 %v5090
    %6007 = vmatpush.msra.mxu0 %v5084
    %6008 = vmatpush.msra.mxu0 %v5078
    %6009 = vmatpush.msra.mxu0 %v5072
    %6010 = vmatpush.msra.mxu0 %v5066
    %6011 = vmatpush.msra.mxu0 %v5060
    %6012 = vmatpush.msra.mxu0 %v5054
    %6013 = vmatmul.f32.gmra.mxu0 %v5941
    %v6014 = vpop.f32.mrf.mxu0
    %v6015 = vadd.f32 0.0, %v6014
    %6016 = vdwg.mxu0
    %6017 = vmatpush.msra.mxu0 %v5240
    %6018 = vmatpush.msra.mxu0 %v5234
    %6019 = vmatpush.msra.mxu0 %v5228
    %6020 = vmatpush.msra.mxu0 %v5222
    %6021 = vmatpush.msra.mxu0 %v5216
    %6022 = vmatpush.msra.mxu0 %v5210
    %6023 = vmatpush.msra.mxu0 %v5204
    %6024 = vmatpush.msra.mxu0 %v5198
    %6025 = vmatpush.msra.mxu0 %v5192
    %6026 = vmatpush.msra.mxu0 %v5186
    %6027 = vmatpush.msra.mxu0 %v5180
    %6028 = vmatpush.msra.mxu0 %v5174
    %6029 = vmatpush.msra.mxu0 %v5168
    %6030 = vmatpush.msra.mxu0 %v5162
    %6031 = vmatpush.msra.mxu0 %v5156
    %6032 = vmatpush.msra.mxu0 %v5150
    %6033 = vmatmul.f32.gmra.mxu0 %v5942
    %v6034 = vpop.f32.mrf.mxu0
    %v6035 = vadd.f32 %v6015, %v6034
    %6036 = vdwg.mxu0
    %6037 = vmatpush.msra.mxu0 %v5145
    %6038 = vmatpush.msra.mxu0 %v5139
    %6039 = vmatpush.msra.mxu0 %v5133
    %6040 = vmatpush.msra.mxu0 %v5127
    %6041 = vmatpush.msra.mxu0 %v5121
    %6042 = vmatpush.msra.mxu0 %v5115
    %6043 = vmatpush.msra.mxu0 %v5109
    %6044 = vmatpush.msra.mxu0 %v5103
    %6045 = vmatpush.msra.mxu0 %v5097
    %6046 = vmatpush.msra.mxu0 %v5091
    %6047 = vmatpush.msra.mxu0 %v5085
    %6048 = vmatpush.msra.mxu0 %v5079
    %6049 = vmatpush.msra.mxu0 %v5073
    %6050 = vmatpush.msra.mxu0 %v5067
    %6051 = vmatpush.msra.mxu0 %v5061
    %6052 = vmatpush.msra.mxu0 %v5055
    %6053 = vmatmul.f32.gmra.mxu0 %v5941
    %v6054 = vpop.f32.mrf.mxu0
    %v6055 = vadd.f32 0.0, %v6054
    %6056 = vdwg.mxu0
    %6057 = vmatpush.msra.mxu0 %v5241
    %6058 = vmatpush.msra.mxu0 %v5235
    %6059 = vmatpush.msra.mxu0 %v5229
    %6060 = vmatpush.msra.mxu0 %v5223
    %6061 = vmatpush.msra.mxu0 %v5217
    %6062 = vmatpush.msra.mxu0 %v5211
    %6063 = vmatpush.msra.mxu0 %v5205
    %6064 = vmatpush.msra.mxu0 %v5199
    %6065 = vmatpush.msra.mxu0 %v5193
    %6066 = vmatpush.msra.mxu0 %v5187
    %6067 = vmatpush.msra.mxu0 %v5181
    %6068 = vmatpush.msra.mxu0 %v5175
    %6069 = vmatpush.msra.mxu0 %v5169
    %6070 = vmatpush.msra.mxu0 %v5163
    %6071 = vmatpush.msra.mxu0 %v5157
    %6072 = vmatpush.msra.mxu0 %v5151
    %6073 = vmatmul.f32.gmra.mxu0 %v5942
    %v6074 = vpop.f32.mrf.mxu0
    %v6075 = vadd.f32 %v6055, %v6074
    %6076 = vdwg.mxu0
    %6077 = vmatpush.msra.mxu0 %v5146
    %6078 = vmatpush.msra.mxu0 %v5140
    %6079 = vmatpush.msra.mxu0 %v5134
    %6080 = vmatpush.msra.mxu0 %v5128
    %6081 = vmatpush.msra.mxu0 %v5122
    %6082 = vmatpush.msra.mxu0 %v5116
    %6083 = vmatpush.msra.mxu0 %v5110
    %6084 = vmatpush.msra.mxu0 %v5104
    %6085 = vmatpush.msra.mxu0 %v5098
    %6086 = vmatpush.msra.mxu0 %v5092
    %6087 = vmatpush.msra.mxu0 %v5086
    %6088 = vmatpush.msra.mxu0 %v5080
    %6089 = vmatpush.msra.mxu0 %v5074
    %6090 = vmatpush.msra.mxu0 %v5068
    %6091 = vmatpush.msra.mxu0 %v5062
    %6092 = vmatpush.msra.mxu0 %v5056
    %6093 = vmatmul.f32.gmra.mxu0 %v5941
    %v6094 = vpop.f32.mrf.mxu0
    %v6095 = vadd.f32 0.0, %v6094
    %6096 = vdwg.mxu0
    %6097 = vmatpush.msra.mxu0 %v5242
    %6098 = vmatpush.msra.mxu0 %v5236
    %6099 = vmatpush.msra.mxu0 %v5230
    %6100 = vmatpush.msra.mxu0 %v5224
    %6101 = vmatpush.msra.mxu0 %v5218
    %6102 = vmatpush.msra.mxu0 %v5212
    %6103 = vmatpush.msra.mxu0 %v5206
    %6104 = vmatpush.msra.mxu0 %v5200
    %6105 = vmatpush.msra.mxu0 %v5194
    %6106 = vmatpush.msra.mxu0 %v5188
    %6107 = vmatpush.msra.mxu0 %v5182
    %6108 = vmatpush.msra.mxu0 %v5176
    %6109 = vmatpush.msra.mxu0 %v5170
    %6110 = vmatpush.msra.mxu0 %v5164
    %6111 = vmatpush.msra.mxu0 %v5158
    %6112 = vmatpush.msra.mxu0 %v5152
    %6113 = vmatmul.f32.gmra.mxu0 %v5942
    %v6114 = vpop.f32.mrf.mxu0
    %v6115 = vadd.f32 %v6095, %v6114
    %6116 = vdwg.mxu0
    %6117 = vmatpush.msra.mxu0 %v5147
    %6118 = vmatpush.msra.mxu0 %v5141
    %6119 = vmatpush.msra.mxu0 %v5135
    %6120 = vmatpush.msra.mxu0 %v5129
    %6121 = vmatpush.msra.mxu0 %v5123
    %6122 = vmatpush.msra.mxu0 %v5117
    %6123 = vmatpush.msra.mxu0 %v5111
    %6124 = vmatpush.msra.mxu0 %v5105
    %6125 = vmatpush.msra.mxu0 %v5099
    %6126 = vmatpush.msra.mxu0 %v5093
    %6127 = vmatpush.msra.mxu0 %v5087
    %6128 = vmatpush.msra.mxu0 %v5081
    %6129 = vmatpush.msra.mxu0 %v5075
    %6130 = vmatpush.msra.mxu0 %v5069
    %6131 = vmatpush.msra.mxu0 %v5063
    %6132 = vmatpush.msra.mxu0 %v5057
    %6133 = vmatmul.f32.gmra.mxu0 %v5941
    %v6134 = vpop.f32.mrf.mxu0
    %v6135 = vadd.f32 0.0, %v6134
    %6136 = vdwg.mxu0
    %6137 = vmatpush.msra.mxu0 %v5243
    %6138 = vmatpush.msra.mxu0 %v5237
    %6139 = vmatpush.msra.mxu0 %v5231
    %6140 = vmatpush.msra.mxu0 %v5225
    %6141 = vmatpush.msra.mxu0 %v5219
    %6142 = vmatpush.msra.mxu0 %v5213
    %6143 = vmatpush.msra.mxu0 %v5207
    %6144 = vmatpush.msra.mxu0 %v5201
    %6145 = vmatpush.msra.mxu0 %v5195
    %6146 = vmatpush.msra.mxu0 %v5189
    %6147 = vmatpush.msra.mxu0 %v5183
    %6148 = vmatpush.msra.mxu0 %v5177
    %6149 = vmatpush.msra.mxu0 %v5171
    %6150 = vmatpush.msra.mxu0 %v5165
    %6151 = vmatpush.msra.mxu0 %v5159
    %6152 = vmatpush.msra.mxu0 %v5153
    %6153 = vmatmul.f32.gmra.mxu0 %v5942
    %v6154 = vpop.f32.mrf.mxu0
    %v6155 = vadd.f32 %v6135, %v6154
    %6156 = vdwg.mxu0
    %6157 = vmatpush.msra.mxu0 %v5148
    %6158 = vmatpush.msra.mxu0 %v5142
    %6159 = vmatpush.msra.mxu0 %v5136
    %6160 = vmatpush.msra.mxu0 %v5130
    %6161 = vmatpush.msra.mxu0 %v5124
    %6162 = vmatpush.msra.mxu0 %v5118
    %6163 = vmatpush.msra.mxu0 %v5112
    %6164 = vmatpush.msra.mxu0 %v5106
    %6165 = vmatpush.msra.mxu0 %v5100
    %6166 = vmatpush.msra.mxu0 %v5094
    %6167 = vmatpush.msra.mxu0 %v5088
    %6168 = vmatpush.msra.mxu0 %v5082
    %6169 = vmatpush.msra.mxu0 %v5076
    %6170 = vmatpush.msra.mxu0 %v5070
    %6171 = vmatpush.msra.mxu0 %v5064
    %6172 = vmatpush.msra.mxu0 %v5058
    %6173 = vmatmul.f32.gmra.mxu0 %v5941
    %v6174 = vpop.f32.mrf.mxu0
    %v6175 = vadd.f32 0.0, %v6174
    %6176 = vdwg.mxu0
    %6177 = vmatpush.msra.mxu0 %v5244
    %6178 = vmatpush.msra.mxu0 %v5238
    %6179 = vmatpush.msra.mxu0 %v5232
    %6180 = vmatpush.msra.mxu0 %v5226
    %6181 = vmatpush.msra.mxu0 %v5220
    %6182 = vmatpush.msra.mxu0 %v5214
    %6183 = vmatpush.msra.mxu0 %v5208
    %6184 = vmatpush.msra.mxu0 %v5202
    %6185 = vmatpush.msra.mxu0 %v5196
    %6186 = vmatpush.msra.mxu0 %v5190
    %6187 = vmatpush.msra.mxu0 %v5184
    %6188 = vmatpush.msra.mxu0 %v5178
    %6189 = vmatpush.msra.mxu0 %v5172
    %6190 = vmatpush.msra.mxu0 %v5166
    %6191 = vmatpush.msra.mxu0 %v5160
    %6192 = vmatpush.msra.mxu0 %v5154
    %6193 = vmatmul.f32.gmra.mxu0 %v5942
    %v6194 = vpop.f32.mrf.mxu0
    %v6195 = vadd.f32 %v6175, %v6194
    %6196 = vdwg.mxu0
    %v6197 = vadd.f32 %v5951, %v5995
    %v6198 = vadd.f32 %v5952, %v6035
    %v6199 = vadd.f32 %v5953, %v6075
    %v6200 = vadd.f32 %v5954, %v6115
    %v6201 = vxor.u32 %v6197, 2147483648
    %v6202 = vxor.u32 %v6198, 2147483648
    %v6203 = vxor.u32 %v6199, 2147483648
    %v6204 = vxor.u32 %v6200, 2147483648
    %v6205 = vmul.f32 %v6201, 1.442695
    %v6206 = vpow.pop %v6205
    %v6207 = vmul.f32 %v6202, 1.442695
    %v6208 = vpow.pop %v6207
    %v6209 = vmul.f32 %v6203, 1.442695
    %v6210 = vpow.pop %v6209
    %v6211 = vmul.f32 %v6204, 1.442695
    %v6212 = vpow.pop %v6211
    %v6213 = vadd.f32 %v6206, 1.0
    %v6214 = vadd.f32 %v6208, 1.0
    %v6215 = vadd.f32 %v6210, 1.0
    %v6216 = vadd.f32 %v6212, 1.0
    %v6217 = vrcp.pop %v6213
    %v6218 = vmul.f32 %v6213, %v6217
    %v6219 = vsub.f32 1.0, %v6218
    %v6220 = vmul.f32 %v6217, %v6219
    %v6221 = vadd.f32 %v6217, %v6220
    %vm6222 = vweird.f32 %v6213
    %vm6223 = vweird.f32 %v6217
    %vm6224 = vmor %vm6222, %vm6223
    %v6225 = vsel %vm6224, %v6217, %v6221
    %v6226 = vand.u32 2147483647, %v6213
    %vm6227 = vcmp.eq.f32.partialorder %v6226, 8.507059e+37
    %v6228 = vand.u32 %v6213, 2147483648
    %v6229 = vor.u32 1.1754944e-38, %v6228
    %v6230 = vsel %vm6227, %v6229, %v6225
    %v6231 = vmul.f32 1.0, %v6230
    %v6232 = vrcp.pop %v6214
    %v6233 = vmul.f32 %v6214, %v6232
    %v6234 = vsub.f32 1.0, %v6233
    %v6235 = vmul.f32 %v6232, %v6234
    %v6236 = vadd.f32 %v6232, %v6235
    %vm6237 = vweird.f32 %v6214
    %vm6238 = vweird.f32 %v6232
    %vm6239 = vmor %vm6237, %vm6238
    %v6240 = vsel %vm6239, %v6232, %v6236
    %v6241 = vand.u32 2147483647, %v6214
    %vm6242 = vcmp.eq.f32.partialorder %v6241, 8.507059e+37
    %v6243 = vand.u32 %v6214, 2147483648
    %v6244 = vor.u32 1.1754944e-38, %v6243
    %v6245 = vsel %vm6242, %v6244, %v6240
    %v6246 = vmul.f32 1.0, %v6245
    %v6247 = vrcp.pop %v6215
    %v6248 = vmul.f32 %v6215, %v6247
    %v6249 = vsub.f32 1.0, %v6248
    %v6250 = vmul.f32 %v6247, %v6249
    %v6251 = vadd.f32 %v6247, %v6250
    %vm6252 = vweird.f32 %v6215
    %vm6253 = vweird.f32 %v6247
    %vm6254 = vmor %vm6252, %vm6253
    %v6255 = vsel %vm6254, %v6247, %v6251
    %v6256 = vand.u32 2147483647, %v6215
    %vm6257 = vcmp.eq.f32.partialorder %v6256, 8.507059e+37
    %v6258 = vand.u32 %v6215, 2147483648
    %v6259 = vor.u32 1.1754944e-38, %v6258
    %v6260 = vsel %vm6257, %v6259, %v6255
    %v6261 = vmul.f32 1.0, %v6260
    %v6262 = vrcp.pop %v6216
    %v6263 = vmul.f32 %v6216, %v6262
    %v6264 = vsub.f32 1.0, %v6263
    %v6265 = vmul.f32 %v6262, %v6264
    %v6266 = vadd.f32 %v6262, %v6265
    %vm6267 = vweird.f32 %v6216
    %vm6268 = vweird.f32 %v6262
    %vm6269 = vmor %vm6267, %vm6268
    %v6270 = vsel %vm6269, %v6262, %v6266
    %v6271 = vand.u32 2147483647, %v6216
    %vm6272 = vcmp.eq.f32.partialorder %v6271, 8.507059e+37
    %v6273 = vand.u32 %v6216, 2147483648
    %v6274 = vor.u32 1.1754944e-38, %v6273
    %v6275 = vsel %vm6272, %v6274, %v6270
    %v6276 = vmul.f32 1.0, %v6275
    %v6277 = vadd.f32 %v6155, %v5573
    %v6278 = vadd.f32 %v6195, %v5574
    %v6279 = vmul.f32 %v6231, %v6277
    %v6280 = vmul.f32 %v6246, %v6278
    %v6281 = vadd.f32 %v5955, %v6279
    %v6282 = vadd.f32 %v5956, %v6280
    %v6283 = vtanh.pop %v6281
    %v6284 = vtanh.pop %v6282
    %v6285 = vsub.f32 1.0, %v6261
    %v6286 = vsub.f32 1.0, %v6276
    %v6287 = vmul.f32 %v6285, %v6283
    %v6288 = vmul.f32 %v6286, %v6284
    %v6289 = vmul.f32 %v6261, %v5941
    %v6290 = vmul.f32 %v6276, %v5942
    %v6291 = vadd.f32 %v6287, %v6289
    %v6292 = vadd.f32 %v6288, %v6290
    %s6293 = smul.u32 2, 2
    %s6294 = smul.addr %s6293, 8
    %s6295 = scalar_lea.vmem [#allocation19], %s6294
    %6296 = vst [vmem:[%s6295] sm:$0xff] %v6291
    %s6297 = smul.u32 5, 2
    %s6298 = smul.addr %s6297, 8
    %s6299 = scalar_lea.vmem [#allocation19], %s6298
    %6300 = vst [vmem:[%s6299 + $0x8] sm:$0xff] %v6292
    %v6301 = vld [vmem:[%s1842] sm:$0xff]
    %v6302 = vld [vmem:[%s1842 + $0x8] sm:$0xff]
    %v6303 = vld [vmem:[%s1842 + $0x10] sm:$0xff]
    %v6304 = vld [vmem:[%s1842 + $0x18] sm:$0xff]
    %v6305 = vld [vmem:[%s1842 + $0x20] sm:$0xff]
    %v6306 = vld [vmem:[%s1842 + $0x28] sm:$0xff]
    %6307 = vmatpush.msra.mxu0 %v5143
    %6308 = vmatpush.msra.mxu0 %v5137
    %6309 = vmatpush.msra.mxu0 %v5131
    %6310 = vmatpush.msra.mxu0 %v5125
    %6311 = vmatpush.msra.mxu0 %v5119
    %6312 = vmatpush.msra.mxu0 %v5113
    %6313 = vmatpush.msra.mxu0 %v5107
    %6314 = vmatpush.msra.mxu0 %v5101
    %6315 = vmatpush.msra.mxu0 %v5095
    %6316 = vmatpush.msra.mxu0 %v5089
    %6317 = vmatpush.msra.mxu0 %v5083
    %6318 = vmatpush.msra.mxu0 %v5077
    %6319 = vmatpush.msra.mxu0 %v5071
    %6320 = vmatpush.msra.mxu0 %v5065
    %6321 = vmatpush.msra.mxu0 %v5059
    %6322 = vmatpush.msra.mxu0 %v5053
    %6323 = vmatmul.f32.gmra.mxu0 %v6291
    %v6324 = vpop.f32.mrf.mxu0
    %v6325 = vadd.f32 0.0, %v6324
    %6326 = vdwg.mxu0
    %6327 = vmatpush.msra.mxu0 %v5239
    %6328 = vmatpush.msra.mxu0 %v5233
    %6329 = vmatpush.msra.mxu0 %v5227
    %6330 = vmatpush.msra.mxu0 %v5221
    %6331 = vmatpush.msra.mxu0 %v5215
    %6332 = vmatpush.msra.mxu0 %v5209
    %6333 = vmatpush.msra.mxu0 %v5203
    %6334 = vmatpush.msra.mxu0 %v5197
    %6335 = vmatpush.msra.mxu0 %v5191
    %6336 = vmatpush.msra.mxu0 %v5185
    %6337 = vmatpush.msra.mxu0 %v5179
    %6338 = vmatpush.msra.mxu0 %v5173
    %6339 = vmatpush.msra.mxu0 %v5167
    %6340 = vmatpush.msra.mxu0 %v5161
    %6341 = vmatpush.msra.mxu0 %v5155
    %6342 = vmatpush.msra.mxu0 %v5149
    %6343 = vmatmul.f32.gmra.mxu0 %v6292
    %v6344 = vpop.f32.mrf.mxu0
    %v6345 = vadd.f32 %v6325, %v6344
    %6346 = vdwg.mxu0
    %6347 = vmatpush.msra.mxu0 %v5144
    %6348 = vmatpush.msra.mxu0 %v5138
    %6349 = vmatpush.msra.mxu0 %v5132
    %6350 = vmatpush.msra.mxu0 %v5126
    %6351 = vmatpush.msra.mxu0 %v5120
    %6352 = vmatpush.msra.mxu0 %v5114
    %6353 = vmatpush.msra.mxu0 %v5108
    %6354 = vmatpush.msra.mxu0 %v5102
    %6355 = vmatpush.msra.mxu0 %v5096
    %6356 = vmatpush.msra.mxu0 %v5090
    %6357 = vmatpush.msra.mxu0 %v5084
    %6358 = vmatpush.msra.mxu0 %v5078
    %6359 = vmatpush.msra.mxu0 %v5072
    %6360 = vmatpush.msra.mxu0 %v5066
    %6361 = vmatpush.msra.mxu0 %v5060
    %6362 = vmatpush.msra.mxu0 %v5054
    %6363 = vmatmul.f32.gmra.mxu0 %v6291
    %v6364 = vpop.f32.mrf.mxu0
    %v6365 = vadd.f32 0.0, %v6364
    %6366 = vdwg.mxu0
    %6367 = vmatpush.msra.mxu0 %v5240
    %6368 = vmatpush.msra.mxu0 %v5234
    %6369 = vmatpush.msra.mxu0 %v5228
    %6370 = vmatpush.msra.mxu0 %v5222
    %6371 = vmatpush.msra.mxu0 %v5216
    %6372 = vmatpush.msra.mxu0 %v5210
    %6373 = vmatpush.msra.mxu0 %v5204
    %6374 = vmatpush.msra.mxu0 %v5198
    %6375 = vmatpush.msra.mxu0 %v5192
    %6376 = vmatpush.msra.mxu0 %v5186
    %6377 = vmatpush.msra.mxu0 %v5180
    %6378 = vmatpush.msra.mxu0 %v5174
    %6379 = vmatpush.msra.mxu0 %v5168
    %6380 = vmatpush.msra.mxu0 %v5162
    %6381 = vmatpush.msra.mxu0 %v5156
    %6382 = vmatpush.msra.mxu0 %v5150
    %6383 = vmatmul.f32.gmra.mxu0 %v6292
    %v6384 = vpop.f32.mrf.mxu0
    %v6385 = vadd.f32 %v6365, %v6384
    %6386 = vdwg.mxu0
    %6387 = vmatpush.msra.mxu0 %v5145
    %6388 = vmatpush.msra.mxu0 %v5139
    %6389 = vmatpush.msra.mxu0 %v5133
    %6390 = vmatpush.msra.mxu0 %v5127
    %6391 = vmatpush.msra.mxu0 %v5121
    %6392 = vmatpush.msra.mxu0 %v5115
    %6393 = vmatpush.msra.mxu0 %v5109
    %6394 = vmatpush.msra.mxu0 %v5103
    %6395 = vmatpush.msra.mxu0 %v5097
    %6396 = vmatpush.msra.mxu0 %v5091
    %6397 = vmatpush.msra.mxu0 %v5085
    %6398 = vmatpush.msra.mxu0 %v5079
    %6399 = vmatpush.msra.mxu0 %v5073
    %6400 = vmatpush.msra.mxu0 %v5067
    %6401 = vmatpush.msra.mxu0 %v5061
    %6402 = vmatpush.msra.mxu0 %v5055
    %6403 = vmatmul.f32.gmra.mxu0 %v6291
    %v6404 = vpop.f32.mrf.mxu0
    %v6405 = vadd.f32 0.0, %v6404
    %6406 = vdwg.mxu0
    %6407 = vmatpush.msra.mxu0 %v5241
    %6408 = vmatpush.msra.mxu0 %v5235
    %6409 = vmatpush.msra.mxu0 %v5229
    %6410 = vmatpush.msra.mxu0 %v5223
    %6411 = vmatpush.msra.mxu0 %v5217
    %6412 = vmatpush.msra.mxu0 %v5211
    %6413 = vmatpush.msra.mxu0 %v5205
    %6414 = vmatpush.msra.mxu0 %v5199
    %6415 = vmatpush.msra.mxu0 %v5193
    %6416 = vmatpush.msra.mxu0 %v5187
    %6417 = vmatpush.msra.mxu0 %v5181
    %6418 = vmatpush.msra.mxu0 %v5175
    %6419 = vmatpush.msra.mxu0 %v5169
    %6420 = vmatpush.msra.mxu0 %v5163
    %6421 = vmatpush.msra.mxu0 %v5157
    %6422 = vmatpush.msra.mxu0 %v5151
    %6423 = vmatmul.f32.gmra.mxu0 %v6292
    %v6424 = vpop.f32.mrf.mxu0
    %v6425 = vadd.f32 %v6405, %v6424
    %6426 = vdwg.mxu0
    %6427 = vmatpush.msra.mxu0 %v5146
    %6428 = vmatpush.msra.mxu0 %v5140
    %6429 = vmatpush.msra.mxu0 %v5134
    %6430 = vmatpush.msra.mxu0 %v5128
    %6431 = vmatpush.msra.mxu0 %v5122
    %6432 = vmatpush.msra.mxu0 %v5116
    %6433 = vmatpush.msra.mxu0 %v5110
    %6434 = vmatpush.msra.mxu0 %v5104
    %6435 = vmatpush.msra.mxu0 %v5098
    %6436 = vmatpush.msra.mxu0 %v5092
    %6437 = vmatpush.msra.mxu0 %v5086
    %6438 = vmatpush.msra.mxu0 %v5080
    %6439 = vmatpush.msra.mxu0 %v5074
    %6440 = vmatpush.msra.mxu0 %v5068
    %6441 = vmatpush.msra.mxu0 %v5062
    %6442 = vmatpush.msra.mxu0 %v5056
    %6443 = vmatmul.f32.gmra.mxu0 %v6291
    %v6444 = vpop.f32.mrf.mxu0
    %v6445 = vadd.f32 0.0, %v6444
    %6446 = vdwg.mxu0
    %6447 = vmatpush.msra.mxu0 %v5242
    %6448 = vmatpush.msra.mxu0 %v5236
    %6449 = vmatpush.msra.mxu0 %v5230
    %6450 = vmatpush.msra.mxu0 %v5224
    %6451 = vmatpush.msra.mxu0 %v5218
    %6452 = vmatpush.msra.mxu0 %v5212
    %6453 = vmatpush.msra.mxu0 %v5206
    %6454 = vmatpush.msra.mxu0 %v5200
    %6455 = vmatpush.msra.mxu0 %v5194
    %6456 = vmatpush.msra.mxu0 %v5188
    %6457 = vmatpush.msra.mxu0 %v5182
    %6458 = vmatpush.msra.mxu0 %v5176
    %6459 = vmatpush.msra.mxu0 %v5170
    %6460 = vmatpush.msra.mxu0 %v5164
    %6461 = vmatpush.msra.mxu0 %v5158
    %6462 = vmatpush.msra.mxu0 %v5152
    %6463 = vmatmul.f32.gmra.mxu0 %v6292
    %v6464 = vpop.f32.mrf.mxu0
    %v6465 = vadd.f32 %v6445, %v6464
    %6466 = vdwg.mxu0
    %6467 = vmatpush.msra.mxu0 %v5147
    %6468 = vmatpush.msra.mxu0 %v5141
    %6469 = vmatpush.msra.mxu0 %v5135
    %6470 = vmatpush.msra.mxu0 %v5129
    %6471 = vmatpush.msra.mxu0 %v5123
    %6472 = vmatpush.msra.mxu0 %v5117
    %6473 = vmatpush.msra.mxu0 %v5111
    %6474 = vmatpush.msra.mxu0 %v5105
    %6475 = vmatpush.msra.mxu0 %v5099
    %6476 = vmatpush.msra.mxu0 %v5093
    %6477 = vmatpush.msra.mxu0 %v5087
    %6478 = vmatpush.msra.mxu0 %v5081
    %6479 = vmatpush.msra.mxu0 %v5075
    %6480 = vmatpush.msra.mxu0 %v5069
    %6481 = vmatpush.msra.mxu0 %v5063
    %6482 = vmatpush.msra.mxu0 %v5057
    %6483 = vmatmul.f32.gmra.mxu0 %v6291
    %v6484 = vpop.f32.mrf.mxu0
    %v6485 = vadd.f32 0.0, %v6484
    %6486 = vdwg.mxu0
    %6487 = vmatpush.msra.mxu0 %v5243
    %6488 = vmatpush.msra.mxu0 %v5237
    %6489 = vmatpush.msra.mxu0 %v5231
    %6490 = vmatpush.msra.mxu0 %v5225
    %6491 = vmatpush.msra.mxu0 %v5219
    %6492 = vmatpush.msra.mxu0 %v5213
    %6493 = vmatpush.msra.mxu0 %v5207
    %6494 = vmatpush.msra.mxu0 %v5201
    %6495 = vmatpush.msra.mxu0 %v5195
    %6496 = vmatpush.msra.mxu0 %v5189
    %6497 = vmatpush.msra.mxu0 %v5183
    %6498 = vmatpush.msra.mxu0 %v5177
    %6499 = vmatpush.msra.mxu0 %v5171
    %6500 = vmatpush.msra.mxu0 %v5165
    %6501 = vmatpush.msra.mxu0 %v5159
    %6502 = vmatpush.msra.mxu0 %v5153
    %6503 = vmatmul.f32.gmra.mxu0 %v6292
    %v6504 = vpop.f32.mrf.mxu0
    %v6505 = vadd.f32 %v6485, %v6504
    %6506 = vdwg.mxu0
    %6507 = vmatpush.msra.mxu0 %v5148
    %6508 = vmatpush.msra.mxu0 %v5142
    %6509 = vmatpush.msra.mxu0 %v5136
    %6510 = vmatpush.msra.mxu0 %v5130
    %6511 = vmatpush.msra.mxu0 %v5124
    %6512 = vmatpush.msra.mxu0 %v5118
    %6513 = vmatpush.msra.mxu0 %v5112
    %6514 = vmatpush.msra.mxu0 %v5106
    %6515 = vmatpush.msra.mxu0 %v5100
    %6516 = vmatpush.msra.mxu0 %v5094
    %6517 = vmatpush.msra.mxu0 %v5088
    %6518 = vmatpush.msra.mxu0 %v5082
    %6519 = vmatpush.msra.mxu0 %v5076
    %6520 = vmatpush.msra.mxu0 %v5070
    %6521 = vmatpush.msra.mxu0 %v5064
    %6522 = vmatpush.msra.mxu0 %v5058
    %6523 = vmatmul.f32.gmra.mxu0 %v6291
    %v6524 = vpop.f32.mrf.mxu0
    %v6525 = vadd.f32 0.0, %v6524
    %6526 = vdwg.mxu0
    %6527 = vmatpush.msra.mxu0 %v5244
    %6528 = vmatpush.msra.mxu0 %v5238
    %6529 = vmatpush.msra.mxu0 %v5232
    %6530 = vmatpush.msra.mxu0 %v5226
    %6531 = vmatpush.msra.mxu0 %v5220
    %6532 = vmatpush.msra.mxu0 %v5214
    %6533 = vmatpush.msra.mxu0 %v5208
    %6534 = vmatpush.msra.mxu0 %v5202
    %6535 = vmatpush.msra.mxu0 %v5196
    %6536 = vmatpush.msra.mxu0 %v5190
    %6537 = vmatpush.msra.mxu0 %v5184
    %6538 = vmatpush.msra.mxu0 %v5178
    %6539 = vmatpush.msra.mxu0 %v5172
    %6540 = vmatpush.msra.mxu0 %v5166
    %6541 = vmatpush.msra.mxu0 %v5160
    %6542 = vmatpush.msra.mxu0 %v5154
    %6543 = vmatmul.f32.gmra.mxu0 %v6292
    %v6544 = vpop.f32.mrf.mxu0
    %v6545 = vadd.f32 %v6525, %v6544
    %6546 = vdwg.mxu0
    %v6547 = vadd.f32 %v6301, %v6345
    %v6548 = vadd.f32 %v6302, %v6385
    %v6549 = vadd.f32 %v6303, %v6425
    %v6550 = vadd.f32 %v6304, %v6465
    %v6551 = vxor.u32 %v6547, 2147483648
    %v6552 = vxor.u32 %v6548, 2147483648
    %v6553 = vxor.u32 %v6549, 2147483648
    %v6554 = vxor.u32 %v6550, 2147483648
    %v6555 = vmul.f32 %v6551, 1.442695
    %v6556 = vpow.pop %v6555
    %v6557 = vmul.f32 %v6552, 1.442695
    %v6558 = vpow.pop %v6557
    %v6559 = vmul.f32 %v6553, 1.442695
    %v6560 = vpow.pop %v6559
    %v6561 = vmul.f32 %v6554, 1.442695
    %v6562 = vpow.pop %v6561
    %v6563 = vadd.f32 %v6556, 1.0
    %v6564 = vadd.f32 %v6558, 1.0
    %v6565 = vadd.f32 %v6560, 1.0
    %v6566 = vadd.f32 %v6562, 1.0
    %v6567 = vrcp.pop %v6563
    %v6568 = vmul.f32 %v6563, %v6567
    %v6569 = vsub.f32 1.0, %v6568
    %v6570 = vmul.f32 %v6567, %v6569
    %v6571 = vadd.f32 %v6567, %v6570
    %vm6572 = vweird.f32 %v6563
    %vm6573 = vweird.f32 %v6567
    %vm6574 = vmor %vm6572, %vm6573
    %v6575 = vsel %vm6574, %v6567, %v6571
    %v6576 = vand.u32 2147483647, %v6563
    %vm6577 = vcmp.eq.f32.partialorder %v6576, 8.507059e+37
    %v6578 = vand.u32 %v6563, 2147483648
    %v6579 = vor.u32 1.1754944e-38, %v6578
    %v6580 = vsel %vm6577, %v6579, %v6575
    %v6581 = vmul.f32 1.0, %v6580
    %v6582 = vrcp.pop %v6564
    %v6583 = vmul.f32 %v6564, %v6582
    %v6584 = vsub.f32 1.0, %v6583
    %v6585 = vmul.f32 %v6582, %v6584
    %v6586 = vadd.f32 %v6582, %v6585
    %vm6587 = vweird.f32 %v6564
    %vm6588 = vweird.f32 %v6582
    %vm6589 = vmor %vm6587, %vm6588
    %v6590 = vsel %vm6589, %v6582, %v6586
    %v6591 = vand.u32 2147483647, %v6564
    %vm6592 = vcmp.eq.f32.partialorder %v6591, 8.507059e+37
    %v6593 = vand.u32 %v6564, 2147483648
    %v6594 = vor.u32 1.1754944e-38, %v6593
    %v6595 = vsel %vm6592, %v6594, %v6590
    %v6596 = vmul.f32 1.0, %v6595
    %v6597 = vrcp.pop %v6565
    %v6598 = vmul.f32 %v6565, %v6597
    %v6599 = vsub.f32 1.0, %v6598
    %v6600 = vmul.f32 %v6597, %v6599
    %v6601 = vadd.f32 %v6597, %v6600
    %vm6602 = vweird.f32 %v6565
    %vm6603 = vweird.f32 %v6597
    %vm6604 = vmor %vm6602, %vm6603
    %v6605 = vsel %vm6604, %v6597, %v6601
    %v6606 = vand.u32 2147483647, %v6565
    %vm6607 = vcmp.eq.f32.partialorder %v6606, 8.507059e+37
    %v6608 = vand.u32 %v6565, 2147483648
    %v6609 = vor.u32 1.1754944e-38, %v6608
    %v6610 = vsel %vm6607, %v6609, %v6605
    %v6611 = vmul.f32 1.0, %v6610
    %v6612 = vrcp.pop %v6566
    %v6613 = vmul.f32 %v6566, %v6612
    %v6614 = vsub.f32 1.0, %v6613
    %v6615 = vmul.f32 %v6612, %v6614
    %v6616 = vadd.f32 %v6612, %v6615
    %vm6617 = vweird.f32 %v6566
    %vm6618 = vweird.f32 %v6612
    %vm6619 = vmor %vm6617, %vm6618
    %v6620 = vsel %vm6619, %v6612, %v6616
    %v6621 = vand.u32 2147483647, %v6566
    %vm6622 = vcmp.eq.f32.partialorder %v6621, 8.507059e+37
    %v6623 = vand.u32 %v6566, 2147483648
    %v6624 = vor.u32 1.1754944e-38, %v6623
    %v6625 = vsel %vm6622, %v6624, %v6620
    %v6626 = vmul.f32 1.0, %v6625
    %v6627 = vadd.f32 %v6505, %v5573
    %v6628 = vadd.f32 %v6545, %v5574
    %v6629 = vmul.f32 %v6581, %v6627
    %v6630 = vmul.f32 %v6596, %v6628
    %v6631 = vadd.f32 %v6305, %v6629
    %v6632 = vadd.f32 %v6306, %v6630
    %v6633 = vtanh.pop %v6631
    %v6634 = vtanh.pop %v6632
    %v6635 = vsub.f32 1.0, %v6611
    %v6636 = vsub.f32 1.0, %v6626
    %v6637 = vmul.f32 %v6635, %v6633
    %v6638 = vmul.f32 %v6636, %v6634
    %v6639 = vmul.f32 %v6611, %v6291
    %v6640 = vmul.f32 %v6626, %v6292
    %v6641 = vadd.f32 %v6637, %v6639
    %v6642 = vadd.f32 %v6638, %v6640
    %s6643 = smul.u32 3, 2
    %s6644 = smul.addr %s6643, 8
    %s6645 = scalar_lea.vmem [#allocation19], %s6644
    %6646 = vst [vmem:[%s6645] sm:$0xff] %v6641
    %s6647 = smul.u32 4, 2
    %s6648 = smul.addr %s6647, 8
    %s6649 = scalar_lea.vmem [#allocation19], %s6648
    %6650 = vst [vmem:[%s6649 + $0x8] sm:$0xff] %v6642
    %v6651 = vld [vmem:[%s2197] sm:$0xff]
    %v6652 = vld [vmem:[%s2197 + $0x8] sm:$0xff]
    %v6653 = vld [vmem:[%s2197 + $0x10] sm:$0xff]
    %v6654 = vld [vmem:[%s2197 + $0x18] sm:$0xff]
    %v6655 = vld [vmem:[%s2197 + $0x20] sm:$0xff]
    %v6656 = vld [vmem:[%s2197 + $0x28] sm:$0xff]
    %6657 = vmatpush.msra.mxu0 %v5143
    %6658 = vmatpush.msra.mxu0 %v5137
    %6659 = vmatpush.msra.mxu0 %v5131
    %6660 = vmatpush.msra.mxu0 %v5125
    %6661 = vmatpush.msra.mxu0 %v5119
    %6662 = vmatpush.msra.mxu0 %v5113
    %6663 = vmatpush.msra.mxu0 %v5107
    %6664 = vmatpush.msra.mxu0 %v5101
    %6665 = vmatpush.msra.mxu0 %v5095
    %6666 = vmatpush.msra.mxu0 %v5089
    %6667 = vmatpush.msra.mxu0 %v5083
    %6668 = vmatpush.msra.mxu0 %v5077
    %6669 = vmatpush.msra.mxu0 %v5071
    %6670 = vmatpush.msra.mxu0 %v5065
    %6671 = vmatpush.msra.mxu0 %v5059
    %6672 = vmatpush.msra.mxu0 %v5053
    %6673 = vmatmul.f32.gmra.mxu0 %v6641
    %v6674 = vpop.f32.mrf.mxu0
    %v6675 = vadd.f32 0.0, %v6674
    %6676 = vdwg.mxu0
    %6677 = vmatpush.msra.mxu0 %v5239
    %6678 = vmatpush.msra.mxu0 %v5233
    %6679 = vmatpush.msra.mxu0 %v5227
    %6680 = vmatpush.msra.mxu0 %v5221
    %6681 = vmatpush.msra.mxu0 %v5215
    %6682 = vmatpush.msra.mxu0 %v5209
    %6683 = vmatpush.msra.mxu0 %v5203
    %6684 = vmatpush.msra.mxu0 %v5197
    %6685 = vmatpush.msra.mxu0 %v5191
    %6686 = vmatpush.msra.mxu0 %v5185
    %6687 = vmatpush.msra.mxu0 %v5179
    %6688 = vmatpush.msra.mxu0 %v5173
    %6689 = vmatpush.msra.mxu0 %v5167
    %6690 = vmatpush.msra.mxu0 %v5161
    %6691 = vmatpush.msra.mxu0 %v5155
    %6692 = vmatpush.msra.mxu0 %v5149
    %6693 = vmatmul.f32.gmra.mxu0 %v6642
    %v6694 = vpop.f32.mrf.mxu0
    %v6695 = vadd.f32 %v6675, %v6694
    %6696 = vdwg.mxu0
    %6697 = vmatpush.msra.mxu0 %v5144
    %6698 = vmatpush.msra.mxu0 %v5138
    %6699 = vmatpush.msra.mxu0 %v5132
    %6700 = vmatpush.msra.mxu0 %v5126
    %6701 = vmatpush.msra.mxu0 %v5120
    %6702 = vmatpush.msra.mxu0 %v5114
    %6703 = vmatpush.msra.mxu0 %v5108
    %6704 = vmatpush.msra.mxu0 %v5102
    %6705 = vmatpush.msra.mxu0 %v5096
    %6706 = vmatpush.msra.mxu0 %v5090
    %6707 = vmatpush.msra.mxu0 %v5084
    %6708 = vmatpush.msra.mxu0 %v5078
    %6709 = vmatpush.msra.mxu0 %v5072
    %6710 = vmatpush.msra.mxu0 %v5066
    %6711 = vmatpush.msra.mxu0 %v5060
    %6712 = vmatpush.msra.mxu0 %v5054
    %6713 = vmatmul.f32.gmra.mxu0 %v6641
    %v6714 = vpop.f32.mrf.mxu0
    %v6715 = vadd.f32 0.0, %v6714
    %6716 = vdwg.mxu0
    %6717 = vmatpush.msra.mxu0 %v5240
    %6718 = vmatpush.msra.mxu0 %v5234
    %6719 = vmatpush.msra.mxu0 %v5228
    %6720 = vmatpush.msra.mxu0 %v5222
    %6721 = vmatpush.msra.mxu0 %v5216
    %6722 = vmatpush.msra.mxu0 %v5210
    %6723 = vmatpush.msra.mxu0 %v5204
    %6724 = vmatpush.msra.mxu0 %v5198
    %6725 = vmatpush.msra.mxu0 %v5192
    %6726 = vmatpush.msra.mxu0 %v5186
    %6727 = vmatpush.msra.mxu0 %v5180
    %6728 = vmatpush.msra.mxu0 %v5174
    %6729 = vmatpush.msra.mxu0 %v5168
    %6730 = vmatpush.msra.mxu0 %v5162
    %6731 = vmatpush.msra.mxu0 %v5156
    %6732 = vmatpush.msra.mxu0 %v5150
    %6733 = vmatmul.f32.gmra.mxu0 %v6642
    %v6734 = vpop.f32.mrf.mxu0
    %v6735 = vadd.f32 %v6715, %v6734
    %6736 = vdwg.mxu0
    %6737 = vmatpush.msra.mxu0 %v5145
    %6738 = vmatpush.msra.mxu0 %v5139
    %6739 = vmatpush.msra.mxu0 %v5133
    %6740 = vmatpush.msra.mxu0 %v5127
    %6741 = vmatpush.msra.mxu0 %v5121
    %6742 = vmatpush.msra.mxu0 %v5115
    %6743 = vmatpush.msra.mxu0 %v5109
    %6744 = vmatpush.msra.mxu0 %v5103
    %6745 = vmatpush.msra.mxu0 %v5097
    %6746 = vmatpush.msra.mxu0 %v5091
    %6747 = vmatpush.msra.mxu0 %v5085
    %6748 = vmatpush.msra.mxu0 %v5079
    %6749 = vmatpush.msra.mxu0 %v5073
    %6750 = vmatpush.msra.mxu0 %v5067
    %6751 = vmatpush.msra.mxu0 %v5061
    %6752 = vmatpush.msra.mxu0 %v5055
    %6753 = vmatmul.f32.gmra.mxu0 %v6641
    %v6754 = vpop.f32.mrf.mxu0
    %v6755 = vadd.f32 0.0, %v6754
    %6756 = vdwg.mxu0
    %6757 = vmatpush.msra.mxu0 %v5241
    %6758 = vmatpush.msra.mxu0 %v5235
    %6759 = vmatpush.msra.mxu0 %v5229
    %6760 = vmatpush.msra.mxu0 %v5223
    %6761 = vmatpush.msra.mxu0 %v5217
    %6762 = vmatpush.msra.mxu0 %v5211
    %6763 = vmatpush.msra.mxu0 %v5205
    %6764 = vmatpush.msra.mxu0 %v5199
    %6765 = vmatpush.msra.mxu0 %v5193
    %6766 = vmatpush.msra.mxu0 %v5187
    %6767 = vmatpush.msra.mxu0 %v5181
    %6768 = vmatpush.msra.mxu0 %v5175
    %6769 = vmatpush.msra.mxu0 %v5169
    %6770 = vmatpush.msra.mxu0 %v5163
    %6771 = vmatpush.msra.mxu0 %v5157
    %6772 = vmatpush.msra.mxu0 %v5151
    %6773 = vmatmul.f32.gmra.mxu0 %v6642
    %v6774 = vpop.f32.mrf.mxu0
    %v6775 = vadd.f32 %v6755, %v6774
    %6776 = vdwg.mxu0
    %6777 = vmatpush.msra.mxu0 %v5146
    %6778 = vmatpush.msra.mxu0 %v5140
    %6779 = vmatpush.msra.mxu0 %v5134
    %6780 = vmatpush.msra.mxu0 %v5128
    %6781 = vmatpush.msra.mxu0 %v5122
    %6782 = vmatpush.msra.mxu0 %v5116
    %6783 = vmatpush.msra.mxu0 %v5110
    %6784 = vmatpush.msra.mxu0 %v5104
    %6785 = vmatpush.msra.mxu0 %v5098
    %6786 = vmatpush.msra.mxu0 %v5092
    %6787 = vmatpush.msra.mxu0 %v5086
    %6788 = vmatpush.msra.mxu0 %v5080
    %6789 = vmatpush.msra.mxu0 %v5074
    %6790 = vmatpush.msra.mxu0 %v5068
    %6791 = vmatpush.msra.mxu0 %v5062
    %6792 = vmatpush.msra.mxu0 %v5056
    %6793 = vmatmul.f32.gmra.mxu0 %v6641
    %v6794 = vpop.f32.mrf.mxu0
    %v6795 = vadd.f32 0.0, %v6794
    %6796 = vdwg.mxu0
    %6797 = vmatpush.msra.mxu0 %v5242
    %6798 = vmatpush.msra.mxu0 %v5236
    %6799 = vmatpush.msra.mxu0 %v5230
    %6800 = vmatpush.msra.mxu0 %v5224
    %6801 = vmatpush.msra.mxu0 %v5218
    %6802 = vmatpush.msra.mxu0 %v5212
    %6803 = vmatpush.msra.mxu0 %v5206
    %6804 = vmatpush.msra.mxu0 %v5200
    %6805 = vmatpush.msra.mxu0 %v5194
    %6806 = vmatpush.msra.mxu0 %v5188
    %6807 = vmatpush.msra.mxu0 %v5182
    %6808 = vmatpush.msra.mxu0 %v5176
    %6809 = vmatpush.msra.mxu0 %v5170
    %6810 = vmatpush.msra.mxu0 %v5164
    %6811 = vmatpush.msra.mxu0 %v5158
    %6812 = vmatpush.msra.mxu0 %v5152
    %6813 = vmatmul.f32.gmra.mxu0 %v6642
    %v6814 = vpop.f32.mrf.mxu0
    %v6815 = vadd.f32 %v6795, %v6814
    %6816 = vdwg.mxu0
    %6817 = vmatpush.msra.mxu0 %v5147
    %6818 = vmatpush.msra.mxu0 %v5141
    %6819 = vmatpush.msra.mxu0 %v5135
    %6820 = vmatpush.msra.mxu0 %v5129
    %6821 = vmatpush.msra.mxu0 %v5123
    %6822 = vmatpush.msra.mxu0 %v5117
    %6823 = vmatpush.msra.mxu0 %v5111
    %6824 = vmatpush.msra.mxu0 %v5105
    %6825 = vmatpush.msra.mxu0 %v5099
    %6826 = vmatpush.msra.mxu0 %v5093
    %6827 = vmatpush.msra.mxu0 %v5087
    %6828 = vmatpush.msra.mxu0 %v5081
    %6829 = vmatpush.msra.mxu0 %v5075
    %6830 = vmatpush.msra.mxu0 %v5069
    %6831 = vmatpush.msra.mxu0 %v5063
    %6832 = vmatpush.msra.mxu0 %v5057
    %6833 = vmatmul.f32.gmra.mxu0 %v6641
    %v6834 = vpop.f32.mrf.mxu0
    %v6835 = vadd.f32 0.0, %v6834
    %6836 = vdwg.mxu0
    %6837 = vmatpush.msra.mxu0 %v5243
    %6838 = vmatpush.msra.mxu0 %v5237
    %6839 = vmatpush.msra.mxu0 %v5231
    %6840 = vmatpush.msra.mxu0 %v5225
    %6841 = vmatpush.msra.mxu0 %v5219
    %6842 = vmatpush.msra.mxu0 %v5213
    %6843 = vmatpush.msra.mxu0 %v5207
    %6844 = vmatpush.msra.mxu0 %v5201
    %6845 = vmatpush.msra.mxu0 %v5195
    %6846 = vmatpush.msra.mxu0 %v5189
    %6847 = vmatpush.msra.mxu0 %v5183
    %6848 = vmatpush.msra.mxu0 %v5177
    %6849 = vmatpush.msra.mxu0 %v5171
    %6850 = vmatpush.msra.mxu0 %v5165
    %6851 = vmatpush.msra.mxu0 %v5159
    %6852 = vmatpush.msra.mxu0 %v5153
    %6853 = vmatmul.f32.gmra.mxu0 %v6642
    %v6854 = vpop.f32.mrf.mxu0
    %v6855 = vadd.f32 %v6835, %v6854
    %6856 = vdwg.mxu0
    %6857 = vmatpush.msra.mxu0 %v5148
    %6858 = vmatpush.msra.mxu0 %v5142
    %6859 = vmatpush.msra.mxu0 %v5136
    %6860 = vmatpush.msra.mxu0 %v5130
    %6861 = vmatpush.msra.mxu0 %v5124
    %6862 = vmatpush.msra.mxu0 %v5118
    %6863 = vmatpush.msra.mxu0 %v5112
    %6864 = vmatpush.msra.mxu0 %v5106
    %6865 = vmatpush.msra.mxu0 %v5100
    %6866 = vmatpush.msra.mxu0 %v5094
    %6867 = vmatpush.msra.mxu0 %v5088
    %6868 = vmatpush.msra.mxu0 %v5082
    %6869 = vmatpush.msra.mxu0 %v5076
    %6870 = vmatpush.msra.mxu0 %v5070
    %6871 = vmatpush.msra.mxu0 %v5064
    %6872 = vmatpush.msra.mxu0 %v5058
    %6873 = vmatmul.f32.gmra.mxu0 %v6641
    %v6874 = vpop.f32.mrf.mxu0
    %v6875 = vadd.f32 0.0, %v6874
    %6876 = vdwg.mxu0
    %6877 = vmatpush.msra.mxu0 %v5244
    %6878 = vmatpush.msra.mxu0 %v5238
    %6879 = vmatpush.msra.mxu0 %v5232
    %6880 = vmatpush.msra.mxu0 %v5226
    %6881 = vmatpush.msra.mxu0 %v5220
    %6882 = vmatpush.msra.mxu0 %v5214
    %6883 = vmatpush.msra.mxu0 %v5208
    %6884 = vmatpush.msra.mxu0 %v5202
    %6885 = vmatpush.msra.mxu0 %v5196
    %6886 = vmatpush.msra.mxu0 %v5190
    %6887 = vmatpush.msra.mxu0 %v5184
    %6888 = vmatpush.msra.mxu0 %v5178
    %6889 = vmatpush.msra.mxu0 %v5172
    %6890 = vmatpush.msra.mxu0 %v5166
    %6891 = vmatpush.msra.mxu0 %v5160
    %6892 = vmatpush.msra.mxu0 %v5154
    %6893 = vmatmul.f32.gmra.mxu0 %v6642
    %v6894 = vpop.f32.mrf.mxu0
    %v6895 = vadd.f32 %v6875, %v6894
    %6896 = vdwg.mxu0
    %v6897 = vadd.f32 %v6651, %v6695
    %v6898 = vadd.f32 %v6652, %v6735
    %v6899 = vadd.f32 %v6653, %v6775
    %v6900 = vadd.f32 %v6654, %v6815
    %v6901 = vxor.u32 %v6897, 2147483648
    %v6902 = vxor.u32 %v6898, 2147483648
    %v6903 = vxor.u32 %v6899, 2147483648
    %v6904 = vxor.u32 %v6900, 2147483648
    %v6905 = vmul.f32 %v6901, 1.442695
    %v6906 = vpow.pop %v6905
    %v6907 = vmul.f32 %v6902, 1.442695
    %v6908 = vpow.pop %v6907
    %v6909 = vmul.f32 %v6903, 1.442695
    %v6910 = vpow.pop %v6909
    %v6911 = vmul.f32 %v6904, 1.442695
    %v6912 = vpow.pop %v6911
    %v6913 = vadd.f32 %v6906, 1.0
    %v6914 = vadd.f32 %v6908, 1.0
    %v6915 = vadd.f32 %v6910, 1.0
    %v6916 = vadd.f32 %v6912, 1.0
    %v6917 = vrcp.pop %v6913
    %v6918 = vmul.f32 %v6913, %v6917
    %v6919 = vsub.f32 1.0, %v6918
    %v6920 = vmul.f32 %v6917, %v6919
    %v6921 = vadd.f32 %v6917, %v6920
    %vm6922 = vweird.f32 %v6913
    %vm6923 = vweird.f32 %v6917
    %vm6924 = vmor %vm6922, %vm6923
    %v6925 = vsel %vm6924, %v6917, %v6921
    %v6926 = vand.u32 2147483647, %v6913
    %vm6927 = vcmp.eq.f32.partialorder %v6926, 8.507059e+37
    %v6928 = vand.u32 %v6913, 2147483648
    %v6929 = vor.u32 1.1754944e-38, %v6928
    %v6930 = vsel %vm6927, %v6929, %v6925
    %v6931 = vmul.f32 1.0, %v6930
    %v6932 = vrcp.pop %v6914
    %v6933 = vmul.f32 %v6914, %v6932
    %v6934 = vsub.f32 1.0, %v6933
    %v6935 = vmul.f32 %v6932, %v6934
    %v6936 = vadd.f32 %v6932, %v6935
    %vm6937 = vweird.f32 %v6914
    %vm6938 = vweird.f32 %v6932
    %vm6939 = vmor %vm6937, %vm6938
    %v6940 = vsel %vm6939, %v6932, %v6936
    %v6941 = vand.u32 2147483647, %v6914
    %vm6942 = vcmp.eq.f32.partialorder %v6941, 8.507059e+37
    %v6943 = vand.u32 %v6914, 2147483648
    %v6944 = vor.u32 1.1754944e-38, %v6943
    %v6945 = vsel %vm6942, %v6944, %v6940
    %v6946 = vmul.f32 1.0, %v6945
    %v6947 = vrcp.pop %v6915
    %v6948 = vmul.f32 %v6915, %v6947
    %v6949 = vsub.f32 1.0, %v6948
    %v6950 = vmul.f32 %v6947, %v6949
    %v6951 = vadd.f32 %v6947, %v6950
    %vm6952 = vweird.f32 %v6915
    %vm6953 = vweird.f32 %v6947
    %vm6954 = vmor %vm6952, %vm6953
    %v6955 = vsel %vm6954, %v6947, %v6951
    %v6956 = vand.u32 2147483647, %v6915
    %vm6957 = vcmp.eq.f32.partialorder %v6956, 8.507059e+37
    %v6958 = vand.u32 %v6915, 2147483648
    %v6959 = vor.u32 1.1754944e-38, %v6958
    %v6960 = vsel %vm6957, %v6959, %v6955
    %v6961 = vmul.f32 1.0, %v6960
    %v6962 = vrcp.pop %v6916
    %v6963 = vmul.f32 %v6916, %v6962
    %v6964 = vsub.f32 1.0, %v6963
    %v6965 = vmul.f32 %v6962, %v6964
    %v6966 = vadd.f32 %v6962, %v6965
    %vm6967 = vweird.f32 %v6916
    %vm6968 = vweird.f32 %v6962
    %vm6969 = vmor %vm6967, %vm6968
    %v6970 = vsel %vm6969, %v6962, %v6966
    %v6971 = vand.u32 2147483647, %v6916
    %vm6972 = vcmp.eq.f32.partialorder %v6971, 8.507059e+37
    %v6973 = vand.u32 %v6916, 2147483648
    %v6974 = vor.u32 1.1754944e-38, %v6973
    %v6975 = vsel %vm6972, %v6974, %v6970
    %v6976 = vmul.f32 1.0, %v6975
    %v6977 = vadd.f32 %v6855, %v5573
    %v6978 = vadd.f32 %v6895, %v5574
    %v6979 = vmul.f32 %v6931, %v6977
    %v6980 = vmul.f32 %v6946, %v6978
    %v6981 = vadd.f32 %v6655, %v6979
    %v6982 = vadd.f32 %v6656, %v6980
    %v6983 = vtanh.pop %v6981
    %v6984 = vtanh.pop %v6982
    %v6985 = vsub.f32 1.0, %v6961
    %v6986 = vsub.f32 1.0, %v6976
    %v6987 = vmul.f32 %v6985, %v6983
    %v6988 = vmul.f32 %v6986, %v6984
    %v6989 = vmul.f32 %v6961, %v6641
    %v6990 = vmul.f32 %v6976, %v6642
    %v6991 = vadd.f32 %v6987, %v6989
    %v6992 = vadd.f32 %v6988, %v6990
    %6993 = vst [vmem:[%s6649] sm:$0xff] %v6991
    %6994 = vst [vmem:[%s6645 + $0x8] sm:$0xff] %v6992
    %v6995 = vld [vmem:[%s2546] sm:$0xff]
    %v6996 = vld [vmem:[%s2546 + $0x8] sm:$0xff]
    %v6997 = vld [vmem:[%s2546 + $0x10] sm:$0xff]
    %v6998 = vld [vmem:[%s2546 + $0x18] sm:$0xff]
    %v6999 = vld [vmem:[%s2546 + $0x20] sm:$0xff]
    %v7000 = vld [vmem:[%s2546 + $0x28] sm:$0xff]
    %7001 = vmatpush.msra.mxu0 %v5143
    %7002 = vmatpush.msra.mxu0 %v5137
    %7003 = vmatpush.msra.mxu0 %v5131
    %7004 = vmatpush.msra.mxu0 %v5125
    %7005 = vmatpush.msra.mxu0 %v5119
    %7006 = vmatpush.msra.mxu0 %v5113
    %7007 = vmatpush.msra.mxu0 %v5107
    %7008 = vmatpush.msra.mxu0 %v5101
    %7009 = vmatpush.msra.mxu0 %v5095
    %7010 = vmatpush.msra.mxu0 %v5089
    %7011 = vmatpush.msra.mxu0 %v5083
    %7012 = vmatpush.msra.mxu0 %v5077
    %7013 = vmatpush.msra.mxu0 %v5071
    %7014 = vmatpush.msra.mxu0 %v5065
    %7015 = vmatpush.msra.mxu0 %v5059
    %7016 = vmatpush.msra.mxu0 %v5053
    %7017 = vmatmul.f32.gmra.mxu0 %v6991
    %v7018 = vpop.f32.mrf.mxu0
    %v7019 = vadd.f32 0.0, %v7018
    %7020 = vdwg.mxu0
    %7021 = vmatpush.msra.mxu0 %v5239
    %7022 = vmatpush.msra.mxu0 %v5233
    %7023 = vmatpush.msra.mxu0 %v5227
    %7024 = vmatpush.msra.mxu0 %v5221
    %7025 = vmatpush.msra.mxu0 %v5215
    %7026 = vmatpush.msra.mxu0 %v5209
    %7027 = vmatpush.msra.mxu0 %v5203
    %7028 = vmatpush.msra.mxu0 %v5197
    %7029 = vmatpush.msra.mxu0 %v5191
    %7030 = vmatpush.msra.mxu0 %v5185
    %7031 = vmatpush.msra.mxu0 %v5179
    %7032 = vmatpush.msra.mxu0 %v5173
    %7033 = vmatpush.msra.mxu0 %v5167
    %7034 = vmatpush.msra.mxu0 %v5161
    %7035 = vmatpush.msra.mxu0 %v5155
    %7036 = vmatpush.msra.mxu0 %v5149
    %7037 = vmatmul.f32.gmra.mxu0 %v6992
    %v7038 = vpop.f32.mrf.mxu0
    %v7039 = vadd.f32 %v7019, %v7038
    %7040 = vdwg.mxu0
    %7041 = vmatpush.msra.mxu0 %v5144
    %7042 = vmatpush.msra.mxu0 %v5138
    %7043 = vmatpush.msra.mxu0 %v5132
    %7044 = vmatpush.msra.mxu0 %v5126
    %7045 = vmatpush.msra.mxu0 %v5120
    %7046 = vmatpush.msra.mxu0 %v5114
    %7047 = vmatpush.msra.mxu0 %v5108
    %7048 = vmatpush.msra.mxu0 %v5102
    %7049 = vmatpush.msra.mxu0 %v5096
    %7050 = vmatpush.msra.mxu0 %v5090
    %7051 = vmatpush.msra.mxu0 %v5084
    %7052 = vmatpush.msra.mxu0 %v5078
    %7053 = vmatpush.msra.mxu0 %v5072
    %7054 = vmatpush.msra.mxu0 %v5066
    %7055 = vmatpush.msra.mxu0 %v5060
    %7056 = vmatpush.msra.mxu0 %v5054
    %7057 = vmatmul.f32.gmra.mxu0 %v6991
    %v7058 = vpop.f32.mrf.mxu0
    %v7059 = vadd.f32 0.0, %v7058
    %7060 = vdwg.mxu0
    %7061 = vmatpush.msra.mxu0 %v5240
    %7062 = vmatpush.msra.mxu0 %v5234
    %7063 = vmatpush.msra.mxu0 %v5228
    %7064 = vmatpush.msra.mxu0 %v5222
    %7065 = vmatpush.msra.mxu0 %v5216
    %7066 = vmatpush.msra.mxu0 %v5210
    %7067 = vmatpush.msra.mxu0 %v5204
    %7068 = vmatpush.msra.mxu0 %v5198
    %7069 = vmatpush.msra.mxu0 %v5192
    %7070 = vmatpush.msra.mxu0 %v5186
    %7071 = vmatpush.msra.mxu0 %v5180
    %7072 = vmatpush.msra.mxu0 %v5174
    %7073 = vmatpush.msra.mxu0 %v5168
    %7074 = vmatpush.msra.mxu0 %v5162
    %7075 = vmatpush.msra.mxu0 %v5156
    %7076 = vmatpush.msra.mxu0 %v5150
    %7077 = vmatmul.f32.gmra.mxu0 %v6992
    %v7078 = vpop.f32.mrf.mxu0
    %v7079 = vadd.f32 %v7059, %v7078
    %7080 = vdwg.mxu0
    %7081 = vmatpush.msra.mxu0 %v5145
    %7082 = vmatpush.msra.mxu0 %v5139
    %7083 = vmatpush.msra.mxu0 %v5133
    %7084 = vmatpush.msra.mxu0 %v5127
    %7085 = vmatpush.msra.mxu0 %v5121
    %7086 = vmatpush.msra.mxu0 %v5115
    %7087 = vmatpush.msra.mxu0 %v5109
    %7088 = vmatpush.msra.mxu0 %v5103
    %7089 = vmatpush.msra.mxu0 %v5097
    %7090 = vmatpush.msra.mxu0 %v5091
    %7091 = vmatpush.msra.mxu0 %v5085
    %7092 = vmatpush.msra.mxu0 %v5079
    %7093 = vmatpush.msra.mxu0 %v5073
    %7094 = vmatpush.msra.mxu0 %v5067
    %7095 = vmatpush.msra.mxu0 %v5061
    %7096 = vmatpush.msra.mxu0 %v5055
    %7097 = vmatmul.f32.gmra.mxu0 %v6991
    %v7098 = vpop.f32.mrf.mxu0
    %v7099 = vadd.f32 0.0, %v7098
    %7100 = vdwg.mxu0
    %7101 = vmatpush.msra.mxu0 %v5241
    %7102 = vmatpush.msra.mxu0 %v5235
    %7103 = vmatpush.msra.mxu0 %v5229
    %7104 = vmatpush.msra.mxu0 %v5223
    %7105 = vmatpush.msra.mxu0 %v5217
    %7106 = vmatpush.msra.mxu0 %v5211
    %7107 = vmatpush.msra.mxu0 %v5205
    %7108 = vmatpush.msra.mxu0 %v5199
    %7109 = vmatpush.msra.mxu0 %v5193
    %7110 = vmatpush.msra.mxu0 %v5187
    %7111 = vmatpush.msra.mxu0 %v5181
    %7112 = vmatpush.msra.mxu0 %v5175
    %7113 = vmatpush.msra.mxu0 %v5169
    %7114 = vmatpush.msra.mxu0 %v5163
    %7115 = vmatpush.msra.mxu0 %v5157
    %7116 = vmatpush.msra.mxu0 %v5151
    %7117 = vmatmul.f32.gmra.mxu0 %v6992
    %v7118 = vpop.f32.mrf.mxu0
    %v7119 = vadd.f32 %v7099, %v7118
    %7120 = vdwg.mxu0
    %7121 = vmatpush.msra.mxu0 %v5146
    %7122 = vmatpush.msra.mxu0 %v5140
    %7123 = vmatpush.msra.mxu0 %v5134
    %7124 = vmatpush.msra.mxu0 %v5128
    %7125 = vmatpush.msra.mxu0 %v5122
    %7126 = vmatpush.msra.mxu0 %v5116
    %7127 = vmatpush.msra.mxu0 %v5110
    %7128 = vmatpush.msra.mxu0 %v5104
    %7129 = vmatpush.msra.mxu0 %v5098
    %7130 = vmatpush.msra.mxu0 %v5092
    %7131 = vmatpush.msra.mxu0 %v5086
    %7132 = vmatpush.msra.mxu0 %v5080
    %7133 = vmatpush.msra.mxu0 %v5074
    %7134 = vmatpush.msra.mxu0 %v5068
    %7135 = vmatpush.msra.mxu0 %v5062
    %7136 = vmatpush.msra.mxu0 %v5056
    %7137 = vmatmul.f32.gmra.mxu0 %v6991
    %v7138 = vpop.f32.mrf.mxu0
    %v7139 = vadd.f32 0.0, %v7138
    %7140 = vdwg.mxu0
    %7141 = vmatpush.msra.mxu0 %v5242
    %7142 = vmatpush.msra.mxu0 %v5236
    %7143 = vmatpush.msra.mxu0 %v5230
    %7144 = vmatpush.msra.mxu0 %v5224
    %7145 = vmatpush.msra.mxu0 %v5218
    %7146 = vmatpush.msra.mxu0 %v5212
    %7147 = vmatpush.msra.mxu0 %v5206
    %7148 = vmatpush.msra.mxu0 %v5200
    %7149 = vmatpush.msra.mxu0 %v5194
    %7150 = vmatpush.msra.mxu0 %v5188
    %7151 = vmatpush.msra.mxu0 %v5182
    %7152 = vmatpush.msra.mxu0 %v5176
    %7153 = vmatpush.msra.mxu0 %v5170
    %7154 = vmatpush.msra.mxu0 %v5164
    %7155 = vmatpush.msra.mxu0 %v5158
    %7156 = vmatpush.msra.mxu0 %v5152
    %7157 = vmatmul.f32.gmra.mxu0 %v6992
    %v7158 = vpop.f32.mrf.mxu0
    %v7159 = vadd.f32 %v7139, %v7158
    %7160 = vdwg.mxu0
    %7161 = vmatpush.msra.mxu0 %v5147
    %7162 = vmatpush.msra.mxu0 %v5141
    %7163 = vmatpush.msra.mxu0 %v5135
    %7164 = vmatpush.msra.mxu0 %v5129
    %7165 = vmatpush.msra.mxu0 %v5123
    %7166 = vmatpush.msra.mxu0 %v5117
    %7167 = vmatpush.msra.mxu0 %v5111
    %7168 = vmatpush.msra.mxu0 %v5105
    %7169 = vmatpush.msra.mxu0 %v5099
    %7170 = vmatpush.msra.mxu0 %v5093
    %7171 = vmatpush.msra.mxu0 %v5087
    %7172 = vmatpush.msra.mxu0 %v5081
    %7173 = vmatpush.msra.mxu0 %v5075
    %7174 = vmatpush.msra.mxu0 %v5069
    %7175 = vmatpush.msra.mxu0 %v5063
    %7176 = vmatpush.msra.mxu0 %v5057
    %7177 = vmatmul.f32.gmra.mxu0 %v6991
    %v7178 = vpop.f32.mrf.mxu0
    %v7179 = vadd.f32 0.0, %v7178
    %7180 = vdwg.mxu0
    %7181 = vmatpush.msra.mxu0 %v5243
    %7182 = vmatpush.msra.mxu0 %v5237
    %7183 = vmatpush.msra.mxu0 %v5231
    %7184 = vmatpush.msra.mxu0 %v5225
    %7185 = vmatpush.msra.mxu0 %v5219
    %7186 = vmatpush.msra.mxu0 %v5213
    %7187 = vmatpush.msra.mxu0 %v5207
    %7188 = vmatpush.msra.mxu0 %v5201
    %7189 = vmatpush.msra.mxu0 %v5195
    %7190 = vmatpush.msra.mxu0 %v5189
    %7191 = vmatpush.msra.mxu0 %v5183
    %7192 = vmatpush.msra.mxu0 %v5177
    %7193 = vmatpush.msra.mxu0 %v5171
    %7194 = vmatpush.msra.mxu0 %v5165
    %7195 = vmatpush.msra.mxu0 %v5159
    %7196 = vmatpush.msra.mxu0 %v5153
    %7197 = vmatmul.f32.gmra.mxu0 %v6992
    %v7198 = vpop.f32.mrf.mxu0
    %v7199 = vadd.f32 %v7179, %v7198
    %7200 = vdwg.mxu0
    %7201 = vmatpush.msra.mxu0 %v5148
    %7202 = vmatpush.msra.mxu0 %v5142
    %7203 = vmatpush.msra.mxu0 %v5136
    %7204 = vmatpush.msra.mxu0 %v5130
    %7205 = vmatpush.msra.mxu0 %v5124
    %7206 = vmatpush.msra.mxu0 %v5118
    %7207 = vmatpush.msra.mxu0 %v5112
    %7208 = vmatpush.msra.mxu0 %v5106
    %7209 = vmatpush.msra.mxu0 %v5100
    %7210 = vmatpush.msra.mxu0 %v5094
    %7211 = vmatpush.msra.mxu0 %v5088
    %7212 = vmatpush.msra.mxu0 %v5082
    %7213 = vmatpush.msra.mxu0 %v5076
    %7214 = vmatpush.msra.mxu0 %v5070
    %7215 = vmatpush.msra.mxu0 %v5064
    %7216 = vmatpush.msra.mxu0 %v5058
    %7217 = vmatmul.f32.gmra.mxu0 %v6991
    %v7218 = vpop.f32.mrf.mxu0
    %v7219 = vadd.f32 0.0, %v7218
    %7220 = vdwg.mxu0
    %7221 = vmatpush.msra.mxu0 %v5244
    %7222 = vmatpush.msra.mxu0 %v5238
    %7223 = vmatpush.msra.mxu0 %v5232
    %7224 = vmatpush.msra.mxu0 %v5226
    %7225 = vmatpush.msra.mxu0 %v5220
    %7226 = vmatpush.msra.mxu0 %v5214
    %7227 = vmatpush.msra.mxu0 %v5208
    %7228 = vmatpush.msra.mxu0 %v5202
    %7229 = vmatpush.msra.mxu0 %v5196
    %7230 = vmatpush.msra.mxu0 %v5190
    %7231 = vmatpush.msra.mxu0 %v5184
    %7232 = vmatpush.msra.mxu0 %v5178
    %7233 = vmatpush.msra.mxu0 %v5172
    %7234 = vmatpush.msra.mxu0 %v5166
    %7235 = vmatpush.msra.mxu0 %v5160
    %7236 = vmatpush.msra.mxu0 %v5154
    %7237 = vmatmul.f32.gmra.mxu0 %v6992
    %v7238 = vpop.f32.mrf.mxu0
    %v7239 = vadd.f32 %v7219, %v7238
    %7240 = vdwg.mxu0
    %v7241 = vadd.f32 %v6995, %v7039
    %v7242 = vadd.f32 %v6996, %v7079
    %v7243 = vadd.f32 %v6997, %v7119
    %v7244 = vadd.f32 %v6998, %v7159
    %v7245 = vxor.u32 %v7241, 2147483648
    %v7246 = vxor.u32 %v7242, 2147483648
    %v7247 = vxor.u32 %v7243, 2147483648
    %v7248 = vxor.u32 %v7244, 2147483648
    %v7249 = vmul.f32 %v7245, 1.442695
    %v7250 = vpow.pop %v7249
    %v7251 = vmul.f32 %v7246, 1.442695
    %v7252 = vpow.pop %v7251
    %v7253 = vmul.f32 %v7247, 1.442695
    %v7254 = vpow.pop %v7253
    %v7255 = vmul.f32 %v7248, 1.442695
    %v7256 = vpow.pop %v7255
    %v7257 = vadd.f32 %v7250, 1.0
    %v7258 = vadd.f32 %v7252, 1.0
    %v7259 = vadd.f32 %v7254, 1.0
    %v7260 = vadd.f32 %v7256, 1.0
    %v7261 = vrcp.pop %v7257
    %v7262 = vmul.f32 %v7257, %v7261
    %v7263 = vsub.f32 1.0, %v7262
    %v7264 = vmul.f32 %v7261, %v7263
    %v7265 = vadd.f32 %v7261, %v7264
    %vm7266 = vweird.f32 %v7257
    %vm7267 = vweird.f32 %v7261
    %vm7268 = vmor %vm7266, %vm7267
    %v7269 = vsel %vm7268, %v7261, %v7265
    %v7270 = vand.u32 2147483647, %v7257
    %vm7271 = vcmp.eq.f32.partialorder %v7270, 8.507059e+37
    %v7272 = vand.u32 %v7257, 2147483648
    %v7273 = vor.u32 1.1754944e-38, %v7272
    %v7274 = vsel %vm7271, %v7273, %v7269
    %v7275 = vmul.f32 1.0, %v7274
    %v7276 = vrcp.pop %v7258
    %v7277 = vmul.f32 %v7258, %v7276
    %v7278 = vsub.f32 1.0, %v7277
    %v7279 = vmul.f32 %v7276, %v7278
    %v7280 = vadd.f32 %v7276, %v7279
    %vm7281 = vweird.f32 %v7258
    %vm7282 = vweird.f32 %v7276
    %vm7283 = vmor %vm7281, %vm7282
    %v7284 = vsel %vm7283, %v7276, %v7280
    %v7285 = vand.u32 2147483647, %v7258
    %vm7286 = vcmp.eq.f32.partialorder %v7285, 8.507059e+37
    %v7287 = vand.u32 %v7258, 2147483648
    %v7288 = vor.u32 1.1754944e-38, %v7287
    %v7289 = vsel %vm7286, %v7288, %v7284
    %v7290 = vmul.f32 1.0, %v7289
    %v7291 = vrcp.pop %v7259
    %v7292 = vmul.f32 %v7259, %v7291
    %v7293 = vsub.f32 1.0, %v7292
    %v7294 = vmul.f32 %v7291, %v7293
    %v7295 = vadd.f32 %v7291, %v7294
    %vm7296 = vweird.f32 %v7259
    %vm7297 = vweird.f32 %v7291
    %vm7298 = vmor %vm7296, %vm7297
    %v7299 = vsel %vm7298, %v7291, %v7295
    %v7300 = vand.u32 2147483647, %v7259
    %vm7301 = vcmp.eq.f32.partialorder %v7300, 8.507059e+37
    %v7302 = vand.u32 %v7259, 2147483648
    %v7303 = vor.u32 1.1754944e-38, %v7302
    %v7304 = vsel %vm7301, %v7303, %v7299
    %v7305 = vmul.f32 1.0, %v7304
    %v7306 = vrcp.pop %v7260
    %v7307 = vmul.f32 %v7260, %v7306
    %v7308 = vsub.f32 1.0, %v7307
    %v7309 = vmul.f32 %v7306, %v7308
    %v7310 = vadd.f32 %v7306, %v7309
    %vm7311 = vweird.f32 %v7260
    %vm7312 = vweird.f32 %v7306
    %vm7313 = vmor %vm7311, %vm7312
    %v7314 = vsel %vm7313, %v7306, %v7310
    %v7315 = vand.u32 2147483647, %v7260
    %vm7316 = vcmp.eq.f32.partialorder %v7315, 8.507059e+37
    %v7317 = vand.u32 %v7260, 2147483648
    %v7318 = vor.u32 1.1754944e-38, %v7317
    %v7319 = vsel %vm7316, %v7318, %v7314
    %v7320 = vmul.f32 1.0, %v7319
    %v7321 = vadd.f32 %v7199, %v5573
    %v7322 = vadd.f32 %v7239, %v5574
    %v7323 = vmul.f32 %v7275, %v7321
    %v7324 = vmul.f32 %v7290, %v7322
    %v7325 = vadd.f32 %v6999, %v7323
    %v7326 = vadd.f32 %v7000, %v7324
    %v7327 = vtanh.pop %v7325
    %v7328 = vtanh.pop %v7326
    %v7329 = vsub.f32 1.0, %v7305
    %v7330 = vsub.f32 1.0, %v7320
    %v7331 = vmul.f32 %v7329, %v7327
    %v7332 = vmul.f32 %v7330, %v7328
    %v7333 = vmul.f32 %v7305, %v6991
    %v7334 = vmul.f32 %v7320, %v6992
    %v7335 = vadd.f32 %v7331, %v7333
    %v7336 = vadd.f32 %v7332, %v7334
    %7337 = vst [vmem:[%s6299] sm:$0xff] %v7335
    %7338 = vst [vmem:[%s6295 + $0x8] sm:$0xff] %v7336
    %v7339 = vld [vmem:[%s2895] sm:$0xff]
    %v7340 = vld [vmem:[%s2895 + $0x8] sm:$0xff]
    %v7341 = vld [vmem:[%s2895 + $0x10] sm:$0xff]
    %v7342 = vld [vmem:[%s2895 + $0x18] sm:$0xff]
    %v7343 = vld [vmem:[%s2895 + $0x20] sm:$0xff]
    %v7344 = vld [vmem:[%s2895 + $0x28] sm:$0xff]
    %7345 = vmatpush.msra.mxu0 %v5143
    %7346 = vmatpush.msra.mxu0 %v5137
    %7347 = vmatpush.msra.mxu0 %v5131
    %7348 = vmatpush.msra.mxu0 %v5125
    %7349 = vmatpush.msra.mxu0 %v5119
    %7350 = vmatpush.msra.mxu0 %v5113
    %7351 = vmatpush.msra.mxu0 %v5107
    %7352 = vmatpush.msra.mxu0 %v5101
    %7353 = vmatpush.msra.mxu0 %v5095
    %7354 = vmatpush.msra.mxu0 %v5089
    %7355 = vmatpush.msra.mxu0 %v5083
    %7356 = vmatpush.msra.mxu0 %v5077
    %7357 = vmatpush.msra.mxu0 %v5071
    %7358 = vmatpush.msra.mxu0 %v5065
    %7359 = vmatpush.msra.mxu0 %v5059
    %7360 = vmatpush.msra.mxu0 %v5053
    %7361 = vmatmul.f32.gmra.mxu0 %v7335
    %v7362 = vpop.f32.mrf.mxu0
    %v7363 = vadd.f32 0.0, %v7362
    %7364 = vdwg.mxu0
    %7365 = vmatpush.msra.mxu0 %v5239
    %7366 = vmatpush.msra.mxu0 %v5233
    %7367 = vmatpush.msra.mxu0 %v5227
    %7368 = vmatpush.msra.mxu0 %v5221
    %7369 = vmatpush.msra.mxu0 %v5215
    %7370 = vmatpush.msra.mxu0 %v5209
    %7371 = vmatpush.msra.mxu0 %v5203
    %7372 = vmatpush.msra.mxu0 %v5197
    %7373 = vmatpush.msra.mxu0 %v5191
    %7374 = vmatpush.msra.mxu0 %v5185
    %7375 = vmatpush.msra.mxu0 %v5179
    %7376 = vmatpush.msra.mxu0 %v5173
    %7377 = vmatpush.msra.mxu0 %v5167
    %7378 = vmatpush.msra.mxu0 %v5161
    %7379 = vmatpush.msra.mxu0 %v5155
    %7380 = vmatpush.msra.mxu0 %v5149
    %7381 = vmatmul.f32.gmra.mxu0 %v7336
    %v7382 = vpop.f32.mrf.mxu0
    %v7383 = vadd.f32 %v7363, %v7382
    %7384 = vdwg.mxu0
    %7385 = vmatpush.msra.mxu0 %v5144
    %7386 = vmatpush.msra.mxu0 %v5138
    %7387 = vmatpush.msra.mxu0 %v5132
    %7388 = vmatpush.msra.mxu0 %v5126
    %7389 = vmatpush.msra.mxu0 %v5120
    %7390 = vmatpush.msra.mxu0 %v5114
    %7391 = vmatpush.msra.mxu0 %v5108
    %7392 = vmatpush.msra.mxu0 %v5102
    %7393 = vmatpush.msra.mxu0 %v5096
    %7394 = vmatpush.msra.mxu0 %v5090
    %7395 = vmatpush.msra.mxu0 %v5084
    %7396 = vmatpush.msra.mxu0 %v5078
    %7397 = vmatpush.msra.mxu0 %v5072
    %7398 = vmatpush.msra.mxu0 %v5066
    %7399 = vmatpush.msra.mxu0 %v5060
    %7400 = vmatpush.msra.mxu0 %v5054
    %7401 = vmatmul.f32.gmra.mxu0 %v7335
    %v7402 = vpop.f32.mrf.mxu0
    %v7403 = vadd.f32 0.0, %v7402
    %7404 = vdwg.mxu0
    %7405 = vmatpush.msra.mxu0 %v5240
    %7406 = vmatpush.msra.mxu0 %v5234
    %7407 = vmatpush.msra.mxu0 %v5228
    %7408 = vmatpush.msra.mxu0 %v5222
    %7409 = vmatpush.msra.mxu0 %v5216
    %7410 = vmatpush.msra.mxu0 %v5210
    %7411 = vmatpush.msra.mxu0 %v5204
    %7412 = vmatpush.msra.mxu0 %v5198
    %7413 = vmatpush.msra.mxu0 %v5192
    %7414 = vmatpush.msra.mxu0 %v5186
    %7415 = vmatpush.msra.mxu0 %v5180
    %7416 = vmatpush.msra.mxu0 %v5174
    %7417 = vmatpush.msra.mxu0 %v5168
    %7418 = vmatpush.msra.mxu0 %v5162
    %7419 = vmatpush.msra.mxu0 %v5156
    %7420 = vmatpush.msra.mxu0 %v5150
    %7421 = vmatmul.f32.gmra.mxu0 %v7336
    %v7422 = vpop.f32.mrf.mxu0
    %v7423 = vadd.f32 %v7403, %v7422
    %7424 = vdwg.mxu0
    %7425 = vmatpush.msra.mxu0 %v5145
    %7426 = vmatpush.msra.mxu0 %v5139
    %7427 = vmatpush.msra.mxu0 %v5133
    %7428 = vmatpush.msra.mxu0 %v5127
    %7429 = vmatpush.msra.mxu0 %v5121
    %7430 = vmatpush.msra.mxu0 %v5115
    %7431 = vmatpush.msra.mxu0 %v5109
    %7432 = vmatpush.msra.mxu0 %v5103
    %7433 = vmatpush.msra.mxu0 %v5097
    %7434 = vmatpush.msra.mxu0 %v5091
    %7435 = vmatpush.msra.mxu0 %v5085
    %7436 = vmatpush.msra.mxu0 %v5079
    %7437 = vmatpush.msra.mxu0 %v5073
    %7438 = vmatpush.msra.mxu0 %v5067
    %7439 = vmatpush.msra.mxu0 %v5061
    %7440 = vmatpush.msra.mxu0 %v5055
    %7441 = vmatmul.f32.gmra.mxu0 %v7335
    %v7442 = vpop.f32.mrf.mxu0
    %v7443 = vadd.f32 0.0, %v7442
    %7444 = vdwg.mxu0
    %7445 = vmatpush.msra.mxu0 %v5241
    %7446 = vmatpush.msra.mxu0 %v5235
    %7447 = vmatpush.msra.mxu0 %v5229
    %7448 = vmatpush.msra.mxu0 %v5223
    %7449 = vmatpush.msra.mxu0 %v5217
    %7450 = vmatpush.msra.mxu0 %v5211
    %7451 = vmatpush.msra.mxu0 %v5205
    %7452 = vmatpush.msra.mxu0 %v5199
    %7453 = vmatpush.msra.mxu0 %v5193
    %7454 = vmatpush.msra.mxu0 %v5187
    %7455 = vmatpush.msra.mxu0 %v5181
    %7456 = vmatpush.msra.mxu0 %v5175
    %7457 = vmatpush.msra.mxu0 %v5169
    %7458 = vmatpush.msra.mxu0 %v5163
    %7459 = vmatpush.msra.mxu0 %v5157
    %7460 = vmatpush.msra.mxu0 %v5151
    %7461 = vmatmul.f32.gmra.mxu0 %v7336
    %v7462 = vpop.f32.mrf.mxu0
    %v7463 = vadd.f32 %v7443, %v7462
    %7464 = vdwg.mxu0
    %7465 = vmatpush.msra.mxu0 %v5146
    %7466 = vmatpush.msra.mxu0 %v5140
    %7467 = vmatpush.msra.mxu0 %v5134
    %7468 = vmatpush.msra.mxu0 %v5128
    %7469 = vmatpush.msra.mxu0 %v5122
    %7470 = vmatpush.msra.mxu0 %v5116
    %7471 = vmatpush.msra.mxu0 %v5110
    %7472 = vmatpush.msra.mxu0 %v5104
    %7473 = vmatpush.msra.mxu0 %v5098
    %7474 = vmatpush.msra.mxu0 %v5092
    %7475 = vmatpush.msra.mxu0 %v5086
    %7476 = vmatpush.msra.mxu0 %v5080
    %7477 = vmatpush.msra.mxu0 %v5074
    %7478 = vmatpush.msra.mxu0 %v5068
    %7479 = vmatpush.msra.mxu0 %v5062
    %7480 = vmatpush.msra.mxu0 %v5056
    %7481 = vmatmul.f32.gmra.mxu0 %v7335
    %v7482 = vpop.f32.mrf.mxu0
    %v7483 = vadd.f32 0.0, %v7482
    %7484 = vdwg.mxu0
    %7485 = vmatpush.msra.mxu0 %v5242
    %7486 = vmatpush.msra.mxu0 %v5236
    %7487 = vmatpush.msra.mxu0 %v5230
    %7488 = vmatpush.msra.mxu0 %v5224
    %7489 = vmatpush.msra.mxu0 %v5218
    %7490 = vmatpush.msra.mxu0 %v5212
    %7491 = vmatpush.msra.mxu0 %v5206
    %7492 = vmatpush.msra.mxu0 %v5200
    %7493 = vmatpush.msra.mxu0 %v5194
    %7494 = vmatpush.msra.mxu0 %v5188
    %7495 = vmatpush.msra.mxu0 %v5182
    %7496 = vmatpush.msra.mxu0 %v5176
    %7497 = vmatpush.msra.mxu0 %v5170
    %7498 = vmatpush.msra.mxu0 %v5164
    %7499 = vmatpush.msra.mxu0 %v5158
    %7500 = vmatpush.msra.mxu0 %v5152
    %7501 = vmatmul.f32.gmra.mxu0 %v7336
    %v7502 = vpop.f32.mrf.mxu0
    %v7503 = vadd.f32 %v7483, %v7502
    %7504 = vdwg.mxu0
    %7505 = vmatpush.msra.mxu0 %v5147
    %7506 = vmatpush.msra.mxu0 %v5141
    %7507 = vmatpush.msra.mxu0 %v5135
    %7508 = vmatpush.msra.mxu0 %v5129
    %7509 = vmatpush.msra.mxu0 %v5123
    %7510 = vmatpush.msra.mxu0 %v5117
    %7511 = vmatpush.msra.mxu0 %v5111
    %7512 = vmatpush.msra.mxu0 %v5105
    %7513 = vmatpush.msra.mxu0 %v5099
    %7514 = vmatpush.msra.mxu0 %v5093
    %7515 = vmatpush.msra.mxu0 %v5087
    %7516 = vmatpush.msra.mxu0 %v5081
    %7517 = vmatpush.msra.mxu0 %v5075
    %7518 = vmatpush.msra.mxu0 %v5069
    %7519 = vmatpush.msra.mxu0 %v5063
    %7520 = vmatpush.msra.mxu0 %v5057
    %7521 = vmatmul.f32.gmra.mxu0 %v7335
    %v7522 = vpop.f32.mrf.mxu0
    %v7523 = vadd.f32 0.0, %v7522
    %7524 = vdwg.mxu0
    %7525 = vmatpush.msra.mxu0 %v5243
    %7526 = vmatpush.msra.mxu0 %v5237
    %7527 = vmatpush.msra.mxu0 %v5231
    %7528 = vmatpush.msra.mxu0 %v5225
    %7529 = vmatpush.msra.mxu0 %v5219
    %7530 = vmatpush.msra.mxu0 %v5213
    %7531 = vmatpush.msra.mxu0 %v5207
    %7532 = vmatpush.msra.mxu0 %v5201
    %7533 = vmatpush.msra.mxu0 %v5195
    %7534 = vmatpush.msra.mxu0 %v5189
    %7535 = vmatpush.msra.mxu0 %v5183
    %7536 = vmatpush.msra.mxu0 %v5177
    %7537 = vmatpush.msra.mxu0 %v5171
    %7538 = vmatpush.msra.mxu0 %v5165
    %7539 = vmatpush.msra.mxu0 %v5159
    %7540 = vmatpush.msra.mxu0 %v5153
    %7541 = vmatmul.f32.gmra.mxu0 %v7336
    %v7542 = vpop.f32.mrf.mxu0
    %v7543 = vadd.f32 %v7523, %v7542
    %7544 = vdwg.mxu0
    %7545 = vmatpush.msra.mxu0 %v5148
    %7546 = vmatpush.msra.mxu0 %v5142
    %7547 = vmatpush.msra.mxu0 %v5136
    %7548 = vmatpush.msra.mxu0 %v5130
    %7549 = vmatpush.msra.mxu0 %v5124
    %7550 = vmatpush.msra.mxu0 %v5118
    %7551 = vmatpush.msra.mxu0 %v5112
    %7552 = vmatpush.msra.mxu0 %v5106
    %7553 = vmatpush.msra.mxu0 %v5100
    %7554 = vmatpush.msra.mxu0 %v5094
    %7555 = vmatpush.msra.mxu0 %v5088
    %7556 = vmatpush.msra.mxu0 %v5082
    %7557 = vmatpush.msra.mxu0 %v5076
    %7558 = vmatpush.msra.mxu0 %v5070
    %7559 = vmatpush.msra.mxu0 %v5064
    %7560 = vmatpush.msra.mxu0 %v5058
    %7561 = vmatmul.f32.gmra.mxu0 %v7335
    %v7562 = vpop.f32.mrf.mxu0
    %v7563 = vadd.f32 0.0, %v7562
    %7564 = vdwg.mxu0
    %7565 = vmatpush.msra.mxu0 %v5244
    %7566 = vmatpush.msra.mxu0 %v5238
    %7567 = vmatpush.msra.mxu0 %v5232
    %7568 = vmatpush.msra.mxu0 %v5226
    %7569 = vmatpush.msra.mxu0 %v5220
    %7570 = vmatpush.msra.mxu0 %v5214
    %7571 = vmatpush.msra.mxu0 %v5208
    %7572 = vmatpush.msra.mxu0 %v5202
    %7573 = vmatpush.msra.mxu0 %v5196
    %7574 = vmatpush.msra.mxu0 %v5190
    %7575 = vmatpush.msra.mxu0 %v5184
    %7576 = vmatpush.msra.mxu0 %v5178
    %7577 = vmatpush.msra.mxu0 %v5172
    %7578 = vmatpush.msra.mxu0 %v5166
    %7579 = vmatpush.msra.mxu0 %v5160
    %7580 = vmatpush.msra.mxu0 %v5154
    %7581 = vmatmul.f32.gmra.mxu0 %v7336
    %v7582 = vpop.f32.mrf.mxu0
    %v7583 = vadd.f32 %v7563, %v7582
    %7584 = vdwg.mxu0
    %v7585 = vadd.f32 %v7339, %v7383
    %v7586 = vadd.f32 %v7340, %v7423
    %v7587 = vadd.f32 %v7341, %v7463
    %v7588 = vadd.f32 %v7342, %v7503
    %v7589 = vxor.u32 %v7585, 2147483648
    %v7590 = vxor.u32 %v7586, 2147483648
    %v7591 = vxor.u32 %v7587, 2147483648
    %v7592 = vxor.u32 %v7588, 2147483648
    %v7593 = vmul.f32 %v7589, 1.442695
    %v7594 = vpow.pop %v7593
    %v7595 = vmul.f32 %v7590, 1.442695
    %v7596 = vpow.pop %v7595
    %v7597 = vmul.f32 %v7591, 1.442695
    %v7598 = vpow.pop %v7597
    %v7599 = vmul.f32 %v7592, 1.442695
    %v7600 = vpow.pop %v7599
    %v7601 = vadd.f32 %v7594, 1.0
    %v7602 = vadd.f32 %v7596, 1.0
    %v7603 = vadd.f32 %v7598, 1.0
    %v7604 = vadd.f32 %v7600, 1.0
    %v7605 = vrcp.pop %v7601
    %v7606 = vmul.f32 %v7601, %v7605
    %v7607 = vsub.f32 1.0, %v7606
    %v7608 = vmul.f32 %v7605, %v7607
    %v7609 = vadd.f32 %v7605, %v7608
    %vm7610 = vweird.f32 %v7601
    %vm7611 = vweird.f32 %v7605
    %vm7612 = vmor %vm7610, %vm7611
    %v7613 = vsel %vm7612, %v7605, %v7609
    %v7614 = vand.u32 2147483647, %v7601
    %vm7615 = vcmp.eq.f32.partialorder %v7614, 8.507059e+37
    %v7616 = vand.u32 %v7601, 2147483648
    %v7617 = vor.u32 1.1754944e-38, %v7616
    %v7618 = vsel %vm7615, %v7617, %v7613
    %v7619 = vmul.f32 1.0, %v7618
    %v7620 = vrcp.pop %v7602
    %v7621 = vmul.f32 %v7602, %v7620
    %v7622 = vsub.f32 1.0, %v7621
    %v7623 = vmul.f32 %v7620, %v7622
    %v7624 = vadd.f32 %v7620, %v7623
    %vm7625 = vweird.f32 %v7602
    %vm7626 = vweird.f32 %v7620
    %vm7627 = vmor %vm7625, %vm7626
    %v7628 = vsel %vm7627, %v7620, %v7624
    %v7629 = vand.u32 2147483647, %v7602
    %vm7630 = vcmp.eq.f32.partialorder %v7629, 8.507059e+37
    %v7631 = vand.u32 %v7602, 2147483648
    %v7632 = vor.u32 1.1754944e-38, %v7631
    %v7633 = vsel %vm7630, %v7632, %v7628
    %v7634 = vmul.f32 1.0, %v7633
    %v7635 = vrcp.pop %v7603
    %v7636 = vmul.f32 %v7603, %v7635
    %v7637 = vsub.f32 1.0, %v7636
    %v7638 = vmul.f32 %v7635, %v7637
    %v7639 = vadd.f32 %v7635, %v7638
    %vm7640 = vweird.f32 %v7603
    %vm7641 = vweird.f32 %v7635
    %vm7642 = vmor %vm7640, %vm7641
    %v7643 = vsel %vm7642, %v7635, %v7639
    %v7644 = vand.u32 2147483647, %v7603
    %vm7645 = vcmp.eq.f32.partialorder %v7644, 8.507059e+37
    %v7646 = vand.u32 %v7603, 2147483648
    %v7647 = vor.u32 1.1754944e-38, %v7646
    %v7648 = vsel %vm7645, %v7647, %v7643
    %v7649 = vmul.f32 1.0, %v7648
    %v7650 = vrcp.pop %v7604
    %v7651 = vmul.f32 %v7604, %v7650
    %v7652 = vsub.f32 1.0, %v7651
    %v7653 = vmul.f32 %v7650, %v7652
    %v7654 = vadd.f32 %v7650, %v7653
    %vm7655 = vweird.f32 %v7604
    %vm7656 = vweird.f32 %v7650
    %vm7657 = vmor %vm7655, %vm7656
    %v7658 = vsel %vm7657, %v7650, %v7654
    %v7659 = vand.u32 2147483647, %v7604
    %vm7660 = vcmp.eq.f32.partialorder %v7659, 8.507059e+37
    %v7661 = vand.u32 %v7604, 2147483648
    %v7662 = vor.u32 1.1754944e-38, %v7661
    %v7663 = vsel %vm7660, %v7662, %v7658
    %v7664 = vmul.f32 1.0, %v7663
    %v7665 = vadd.f32 %v7543, %v5573
    %v7666 = vadd.f32 %v7583, %v5574
    %v7667 = vmul.f32 %v7619, %v7665
    %v7668 = vmul.f32 %v7634, %v7666
    %v7669 = vadd.f32 %v7343, %v7667
    %v7670 = vadd.f32 %v7344, %v7668
    %v7671 = vtanh.pop %v7669
    %v7672 = vtanh.pop %v7670
    %v7673 = vsub.f32 1.0, %v7649
    %v7674 = vsub.f32 1.0, %v7664
    %v7675 = vmul.f32 %v7673, %v7671
    %v7676 = vmul.f32 %v7674, %v7672
    %v7677 = vmul.f32 %v7649, %v7335
    %v7678 = vmul.f32 %v7664, %v7336
    %v7679 = vadd.f32 %v7675, %v7677
    %v7680 = vadd.f32 %v7676, %v7678
    %7681 = vst [vmem:[%s5949] sm:$0xff] %v7679
    %7682 = vst [vmem:[%s5945 + $0x8] sm:$0xff] %v7680
    %v7683 = vld [vmem:[%s3244] sm:$0xff]
    %v7684 = vld [vmem:[%s3244 + $0x8] sm:$0xff]
    %v7685 = vld [vmem:[%s3244 + $0x10] sm:$0xff]
    %v7686 = vld [vmem:[%s3244 + $0x18] sm:$0xff]
    %v7687 = vld [vmem:[%s3244 + $0x20] sm:$0xff]
    %v7688 = vld [vmem:[%s3244 + $0x28] sm:$0xff]
    %7689 = vmatpush.msra.mxu0 %v5143
    %7690 = vmatpush.msra.mxu0 %v5137
    %7691 = vmatpush.msra.mxu0 %v5131
    %7692 = vmatpush.msra.mxu0 %v5125
    %7693 = vmatpush.msra.mxu0 %v5119
    %7694 = vmatpush.msra.mxu0 %v5113
    %7695 = vmatpush.msra.mxu0 %v5107
    %7696 = vmatpush.msra.mxu0 %v5101
    %7697 = vmatpush.msra.mxu0 %v5095
    %7698 = vmatpush.msra.mxu0 %v5089
    %7699 = vmatpush.msra.mxu0 %v5083
    %7700 = vmatpush.msra.mxu0 %v5077
    %7701 = vmatpush.msra.mxu0 %v5071
    %7702 = vmatpush.msra.mxu0 %v5065
    %7703 = vmatpush.msra.mxu0 %v5059
    %7704 = vmatpush.msra.mxu0 %v5053
    %7705 = vmatmul.f32.gmra.mxu0 %v7679
    %v7706 = vpop.f32.mrf.mxu0
    %v7707 = vadd.f32 0.0, %v7706
    %7708 = vdwg.mxu0
    %7709 = vmatpush.msra.mxu0 %v5239
    %7710 = vmatpush.msra.mxu0 %v5233
    %7711 = vmatpush.msra.mxu0 %v5227
    %7712 = vmatpush.msra.mxu0 %v5221
    %7713 = vmatpush.msra.mxu0 %v5215
    %7714 = vmatpush.msra.mxu0 %v5209
    %7715 = vmatpush.msra.mxu0 %v5203
    %7716 = vmatpush.msra.mxu0 %v5197
    %7717 = vmatpush.msra.mxu0 %v5191
    %7718 = vmatpush.msra.mxu0 %v5185
    %7719 = vmatpush.msra.mxu0 %v5179
    %7720 = vmatpush.msra.mxu0 %v5173
    %7721 = vmatpush.msra.mxu0 %v5167
    %7722 = vmatpush.msra.mxu0 %v5161
    %7723 = vmatpush.msra.mxu0 %v5155
    %7724 = vmatpush.msra.mxu0 %v5149
    %7725 = vmatmul.f32.gmra.mxu0 %v7680
    %v7726 = vpop.f32.mrf.mxu0
    %v7727 = vadd.f32 %v7707, %v7726
    %7728 = vdwg.mxu0
    %7729 = vmatpush.msra.mxu0 %v5144
    %7730 = vmatpush.msra.mxu0 %v5138
    %7731 = vmatpush.msra.mxu0 %v5132
    %7732 = vmatpush.msra.mxu0 %v5126
    %7733 = vmatpush.msra.mxu0 %v5120
    %7734 = vmatpush.msra.mxu0 %v5114
    %7735 = vmatpush.msra.mxu0 %v5108
    %7736 = vmatpush.msra.mxu0 %v5102
    %7737 = vmatpush.msra.mxu0 %v5096
    %7738 = vmatpush.msra.mxu0 %v5090
    %7739 = vmatpush.msra.mxu0 %v5084
    %7740 = vmatpush.msra.mxu0 %v5078
    %7741 = vmatpush.msra.mxu0 %v5072
    %7742 = vmatpush.msra.mxu0 %v5066
    %7743 = vmatpush.msra.mxu0 %v5060
    %7744 = vmatpush.msra.mxu0 %v5054
    %7745 = vmatmul.f32.gmra.mxu0 %v7679
    %v7746 = vpop.f32.mrf.mxu0
    %v7747 = vadd.f32 0.0, %v7746
    %7748 = vdwg.mxu0
    %7749 = vmatpush.msra.mxu0 %v5240
    %7750 = vmatpush.msra.mxu0 %v5234
    %7751 = vmatpush.msra.mxu0 %v5228
    %7752 = vmatpush.msra.mxu0 %v5222
    %7753 = vmatpush.msra.mxu0 %v5216
    %7754 = vmatpush.msra.mxu0 %v5210
    %7755 = vmatpush.msra.mxu0 %v5204
    %7756 = vmatpush.msra.mxu0 %v5198
    %7757 = vmatpush.msra.mxu0 %v5192
    %7758 = vmatpush.msra.mxu0 %v5186
    %7759 = vmatpush.msra.mxu0 %v5180
    %7760 = vmatpush.msra.mxu0 %v5174
    %7761 = vmatpush.msra.mxu0 %v5168
    %7762 = vmatpush.msra.mxu0 %v5162
    %7763 = vmatpush.msra.mxu0 %v5156
    %7764 = vmatpush.msra.mxu0 %v5150
    %7765 = vmatmul.f32.gmra.mxu0 %v7680
    %v7766 = vpop.f32.mrf.mxu0
    %v7767 = vadd.f32 %v7747, %v7766
    %7768 = vdwg.mxu0
    %7769 = vmatpush.msra.mxu0 %v5145
    %7770 = vmatpush.msra.mxu0 %v5139
    %7771 = vmatpush.msra.mxu0 %v5133
    %7772 = vmatpush.msra.mxu0 %v5127
    %7773 = vmatpush.msra.mxu0 %v5121
    %7774 = vmatpush.msra.mxu0 %v5115
    %7775 = vmatpush.msra.mxu0 %v5109
    %7776 = vmatpush.msra.mxu0 %v5103
    %7777 = vmatpush.msra.mxu0 %v5097
    %7778 = vmatpush.msra.mxu0 %v5091
    %7779 = vmatpush.msra.mxu0 %v5085
    %7780 = vmatpush.msra.mxu0 %v5079
    %7781 = vmatpush.msra.mxu0 %v5073
    %7782 = vmatpush.msra.mxu0 %v5067
    %7783 = vmatpush.msra.mxu0 %v5061
    %7784 = vmatpush.msra.mxu0 %v5055
    %7785 = vmatmul.f32.gmra.mxu0 %v7679
    %v7786 = vpop.f32.mrf.mxu0
    %v7787 = vadd.f32 0.0, %v7786
    %7788 = vdwg.mxu0
    %7789 = vmatpush.msra.mxu0 %v5241
    %7790 = vmatpush.msra.mxu0 %v5235
    %7791 = vmatpush.msra.mxu0 %v5229
    %7792 = vmatpush.msra.mxu0 %v5223
    %7793 = vmatpush.msra.mxu0 %v5217
    %7794 = vmatpush.msra.mxu0 %v5211
    %7795 = vmatpush.msra.mxu0 %v5205
    %7796 = vmatpush.msra.mxu0 %v5199
    %7797 = vmatpush.msra.mxu0 %v5193
    %7798 = vmatpush.msra.mxu0 %v5187
    %7799 = vmatpush.msra.mxu0 %v5181
    %7800 = vmatpush.msra.mxu0 %v5175
    %7801 = vmatpush.msra.mxu0 %v5169
    %7802 = vmatpush.msra.mxu0 %v5163
    %7803 = vmatpush.msra.mxu0 %v5157
    %7804 = vmatpush.msra.mxu0 %v5151
    %7805 = vmatmul.f32.gmra.mxu0 %v7680
    %v7806 = vpop.f32.mrf.mxu0
    %v7807 = vadd.f32 %v7787, %v7806
    %7808 = vdwg.mxu0
    %7809 = vmatpush.msra.mxu0 %v5146
    %7810 = vmatpush.msra.mxu0 %v5140
    %7811 = vmatpush.msra.mxu0 %v5134
    %7812 = vmatpush.msra.mxu0 %v5128
    %7813 = vmatpush.msra.mxu0 %v5122
    %7814 = vmatpush.msra.mxu0 %v5116
    %7815 = vmatpush.msra.mxu0 %v5110
    %7816 = vmatpush.msra.mxu0 %v5104
    %7817 = vmatpush.msra.mxu0 %v5098
    %7818 = vmatpush.msra.mxu0 %v5092
    %7819 = vmatpush.msra.mxu0 %v5086
    %7820 = vmatpush.msra.mxu0 %v5080
    %7821 = vmatpush.msra.mxu0 %v5074
    %7822 = vmatpush.msra.mxu0 %v5068
    %7823 = vmatpush.msra.mxu0 %v5062
    %7824 = vmatpush.msra.mxu0 %v5056
    %7825 = vmatmul.f32.gmra.mxu0 %v7679
    %v7826 = vpop.f32.mrf.mxu0
    %v7827 = vadd.f32 0.0, %v7826
    %7828 = vdwg.mxu0
    %7829 = vmatpush.msra.mxu0 %v5242
    %7830 = vmatpush.msra.mxu0 %v5236
    %7831 = vmatpush.msra.mxu0 %v5230
    %7832 = vmatpush.msra.mxu0 %v5224
    %7833 = vmatpush.msra.mxu0 %v5218
    %7834 = vmatpush.msra.mxu0 %v5212
    %7835 = vmatpush.msra.mxu0 %v5206
    %7836 = vmatpush.msra.mxu0 %v5200
    %7837 = vmatpush.msra.mxu0 %v5194
    %7838 = vmatpush.msra.mxu0 %v5188
    %7839 = vmatpush.msra.mxu0 %v5182
    %7840 = vmatpush.msra.mxu0 %v5176
    %7841 = vmatpush.msra.mxu0 %v5170
    %7842 = vmatpush.msra.mxu0 %v5164
    %7843 = vmatpush.msra.mxu0 %v5158
    %7844 = vmatpush.msra.mxu0 %v5152
    %7845 = vmatmul.f32.gmra.mxu0 %v7680
    %v7846 = vpop.f32.mrf.mxu0
    %v7847 = vadd.f32 %v7827, %v7846
    %7848 = vdwg.mxu0
    %7849 = vmatpush.msra.mxu0 %v5147
    %7850 = vmatpush.msra.mxu0 %v5141
    %7851 = vmatpush.msra.mxu0 %v5135
    %7852 = vmatpush.msra.mxu0 %v5129
    %7853 = vmatpush.msra.mxu0 %v5123
    %7854 = vmatpush.msra.mxu0 %v5117
    %7855 = vmatpush.msra.mxu0 %v5111
    %7856 = vmatpush.msra.mxu0 %v5105
    %7857 = vmatpush.msra.mxu0 %v5099
    %7858 = vmatpush.msra.mxu0 %v5093
    %7859 = vmatpush.msra.mxu0 %v5087
    %7860 = vmatpush.msra.mxu0 %v5081
    %7861 = vmatpush.msra.mxu0 %v5075
    %7862 = vmatpush.msra.mxu0 %v5069
    %7863 = vmatpush.msra.mxu0 %v5063
    %7864 = vmatpush.msra.mxu0 %v5057
    %7865 = vmatmul.f32.gmra.mxu0 %v7679
    %v7866 = vpop.f32.mrf.mxu0
    %v7867 = vadd.f32 0.0, %v7866
    %7868 = vdwg.mxu0
    %7869 = vmatpush.msra.mxu0 %v5243
    %7870 = vmatpush.msra.mxu0 %v5237
    %7871 = vmatpush.msra.mxu0 %v5231
    %7872 = vmatpush.msra.mxu0 %v5225
    %7873 = vmatpush.msra.mxu0 %v5219
    %7874 = vmatpush.msra.mxu0 %v5213
    %7875 = vmatpush.msra.mxu0 %v5207
    %7876 = vmatpush.msra.mxu0 %v5201
    %7877 = vmatpush.msra.mxu0 %v5195
    %7878 = vmatpush.msra.mxu0 %v5189
    %7879 = vmatpush.msra.mxu0 %v5183
    %7880 = vmatpush.msra.mxu0 %v5177
    %7881 = vmatpush.msra.mxu0 %v5171
    %7882 = vmatpush.msra.mxu0 %v5165
    %7883 = vmatpush.msra.mxu0 %v5159
    %7884 = vmatpush.msra.mxu0 %v5153
    %7885 = vmatmul.f32.gmra.mxu0 %v7680
    %v7886 = vpop.f32.mrf.mxu0
    %v7887 = vadd.f32 %v7867, %v7886
    %7888 = vdwg.mxu0
    %7889 = vmatpush.msra.mxu0 %v5148
    %7890 = vmatpush.msra.mxu0 %v5142
    %7891 = vmatpush.msra.mxu0 %v5136
    %7892 = vmatpush.msra.mxu0 %v5130
    %7893 = vmatpush.msra.mxu0 %v5124
    %7894 = vmatpush.msra.mxu0 %v5118
    %7895 = vmatpush.msra.mxu0 %v5112
    %7896 = vmatpush.msra.mxu0 %v5106
    %7897 = vmatpush.msra.mxu0 %v5100
    %7898 = vmatpush.msra.mxu0 %v5094
    %7899 = vmatpush.msra.mxu0 %v5088
    %7900 = vmatpush.msra.mxu0 %v5082
    %7901 = vmatpush.msra.mxu0 %v5076
    %7902 = vmatpush.msra.mxu0 %v5070
    %7903 = vmatpush.msra.mxu0 %v5064
    %7904 = vmatpush.msra.mxu0 %v5058
    %7905 = vmatmul.f32.gmra.mxu0 %v7679
    %v7906 = vpop.f32.mrf.mxu0
    %v7907 = vadd.f32 0.0, %v7906
    %7908 = vdwg.mxu0
    %7909 = vmatpush.msra.mxu0 %v5244
    %7910 = vmatpush.msra.mxu0 %v5238
    %7911 = vmatpush.msra.mxu0 %v5232
    %7912 = vmatpush.msra.mxu0 %v5226
    %7913 = vmatpush.msra.mxu0 %v5220
    %7914 = vmatpush.msra.mxu0 %v5214
    %7915 = vmatpush.msra.mxu0 %v5208
    %7916 = vmatpush.msra.mxu0 %v5202
    %7917 = vmatpush.msra.mxu0 %v5196
    %7918 = vmatpush.msra.mxu0 %v5190
    %7919 = vmatpush.msra.mxu0 %v5184
    %7920 = vmatpush.msra.mxu0 %v5178
    %7921 = vmatpush.msra.mxu0 %v5172
    %7922 = vmatpush.msra.mxu0 %v5166
    %7923 = vmatpush.msra.mxu0 %v5160
    %7924 = vmatpush.msra.mxu0 %v5154
    %7925 = vmatmul.f32.gmra.mxu0 %v7680
    %v7926 = vpop.f32.mrf.mxu0
    %v7927 = vadd.f32 %v7907, %v7926
    %7928 = vdwg.mxu0
    %v7929 = vadd.f32 %v7683, %v7727
    %v7930 = vadd.f32 %v7684, %v7767
    %v7931 = vadd.f32 %v7685, %v7807
    %v7932 = vadd.f32 %v7686, %v7847
    %v7933 = vxor.u32 %v7929, 2147483648
    %v7934 = vxor.u32 %v7930, 2147483648
    %v7935 = vxor.u32 %v7931, 2147483648
    %v7936 = vxor.u32 %v7932, 2147483648
    %v7937 = vmul.f32 %v7933, 1.442695
    %v7938 = vpow.pop %v7937
    %v7939 = vmul.f32 %v7934, 1.442695
    %v7940 = vpow.pop %v7939
    %v7941 = vmul.f32 %v7935, 1.442695
    %v7942 = vpow.pop %v7941
    %v7943 = vmul.f32 %v7936, 1.442695
    %v7944 = vpow.pop %v7943
    %v7945 = vadd.f32 %v7938, 1.0
    %v7946 = vadd.f32 %v7940, 1.0
    %v7947 = vadd.f32 %v7942, 1.0
    %v7948 = vadd.f32 %v7944, 1.0
    %v7949 = vrcp.pop %v7945
    %v7950 = vmul.f32 %v7945, %v7949
    %v7951 = vsub.f32 1.0, %v7950
    %v7952 = vmul.f32 %v7949, %v7951
    %v7953 = vadd.f32 %v7949, %v7952
    %vm7954 = vweird.f32 %v7945
    %vm7955 = vweird.f32 %v7949
    %vm7956 = vmor %vm7954, %vm7955
    %v7957 = vsel %vm7956, %v7949, %v7953
    %v7958 = vand.u32 2147483647, %v7945
    %vm7959 = vcmp.eq.f32.partialorder %v7958, 8.507059e+37
    %v7960 = vand.u32 %v7945, 2147483648
    %v7961 = vor.u32 1.1754944e-38, %v7960
    %v7962 = vsel %vm7959, %v7961, %v7957
    %v7963 = vmul.f32 1.0, %v7962
    %v7964 = vrcp.pop %v7946
    %v7965 = vmul.f32 %v7946, %v7964
    %v7966 = vsub.f32 1.0, %v7965
    %v7967 = vmul.f32 %v7964, %v7966
    %v7968 = vadd.f32 %v7964, %v7967
    %vm7969 = vweird.f32 %v7946
    %vm7970 = vweird.f32 %v7964
    %vm7971 = vmor %vm7969, %vm7970
    %v7972 = vsel %vm7971, %v7964, %v7968
    %v7973 = vand.u32 2147483647, %v7946
    %vm7974 = vcmp.eq.f32.partialorder %v7973, 8.507059e+37
    %v7975 = vand.u32 %v7946, 2147483648
    %v7976 = vor.u32 1.1754944e-38, %v7975
    %v7977 = vsel %vm7974, %v7976, %v7972
    %v7978 = vmul.f32 1.0, %v7977
    %v7979 = vrcp.pop %v7947
    %v7980 = vmul.f32 %v7947, %v7979
    %v7981 = vsub.f32 1.0, %v7980
    %v7982 = vmul.f32 %v7979, %v7981
    %v7983 = vadd.f32 %v7979, %v7982
    %vm7984 = vweird.f32 %v7947
    %vm7985 = vweird.f32 %v7979
    %vm7986 = vmor %vm7984, %vm7985
    %v7987 = vsel %vm7986, %v7979, %v7983
    %v7988 = vand.u32 2147483647, %v7947
    %vm7989 = vcmp.eq.f32.partialorder %v7988, 8.507059e+37
    %v7990 = vand.u32 %v7947, 2147483648
    %v7991 = vor.u32 1.1754944e-38, %v7990
    %v7992 = vsel %vm7989, %v7991, %v7987
    %v7993 = vmul.f32 1.0, %v7992
    %v7994 = vrcp.pop %v7948
    %v7995 = vmul.f32 %v7948, %v7994
    %v7996 = vsub.f32 1.0, %v7995
    %v7997 = vmul.f32 %v7994, %v7996
    %v7998 = vadd.f32 %v7994, %v7997
    %vm7999 = vweird.f32 %v7948
    %vm8000 = vweird.f32 %v7994
    %vm8001 = vmor %vm7999, %vm8000
    %v8002 = vsel %vm8001, %v7994, %v7998
    %v8003 = vand.u32 2147483647, %v7948
    %vm8004 = vcmp.eq.f32.partialorder %v8003, 8.507059e+37
    %v8005 = vand.u32 %v7948, 2147483648
    %v8006 = vor.u32 1.1754944e-38, %v8005
    %v8007 = vsel %vm8004, %v8006, %v8002
    %v8008 = vmul.f32 1.0, %v8007
    %v8009 = vadd.f32 %v7887, %v5573
    %v8010 = vadd.f32 %v7927, %v5574
    %v8011 = vmul.f32 %v7963, %v8009
    %v8012 = vmul.f32 %v7978, %v8010
    %v8013 = vadd.f32 %v7687, %v8011
    %v8014 = vadd.f32 %v7688, %v8012
    %v8015 = vtanh.pop %v8013
    %v8016 = vtanh.pop %v8014
    %v8017 = vsub.f32 1.0, %v7993
    %v8018 = vsub.f32 1.0, %v8008
    %v8019 = vmul.f32 %v8017, %v8015
    %v8020 = vmul.f32 %v8018, %v8016
    %v8021 = vmul.f32 %v7993, %v7679
    %v8022 = vmul.f32 %v8008, %v7680
    %v8023 = vadd.f32 %v8019, %v8021
    %v8024 = vadd.f32 %v8020, %v8022
    %8025 = vst [vmem:[%s5599] sm:$0xff] %v8023
    %8026 = vst [vmem:[%s5595 + $0x8] sm:$0xff] %v8024
    // Predicated region
    $region74: #{tpu_custom_call.1} parent=1 // pred_check
      _
    $region75: #{tpu_custom_call.1} parent=1 // pred_check_branch
      %8028 = sbr.rel (0) target = $region77
    $region76: #{tpu_custom_call.1} parent=1 // pred_region
      %8030 = vsyncadd [#allocation6], 0
      %s8031 = sshll.u32 [#allocation19], 4
      %s8032 = int_to_ptr.vmem [resolvable:$true] %s8031
      %s8033 = sshll.u32 %s9, 4
      %s8034 = int_to_ptr.hbm [resolvable:$true] %s8033
      %8039 = dma.vmem_to_hbm [thread:$0]  %s8032, 2048, %s8034, [#allocation6], 256, 256, 16
    $region77: #{tpu_custom_call.1} parent=1 // pred_fallthru
      _
    // Predicated region
    $region78: #{tpu_custom_call.1} parent=1 // pred_check
      _
    $region79: #{tpu_custom_call.1} parent=1 // pred_check_branch
      %8041 = sbr.rel (0) target = $region81
    $region80: #{tpu_custom_call.1} parent=1 // pred_region
      %8043 = dma.done [#allocation6], 2048
    $region81: #{tpu_custom_call.1} parent=1 // pred_fallthru
      _
    %8044 = vsyncpa [#allocation5], 1
    %8045 = vsyncpa [#allocation8], 1
    %8046 = vsyncpa [#allocation11], 1
    %8047 = vsyncpa [#allocation14], 1
    %8048 = vsyncpa [#allocation17], 1
    %8049 = vsyncpa [#allocation6], 1

</llo_original>
